<compile_context>
chip_gen: v6e
topology: v6e:2x2x1
jax: 0.10.0
libtpu: 0.0.40
codegen_flags: <defaults>
</compile_context>

<pallas_src>
import jax
import jax.numpy as jnp
from jax import lax
from jax.experimental import pallas as pl
from jax.experimental.pallas import tpu as pltpu

# ---------------- config (small but consistent with the module) ----------------
INPUT_FEAT  = 640          # raw bone features (module slices to :624)
INPUT_SIZE  = 624          # encoder LSTM input size (fixed slice in the module)
HIDDEN      = 32           # hidden_size
DEC_HIDDEN  = 2 * HIDDEN   # decoder LSTM hidden size (hidden_size * 2)
NUM_LAYERS  = 2            # num_layers
OUTPUT_SIZE = 48           # output_size (mesh dim)
OUT_PAD     = 128          # lane-dense padded head output width
BATCH       = 2
SEQ_LEN     = 8


# ------------------------------ fused forward kernel ------------------------------
def fused_forward_kernel(
        # auto-DMA'd VMEM inputs
        x_ref, fp_ref,
        e0_wih, e0_whh, e0_b,
        e1_wih, e1_whh, e1_b,
        fp_w1, fp_b1, fp_w2, fp_b2,
        att_w1_enc, att_w1_fp, att_b1, att_w2t, att_b2,
        bcastT,
        d0_b, d1_b, hd_b1, ln_g, ln_b, hd_w2, hd_b2,
        # pl.ANY (HBM) inputs: decoder / head matrices, copied manually so the DMA
        # overlaps with the encoder compute
        d0_wih_enc_hbm, d0_wih_fp_hbm, d0_whh_hbm, d1_wih_hbm, d1_whh_hbm, hd_w1_hbm,
        # output
        out_ref,
        # scratch
        enc_seq, dec_seq,
        d0_wih_enc_v, d0_wih_fp_v, d0_whh_v, d1_wih_v, d1_whh_v, hd_w1_v,
        dma_sem):
    f32 = jnp.float32
    TB = x_ref.shape[0]
    B = fp_ref.shape[0]
    T = TB // B
    H = e0_whh.shape[0]          # 32
    DH = d0_whh_v.shape[0]       # 64

    # ---- Kick off decoder/head weight DMA; it hides under the encoder section. ----
    dec_copies = [
        pltpu.make_async_copy(d0_wih_enc_hbm, d0_wih_enc_v, dma_sem.at[0]),
        pltpu.make_async_copy(d0_wih_fp_hbm,  d0_wih_fp_v,  dma_sem.at[1]),
        pltpu.make_async_copy(d0_whh_hbm,     d0_whh_v,     dma_sem.at[2]),
        pltpu.make_async_copy(d1_wih_hbm,     d1_wih_v,     dma_sem.at[3]),
        pltpu.make_async_copy(d1_whh_hbm,     d1_whh_v,     dma_sem.at[4]),
        pltpu.make_async_copy(hd_w1_hbm,      hd_w1_v,      dma_sem.at[5]),
    ]
    for cp in dec_copies:
        cp.start()

    def cell(gates, c, hs):
        # One full-width sigmoid (reused for i/f/o); tanh only on the g-quarter,
        # which is the only transcendental actually needed at 4H width otherwise.
        sig = jax.nn.sigmoid(gates)
        i_g = sig[:, 0:hs]
        f_g = sig[:, hs:2 * hs]
        o_g = sig[:, 3 * hs:4 * hs]
        g_g = jnp.tanh(gates[:, 2 * hs:3 * hs])
        c_new = f_g * c + i_g * g_g
        h_new = o_g * jnp.tanh(c_new)
        return h_new, c_new

    # ---- Encoder: 2 LSTM layers, interleaved step-by-step. ----
    # Layer-0 input projection hoisted into one big matmul (bias folded in),
    # kept as an SSA value and sliced per step (no VMEM round-trip in the loop).
    g0 = jnp.dot(x_ref[...], e0_wih[...], preferred_element_type=f32) + e0_b[...]   # (T*B, 4H)

    h0 = jnp.zeros((B, H), f32); c0 = jnp.zeros((B, H), f32)
    h1 = jnp.zeros((B, H), f32); c1 = jnp.zeros((B, H), f32)
    enc_list = []
    for t in range(T):
        r = t * B
        ga = g0[r:r + B, :] + jnp.dot(h0, e0_whh[...], preferred_element_type=f32)
        h0, c0 = cell(ga, c0, H)
        # Layer-1 step t: h1_{t-1} @ W_hh can overlap with layer-0's step-t work;
        # only h0_t @ W_ih sits on the dependency chain.
        gb = (jnp.dot(h0, e1_wih[...], preferred_element_type=f32)
              + jnp.dot(h1, e1_whh[...], preferred_element_type=f32) + e1_b[...])
        h1, c1 = cell(gb, c1, H)
        ho = jnp.tanh(h1)                      # fused encoder-output tanh
        enc_list.append(ho)
        enc_seq[r:r + B, :] = ho               # store only; never re-read per step

    # ---- Encoder_firstPose: Linear -> tanh -> Linear -> tanh ----
    fp_h = jnp.tanh(jnp.dot(fp_ref[...], fp_w1[...],
                            preferred_element_type=f32) + fp_b1[...])
    fp_h = jnp.tanh(jnp.dot(fp_h, fp_w2[...],
                            preferred_element_type=f32) + fp_b2[...])               # (B, H)

    # ---- Attention (combined = [enc, fp]; W1 pre-split, no concat). ----
    a_top = jnp.dot(enc_seq[...], att_w1_enc[...], preferred_element_type=f32)      # (T*B, 2H)
    a_bot = jnp.dot(fp_h, att_w1_fp[...], preferred_element_type=f32) + att_b1[...] # (B, 2H)
    # Broadcast a_bot over time with a tiny one-hot matmul (row r gets a_bot[r % B]).
    a_bot_t = jnp.dot(bcastT[...], a_bot, preferred_element_type=f32)               # (T*B, 2H)
    hm = jnp.tanh(a_top + a_bot_t)                                                  # one tanh
    s_all = jnp.sum(hm * att_w2t[...], axis=-1, keepdims=True) + att_b2[...]        # (T*B, 1)

    # Numerically stable softmax over the time axis (rows ordered t*B + b).
    m = s_all[0:B, :]
    for t in range(1, T):
        m = jnp.maximum(m, s_all[t * B:t * B + B, :])
    m_t = jnp.dot(bcastT[...], m, preferred_element_type=f32)                       # (T*B, 1)
    e_all = jnp.exp(s_all - m_t)                                                    # one exp
    denom = e_all[0:B, :]
    for t in range(1, T):
        denom = denom + e_all[t * B:t * B + B, :]
    inv_denom = 1.0 / denom                                                         # (B, 1)

    att_enc = jnp.zeros((B, H), f32)
    sum_w = jnp.zeros((B, 1), f32)
    for t in range(T):
        w_t = e_all[t * B:t * B + B, :] * inv_denom
        att_enc = att_enc + w_t * enc_list[t]
        sum_w = sum_w + w_t
    att_fp = fp_h * sum_w              # second half of attended = fp * sum_t(w_t)

    # ---- Decoder: make sure the overlapped weight DMAs have landed. ----
    for cp in dec_copies:
        cp.wait()

    # Decoder input is constant over time -> input-gate projection computed ONCE.
    d_gin = (jnp.dot(att_enc, d0_wih_enc_v[...], preferred_element_type=f32)
             + jnp.dot(att_fp, d0_wih_fp_v[...], preferred_element_type=f32)
             + d0_b[...])                                                           # (B, 4*DH)

    h0 = jnp.zeros((B, DH), f32); c0 = jnp.zeros((B, DH), f32)
    h1 = jnp.zeros((B, DH), f32); c1 = jnp.zeros((B, DH), f32)
    for t in range(T):
        r = t * B
        ga = d_gin + jnp.dot(h0, d0_whh_v[...], preferred_element_type=f32)
        h0, c0 = cell(ga, c0, DH)
        gb = (jnp.dot(h0, d1_wih_v[...], preferred_element_type=f32)
              + jnp.dot(h1, d1_whh_v[...], preferred_element_type=f32) + d1_b[...])
        h1, c1 = cell(gb, c1, DH)
        dec_seq[r:r + B, :] = h1

    # ---- Head: Linear(2H->H) -> LayerNorm(H) -> Linear(H->128 padded), one pass. ----
    hh = jnp.dot(dec_seq[...], hd_w1_v[...], preferred_element_type=f32) + hd_b1[...]
    mu = jnp.mean(hh, axis=-1, keepdims=True)
    var = jnp.mean((hh - mu) * (hh - mu), axis=-1, keepdims=True)   # biased (PyTorch LN)
    hn = (hh - mu) * lax.rsqrt(var + 1e-5)
    hn = hn * ln_g[...] + ln_b[...]
    # Lane-dense (T*B, 128) store; wrapper slices back to OUTPUT_SIZE.
    out_ref[...] = jnp.dot(hn, hd_w2[...], preferred_element_type=f32) + hd_b2[...]


# ----------------------------------- parameters -----------------------------------
def init_params(key):
    def nrm(k, shape, scale=0.08):
        return scale * jax.random.normal(k, shape, jnp.float32)

    keys = iter(jax.random.split(key, 40))
    p = {}

    # Encoder LSTM layer 0: W_ih zero-padded 624 -> 640 rows (lane-aligned input;
    # numerically identical to the module's input_bone[:, :, :624] slice for finite data).
    w0 = nrm(next(keys), (INPUT_SIZE, 4 * HIDDEN))
    p["e0_wih"] = jnp.concatenate(
        [w0, jnp.zeros((INPUT_FEAT - INPUT_SIZE, 4 * HIDDEN), jnp.float32)], axis=0)
    p["e0_whh"] = nrm(next(keys), (HIDDEN, 4 * HIDDEN))
    p["e0_b"]   = nrm(next(keys), (1, 4 * HIDDEN))        # b_ih + b_hh combined
    p["e1_wih"] = nrm(next(keys), (HIDDEN, 4 * HIDDEN))
    p["e1_whh"] = nrm(next(keys), (HIDDEN, 4 * HIDDEN))
    p["e1_b"]   = nrm(next(keys), (1, 4 * HIDDEN))

    p["fp_w1"] = nrm(next(keys), (OUTPUT_SIZE, HIDDEN))
    p["fp_b1"] = nrm(next(keys), (1, HIDDEN))
    p["fp_w2"] = nrm(next(keys), (HIDDEN, HIDDEN))
    p["fp_b2"] = nrm(next(keys), (1, HIDDEN))

    p["att_w1"]  = nrm(next(keys), (2 * HIDDEN, 2 * HIDDEN))
    p["att_b1"]  = nrm(next(keys), (1, 2 * HIDDEN))
    p["att_w2t"] = nrm(next(keys), (1, 2 * HIDDEN))        # (out=1, in=2H) row vector
    p["att_b2"]  = nrm(next(keys), (1, 1))

    p["d0_wih"] = nrm(next(keys), (DEC_HIDDEN, 4 * DEC_HIDDEN))
    p["d0_whh"] = nrm(next(keys), (DEC_HIDDEN, 4 * DEC_HIDDEN))
    p["d0_b"]   = nrm(next(keys), (1, 4 * DEC_HIDDEN))
    p["d1_wih"] = nrm(next(keys), (DEC_HIDDEN, 4 * DEC_HIDDEN))
    p["d1_whh"] = nrm(next(keys), (DEC_HIDDEN, 4 * DEC_HIDDEN))
    p["d1_b"]   = nrm(next(keys), (1, 4 * DEC_HIDDEN))

    p["head_w1"] = nrm(next(keys), (DEC_HIDDEN, HIDDEN))
    p["head_b1"] = nrm(next(keys), (1, HIDDEN))
    p["ln_g"]    = jnp.ones((1, HIDDEN), jnp.float32)
    p["ln_b"]    = jnp.zeros((1, HIDDEN), jnp.float32)
    p["head_w2"] = nrm(next(keys), (HIDDEN, OUTPUT_SIZE))
    p["head_b2"] = nrm(next(keys), (1, OUTPUT_SIZE))
    return p


def prep_kernel_params(p, T, B):
    """Host-side plumbing: split / pad weights so the kernel never re-slices them."""
    H = HIDDEN
    f32 = jnp.float32
    bcastT = jax.nn.one_hot(jnp.arange(T * B) % B, B, dtype=f32)       # (T*B, B)
    hd_w2p = jnp.pad(p["head_w2"], ((0, 0), (0, OUT_PAD - OUTPUT_SIZE)))
    hd_b2p = jnp.pad(p["head_b2"], ((0, 0), (0, OUT_PAD - OUTPUT_SIZE)))

    auto_ws = [
        p["e0_wih"], p["e0_whh"], p["e0_b"],
        p["e1_wih"], p["e1_whh"], p["e1_b"],
        p["fp_w1"], p["fp_b1"], p["fp_w2"], p["fp_b2"],
        p["att_w1"][:H, :], p["att_w1"][H:, :], p["att_b1"], p["att_w2t"], p["att_b2"],
        bcastT,
        p["d0_b"], p["d1_b"], p["head_b1"], p["ln_g"], p["ln_b"], hd_w2p, hd_b2p,
    ]
    any_ws = [
        p["d0_wih"][:H, :], p["d0_wih"][H:, :], p["d0_whh"],
        p["d1_wih"], p["d1_whh"], p["head_w1"],
    ]
    return auto_ws, any_ws


# ------------------------------------- forward -------------------------------------
def model_forward(params, input_bone, first_frame_pose):
    B, T, F = input_bone.shape
    f32 = jnp.float32

    # Time-major flat layout (row = t*B + b); the only wrapper-side reshaping.
    x2 = jnp.transpose(input_bone, (1, 0, 2)).reshape(T * B, F)
    auto_ws, any_ws = prep_kernel_params(params, T, B)

    vmem = pl.BlockSpec(memory_space=pltpu.MemorySpace.VMEM)
    anyspec = pl.BlockSpec(memory_space=pl.ANY)

    out_flat = pl.pallas_call(
        fused_forward_kernel,
        out_shape=jax.ShapeDtypeStruct((T * B, OUT_PAD), f32),
        in_specs=[vmem] * (2 + len(auto_ws)) + [anyspec] * len(any_ws),
        out_specs=vmem,
        scratch_shapes=[
            pltpu.VMEM((T * B, HIDDEN), f32),               # enc_seq (tanh'd encoder out)
            pltpu.VMEM((T * B, DEC_HIDDEN), f32),           # dec_seq (decoder L1 out)
            pltpu.VMEM((HIDDEN, 4 * DEC_HIDDEN), f32),      # d0_wih_enc_v
            pltpu.VMEM((HIDDEN, 4 * DEC_HIDDEN), f32),      # d0_wih_fp_v
            pltpu.VMEM((DEC_HIDDEN, 4 * DEC_HIDDEN), f32),  # d0_whh_v
            pltpu.VMEM((DEC_HIDDEN, 4 * DEC_HIDDEN), f32),  # d1_wih_v
            pltpu.VMEM((DEC_HIDDEN, 4 * DEC_HIDDEN), f32),  # d1_whh_v
            pltpu.VMEM((DEC_HIDDEN, HIDDEN), f32),          # hd_w1_v
            pltpu.SemaphoreType.DMA((6,)),                  # one sem per overlapped copy
        ],
    )(x2, first_frame_pose, *auto_ws, *any_ws)

    out = out_flat[:, :OUTPUT_SIZE]
    return jnp.transpose(out.reshape(T, B, OUTPUT_SIZE), (1, 0, 2))


# ----------------------------- pure-JAX reference (check) -----------------------------
def reference_forward(params, input_bone, first_frame_pose):
    B, T, _ = input_bone.shape
    H, DH = HIDDEN, DEC_HIDDEN

    def lstm_seq(x_btf, w_ih, w_hh, b, hs):
        def step(carry, xt):
            h, c = carry
            g = xt @ w_ih + h @ w_hh + b
            i = jax.nn.sigmoid(g[:, :hs])
            f = jax.nn.sigmoid(g[:, hs:2 * hs])
            gg = jnp.tanh(g[:, 2 * hs:3 * hs])
            o = jax.nn.sigmoid(g[:, 3 * hs:])
            c = f * c + i * gg
            h = o * jnp.tanh(c)
            return (h, c), h
        init = (jnp.zeros((B, hs), jnp.float32), jnp.zeros((B, hs), jnp.float32))
        _, hseq = lax.scan(step, init, jnp.transpose(x_btf, (1, 0, 2)))
        return jnp.transpose(hseq, (1, 0, 2))

    e0 = lstm_seq(input_bone, params["e0_wih"], params["e0_whh"], params["e0_b"], H)
    e1 = lstm_seq(e0, params["e1_wih"], params["e1_whh"], params["e1_b"], H)
    enc_out = jnp.tanh(e1)

    fp = jnp.tanh(first_frame_pose @ params["fp_w1"] + params["fp_b1"])
    fp = jnp.tanh(fp @ params["fp_w2"] + params["fp_b2"])
    fpe = jnp.broadcast_to(fp[:, None, :], (B, T, H))
    comb = jnp.concatenate([enc_out, fpe], axis=-1)
    hmid = jnp.tanh(comb @ params["att_w1"] + params["att_b1"])
    scores = hmid @ params["att_w2t"].T + params["att_b2"]
    w = jax.nn.softmax(scores, axis=1)
    attended = jnp.sum(w * comb, axis=1)

    dec_in = jnp.broadcast_to(attended[:, None, :], (B, T, DH))
    d0 = lstm_seq(dec_in, params["d0_wih"], params["d0_whh"], params["d0_b"], DH)
    d1 = lstm_seq(d0, params["d1_wih"], params["d1_whh"], params["d1_b"], DH)

    hh = d1 @ params["head_w1"] + params["head_b1"]
    mu = jnp.mean(hh, axis=-1, keepdims=True)
    var = jnp.mean((hh - mu) ** 2, axis=-1, keepdims=True)
    hn = (hh - mu) / jnp.sqrt(var + 1e-5) * params["ln_g"] + params["ln_b"]
    return hn @ params["head_w2"] + params["head_b2"]


if __name__ == "__main__":
    key = jax.random.PRNGKey(0)
    k_p, k_bone, k_pose = jax.random.split(key, 3)

    params = init_params(k_p)
    input_bone = jax.random.normal(k_bone, (BATCH, SEQ_LEN, INPUT_FEAT), jnp.float32)
    first_frame_pose = jax.random.normal(k_pose, (BATCH, OUTPUT_SIZE), jnp.float32)

    fwd = jax.jit(model_forward)
    out = jax.block_until_ready(fwd(params, input_bone, first_frame_pose))

    assert out.shape == (BATCH, SEQ_LEN, OUTPUT_SIZE)
    assert bool(jnp.all(jnp.isfinite(out)))

    with jax.default_matmul_precision("highest"):
        ref = jax.block_until_ready(
            jax.jit(reference_forward)(params, input_bone, first_frame_pose))
    max_err = float(jnp.max(jnp.abs(out - ref)))
    assert max_err < 1e-2, f"max abs error vs reference: {max_err}"

    print("KERNEL_OK")
</pallas_src>

<mosaic_0001>
module attributes {stable_mosaic.version = 11 : i64} {
  func.func @fused_forward_kernel(%arg0: memref<16x640xf32, #tpu.memory_space<vmem>>, %arg1: memref<2x48xf32, #tpu.memory_space<vmem>>, %arg2: memref<640x128xf32, #tpu.memory_space<vmem>>, %arg3: memref<32x128xf32, #tpu.memory_space<vmem>>, %arg4: memref<1x128xf32, #tpu.memory_space<vmem>>, %arg5: memref<32x128xf32, #tpu.memory_space<vmem>>, %arg6: memref<32x128xf32, #tpu.memory_space<vmem>>, %arg7: memref<1x128xf32, #tpu.memory_space<vmem>>, %arg8: memref<48x32xf32, #tpu.memory_space<vmem>>, %arg9: memref<1x32xf32, #tpu.memory_space<vmem>>, %arg10: memref<32x32xf32, #tpu.memory_space<vmem>>, %arg11: memref<1x32xf32, #tpu.memory_space<vmem>>, %arg12: memref<32x64xf32, #tpu.memory_space<vmem>>, %arg13: memref<32x64xf32, #tpu.memory_space<vmem>>, %arg14: memref<1x64xf32, #tpu.memory_space<vmem>>, %arg15: memref<1x64xf32, #tpu.memory_space<vmem>>, %arg16: memref<1x1xf32, #tpu.memory_space<vmem>>, %arg17: memref<16x2xf32, #tpu.memory_space<vmem>>, %arg18: memref<1x256xf32, #tpu.memory_space<vmem>>, %arg19: memref<1x256xf32, #tpu.memory_space<vmem>>, %arg20: memref<1x32xf32, #tpu.memory_space<vmem>>, %arg21: memref<1x32xf32, #tpu.memory_space<vmem>>, %arg22: memref<1x32xf32, #tpu.memory_space<vmem>>, %arg23: memref<32x128xf32, #tpu.memory_space<vmem>>, %arg24: memref<1x128xf32, #tpu.memory_space<vmem>>, %arg25: memref<32x256xf32, #tpu.memory_space<any>>, %arg26: memref<32x256xf32, #tpu.memory_space<any>>, %arg27: memref<64x256xf32, #tpu.memory_space<any>>, %arg28: memref<64x256xf32, #tpu.memory_space<any>>, %arg29: memref<64x256xf32, #tpu.memory_space<any>>, %arg30: memref<64x32xf32, #tpu.memory_space<any>>, %arg31: memref<16x128xf32, #tpu.memory_space<vmem>>, %arg32: memref<16x32xf32, #tpu.memory_space<vmem>>, %arg33: memref<16x64xf32, #tpu.memory_space<vmem>>, %arg34: memref<32x256xf32, #tpu.memory_space<vmem>>, %arg35: memref<32x256xf32, #tpu.memory_space<vmem>>, %arg36: memref<64x256xf32, #tpu.memory_space<vmem>>, %arg37: memref<64x256xf32, #tpu.memory_space<vmem>>, %arg38: memref<64x256xf32, #tpu.memory_space<vmem>>, %arg39: memref<64x32xf32, #tpu.memory_space<vmem>>, %arg40: memref<6x!tpu.dma_semaphore, #tpu.memory_space<semaphore_mem>>) attributes {dimension_semantics = [], scalar_prefetch = 0 : i64, scratch_operands = 9 : i64, tpu.core_type = #tpu.core_type<tc>} {
    %c0_i32 = arith.constant 0 : i32
    %0 = tpu.memref_slice %arg40[%c0_i32] : memref<6x!tpu.dma_semaphore, #tpu.memory_space<semaphore_mem>> -> memref<1x!tpu.dma_semaphore, #tpu.memory_space<semaphore_mem>>
    %1 = tpu.memref_squeeze %0 : memref<1x!tpu.dma_semaphore, #tpu.memory_space<semaphore_mem>> -> memref<!tpu.dma_semaphore, #tpu.memory_space<semaphore_mem>>
    tpu.enqueue_dma source(%arg25 : memref<32x256xf32, #tpu.memory_space<any>>) target(%arg34 : memref<32x256xf32, #tpu.memory_space<vmem>>) target_semaphore(%1 : memref<!tpu.dma_semaphore, #tpu.memory_space<semaphore_mem>>)
    %c1_i32 = arith.constant 1 : i32
    %2 = tpu.memref_slice %arg40[%c1_i32] : memref<6x!tpu.dma_semaphore, #tpu.memory_space<semaphore_mem>> -> memref<1x!tpu.dma_semaphore, #tpu.memory_space<semaphore_mem>>
    %3 = tpu.memref_squeeze %2 : memref<1x!tpu.dma_semaphore, #tpu.memory_space<semaphore_mem>> -> memref<!tpu.dma_semaphore, #tpu.memory_space<semaphore_mem>>
    tpu.enqueue_dma source(%arg26 : memref<32x256xf32, #tpu.memory_space<any>>) target(%arg35 : memref<32x256xf32, #tpu.memory_space<vmem>>) target_semaphore(%3 : memref<!tpu.dma_semaphore, #tpu.memory_space<semaphore_mem>>)
    %c2_i32 = arith.constant 2 : i32
    %4 = tpu.memref_slice %arg40[%c2_i32] : memref<6x!tpu.dma_semaphore, #tpu.memory_space<semaphore_mem>> -> memref<1x!tpu.dma_semaphore, #tpu.memory_space<semaphore_mem>>
    %5 = tpu.memref_squeeze %4 : memref<1x!tpu.dma_semaphore, #tpu.memory_space<semaphore_mem>> -> memref<!tpu.dma_semaphore, #tpu.memory_space<semaphore_mem>>
    tpu.enqueue_dma source(%arg27 : memref<64x256xf32, #tpu.memory_space<any>>) target(%arg36 : memref<64x256xf32, #tpu.memory_space<vmem>>) target_semaphore(%5 : memref<!tpu.dma_semaphore, #tpu.memory_space<semaphore_mem>>)
    %c3_i32 = arith.constant 3 : i32
    %6 = tpu.memref_slice %arg40[%c3_i32] : memref<6x!tpu.dma_semaphore, #tpu.memory_space<semaphore_mem>> -> memref<1x!tpu.dma_semaphore, #tpu.memory_space<semaphore_mem>>
    %7 = tpu.memref_squeeze %6 : memref<1x!tpu.dma_semaphore, #tpu.memory_space<semaphore_mem>> -> memref<!tpu.dma_semaphore, #tpu.memory_space<semaphore_mem>>
    tpu.enqueue_dma source(%arg28 : memref<64x256xf32, #tpu.memory_space<any>>) target(%arg37 : memref<64x256xf32, #tpu.memory_space<vmem>>) target_semaphore(%7 : memref<!tpu.dma_semaphore, #tpu.memory_space<semaphore_mem>>)
    %c4_i32 = arith.constant 4 : i32
    %8 = tpu.memref_slice %arg40[%c4_i32] : memref<6x!tpu.dma_semaphore, #tpu.memory_space<semaphore_mem>> -> memref<1x!tpu.dma_semaphore, #tpu.memory_space<semaphore_mem>>
    %9 = tpu.memref_squeeze %8 : memref<1x!tpu.dma_semaphore, #tpu.memory_space<semaphore_mem>> -> memref<!tpu.dma_semaphore, #tpu.memory_space<semaphore_mem>>
    tpu.enqueue_dma source(%arg29 : memref<64x256xf32, #tpu.memory_space<any>>) target(%arg38 : memref<64x256xf32, #tpu.memory_space<vmem>>) target_semaphore(%9 : memref<!tpu.dma_semaphore, #tpu.memory_space<semaphore_mem>>)
    %c5_i32 = arith.constant 5 : i32
    %10 = tpu.memref_slice %arg40[%c5_i32] : memref<6x!tpu.dma_semaphore, #tpu.memory_space<semaphore_mem>> -> memref<1x!tpu.dma_semaphore, #tpu.memory_space<semaphore_mem>>
    %11 = tpu.memref_squeeze %10 : memref<1x!tpu.dma_semaphore, #tpu.memory_space<semaphore_mem>> -> memref<!tpu.dma_semaphore, #tpu.memory_space<semaphore_mem>>
    tpu.enqueue_dma source(%arg30 : memref<64x32xf32, #tpu.memory_space<any>>) target(%arg39 : memref<64x32xf32, #tpu.memory_space<vmem>>) target_semaphore(%11 : memref<!tpu.dma_semaphore, #tpu.memory_space<semaphore_mem>>)
    %c0 = arith.constant 0 : index
    %c0_0 = arith.constant 0 : index
    %12 = vector.load %arg0[%c0, %c0_0] : memref<16x640xf32, #tpu.memory_space<vmem>>, vector<16x640xf32>
    %c0_1 = arith.constant 0 : index
    %c0_2 = arith.constant 0 : index
    %13 = vector.load %arg2[%c0_1, %c0_2] : memref<640x128xf32, #tpu.memory_space<vmem>>, vector<640x128xf32>
    %cst = arith.constant dense<0.000000e+00> : vector<16x128xf32>
    %14 = tpu.matmul %12, %13, %cst {dimension_numbers = #tpu.dot_dimension_numbers<[1], [0], [0], [1], [0, 0, 1, 1], [], []>} : vector<16x640xf32>, vector<640x128xf32>, vector<16x128xf32> -> vector<16x128xf32>
    %c0_3 = arith.constant 0 : index
    %c0_4 = arith.constant 0 : index
    %15 = vector.load %arg4[%c0_3, %c0_4] : memref<1x128xf32, #tpu.memory_space<vmem>>, vector<1x128xf32>
    %16 = vector.broadcast %15 : vector<1x128xf32> to vector<16x128xf32>
    %17 = arith.addf %14, %16 : vector<16x128xf32>
    %cst_5 = arith.constant 0.000000e+00 : f32
    %18 = vector.broadcast %cst_5 : f32 to vector<2x32xf32>
    %cst_6 = arith.constant 0.000000e+00 : f32
    %19 = vector.broadcast %cst_6 : f32 to vector<2x32xf32>
    %cst_7 = arith.constant 0.000000e+00 : f32
    %20 = vector.broadcast %cst_7 : f32 to vector<2x32xf32>
    %cst_8 = arith.constant 0.000000e+00 : f32
    %21 = vector.broadcast %cst_8 : f32 to vector<2x32xf32>
    %22 = vector.extract_strided_slice %17 {offsets = [0, 0], sizes = [2, 128], strides = [1, 1]} : vector<16x128xf32> to vector<2x128xf32>
    %c0_9 = arith.constant 0 : index
    %c0_10 = arith.constant 0 : index
    %23 = vector.load %arg3[%c0_9, %c0_10] : memref<32x128xf32, #tpu.memory_space<vmem>>, vector<32x128xf32>
    %cst_11 = arith.constant dense<0.000000e+00> : vector<2x128xf32>
    %24 = tpu.matmul %18, %23, %cst_11 {dimension_numbers = #tpu.dot_dimension_numbers<[1], [0], [0], [1], [0, 0, 1, 1], [], []>} : vector<2x32xf32>, vector<32x128xf32>, vector<2x128xf32> -> vector<2x128xf32>
    %25 = arith.addf %22, %24 : vector<2x128xf32>
    %26 = arith.negf %25 : vector<2x128xf32>
    %27 = math.exp %26 : vector<2x128xf32>
    %cst_12 = arith.constant 1.000000e+00 : f32
    %28 = vector.broadcast %cst_12 : f32 to vector<2x128xf32>
    %29 = arith.addf %28, %27 : vector<2x128xf32>
    %30 = arith.divf %28, %29 : vector<2x128xf32>
    %31 = vector.extract_strided_slice %30 {offsets = [0, 0], sizes = [2, 32], strides = [1, 1]} : vector<2x128xf32> to vector<2x32xf32>
    %32 = vector.extract_strided_slice %30 {offsets = [0, 32], sizes = [2, 32], strides = [1, 1]} : vector<2x128xf32> to vector<2x32xf32>
    %33 = vector.extract_strided_slice %30 {offsets = [0, 96], sizes = [2, 32], strides = [1, 1]} : vector<2x128xf32> to vector<2x32xf32>
    %34 = vector.extract_strided_slice %25 {offsets = [0, 64], sizes = [2, 32], strides = [1, 1]} : vector<2x128xf32> to vector<2x32xf32>
    %35 = math.tanh %34 : vector<2x32xf32>
    %36 = arith.mulf %32, %19 : vector<2x32xf32>
    %37 = arith.mulf %31, %35 : vector<2x32xf32>
    %38 = arith.addf %36, %37 : vector<2x32xf32>
    %39 = math.tanh %38 : vector<2x32xf32>
    %40 = arith.mulf %33, %39 : vector<2x32xf32>
    %c0_13 = arith.constant 0 : index
    %c0_14 = arith.constant 0 : index
    %41 = vector.load %arg5[%c0_13, %c0_14] : memref<32x128xf32, #tpu.memory_space<vmem>>, vector<32x128xf32>
    %cst_15 = arith.constant dense<0.000000e+00> : vector<2x128xf32>
    %42 = tpu.matmul %40, %41, %cst_15 {dimension_numbers = #tpu.dot_dimension_numbers<[1], [0], [0], [1], [0, 0, 1, 1], [], []>} : vector<2x32xf32>, vector<32x128xf32>, vector<2x128xf32> -> vector<2x128xf32>
    %c0_16 = arith.constant 0 : index
    %c0_17 = arith.constant 0 : index
    %43 = vector.load %arg6[%c0_16, %c0_17] : memref<32x128xf32, #tpu.memory_space<vmem>>, vector<32x128xf32>
    %cst_18 = arith.constant dense<0.000000e+00> : vector<2x128xf32>
    %44 = tpu.matmul %20, %43, %cst_18 {dimension_numbers = #tpu.dot_dimension_numbers<[1], [0], [0], [1], [0, 0, 1, 1], [], []>} : vector<2x32xf32>, vector<32x128xf32>, vector<2x128xf32> -> vector<2x128xf32>
    %45 = arith.addf %42, %44 : vector<2x128xf32>
    %c0_19 = arith.constant 0 : index
    %c0_20 = arith.constant 0 : index
    %46 = vector.load %arg7[%c0_19, %c0_20] : memref<1x128xf32, #tpu.memory_space<vmem>>, vector<1x128xf32>
    %47 = vector.broadcast %46 : vector<1x128xf32> to vector<2x128xf32>
    %48 = arith.addf %45, %47 : vector<2x128xf32>
    %49 = arith.negf %48 : vector<2x128xf32>
    %50 = math.exp %49 : vector<2x128xf32>
    %cst_21 = arith.constant 1.000000e+00 : f32
    %51 = vector.broadcast %cst_21 : f32 to vector<2x128xf32>
    %52 = arith.addf %51, %50 : vector<2x128xf32>
    %53 = arith.divf %51, %52 : vector<2x128xf32>
    %54 = vector.extract_strided_slice %53 {offsets = [0, 0], sizes = [2, 32], strides = [1, 1]} : vector<2x128xf32> to vector<2x32xf32>
    %55 = vector.extract_strided_slice %53 {offsets = [0, 32], sizes = [2, 32], strides = [1, 1]} : vector<2x128xf32> to vector<2x32xf32>
    %56 = vector.extract_strided_slice %53 {offsets = [0, 96], sizes = [2, 32], strides = [1, 1]} : vector<2x128xf32> to vector<2x32xf32>
    %57 = vector.extract_strided_slice %48 {offsets = [0, 64], sizes = [2, 32], strides = [1, 1]} : vector<2x128xf32> to vector<2x32xf32>
    %58 = math.tanh %57 : vector<2x32xf32>
    %59 = arith.mulf %55, %21 : vector<2x32xf32>
    %60 = arith.mulf %54, %58 : vector<2x32xf32>
    %61 = arith.addf %59, %60 : vector<2x32xf32>
    %62 = math.tanh %61 : vector<2x32xf32>
    %63 = arith.mulf %56, %62 : vector<2x32xf32>
    %64 = math.tanh %63 : vector<2x32xf32>
    %c0_22 = arith.constant 0 : index
    %c0_23 = arith.constant 0 : index
    %65 = vector.load %arg32[%c0_22, %c0_23] : memref<16x32xf32, #tpu.memory_space<vmem>>, vector<2x32xf32>
    tpu.vector_store %arg32[%c0_22, %c0_23], %64 {strides = array<i32>} : memref<16x32xf32, #tpu.memory_space<vmem>>, vector<2x32xf32>,
    %66 = vector.extract_strided_slice %17 {offsets = [2, 0], sizes = [2, 128], strides = [1, 1]} : vector<16x128xf32> to vector<2x128xf32>
    %c0_24 = arith.constant 0 : index
    %c0_25 = arith.constant 0 : index
    %67 = vector.load %arg3[%c0_24, %c0_25] : memref<32x128xf32, #tpu.memory_space<vmem>>, vector<32x128xf32>
    %cst_26 = arith.constant dense<0.000000e+00> : vector<2x128xf32>
    %68 = tpu.matmul %40, %67, %cst_26 {dimension_numbers = #tpu.dot_dimension_numbers<[1], [0], [0], [1], [0, 0, 1, 1], [], []>} : vector<2x32xf32>, vector<32x128xf32>, vector<2x128xf32> -> vector<2x128xf32>
    %69 = arith.addf %66, %68 : vector<2x128xf32>
    %70 = arith.negf %69 : vector<2x128xf32>
    %71 = math.exp %70 : vector<2x128xf32>
    %cst_27 = arith.constant 1.000000e+00 : f32
    %72 = vector.broadcast %cst_27 : f32 to vector<2x128xf32>
    %73 = arith.addf %72, %71 : vector<2x128xf32>
    %74 = arith.divf %72, %73 : vector<2x128xf32>
    %75 = vector.extract_strided_slice %74 {offsets = [0, 0], sizes = [2, 32], strides = [1, 1]} : vector<2x128xf32> to vector<2x32xf32>
    %76 = vector.extract_strided_slice %74 {offsets = [0, 32], sizes = [2, 32], strides = [1, 1]} : vector<2x128xf32> to vector<2x32xf32>
    %77 = vector.extract_strided_slice %74 {offsets = [0, 96], sizes = [2, 32], strides = [1, 1]} : vector<2x128xf32> to vector<2x32xf32>
    %78 = vector.extract_strided_slice %69 {offsets = [0, 64], sizes = [2, 32], strides = [1, 1]} : vector<2x128xf32> to vector<2x32xf32>
    %79 = math.tanh %78 : vector<2x32xf32>
    %80 = arith.mulf %76, %38 : vector<2x32xf32>
    %81 = arith.mulf %75, %79 : vector<2x32xf32>
    %82 = arith.addf %80, %81 : vector<2x32xf32>
    %83 = math.tanh %82 : vector<2x32xf32>
    %84 = arith.mulf %77, %83 : vector<2x32xf32>
    %c0_28 = arith.constant 0 : index
    %c0_29 = arith.constant 0 : index
    %85 = vector.load %arg5[%c0_28, %c0_29] : memref<32x128xf32, #tpu.memory_space<vmem>>, vector<32x128xf32>
    %cst_30 = arith.constant dense<0.000000e+00> : vector<2x128xf32>
    %86 = tpu.matmul %84, %85, %cst_30 {dimension_numbers = #tpu.dot_dimension_numbers<[1], [0], [0], [1], [0, 0, 1, 1], [], []>} : vector<2x32xf32>, vector<32x128xf32>, vector<2x128xf32> -> vector<2x128xf32>
    %c0_31 = arith.constant 0 : index
    %c0_32 = arith.constant 0 : index
    %87 = vector.load %arg6[%c0_31, %c0_32] : memref<32x128xf32, #tpu.memory_space<vmem>>, vector<32x128xf32>
    %cst_33 = arith.constant dense<0.000000e+00> : vector<2x128xf32>
    %88 = tpu.matmul %63, %87, %cst_33 {dimension_numbers = #tpu.dot_dimension_numbers<[1], [0], [0], [1], [0, 0, 1, 1], [], []>} : vector<2x32xf32>, vector<32x128xf32>, vector<2x128xf32> -> vector<2x128xf32>
    %89 = arith.addf %86, %88 : vector<2x128xf32>
    %c0_34 = arith.constant 0 : index
    %c0_35 = arith.constant 0 : index
    %90 = vector.load %arg7[%c0_34, %c0_35] : memref<1x128xf32, #tpu.memory_space<vmem>>, vector<1x128xf32>
    %91 = vector.broadcast %90 : vector<1x128xf32> to vector<2x128xf32>
    %92 = arith.addf %89, %91 : vector<2x128xf32>
    %93 = arith.negf %92 : vector<2x128xf32>
    %94 = math.exp %93 : vector<2x128xf32>
    %cst_36 = arith.constant 1.000000e+00 : f32
    %95 = vector.broadcast %cst_36 : f32 to vector<2x128xf32>
    %96 = arith.addf %95, %94 : vector<2x128xf32>
    %97 = arith.divf %95, %96 : vector<2x128xf32>
    %98 = vector.extract_strided_slice %97 {offsets = [0, 0], sizes = [2, 32], strides = [1, 1]} : vector<2x128xf32> to vector<2x32xf32>
    %99 = vector.extract_strided_slice %97 {offsets = [0, 32], sizes = [2, 32], strides = [1, 1]} : vector<2x128xf32> to vector<2x32xf32>
    %100 = vector.extract_strided_slice %97 {offsets = [0, 96], sizes = [2, 32], strides = [1, 1]} : vector<2x128xf32> to vector<2x32xf32>
    %101 = vector.extract_strided_slice %92 {offsets = [0, 64], sizes = [2, 32], strides = [1, 1]} : vector<2x128xf32> to vector<2x32xf32>
    %102 = math.tanh %101 : vector<2x32xf32>
    %103 = arith.mulf %99, %61 : vector<2x32xf32>
    %104 = arith.mulf %98, %102 : vector<2x32xf32>
    %105 = arith.addf %103, %104 : vector<2x32xf32>
    %106 = math.tanh %105 : vector<2x32xf32>
    %107 = arith.mulf %100, %106 : vector<2x32xf32>
    %108 = math.tanh %107 : vector<2x32xf32>
    %c2 = arith.constant 2 : index
    %c0_37 = arith.constant 0 : index
    %109 = vector.load %arg32[%c2, %c0_37] : memref<16x32xf32, #tpu.memory_space<vmem>>, vector<2x32xf32>
    tpu.vector_store %arg32[%c2, %c0_37], %108 {strides = array<i32>} : memref<16x32xf32, #tpu.memory_space<vmem>>, vector<2x32xf32>,
    %110 = vector.extract_strided_slice %17 {offsets = [4, 0], sizes = [2, 128], strides = [1, 1]} : vector<16x128xf32> to vector<2x128xf32>
    %c0_38 = arith.constant 0 : index
    %c0_39 = arith.constant 0 : index
    %111 = vector.load %arg3[%c0_38, %c0_39] : memref<32x128xf32, #tpu.memory_space<vmem>>, vector<32x128xf32>
    %cst_40 = arith.constant dense<0.000000e+00> : vector<2x128xf32>
    %112 = tpu.matmul %84, %111, %cst_40 {dimension_numbers = #tpu.dot_dimension_numbers<[1], [0], [0], [1], [0, 0, 1, 1], [], []>} : vector<2x32xf32>, vector<32x128xf32>, vector<2x128xf32> -> vector<2x128xf32>
    %113 = arith.addf %110, %112 : vector<2x128xf32>
    %114 = arith.negf %113 : vector<2x128xf32>
    %115 = math.exp %114 : vector<2x128xf32>
    %cst_41 = arith.constant 1.000000e+00 : f32
    %116 = vector.broadcast %cst_41 : f32 to vector<2x128xf32>
    %117 = arith.addf %116, %115 : vector<2x128xf32>
    %118 = arith.divf %116, %117 : vector<2x128xf32>
    %119 = vector.extract_strided_slice %118 {offsets = [0, 0], sizes = [2, 32], strides = [1, 1]} : vector<2x128xf32> to vector<2x32xf32>
    %120 = vector.extract_strided_slice %118 {offsets = [0, 32], sizes = [2, 32], strides = [1, 1]} : vector<2x128xf32> to vector<2x32xf32>
    %121 = vector.extract_strided_slice %118 {offsets = [0, 96], sizes = [2, 32], strides = [1, 1]} : vector<2x128xf32> to vector<2x32xf32>
    %122 = vector.extract_strided_slice %113 {offsets = [0, 64], sizes = [2, 32], strides = [1, 1]} : vector<2x128xf32> to vector<2x32xf32>
    %123 = math.tanh %122 : vector<2x32xf32>
    %124 = arith.mulf %120, %82 : vector<2x32xf32>
    %125 = arith.mulf %119, %123 : vector<2x32xf32>
    %126 = arith.addf %124, %125 : vector<2x32xf32>
    %127 = math.tanh %126 : vector<2x32xf32>
    %128 = arith.mulf %121, %127 : vector<2x32xf32>
    %c0_42 = arith.constant 0 : index
    %c0_43 = arith.constant 0 : index
    %129 = vector.load %arg5[%c0_42, %c0_43] : memref<32x128xf32, #tpu.memory_space<vmem>>, vector<32x128xf32>
    %cst_44 = arith.constant dense<0.000000e+00> : vector<2x128xf32>
    %130 = tpu.matmul %128, %129, %cst_44 {dimension_numbers = #tpu.dot_dimension_numbers<[1], [0], [0], [1], [0, 0, 1, 1], [], []>} : vector<2x32xf32>, vector<32x128xf32>, vector<2x128xf32> -> vector<2x128xf32>
    %c0_45 = arith.constant 0 : index
    %c0_46 = arith.constant 0 : index
    %131 = vector.load %arg6[%c0_45, %c0_46] : memref<32x128xf32, #tpu.memory_space<vmem>>, vector<32x128xf32>
    %cst_47 = arith.constant dense<0.000000e+00> : vector<2x128xf32>
    %132 = tpu.matmul %107, %131, %cst_47 {dimension_numbers = #tpu.dot_dimension_numbers<[1], [0], [0], [1], [0, 0, 1, 1], [], []>} : vector<2x32xf32>, vector<32x128xf32>, vector<2x128xf32> -> vector<2x128xf32>
    %133 = arith.addf %130, %132 : vector<2x128xf32>
    %c0_48 = arith.constant 0 : index
    %c0_49 = arith.constant 0 : index
    %134 = vector.load %arg7[%c0_48, %c0_49] : memref<1x128xf32, #tpu.memory_space<vmem>>, vector<1x128xf32>
    %135 = vector.broadcast %134 : vector<1x128xf32> to vector<2x128xf32>
    %136 = arith.addf %133, %135 : vector<2x128xf32>
    %137 = arith.negf %136 : vector<2x128xf32>
    %138 = math.exp %137 : vector<2x128xf32>
    %cst_50 = arith.constant 1.000000e+00 : f32
    %139 = vector.broadcast %cst_50 : f32 to vector<2x128xf32>
    %140 = arith.addf %139, %138 : vector<2x128xf32>
    %141 = arith.divf %139, %140 : vector<2x128xf32>
    %142 = vector.extract_strided_slice %141 {offsets = [0, 0], sizes = [2, 32], strides = [1, 1]} : vector<2x128xf32> to vector<2x32xf32>
    %143 = vector.extract_strided_slice %141 {offsets = [0, 32], sizes = [2, 32], strides = [1, 1]} : vector<2x128xf32> to vector<2x32xf32>
    %144 = vector.extract_strided_slice %141 {offsets = [0, 96], sizes = [2, 32], strides = [1, 1]} : vector<2x128xf32> to vector<2x32xf32>
    %145 = vector.extract_strided_slice %136 {offsets = [0, 64], sizes = [2, 32], strides = [1, 1]} : vector<2x128xf32> to vector<2x32xf32>
    %146 = math.tanh %145 : vector<2x32xf32>
    %147 = arith.mulf %143, %105 : vector<2x32xf32>
    %148 = arith.mulf %142, %146 : vector<2x32xf32>
    %149 = arith.addf %147, %148 : vector<2x32xf32>
    %150 = math.tanh %149 : vector<2x32xf32>
    %151 = arith.mulf %144, %150 : vector<2x32xf32>
    %152 = math.tanh %151 : vector<2x32xf32>
    %c4 = arith.constant 4 : index
    %c0_51 = arith.constant 0 : index
    %153 = vector.load %arg32[%c4, %c0_51] : memref<16x32xf32, #tpu.memory_space<vmem>>, vector<2x32xf32>
    tpu.vector_store %arg32[%c4, %c0_51], %152 {strides = array<i32>} : memref<16x32xf32, #tpu.memory_space<vmem>>, vector<2x32xf32>,
    %154 = vector.extract_strided_slice %17 {offsets = [6, 0], sizes = [2, 128], strides = [1, 1]} : vector<16x128xf32> to vector<2x128xf32>
    %c0_52 = arith.constant 0 : index
    %c0_53 = arith.constant 0 : index
    %155 = vector.load %arg3[%c0_52, %c0_53] : memref<32x128xf32, #tpu.memory_space<vmem>>, vector<32x128xf32>
    %cst_54 = arith.constant dense<0.000000e+00> : vector<2x128xf32>
    %156 = tpu.matmul %128, %155, %cst_54 {dimension_numbers = #tpu.dot_dimension_numbers<[1], [0], [0], [1], [0, 0, 1, 1], [], []>} : vector<2x32xf32>, vector<32x128xf32>, vector<2x128xf32> -> vector<2x128xf32>
    %157 = arith.addf %154, %156 : vector<2x128xf32>
    %158 = arith.negf %157 : vector<2x128xf32>
    %159 = math.exp %158 : vector<2x128xf32>
    %cst_55 = arith.constant 1.000000e+00 : f32
    %160 = vector.broadcast %cst_55 : f32 to vector<2x128xf32>
    %161 = arith.addf %160, %159 : vector<2x128xf32>
    %162 = arith.divf %160, %161 : vector<2x128xf32>
    %163 = vector.extract_strided_slice %162 {offsets = [0, 0], sizes = [2, 32], strides = [1, 1]} : vector<2x128xf32> to vector<2x32xf32>
    %164 = vector.extract_strided_slice %162 {offsets = [0, 32], sizes = [2, 32], strides = [1, 1]} : vector<2x128xf32> to vector<2x32xf32>
    %165 = vector.extract_strided_slice %162 {offsets = [0, 96], sizes = [2, 32], strides = [1, 1]} : vector<2x128xf32> to vector<2x32xf32>
    %166 = vector.extract_strided_slice %157 {offsets = [0, 64], sizes = [2, 32], strides = [1, 1]} : vector<2x128xf32> to vector<2x32xf32>
    %167 = math.tanh %166 : vector<2x32xf32>
    %168 = arith.mulf %164, %126 : vector<2x32xf32>
    %169 = arith.mulf %163, %167 : vector<2x32xf32>
    %170 = arith.addf %168, %169 : vector<2x32xf32>
    %171 = math.tanh %170 : vector<2x32xf32>
    %172 = arith.mulf %165, %171 : vector<2x32xf32>
    %c0_56 = arith.constant 0 : index
    %c0_57 = arith.constant 0 : index
    %173 = vector.load %arg5[%c0_56, %c0_57] : memref<32x128xf32, #tpu.memory_space<vmem>>, vector<32x128xf32>
    %cst_58 = arith.constant dense<0.000000e+00> : vector<2x128xf32>
    %174 = tpu.matmul %172, %173, %cst_58 {dimension_numbers = #tpu.dot_dimension_numbers<[1], [0], [0], [1], [0, 0, 1, 1], [], []>} : vector<2x32xf32>, vector<32x128xf32>, vector<2x128xf32> -> vector<2x128xf32>
    %c0_59 = arith.constant 0 : index
    %c0_60 = arith.constant 0 : index
    %175 = vector.load %arg6[%c0_59, %c0_60] : memref<32x128xf32, #tpu.memory_space<vmem>>, vector<32x128xf32>
    %cst_61 = arith.constant dense<0.000000e+00> : vector<2x128xf32>
    %176 = tpu.matmul %151, %175, %cst_61 {dimension_numbers = #tpu.dot_dimension_numbers<[1], [0], [0], [1], [0, 0, 1, 1], [], []>} : vector<2x32xf32>, vector<32x128xf32>, vector<2x128xf32> -> vector<2x128xf32>
    %177 = arith.addf %174, %176 : vector<2x128xf32>
    %c0_62 = arith.constant 0 : index
    %c0_63 = arith.constant 0 : index
    %178 = vector.load %arg7[%c0_62, %c0_63] : memref<1x128xf32, #tpu.memory_space<vmem>>, vector<1x128xf32>
    %179 = vector.broadcast %178 : vector<1x128xf32> to vector<2x128xf32>
    %180 = arith.addf %177, %179 : vector<2x128xf32>
    %181 = arith.negf %180 : vector<2x128xf32>
    %182 = math.exp %181 : vector<2x128xf32>
    %cst_64 = arith.constant 1.000000e+00 : f32
    %183 = vector.broadcast %cst_64 : f32 to vector<2x128xf32>
    %184 = arith.addf %183, %182 : vector<2x128xf32>
    %185 = arith.divf %183, %184 : vector<2x128xf32>
    %186 = vector.extract_strided_slice %185 {offsets = [0, 0], sizes = [2, 32], strides = [1, 1]} : vector<2x128xf32> to vector<2x32xf32>
    %187 = vector.extract_strided_slice %185 {offsets = [0, 32], sizes = [2, 32], strides = [1, 1]} : vector<2x128xf32> to vector<2x32xf32>
    %188 = vector.extract_strided_slice %185 {offsets = [0, 96], sizes = [2, 32], strides = [1, 1]} : vector<2x128xf32> to vector<2x32xf32>
    %189 = vector.extract_strided_slice %180 {offsets = [0, 64], sizes = [2, 32], strides = [1, 1]} : vector<2x128xf32> to vector<2x32xf32>
    %190 = math.tanh %189 : vector<2x32xf32>
    %191 = arith.mulf %187, %149 : vector<2x32xf32>
    %192 = arith.mulf %186, %190 : vector<2x32xf32>
    %193 = arith.addf %191, %192 : vector<2x32xf32>
    %194 = math.tanh %193 : vector<2x32xf32>
    %195 = arith.mulf %188, %194 : vector<2x32xf32>
    %196 = math.tanh %195 : vector<2x32xf32>
    %c6 = arith.constant 6 : index
    %c0_65 = arith.constant 0 : index
    %197 = vector.load %arg32[%c6, %c0_65] : memref<16x32xf32, #tpu.memory_space<vmem>>, vector<2x32xf32>
    tpu.vector_store %arg32[%c6, %c0_65], %196 {strides = array<i32>} : memref<16x32xf32, #tpu.memory_space<vmem>>, vector<2x32xf32>,
    %198 = vector.extract_strided_slice %17 {offsets = [8, 0], sizes = [2, 128], strides = [1, 1]} : vector<16x128xf32> to vector<2x128xf32>
    %c0_66 = arith.constant 0 : index
    %c0_67 = arith.constant 0 : index
    %199 = vector.load %arg3[%c0_66, %c0_67] : memref<32x128xf32, #tpu.memory_space<vmem>>, vector<32x128xf32>
    %cst_68 = arith.constant dense<0.000000e+00> : vector<2x128xf32>
    %200 = tpu.matmul %172, %199, %cst_68 {dimension_numbers = #tpu.dot_dimension_numbers<[1], [0], [0], [1], [0, 0, 1, 1], [], []>} : vector<2x32xf32>, vector<32x128xf32>, vector<2x128xf32> -> vector<2x128xf32>
    %201 = arith.addf %198, %200 : vector<2x128xf32>
    %202 = arith.negf %201 : vector<2x128xf32>
    %203 = math.exp %202 : vector<2x128xf32>
    %cst_69 = arith.constant 1.000000e+00 : f32
    %204 = vector.broadcast %cst_69 : f32 to vector<2x128xf32>
    %205 = arith.addf %204, %203 : vector<2x128xf32>
    %206 = arith.divf %204, %205 : vector<2x128xf32>
    %207 = vector.extract_strided_slice %206 {offsets = [0, 0], sizes = [2, 32], strides = [1, 1]} : vector<2x128xf32> to vector<2x32xf32>
    %208 = vector.extract_strided_slice %206 {offsets = [0, 32], sizes = [2, 32], strides = [1, 1]} : vector<2x128xf32> to vector<2x32xf32>
    %209 = vector.extract_strided_slice %206 {offsets = [0, 96], sizes = [2, 32], strides = [1, 1]} : vector<2x128xf32> to vector<2x32xf32>
    %210 = vector.extract_strided_slice %201 {offsets = [0, 64], sizes = [2, 32], strides = [1, 1]} : vector<2x128xf32> to vector<2x32xf32>
    %211 = math.tanh %210 : vector<2x32xf32>
    %212 = arith.mulf %208, %170 : vector<2x32xf32>
    %213 = arith.mulf %207, %211 : vector<2x32xf32>
    %214 = arith.addf %212, %213 : vector<2x32xf32>
    %215 = math.tanh %214 : vector<2x32xf32>
    %216 = arith.mulf %209, %215 : vector<2x32xf32>
    %c0_70 = arith.constant 0 : index
    %c0_71 = arith.constant 0 : index
    %217 = vector.load %arg5[%c0_70, %c0_71] : memref<32x128xf32, #tpu.memory_space<vmem>>, vector<32x128xf32>
    %cst_72 = arith.constant dense<0.000000e+00> : vector<2x128xf32>
    %218 = tpu.matmul %216, %217, %cst_72 {dimension_numbers = #tpu.dot_dimension_numbers<[1], [0], [0], [1], [0, 0, 1, 1], [], []>} : vector<2x32xf32>, vector<32x128xf32>, vector<2x128xf32> -> vector<2x128xf32>
    %c0_73 = arith.constant 0 : index
    %c0_74 = arith.constant 0 : index
    %219 = vector.load %arg6[%c0_73, %c0_74] : memref<32x128xf32, #tpu.memory_space<vmem>>, vector<32x128xf32>
    %cst_75 = arith.constant dense<0.000000e+00> : vector<2x128xf32>
    %220 = tpu.matmul %195, %219, %cst_75 {dimension_numbers = #tpu.dot_dimension_numbers<[1], [0], [0], [1], [0, 0, 1, 1], [], []>} : vector<2x32xf32>, vector<32x128xf32>, vector<2x128xf32> -> vector<2x128xf32>
    %221 = arith.addf %218, %220 : vector<2x128xf32>
    %c0_76 = arith.constant 0 : index
    %c0_77 = arith.constant 0 : index
    %222 = vector.load %arg7[%c0_76, %c0_77] : memref<1x128xf32, #tpu.memory_space<vmem>>, vector<1x128xf32>
    %223 = vector.broadcast %222 : vector<1x128xf32> to vector<2x128xf32>
    %224 = arith.addf %221, %223 : vector<2x128xf32>
    %225 = arith.negf %224 : vector<2x128xf32>
    %226 = math.exp %225 : vector<2x128xf32>
    %cst_78 = arith.constant 1.000000e+00 : f32
    %227 = vector.broadcast %cst_78 : f32 to vector<2x128xf32>
    %228 = arith.addf %227, %226 : vector<2x128xf32>
    %229 = arith.divf %227, %228 : vector<2x128xf32>
    %230 = vector.extract_strided_slice %229 {offsets = [0, 0], sizes = [2, 32], strides = [1, 1]} : vector<2x128xf32> to vector<2x32xf32>
    %231 = vector.extract_strided_slice %229 {offsets = [0, 32], sizes = [2, 32], strides = [1, 1]} : vector<2x128xf32> to vector<2x32xf32>
    %232 = vector.extract_strided_slice %229 {offsets = [0, 96], sizes = [2, 32], strides = [1, 1]} : vector<2x128xf32> to vector<2x32xf32>
    %233 = vector.extract_strided_slice %224 {offsets = [0, 64], sizes = [2, 32], strides = [1, 1]} : vector<2x128xf32> to vector<2x32xf32>
    %234 = math.tanh %233 : vector<2x32xf32>
    %235 = arith.mulf %231, %193 : vector<2x32xf32>
    %236 = arith.mulf %230, %234 : vector<2x32xf32>
    %237 = arith.addf %235, %236 : vector<2x32xf32>
    %238 = math.tanh %237 : vector<2x32xf32>
    %239 = arith.mulf %232, %238 : vector<2x32xf32>
    %240 = math.tanh %239 : vector<2x32xf32>
    %c8 = arith.constant 8 : index
    %c0_79 = arith.constant 0 : index
    %241 = vector.load %arg32[%c8, %c0_79] : memref<16x32xf32, #tpu.memory_space<vmem>>, vector<2x32xf32>
    tpu.vector_store %arg32[%c8, %c0_79], %240 {strides = array<i32>} : memref<16x32xf32, #tpu.memory_space<vmem>>, vector<2x32xf32>,
    %242 = vector.extract_strided_slice %17 {offsets = [10, 0], sizes = [2, 128], strides = [1, 1]} : vector<16x128xf32> to vector<2x128xf32>
    %c0_80 = arith.constant 0 : index
    %c0_81 = arith.constant 0 : index
    %243 = vector.load %arg3[%c0_80, %c0_81] : memref<32x128xf32, #tpu.memory_space<vmem>>, vector<32x128xf32>
    %cst_82 = arith.constant dense<0.000000e+00> : vector<2x128xf32>
    %244 = tpu.matmul %216, %243, %cst_82 {dimension_numbers = #tpu.dot_dimension_numbers<[1], [0], [0], [1], [0, 0, 1, 1], [], []>} : vector<2x32xf32>, vector<32x128xf32>, vector<2x128xf32> -> vector<2x128xf32>
    %245 = arith.addf %242, %244 : vector<2x128xf32>
    %246 = arith.negf %245 : vector<2x128xf32>
    %247 = math.exp %246 : vector<2x128xf32>
    %cst_83 = arith.constant 1.000000e+00 : f32
    %248 = vector.broadcast %cst_83 : f32 to vector<2x128xf32>
    %249 = arith.addf %248, %247 : vector<2x128xf32>
    %250 = arith.divf %248, %249 : vector<2x128xf32>
    %251 = vector.extract_strided_slice %250 {offsets = [0, 0], sizes = [2, 32], strides = [1, 1]} : vector<2x128xf32> to vector<2x32xf32>
    %252 = vector.extract_strided_slice %250 {offsets = [0, 32], sizes = [2, 32], strides = [1, 1]} : vector<2x128xf32> to vector<2x32xf32>
    %253 = vector.extract_strided_slice %250 {offsets = [0, 96], sizes = [2, 32], strides = [1, 1]} : vector<2x128xf32> to vector<2x32xf32>
    %254 = vector.extract_strided_slice %245 {offsets = [0, 64], sizes = [2, 32], strides = [1, 1]} : vector<2x128xf32> to vector<2x32xf32>
    %255 = math.tanh %254 : vector<2x32xf32>
    %256 = arith.mulf %252, %214 : vector<2x32xf32>
    %257 = arith.mulf %251, %255 : vector<2x32xf32>
    %258 = arith.addf %256, %257 : vector<2x32xf32>
    %259 = math.tanh %258 : vector<2x32xf32>
    %260 = arith.mulf %253, %259 : vector<2x32xf32>
    %c0_84 = arith.constant 0 : index
    %c0_85 = arith.constant 0 : index
    %261 = vector.load %arg5[%c0_84, %c0_85] : memref<32x128xf32, #tpu.memory_space<vmem>>, vector<32x128xf32>
    %cst_86 = arith.constant dense<0.000000e+00> : vector<2x128xf32>
    %262 = tpu.matmul %260, %261, %cst_86 {dimension_numbers = #tpu.dot_dimension_numbers<[1], [0], [0], [1], [0, 0, 1, 1], [], []>} : vector<2x32xf32>, vector<32x128xf32>, vector<2x128xf32> -> vector<2x128xf32>
    %c0_87 = arith.constant 0 : index
    %c0_88 = arith.constant 0 : index
    %263 = vector.load %arg6[%c0_87, %c0_88] : memref<32x128xf32, #tpu.memory_space<vmem>>, vector<32x128xf32>
    %cst_89 = arith.constant dense<0.000000e+00> : vector<2x128xf32>
    %264 = tpu.matmul %239, %263, %cst_89 {dimension_numbers = #tpu.dot_dimension_numbers<[1], [0], [0], [1], [0, 0, 1, 1], [], []>} : vector<2x32xf32>, vector<32x128xf32>, vector<2x128xf32> -> vector<2x128xf32>
    %265 = arith.addf %262, %264 : vector<2x128xf32>
    %c0_90 = arith.constant 0 : index
    %c0_91 = arith.constant 0 : index
    %266 = vector.load %arg7[%c0_90, %c0_91] : memref<1x128xf32, #tpu.memory_space<vmem>>, vector<1x128xf32>
    %267 = vector.broadcast %266 : vector<1x128xf32> to vector<2x128xf32>
    %268 = arith.addf %265, %267 : vector<2x128xf32>
    %269 = arith.negf %268 : vector<2x128xf32>
    %270 = math.exp %269 : vector<2x128xf32>
    %cst_92 = arith.constant 1.000000e+00 : f32
    %271 = vector.broadcast %cst_92 : f32 to vector<2x128xf32>
    %272 = arith.addf %271, %270 : vector<2x128xf32>
    %273 = arith.divf %271, %272 : vector<2x128xf32>
    %274 = vector.extract_strided_slice %273 {offsets = [0, 0], sizes = [2, 32], strides = [1, 1]} : vector<2x128xf32> to vector<2x32xf32>
    %275 = vector.extract_strided_slice %273 {offsets = [0, 32], sizes = [2, 32], strides = [1, 1]} : vector<2x128xf32> to vector<2x32xf32>
    %276 = vector.extract_strided_slice %273 {offsets = [0, 96], sizes = [2, 32], strides = [1, 1]} : vector<2x128xf32> to vector<2x32xf32>
    %277 = vector.extract_strided_slice %268 {offsets = [0, 64], sizes = [2, 32], strides = [1, 1]} : vector<2x128xf32> to vector<2x32xf32>
    %278 = math.tanh %277 : vector<2x32xf32>
    %279 = arith.mulf %275, %237 : vector<2x32xf32>
    %280 = arith.mulf %274, %278 : vector<2x32xf32>
    %281 = arith.addf %279, %280 : vector<2x32xf32>
    %282 = math.tanh %281 : vector<2x32xf32>
    %283 = arith.mulf %276, %282 : vector<2x32xf32>
    %284 = math.tanh %283 : vector<2x32xf32>
    %c10 = arith.constant 10 : index
    %c0_93 = arith.constant 0 : index
    %285 = vector.load %arg32[%c10, %c0_93] : memref<16x32xf32, #tpu.memory_space<vmem>>, vector<2x32xf32>
    tpu.vector_store %arg32[%c10, %c0_93], %284 {strides = array<i32>} : memref<16x32xf32, #tpu.memory_space<vmem>>, vector<2x32xf32>,
    %286 = vector.extract_strided_slice %17 {offsets = [12, 0], sizes = [2, 128], strides = [1, 1]} : vector<16x128xf32> to vector<2x128xf32>
    %c0_94 = arith.constant 0 : index
    %c0_95 = arith.constant 0 : index
    %287 = vector.load %arg3[%c0_94, %c0_95] : memref<32x128xf32, #tpu.memory_space<vmem>>, vector<32x128xf32>
    %cst_96 = arith.constant dense<0.000000e+00> : vector<2x128xf32>
    %288 = tpu.matmul %260, %287, %cst_96 {dimension_numbers = #tpu.dot_dimension_numbers<[1], [0], [0], [1], [0, 0, 1, 1], [], []>} : vector<2x32xf32>, vector<32x128xf32>, vector<2x128xf32> -> vector<2x128xf32>
    %289 = arith.addf %286, %288 : vector<2x128xf32>
    %290 = arith.negf %289 : vector<2x128xf32>
    %291 = math.exp %290 : vector<2x128xf32>
    %cst_97 = arith.constant 1.000000e+00 : f32
    %292 = vector.broadcast %cst_97 : f32 to vector<2x128xf32>
    %293 = arith.addf %292, %291 : vector<2x128xf32>
    %294 = arith.divf %292, %293 : vector<2x128xf32>
    %295 = vector.extract_strided_slice %294 {offsets = [0, 0], sizes = [2, 32], strides = [1, 1]} : vector<2x128xf32> to vector<2x32xf32>
    %296 = vector.extract_strided_slice %294 {offsets = [0, 32], sizes = [2, 32], strides = [1, 1]} : vector<2x128xf32> to vector<2x32xf32>
    %297 = vector.extract_strided_slice %294 {offsets = [0, 96], sizes = [2, 32], strides = [1, 1]} : vector<2x128xf32> to vector<2x32xf32>
    %298 = vector.extract_strided_slice %289 {offsets = [0, 64], sizes = [2, 32], strides = [1, 1]} : vector<2x128xf32> to vector<2x32xf32>
    %299 = math.tanh %298 : vector<2x32xf32>
    %300 = arith.mulf %296, %258 : vector<2x32xf32>
    %301 = arith.mulf %295, %299 : vector<2x32xf32>
    %302 = arith.addf %300, %301 : vector<2x32xf32>
    %303 = math.tanh %302 : vector<2x32xf32>
    %304 = arith.mulf %297, %303 : vector<2x32xf32>
    %c0_98 = arith.constant 0 : index
    %c0_99 = arith.constant 0 : index
    %305 = vector.load %arg5[%c0_98, %c0_99] : memref<32x128xf32, #tpu.memory_space<vmem>>, vector<32x128xf32>
    %cst_100 = arith.constant dense<0.000000e+00> : vector<2x128xf32>
    %306 = tpu.matmul %304, %305, %cst_100 {dimension_numbers = #tpu.dot_dimension_numbers<[1], [0], [0], [1], [0, 0, 1, 1], [], []>} : vector<2x32xf32>, vector<32x128xf32>, vector<2x128xf32> -> vector<2x128xf32>
    %c0_101 = arith.constant 0 : index
    %c0_102 = arith.constant 0 : index
    %307 = vector.load %arg6[%c0_101, %c0_102] : memref<32x128xf32, #tpu.memory_space<vmem>>, vector<32x128xf32>
    %cst_103 = arith.constant dense<0.000000e+00> : vector<2x128xf32>
    %308 = tpu.matmul %283, %307, %cst_103 {dimension_numbers = #tpu.dot_dimension_numbers<[1], [0], [0], [1], [0, 0, 1, 1], [], []>} : vector<2x32xf32>, vector<32x128xf32>, vector<2x128xf32> -> vector<2x128xf32>
    %309 = arith.addf %306, %308 : vector<2x128xf32>
    %c0_104 = arith.constant 0 : index
    %c0_105 = arith.constant 0 : index
    %310 = vector.load %arg7[%c0_104, %c0_105] : memref<1x128xf32, #tpu.memory_space<vmem>>, vector<1x128xf32>
    %311 = vector.broadcast %310 : vector<1x128xf32> to vector<2x128xf32>
    %312 = arith.addf %309, %311 : vector<2x128xf32>
    %313 = arith.negf %312 : vector<2x128xf32>
    %314 = math.exp %313 : vector<2x128xf32>
    %cst_106 = arith.constant 1.000000e+00 : f32
    %315 = vector.broadcast %cst_106 : f32 to vector<2x128xf32>
    %316 = arith.addf %315, %314 : vector<2x128xf32>
    %317 = arith.divf %315, %316 : vector<2x128xf32>
    %318 = vector.extract_strided_slice %317 {offsets = [0, 0], sizes = [2, 32], strides = [1, 1]} : vector<2x128xf32> to vector<2x32xf32>
    %319 = vector.extract_strided_slice %317 {offsets = [0, 32], sizes = [2, 32], strides = [1, 1]} : vector<2x128xf32> to vector<2x32xf32>
    %320 = vector.extract_strided_slice %317 {offsets = [0, 96], sizes = [2, 32], strides = [1, 1]} : vector<2x128xf32> to vector<2x32xf32>
    %321 = vector.extract_strided_slice %312 {offsets = [0, 64], sizes = [2, 32], strides = [1, 1]} : vector<2x128xf32> to vector<2x32xf32>
    %322 = math.tanh %321 : vector<2x32xf32>
    %323 = arith.mulf %319, %281 : vector<2x32xf32>
    %324 = arith.mulf %318, %322 : vector<2x32xf32>
    %325 = arith.addf %323, %324 : vector<2x32xf32>
    %326 = math.tanh %325 : vector<2x32xf32>
    %327 = arith.mulf %320, %326 : vector<2x32xf32>
    %328 = math.tanh %327 : vector<2x32xf32>
    %c12 = arith.constant 12 : index
    %c0_107 = arith.constant 0 : index
    %329 = vector.load %arg32[%c12, %c0_107] : memref<16x32xf32, #tpu.memory_space<vmem>>, vector<2x32xf32>
    tpu.vector_store %arg32[%c12, %c0_107], %328 {strides = array<i32>} : memref<16x32xf32, #tpu.memory_space<vmem>>, vector<2x32xf32>,
    %330 = vector.extract_strided_slice %17 {offsets = [14, 0], sizes = [2, 128], strides = [1, 1]} : vector<16x128xf32> to vector<2x128xf32>
    %c0_108 = arith.constant 0 : index
    %c0_109 = arith.constant 0 : index
    %331 = vector.load %arg3[%c0_108, %c0_109] : memref<32x128xf32, #tpu.memory_space<vmem>>, vector<32x128xf32>
    %cst_110 = arith.constant dense<0.000000e+00> : vector<2x128xf32>
    %332 = tpu.matmul %304, %331, %cst_110 {dimension_numbers = #tpu.dot_dimension_numbers<[1], [0], [0], [1], [0, 0, 1, 1], [], []>} : vector<2x32xf32>, vector<32x128xf32>, vector<2x128xf32> -> vector<2x128xf32>
    %333 = arith.addf %330, %332 : vector<2x128xf32>
    %334 = arith.negf %333 : vector<2x128xf32>
    %335 = math.exp %334 : vector<2x128xf32>
    %cst_111 = arith.constant 1.000000e+00 : f32
    %336 = vector.broadcast %cst_111 : f32 to vector<2x128xf32>
    %337 = arith.addf %336, %335 : vector<2x128xf32>
    %338 = arith.divf %336, %337 : vector<2x128xf32>
    %339 = vector.extract_strided_slice %338 {offsets = [0, 0], sizes = [2, 32], strides = [1, 1]} : vector<2x128xf32> to vector<2x32xf32>
    %340 = vector.extract_strided_slice %338 {offsets = [0, 32], sizes = [2, 32], strides = [1, 1]} : vector<2x128xf32> to vector<2x32xf32>
    %341 = vector.extract_strided_slice %338 {offsets = [0, 96], sizes = [2, 32], strides = [1, 1]} : vector<2x128xf32> to vector<2x32xf32>
    %342 = vector.extract_strided_slice %333 {offsets = [0, 64], sizes = [2, 32], strides = [1, 1]} : vector<2x128xf32> to vector<2x32xf32>
    %343 = math.tanh %342 : vector<2x32xf32>
    %344 = arith.mulf %340, %302 : vector<2x32xf32>
    %345 = arith.mulf %339, %343 : vector<2x32xf32>
    %346 = arith.addf %344, %345 : vector<2x32xf32>
    %347 = math.tanh %346 : vector<2x32xf32>
    %348 = arith.mulf %341, %347 : vector<2x32xf32>
    %c0_112 = arith.constant 0 : index
    %c0_113 = arith.constant 0 : index
    %349 = vector.load %arg5[%c0_112, %c0_113] : memref<32x128xf32, #tpu.memory_space<vmem>>, vector<32x128xf32>
    %cst_114 = arith.constant dense<0.000000e+00> : vector<2x128xf32>
    %350 = tpu.matmul %348, %349, %cst_114 {dimension_numbers = #tpu.dot_dimension_numbers<[1], [0], [0], [1], [0, 0, 1, 1], [], []>} : vector<2x32xf32>, vector<32x128xf32>, vector<2x128xf32> -> vector<2x128xf32>
    %c0_115 = arith.constant 0 : index
    %c0_116 = arith.constant 0 : index
    %351 = vector.load %arg6[%c0_115, %c0_116] : memref<32x128xf32, #tpu.memory_space<vmem>>, vector<32x128xf32>
    %cst_117 = arith.constant dense<0.000000e+00> : vector<2x128xf32>
    %352 = tpu.matmul %327, %351, %cst_117 {dimension_numbers = #tpu.dot_dimension_numbers<[1], [0], [0], [1], [0, 0, 1, 1], [], []>} : vector<2x32xf32>, vector<32x128xf32>, vector<2x128xf32> -> vector<2x128xf32>
    %353 = arith.addf %350, %352 : vector<2x128xf32>
    %c0_118 = arith.constant 0 : index
    %c0_119 = arith.constant 0 : index
    %354 = vector.load %arg7[%c0_118, %c0_119] : memref<1x128xf32, #tpu.memory_space<vmem>>, vector<1x128xf32>
    %355 = vector.broadcast %354 : vector<1x128xf32> to vector<2x128xf32>
    %356 = arith.addf %353, %355 : vector<2x128xf32>
    %357 = arith.negf %356 : vector<2x128xf32>
    %358 = math.exp %357 : vector<2x128xf32>
    %cst_120 = arith.constant 1.000000e+00 : f32
    %359 = vector.broadcast %cst_120 : f32 to vector<2x128xf32>
    %360 = arith.addf %359, %358 : vector<2x128xf32>
    %361 = arith.divf %359, %360 : vector<2x128xf32>
    %362 = vector.extract_strided_slice %361 {offsets = [0, 0], sizes = [2, 32], strides = [1, 1]} : vector<2x128xf32> to vector<2x32xf32>
    %363 = vector.extract_strided_slice %361 {offsets = [0, 32], sizes = [2, 32], strides = [1, 1]} : vector<2x128xf32> to vector<2x32xf32>
    %364 = vector.extract_strided_slice %361 {offsets = [0, 96], sizes = [2, 32], strides = [1, 1]} : vector<2x128xf32> to vector<2x32xf32>
    %365 = vector.extract_strided_slice %356 {offsets = [0, 64], sizes = [2, 32], strides = [1, 1]} : vector<2x128xf32> to vector<2x32xf32>
    %366 = math.tanh %365 : vector<2x32xf32>
    %367 = arith.mulf %363, %325 : vector<2x32xf32>
    %368 = arith.mulf %362, %366 : vector<2x32xf32>
    %369 = arith.addf %367, %368 : vector<2x32xf32>
    %370 = math.tanh %369 : vector<2x32xf32>
    %371 = arith.mulf %364, %370 : vector<2x32xf32>
    %372 = math.tanh %371 : vector<2x32xf32>
    %c14 = arith.constant 14 : index
    %c0_121 = arith.constant 0 : index
    %373 = vector.load %arg32[%c14, %c0_121] : memref<16x32xf32, #tpu.memory_space<vmem>>, vector<2x32xf32>
    tpu.vector_store %arg32[%c14, %c0_121], %372 {strides = array<i32>} : memref<16x32xf32, #tpu.memory_space<vmem>>, vector<2x32xf32>,
    %c0_122 = arith.constant 0 : index
    %c0_123 = arith.constant 0 : index
    %374 = vector.load %arg1[%c0_122, %c0_123] : memref<2x48xf32, #tpu.memory_space<vmem>>, vector<2x48xf32>
    %c0_124 = arith.constant 0 : index
    %c0_125 = arith.constant 0 : index
    %375 = vector.load %arg8[%c0_124, %c0_125] : memref<48x32xf32, #tpu.memory_space<vmem>>, vector<48x32xf32>
    %cst_126 = arith.constant dense<0.000000e+00> : vector<2x32xf32>
    %376 = tpu.matmul %374, %375, %cst_126 {dimension_numbers = #tpu.dot_dimension_numbers<[1], [0], [0], [1], [0, 0, 1, 1], [], []>} : vector<2x48xf32>, vector<48x32xf32>, vector<2x32xf32> -> vector<2x32xf32>
    %c0_127 = arith.constant 0 : index
    %c0_128 = arith.constant 0 : index
    %377 = vector.load %arg9[%c0_127, %c0_128] : memref<1x32xf32, #tpu.memory_space<vmem>>, vector<1x32xf32>
    %378 = vector.broadcast %377 : vector<1x32xf32> to vector<2x32xf32>
    %379 = arith.addf %376, %378 : vector<2x32xf32>
    %380 = math.tanh %379 : vector<2x32xf32>
    %c0_129 = arith.constant 0 : index
    %c0_130 = arith.constant 0 : index
    %381 = vector.load %arg10[%c0_129, %c0_130] : memref<32x32xf32, #tpu.memory_space<vmem>>, vector<32x32xf32>
    %cst_131 = arith.constant dense<0.000000e+00> : vector<2x32xf32>
    %382 = tpu.matmul %380, %381, %cst_131 {dimension_numbers = #tpu.dot_dimension_numbers<[1], [0], [0], [1], [0, 0, 1, 1], [], []>} : vector<2x32xf32>, vector<32x32xf32>, vector<2x32xf32> -> vector<2x32xf32>
    %c0_132 = arith.constant 0 : index
    %c0_133 = arith.constant 0 : index
    %383 = vector.load %arg11[%c0_132, %c0_133] : memref<1x32xf32, #tpu.memory_space<vmem>>, vector<1x32xf32>
    %384 = vector.broadcast %383 : vector<1x32xf32> to vector<2x32xf32>
    %385 = arith.addf %382, %384 : vector<2x32xf32>
    %386 = math.tanh %385 : vector<2x32xf32>
    %c0_134 = arith.constant 0 : index
    %c0_135 = arith.constant 0 : index
    %387 = vector.load %arg32[%c0_134, %c0_135] : memref<16x32xf32, #tpu.memory_space<vmem>>, vector<16x32xf32>
    %c0_136 = arith.constant 0 : index
    %c0_137 = arith.constant 0 : index
    %388 = vector.load %arg12[%c0_136, %c0_137] : memref<32x64xf32, #tpu.memory_space<vmem>>, vector<32x64xf32>
    %cst_138 = arith.constant dense<0.000000e+00> : vector<16x64xf32>
    %389 = tpu.matmul %387, %388, %cst_138 {dimension_numbers = #tpu.dot_dimension_numbers<[1], [0], [0], [1], [0, 0, 1, 1], [], []>} : vector<16x32xf32>, vector<32x64xf32>, vector<16x64xf32> -> vector<16x64xf32>
    %c0_139 = arith.constant 0 : index
    %c0_140 = arith.constant 0 : index
    %390 = vector.load %arg13[%c0_139, %c0_140] : memref<32x64xf32, #tpu.memory_space<vmem>>, vector<32x64xf32>
    %cst_141 = arith.constant dense<0.000000e+00> : vector<2x64xf32>
    %391 = tpu.matmul %386, %390, %cst_141 {dimension_numbers = #tpu.dot_dimension_numbers<[1], [0], [0], [1], [0, 0, 1, 1], [], []>} : vector<2x32xf32>, vector<32x64xf32>, vector<2x64xf32> -> vector<2x64xf32>
    %c0_142 = arith.constant 0 : index
    %c0_143 = arith.constant 0 : index
    %392 = vector.load %arg14[%c0_142, %c0_143] : memref<1x64xf32, #tpu.memory_space<vmem>>, vector<1x64xf32>
    %393 = vector.broadcast %392 : vector<1x64xf32> to vector<2x64xf32>
    %394 = arith.addf %391, %393 : vector<2x64xf32>
    %c0_144 = arith.constant 0 : index
    %c0_145 = arith.constant 0 : index
    %395 = vector.load %arg17[%c0_144, %c0_145] : memref<16x2xf32, #tpu.memory_space<vmem>>, vector<16x2xf32>
    %cst_146 = arith.constant dense<0.000000e+00> : vector<16x64xf32>
    %396 = tpu.matmul %395, %394, %cst_146 {dimension_numbers = #tpu.dot_dimension_numbers<[1], [0], [0], [1], [0, 0, 1, 1], [], []>} : vector<16x2xf32>, vector<2x64xf32>, vector<16x64xf32> -> vector<16x64xf32>
    %397 = arith.addf %389, %396 : vector<16x64xf32>
    %398 = math.tanh %397 : vector<16x64xf32>
    %c0_147 = arith.constant 0 : index
    %c0_148 = arith.constant 0 : index
    %399 = vector.load %arg15[%c0_147, %c0_148] : memref<1x64xf32, #tpu.memory_space<vmem>>, vector<1x64xf32>
    %400 = vector.broadcast %399 : vector<1x64xf32> to vector<16x64xf32>
    %401 = arith.mulf %398, %400 : vector<16x64xf32>
    %cst_149 = arith.constant dense<0.000000e+00> : vector<16xf32>
    %402 = vector.multi_reduction <add>, %401, %cst_149 [1] : vector<16x64xf32> to vector<16xf32>
    %403 = vector.shape_cast %402 : vector<16xf32> to vector<16x1xf32>
    %c0_150 = arith.constant 0 : index
    %c0_151 = arith.constant 0 : index
    %404 = vector.load %arg16[%c0_150, %c0_151] : memref<1x1xf32, #tpu.memory_space<vmem>>, vector<1x1xf32>
    %405 = vector.broadcast %404 : vector<1x1xf32> to vector<16x1xf32>
    %406 = arith.addf %403, %405 : vector<16x1xf32>
    %407 = vector.extract_strided_slice %406 {offsets = [0, 0], sizes = [2, 1], strides = [1, 1]} : vector<16x1xf32> to vector<2x1xf32>
    %408 = vector.extract_strided_slice %406 {offsets = [2, 0], sizes = [2, 1], strides = [1, 1]} : vector<16x1xf32> to vector<2x1xf32>
    %409 = arith.maximumf %407, %408 : vector<2x1xf32>
    %410 = vector.extract_strided_slice %406 {offsets = [4, 0], sizes = [2, 1], strides = [1, 1]} : vector<16x1xf32> to vector<2x1xf32>
    %411 = arith.maximumf %409, %410 : vector<2x1xf32>
    %412 = vector.extract_strided_slice %406 {offsets = [6, 0], sizes = [2, 1], strides = [1, 1]} : vector<16x1xf32> to vector<2x1xf32>
    %413 = arith.maximumf %411, %412 : vector<2x1xf32>
    %414 = vector.extract_strided_slice %406 {offsets = [8, 0], sizes = [2, 1], strides = [1, 1]} : vector<16x1xf32> to vector<2x1xf32>
    %415 = arith.maximumf %413, %414 : vector<2x1xf32>
    %416 = vector.extract_strided_slice %406 {offsets = [10, 0], sizes = [2, 1], strides = [1, 1]} : vector<16x1xf32> to vector<2x1xf32>
    %417 = arith.maximumf %415, %416 : vector<2x1xf32>
    %418 = vector.extract_strided_slice %406 {offsets = [12, 0], sizes = [2, 1], strides = [1, 1]} : vector<16x1xf32> to vector<2x1xf32>
    %419 = arith.maximumf %417, %418 : vector<2x1xf32>
    %420 = vector.extract_strided_slice %406 {offsets = [14, 0], sizes = [2, 1], strides = [1, 1]} : vector<16x1xf32> to vector<2x1xf32>
    %421 = arith.maximumf %419, %420 : vector<2x1xf32>
    %c0_152 = arith.constant 0 : index
    %c0_153 = arith.constant 0 : index
    %422 = vector.load %arg17[%c0_152, %c0_153] : memref<16x2xf32, #tpu.memory_space<vmem>>, vector<16x2xf32>
    %cst_154 = arith.constant dense<0.000000e+00> : vector<16x1xf32>
    %423 = tpu.matmul %422, %421, %cst_154 {dimension_numbers = #tpu.dot_dimension_numbers<[1], [0], [0], [1], [0, 0, 1, 1], [], []>} : vector<16x2xf32>, vector<2x1xf32>, vector<16x1xf32> -> vector<16x1xf32>
    %424 = arith.subf %406, %423 : vector<16x1xf32>
    %425 = math.exp %424 : vector<16x1xf32>
    %426 = vector.extract_strided_slice %425 {offsets = [0, 0], sizes = [2, 1], strides = [1, 1]} : vector<16x1xf32> to vector<2x1xf32>
    %427 = vector.extract_strided_slice %425 {offsets = [2, 0], sizes = [2, 1], strides = [1, 1]} : vector<16x1xf32> to vector<2x1xf32>
    %428 = arith.addf %426, %427 : vector<2x1xf32>
    %429 = vector.extract_strided_slice %425 {offsets = [4, 0], sizes = [2, 1], strides = [1, 1]} : vector<16x1xf32> to vector<2x1xf32>
    %430 = arith.addf %428, %429 : vector<2x1xf32>
    %431 = vector.extract_strided_slice %425 {offsets = [6, 0], sizes = [2, 1], strides = [1, 1]} : vector<16x1xf32> to vector<2x1xf32>
    %432 = arith.addf %430, %431 : vector<2x1xf32>
    %433 = vector.extract_strided_slice %425 {offsets = [8, 0], sizes = [2, 1], strides = [1, 1]} : vector<16x1xf32> to vector<2x1xf32>
    %434 = arith.addf %432, %433 : vector<2x1xf32>
    %435 = vector.extract_strided_slice %425 {offsets = [10, 0], sizes = [2, 1], strides = [1, 1]} : vector<16x1xf32> to vector<2x1xf32>
    %436 = arith.addf %434, %435 : vector<2x1xf32>
    %437 = vector.extract_strided_slice %425 {offsets = [12, 0], sizes = [2, 1], strides = [1, 1]} : vector<16x1xf32> to vector<2x1xf32>
    %438 = arith.addf %436, %437 : vector<2x1xf32>
    %439 = vector.extract_strided_slice %425 {offsets = [14, 0], sizes = [2, 1], strides = [1, 1]} : vector<16x1xf32> to vector<2x1xf32>
    %440 = arith.addf %438, %439 : vector<2x1xf32>
    %cst_155 = arith.constant 1.000000e+00 : f32
    %441 = vector.broadcast %cst_155 : f32 to vector<2x1xf32>
    %442 = arith.divf %441, %440 : vector<2x1xf32>
    %cst_156 = arith.constant 0.000000e+00 : f32
    %443 = vector.broadcast %cst_156 : f32 to vector<2x32xf32>
    %cst_157 = arith.constant 0.000000e+00 : f32
    %444 = vector.broadcast %cst_157 : f32 to vector<2x1xf32>
    %445 = vector.extract_strided_slice %425 {offsets = [0, 0], sizes = [2, 1], strides = [1, 1]} : vector<16x1xf32> to vector<2x1xf32>
    %446 = arith.mulf %445, %442 : vector<2x1xf32>
    %447 = vector.broadcast %446 : vector<2x1xf32> to vector<2x32xf32>
    %448 = arith.mulf %447, %64 : vector<2x32xf32>
    %449 = arith.addf %443, %448 : vector<2x32xf32>
    %450 = arith.addf %444, %446 : vector<2x1xf32>
    %451 = vector.extract_strided_slice %425 {offsets = [2, 0], sizes = [2, 1], strides = [1, 1]} : vector<16x1xf32> to vector<2x1xf32>
    %452 = arith.mulf %451, %442 : vector<2x1xf32>
    %453 = vector.broadcast %452 : vector<2x1xf32> to vector<2x32xf32>
    %454 = arith.mulf %453, %108 : vector<2x32xf32>
    %455 = arith.addf %449, %454 : vector<2x32xf32>
    %456 = arith.addf %450, %452 : vector<2x1xf32>
    %457 = vector.extract_strided_slice %425 {offsets = [4, 0], sizes = [2, 1], strides = [1, 1]} : vector<16x1xf32> to vector<2x1xf32>
    %458 = arith.mulf %457, %442 : vector<2x1xf32>
    %459 = vector.broadcast %458 : vector<2x1xf32> to vector<2x32xf32>
    %460 = arith.mulf %459, %152 : vector<2x32xf32>
    %461 = arith.addf %455, %460 : vector<2x32xf32>
    %462 = arith.addf %456, %458 : vector<2x1xf32>
    %463 = vector.extract_strided_slice %425 {offsets = [6, 0], sizes = [2, 1], strides = [1, 1]} : vector<16x1xf32> to vector<2x1xf32>
    %464 = arith.mulf %463, %442 : vector<2x1xf32>
    %465 = vector.broadcast %464 : vector<2x1xf32> to vector<2x32xf32>
    %466 = arith.mulf %465, %196 : vector<2x32xf32>
    %467 = arith.addf %461, %466 : vector<2x32xf32>
    %468 = arith.addf %462, %464 : vector<2x1xf32>
    %469 = vector.extract_strided_slice %425 {offsets = [8, 0], sizes = [2, 1], strides = [1, 1]} : vector<16x1xf32> to vector<2x1xf32>
    %470 = arith.mulf %469, %442 : vector<2x1xf32>
    %471 = vector.broadcast %470 : vector<2x1xf32> to vector<2x32xf32>
    %472 = arith.mulf %471, %240 : vector<2x32xf32>
    %473 = arith.addf %467, %472 : vector<2x32xf32>
    %474 = arith.addf %468, %470 : vector<2x1xf32>
    %475 = vector.extract_strided_slice %425 {offsets = [10, 0], sizes = [2, 1], strides = [1, 1]} : vector<16x1xf32> to vector<2x1xf32>
    %476 = arith.mulf %475, %442 : vector<2x1xf32>
    %477 = vector.broadcast %476 : vector<2x1xf32> to vector<2x32xf32>
    %478 = arith.mulf %477, %284 : vector<2x32xf32>
    %479 = arith.addf %473, %478 : vector<2x32xf32>
    %480 = arith.addf %474, %476 : vector<2x1xf32>
    %481 = vector.extract_strided_slice %425 {offsets = [12, 0], sizes = [2, 1], strides = [1, 1]} : vector<16x1xf32> to vector<2x1xf32>
    %482 = arith.mulf %481, %442 : vector<2x1xf32>
    %483 = vector.broadcast %482 : vector<2x1xf32> to vector<2x32xf32>
    %484 = arith.mulf %483, %328 : vector<2x32xf32>
    %485 = arith.addf %479, %484 : vector<2x32xf32>
    %486 = arith.addf %480, %482 : vector<2x1xf32>
    %487 = vector.extract_strided_slice %425 {offsets = [14, 0], sizes = [2, 1], strides = [1, 1]} : vector<16x1xf32> to vector<2x1xf32>
    %488 = arith.mulf %487, %442 : vector<2x1xf32>
    %489 = vector.broadcast %488 : vector<2x1xf32> to vector<2x32xf32>
    %490 = arith.mulf %489, %372 : vector<2x32xf32>
    %491 = arith.addf %485, %490 : vector<2x32xf32>
    %492 = arith.addf %486, %488 : vector<2x1xf32>
    %493 = vector.broadcast %492 : vector<2x1xf32> to vector<2x32xf32>
    %494 = arith.mulf %386, %493 : vector<2x32xf32>
    %c0_i32_158 = arith.constant 0 : i32
    %495 = tpu.memref_slice %arg40[%c0_i32_158] : memref<6x!tpu.dma_semaphore, #tpu.memory_space<semaphore_mem>> -> memref<1x!tpu.dma_semaphore, #tpu.memory_space<semaphore_mem>>
    %496 = tpu.memref_squeeze %495 : memref<1x!tpu.dma_semaphore, #tpu.memory_space<semaphore_mem>> -> memref<!tpu.dma_semaphore, #tpu.memory_space<semaphore_mem>>
    tpu.wait_dma2 semaphore(%496 : memref<!tpu.dma_semaphore, #tpu.memory_space<semaphore_mem>>) src(%arg25 : memref<32x256xf32, #tpu.memory_space<any>>) dst(%arg34 : memref<32x256xf32, #tpu.memory_space<vmem>>)
    %c1_i32_159 = arith.constant 1 : i32
    %497 = tpu.memref_slice %arg40[%c1_i32_159] : memref<6x!tpu.dma_semaphore, #tpu.memory_space<semaphore_mem>> -> memref<1x!tpu.dma_semaphore, #tpu.memory_space<semaphore_mem>>
    %498 = tpu.memref_squeeze %497 : memref<1x!tpu.dma_semaphore, #tpu.memory_space<semaphore_mem>> -> memref<!tpu.dma_semaphore, #tpu.memory_space<semaphore_mem>>
    tpu.wait_dma2 semaphore(%498 : memref<!tpu.dma_semaphore, #tpu.memory_space<semaphore_mem>>) src(%arg26 : memref<32x256xf32, #tpu.memory_space<any>>) dst(%arg35 : memref<32x256xf32, #tpu.memory_space<vmem>>)
    %c2_i32_160 = arith.constant 2 : i32
    %499 = tpu.memref_slice %arg40[%c2_i32_160] : memref<6x!tpu.dma_semaphore, #tpu.memory_space<semaphore_mem>> -> memref<1x!tpu.dma_semaphore, #tpu.memory_space<semaphore_mem>>
    %500 = tpu.memref_squeeze %499 : memref<1x!tpu.dma_semaphore, #tpu.memory_space<semaphore_mem>> -> memref<!tpu.dma_semaphore, #tpu.memory_space<semaphore_mem>>
    tpu.wait_dma2 semaphore(%500 : memref<!tpu.dma_semaphore, #tpu.memory_space<semaphore_mem>>) src(%arg27 : memref<64x256xf32, #tpu.memory_space<any>>) dst(%arg36 : memref<64x256xf32, #tpu.memory_space<vmem>>)
    %c3_i32_161 = arith.constant 3 : i32
    %501 = tpu.memref_slice %arg40[%c3_i32_161] : memref<6x!tpu.dma_semaphore, #tpu.memory_space<semaphore_mem>> -> memref<1x!tpu.dma_semaphore, #tpu.memory_space<semaphore_mem>>
    %502 = tpu.memref_squeeze %501 : memref<1x!tpu.dma_semaphore, #tpu.memory_space<semaphore_mem>> -> memref<!tpu.dma_semaphore, #tpu.memory_space<semaphore_mem>>
    tpu.wait_dma2 semaphore(%502 : memref<!tpu.dma_semaphore, #tpu.memory_space<semaphore_mem>>) src(%arg28 : memref<64x256xf32, #tpu.memory_space<any>>) dst(%arg37 : memref<64x256xf32, #tpu.memory_space<vmem>>)
    %c4_i32_162 = arith.constant 4 : i32
    %503 = tpu.memref_slice %arg40[%c4_i32_162] : memref<6x!tpu.dma_semaphore, #tpu.memory_space<semaphore_mem>> -> memref<1x!tpu.dma_semaphore, #tpu.memory_space<semaphore_mem>>
    %504 = tpu.memref_squeeze %503 : memref<1x!tpu.dma_semaphore, #tpu.memory_space<semaphore_mem>> -> memref<!tpu.dma_semaphore, #tpu.memory_space<semaphore_mem>>
    tpu.wait_dma2 semaphore(%504 : memref<!tpu.dma_semaphore, #tpu.memory_space<semaphore_mem>>) src(%arg29 : memref<64x256xf32, #tpu.memory_space<any>>) dst(%arg38 : memref<64x256xf32, #tpu.memory_space<vmem>>)
    %c5_i32_163 = arith.constant 5 : i32
    %505 = tpu.memref_slice %arg40[%c5_i32_163] : memref<6x!tpu.dma_semaphore, #tpu.memory_space<semaphore_mem>> -> memref<1x!tpu.dma_semaphore, #tpu.memory_space<semaphore_mem>>
    %506 = tpu.memref_squeeze %505 : memref<1x!tpu.dma_semaphore, #tpu.memory_space<semaphore_mem>> -> memref<!tpu.dma_semaphore, #tpu.memory_space<semaphore_mem>>
    tpu.wait_dma2 semaphore(%506 : memref<!tpu.dma_semaphore, #tpu.memory_space<semaphore_mem>>) src(%arg30 : memref<64x32xf32, #tpu.memory_space<any>>) dst(%arg39 : memref<64x32xf32, #tpu.memory_space<vmem>>)
    %c0_164 = arith.constant 0 : index
    %c0_165 = arith.constant 0 : index
    %507 = vector.load %arg34[%c0_164, %c0_165] : memref<32x256xf32, #tpu.memory_space<vmem>>, vector<32x256xf32>
    %cst_166 = arith.constant dense<0.000000e+00> : vector<2x256xf32>
    %508 = tpu.matmul %491, %507, %cst_166 {dimension_numbers = #tpu.dot_dimension_numbers<[1], [0], [0], [1], [0, 0, 1, 1], [], []>} : vector<2x32xf32>, vector<32x256xf32>, vector<2x256xf32> -> vector<2x256xf32>
    %c0_167 = arith.constant 0 : index
    %c0_168 = arith.constant 0 : index
    %509 = vector.load %arg35[%c0_167, %c0_168] : memref<32x256xf32, #tpu.memory_space<vmem>>, vector<32x256xf32>
    %cst_169 = arith.constant dense<0.000000e+00> : vector<2x256xf32>
    %510 = tpu.matmul %494, %509, %cst_169 {dimension_numbers = #tpu.dot_dimension_numbers<[1], [0], [0], [1], [0, 0, 1, 1], [], []>} : vector<2x32xf32>, vector<32x256xf32>, vector<2x256xf32> -> vector<2x256xf32>
    %511 = arith.addf %508, %510 : vector<2x256xf32>
    %c0_170 = arith.constant 0 : index
    %c0_171 = arith.constant 0 : index
    %512 = vector.load %arg18[%c0_170, %c0_171] : memref<1x256xf32, #tpu.memory_space<vmem>>, vector<1x256xf32>
    %513 = vector.broadcast %512 : vector<1x256xf32> to vector<2x256xf32>
    %514 = arith.addf %511, %513 : vector<2x256xf32>
    %cst_172 = arith.constant 0.000000e+00 : f32
    %515 = vector.broadcast %cst_172 : f32 to vector<2x64xf32>
    %cst_173 = arith.constant 0.000000e+00 : f32
    %516 = vector.broadcast %cst_173 : f32 to vector<2x64xf32>
    %cst_174 = arith.constant 0.000000e+00 : f32
    %517 = vector.broadcast %cst_174 : f32 to vector<2x64xf32>
    %cst_175 = arith.constant 0.000000e+00 : f32
    %518 = vector.broadcast %cst_175 : f32 to vector<2x64xf32>
    %c0_176 = arith.constant 0 : index
    %c0_177 = arith.constant 0 : index
    %519 = vector.load %arg36[%c0_176, %c0_177] : memref<64x256xf32, #tpu.memory_space<vmem>>, vector<64x256xf32>
    %cst_178 = arith.constant dense<0.000000e+00> : vector<2x256xf32>
    %520 = tpu.matmul %515, %519, %cst_178 {dimension_numbers = #tpu.dot_dimension_numbers<[1], [0], [0], [1], [0, 0, 1, 1], [], []>} : vector<2x64xf32>, vector<64x256xf32>, vector<2x256xf32> -> vector<2x256xf32>
    %521 = arith.addf %514, %520 : vector<2x256xf32>
    %522 = arith.negf %521 : vector<2x256xf32>
    %523 = math.exp %522 : vector<2x256xf32>
    %cst_179 = arith.constant 1.000000e+00 : f32
    %524 = vector.broadcast %cst_179 : f32 to vector<2x256xf32>
    %525 = arith.addf %524, %523 : vector<2x256xf32>
    %526 = arith.divf %524, %525 : vector<2x256xf32>
    %527 = vector.extract_strided_slice %526 {offsets = [0, 0], sizes = [2, 64], strides = [1, 1]} : vector<2x256xf32> to vector<2x64xf32>
    %528 = vector.extract_strided_slice %526 {offsets = [0, 64], sizes = [2, 64], strides = [1, 1]} : vector<2x256xf32> to vector<2x64xf32>
    %529 = vector.extract_strided_slice %526 {offsets = [0, 192], sizes = [2, 64], strides = [1, 1]} : vector<2x256xf32> to vector<2x64xf32>
    %530 = vector.extract_strided_slice %521 {offsets = [0, 128], sizes = [2, 64], strides = [1, 1]} : vector<2x256xf32> to vector<2x64xf32>
    %531 = math.tanh %530 : vector<2x64xf32>
    %532 = arith.mulf %528, %516 : vector<2x64xf32>
    %533 = arith.mulf %527, %531 : vector<2x64xf32>
    %534 = arith.addf %532, %533 : vector<2x64xf32>
    %535 = math.tanh %534 : vector<2x64xf32>
    %536 = arith.mulf %529, %535 : vector<2x64xf32>
    %c0_180 = arith.constant 0 : index
    %c0_181 = arith.constant 0 : index
    %537 = vector.load %arg37[%c0_180, %c0_181] : memref<64x256xf32, #tpu.memory_space<vmem>>, vector<64x256xf32>
    %cst_182 = arith.constant dense<0.000000e+00> : vector<2x256xf32>
    %538 = tpu.matmul %536, %537, %cst_182 {dimension_numbers = #tpu.dot_dimension_numbers<[1], [0], [0], [1], [0, 0, 1, 1], [], []>} : vector<2x64xf32>, vector<64x256xf32>, vector<2x256xf32> -> vector<2x256xf32>
    %c0_183 = arith.constant 0 : index
    %c0_184 = arith.constant 0 : index
    %539 = vector.load %arg38[%c0_183, %c0_184] : memref<64x256xf32, #tpu.memory_space<vmem>>, vector<64x256xf32>
    %cst_185 = arith.constant dense<0.000000e+00> : vector<2x256xf32>
    %540 = tpu.matmul %517, %539, %cst_185 {dimension_numbers = #tpu.dot_dimension_numbers<[1], [0], [0], [1], [0, 0, 1, 1], [], []>} : vector<2x64xf32>, vector<64x256xf32>, vector<2x256xf32> -> vector<2x256xf32>
    %541 = arith.addf %538, %540 : vector<2x256xf32>
    %c0_186 = arith.constant 0 : index
    %c0_187 = arith.constant 0 : index
    %542 = vector.load %arg19[%c0_186, %c0_187] : memref<1x256xf32, #tpu.memory_space<vmem>>, vector<1x256xf32>
    %543 = vector.broadcast %542 : vector<1x256xf32> to vector<2x256xf32>
    %544 = arith.addf %541, %543 : vector<2x256xf32>
    %545 = arith.negf %544 : vector<2x256xf32>
    %546 = math.exp %545 : vector<2x256xf32>
    %cst_188 = arith.constant 1.000000e+00 : f32
    %547 = vector.broadcast %cst_188 : f32 to vector<2x256xf32>
    %548 = arith.addf %547, %546 : vector<2x256xf32>
    %549 = arith.divf %547, %548 : vector<2x256xf32>
    %550 = vector.extract_strided_slice %549 {offsets = [0, 0], sizes = [2, 64], strides = [1, 1]} : vector<2x256xf32> to vector<2x64xf32>
    %551 = vector.extract_strided_slice %549 {offsets = [0, 64], sizes = [2, 64], strides = [1, 1]} : vector<2x256xf32> to vector<2x64xf32>
    %552 = vector.extract_strided_slice %549 {offsets = [0, 192], sizes = [2, 64], strides = [1, 1]} : vector<2x256xf32> to vector<2x64xf32>
    %553 = vector.extract_strided_slice %544 {offsets = [0, 128], sizes = [2, 64], strides = [1, 1]} : vector<2x256xf32> to vector<2x64xf32>
    %554 = math.tanh %553 : vector<2x64xf32>
    %555 = arith.mulf %551, %518 : vector<2x64xf32>
    %556 = arith.mulf %550, %554 : vector<2x64xf32>
    %557 = arith.addf %555, %556 : vector<2x64xf32>
    %558 = math.tanh %557 : vector<2x64xf32>
    %559 = arith.mulf %552, %558 : vector<2x64xf32>
    %c0_189 = arith.constant 0 : index
    %c0_190 = arith.constant 0 : index
    %560 = vector.load %arg33[%c0_189, %c0_190] : memref<16x64xf32, #tpu.memory_space<vmem>>, vector<2x64xf32>
    tpu.vector_store %arg33[%c0_189, %c0_190], %559 {strides = array<i32>} : memref<16x64xf32, #tpu.memory_space<vmem>>, vector<2x64xf32>,
    %c0_191 = arith.constant 0 : index
    %c0_192 = arith.constant 0 : index
    %561 = vector.load %arg36[%c0_191, %c0_192] : memref<64x256xf32, #tpu.memory_space<vmem>>, vector<64x256xf32>
    %cst_193 = arith.constant dense<0.000000e+00> : vector<2x256xf32>
    %562 = tpu.matmul %536, %561, %cst_193 {dimension_numbers = #tpu.dot_dimension_numbers<[1], [0], [0], [1], [0, 0, 1, 1], [], []>} : vector<2x64xf32>, vector<64x256xf32>, vector<2x256xf32> -> vector<2x256xf32>
    %563 = arith.addf %514, %562 : vector<2x256xf32>
    %564 = arith.negf %563 : vector<2x256xf32>
    %565 = math.exp %564 : vector<2x256xf32>
    %cst_194 = arith.constant 1.000000e+00 : f32
    %566 = vector.broadcast %cst_194 : f32 to vector<2x256xf32>
    %567 = arith.addf %566, %565 : vector<2x256xf32>
    %568 = arith.divf %566, %567 : vector<2x256xf32>
    %569 = vector.extract_strided_slice %568 {offsets = [0, 0], sizes = [2, 64], strides = [1, 1]} : vector<2x256xf32> to vector<2x64xf32>
    %570 = vector.extract_strided_slice %568 {offsets = [0, 64], sizes = [2, 64], strides = [1, 1]} : vector<2x256xf32> to vector<2x64xf32>
    %571 = vector.extract_strided_slice %568 {offsets = [0, 192], sizes = [2, 64], strides = [1, 1]} : vector<2x256xf32> to vector<2x64xf32>
    %572 = vector.extract_strided_slice %563 {offsets = [0, 128], sizes = [2, 64], strides = [1, 1]} : vector<2x256xf32> to vector<2x64xf32>
    %573 = math.tanh %572 : vector<2x64xf32>
    %574 = arith.mulf %570, %534 : vector<2x64xf32>
    %575 = arith.mulf %569, %573 : vector<2x64xf32>
    %576 = arith.addf %574, %575 : vector<2x64xf32>
    %577 = math.tanh %576 : vector<2x64xf32>
    %578 = arith.mulf %571, %577 : vector<2x64xf32>
    %c0_195 = arith.constant 0 : index
    %c0_196 = arith.constant 0 : index
    %579 = vector.load %arg37[%c0_195, %c0_196] : memref<64x256xf32, #tpu.memory_space<vmem>>, vector<64x256xf32>
    %cst_197 = arith.constant dense<0.000000e+00> : vector<2x256xf32>
    %580 = tpu.matmul %578, %579, %cst_197 {dimension_numbers = #tpu.dot_dimension_numbers<[1], [0], [0], [1], [0, 0, 1, 1], [], []>} : vector<2x64xf32>, vector<64x256xf32>, vector<2x256xf32> -> vector<2x256xf32>
    %c0_198 = arith.constant 0 : index
    %c0_199 = arith.constant 0 : index
    %581 = vector.load %arg38[%c0_198, %c0_199] : memref<64x256xf32, #tpu.memory_space<vmem>>, vector<64x256xf32>
    %cst_200 = arith.constant dense<0.000000e+00> : vector<2x256xf32>
    %582 = tpu.matmul %559, %581, %cst_200 {dimension_numbers = #tpu.dot_dimension_numbers<[1], [0], [0], [1], [0, 0, 1, 1], [], []>} : vector<2x64xf32>, vector<64x256xf32>, vector<2x256xf32> -> vector<2x256xf32>
    %583 = arith.addf %580, %582 : vector<2x256xf32>
    %c0_201 = arith.constant 0 : index
    %c0_202 = arith.constant 0 : index
    %584 = vector.load %arg19[%c0_201, %c0_202] : memref<1x256xf32, #tpu.memory_space<vmem>>, vector<1x256xf32>
    %585 = vector.broadcast %584 : vector<1x256xf32> to vector<2x256xf32>
    %586 = arith.addf %583, %585 : vector<2x256xf32>
    %587 = arith.negf %586 : vector<2x256xf32>
    %588 = math.exp %587 : vector<2x256xf32>
    %cst_203 = arith.constant 1.000000e+00 : f32
    %589 = vector.broadcast %cst_203 : f32 to vector<2x256xf32>
    %590 = arith.addf %589, %588 : vector<2x256xf32>
    %591 = arith.divf %589, %590 : vector<2x256xf32>
    %592 = vector.extract_strided_slice %591 {offsets = [0, 0], sizes = [2, 64], strides = [1, 1]} : vector<2x256xf32> to vector<2x64xf32>
    %593 = vector.extract_strided_slice %591 {offsets = [0, 64], sizes = [2, 64], strides = [1, 1]} : vector<2x256xf32> to vector<2x64xf32>
    %594 = vector.extract_strided_slice %591 {offsets = [0, 192], sizes = [2, 64], strides = [1, 1]} : vector<2x256xf32> to vector<2x64xf32>
    %595 = vector.extract_strided_slice %586 {offsets = [0, 128], sizes = [2, 64], strides = [1, 1]} : vector<2x256xf32> to vector<2x64xf32>
    %596 = math.tanh %595 : vector<2x64xf32>
    %597 = arith.mulf %593, %557 : vector<2x64xf32>
    %598 = arith.mulf %592, %596 : vector<2x64xf32>
    %599 = arith.addf %597, %598 : vector<2x64xf32>
    %600 = math.tanh %599 : vector<2x64xf32>
    %601 = arith.mulf %594, %600 : vector<2x64xf32>
    %c2_204 = arith.constant 2 : index
    %c0_205 = arith.constant 0 : index
    %602 = vector.load %arg33[%c2_204, %c0_205] : memref<16x64xf32, #tpu.memory_space<vmem>>, vector<2x64xf32>
    tpu.vector_store %arg33[%c2_204, %c0_205], %601 {strides = array<i32>} : memref<16x64xf32, #tpu.memory_space<vmem>>, vector<2x64xf32>,
    %c0_206 = arith.constant 0 : index
    %c0_207 = arith.constant 0 : index
    %603 = vector.load %arg36[%c0_206, %c0_207] : memref<64x256xf32, #tpu.memory_space<vmem>>, vector<64x256xf32>
    %cst_208 = arith.constant dense<0.000000e+00> : vector<2x256xf32>
    %604 = tpu.matmul %578, %603, %cst_208 {dimension_numbers = #tpu.dot_dimension_numbers<[1], [0], [0], [1], [0, 0, 1, 1], [], []>} : vector<2x64xf32>, vector<64x256xf32>, vector<2x256xf32> -> vector<2x256xf32>
    %605 = arith.addf %514, %604 : vector<2x256xf32>
    %606 = arith.negf %605 : vector<2x256xf32>
    %607 = math.exp %606 : vector<2x256xf32>
    %cst_209 = arith.constant 1.000000e+00 : f32
    %608 = vector.broadcast %cst_209 : f32 to vector<2x256xf32>
    %609 = arith.addf %608, %607 : vector<2x256xf32>
    %610 = arith.divf %608, %609 : vector<2x256xf32>
    %611 = vector.extract_strided_slice %610 {offsets = [0, 0], sizes = [2, 64], strides = [1, 1]} : vector<2x256xf32> to vector<2x64xf32>
    %612 = vector.extract_strided_slice %610 {offsets = [0, 64], sizes = [2, 64], strides = [1, 1]} : vector<2x256xf32> to vector<2x64xf32>
    %613 = vector.extract_strided_slice %610 {offsets = [0, 192], sizes = [2, 64], strides = [1, 1]} : vector<2x256xf32> to vector<2x64xf32>
    %614 = vector.extract_strided_slice %605 {offsets = [0, 128], sizes = [2, 64], strides = [1, 1]} : vector<2x256xf32> to vector<2x64xf32>
    %615 = math.tanh %614 : vector<2x64xf32>
    %616 = arith.mulf %612, %576 : vector<2x64xf32>
    %617 = arith.mulf %611, %615 : vector<2x64xf32>
    %618 = arith.addf %616, %617 : vector<2x64xf32>
    %619 = math.tanh %618 : vector<2x64xf32>
    %620 = arith.mulf %613, %619 : vector<2x64xf32>
    %c0_210 = arith.constant 0 : index
    %c0_211 = arith.constant 0 : index
    %621 = vector.load %arg37[%c0_210, %c0_211] : memref<64x256xf32, #tpu.memory_space<vmem>>, vector<64x256xf32>
    %cst_212 = arith.constant dense<0.000000e+00> : vector<2x256xf32>
    %622 = tpu.matmul %620, %621, %cst_212 {dimension_numbers = #tpu.dot_dimension_numbers<[1], [0], [0], [1], [0, 0, 1, 1], [], []>} : vector<2x64xf32>, vector<64x256xf32>, vector<2x256xf32> -> vector<2x256xf32>
    %c0_213 = arith.constant 0 : index
    %c0_214 = arith.constant 0 : index
    %623 = vector.load %arg38[%c0_213, %c0_214] : memref<64x256xf32, #tpu.memory_space<vmem>>, vector<64x256xf32>
    %cst_215 = arith.constant dense<0.000000e+00> : vector<2x256xf32>
    %624 = tpu.matmul %601, %623, %cst_215 {dimension_numbers = #tpu.dot_dimension_numbers<[1], [0], [0], [1], [0, 0, 1, 1], [], []>} : vector<2x64xf32>, vector<64x256xf32>, vector<2x256xf32> -> vector<2x256xf32>
    %625 = arith.addf %622, %624 : vector<2x256xf32>
    %c0_216 = arith.constant 0 : index
    %c0_217 = arith.constant 0 : index
    %626 = vector.load %arg19[%c0_216, %c0_217] : memref<1x256xf32, #tpu.memory_space<vmem>>, vector<1x256xf32>
    %627 = vector.broadcast %626 : vector<1x256xf32> to vector<2x256xf32>
    %628 = arith.addf %625, %627 : vector<2x256xf32>
    %629 = arith.negf %628 : vector<2x256xf32>
    %630 = math.exp %629 : vector<2x256xf32>
    %cst_218 = arith.constant 1.000000e+00 : f32
    %631 = vector.broadcast %cst_218 : f32 to vector<2x256xf32>
    %632 = arith.addf %631, %630 : vector<2x256xf32>
    %633 = arith.divf %631, %632 : vector<2x256xf32>
    %634 = vector.extract_strided_slice %633 {offsets = [0, 0], sizes = [2, 64], strides = [1, 1]} : vector<2x256xf32> to vector<2x64xf32>
    %635 = vector.extract_strided_slice %633 {offsets = [0, 64], sizes = [2, 64], strides = [1, 1]} : vector<2x256xf32> to vector<2x64xf32>
    %636 = vector.extract_strided_slice %633 {offsets = [0, 192], sizes = [2, 64], strides = [1, 1]} : vector<2x256xf32> to vector<2x64xf32>
    %637 = vector.extract_strided_slice %628 {offsets = [0, 128], sizes = [2, 64], strides = [1, 1]} : vector<2x256xf32> to vector<2x64xf32>
    %638 = math.tanh %637 : vector<2x64xf32>
    %639 = arith.mulf %635, %599 : vector<2x64xf32>
    %640 = arith.mulf %634, %638 : vector<2x64xf32>
    %641 = arith.addf %639, %640 : vector<2x64xf32>
    %642 = math.tanh %641 : vector<2x64xf32>
    %643 = arith.mulf %636, %642 : vector<2x64xf32>
    %c4_219 = arith.constant 4 : index
    %c0_220 = arith.constant 0 : index
    %644 = vector.load %arg33[%c4_219, %c0_220] : memref<16x64xf32, #tpu.memory_space<vmem>>, vector<2x64xf32>
    tpu.vector_store %arg33[%c4_219, %c0_220], %643 {strides = array<i32>} : memref<16x64xf32, #tpu.memory_space<vmem>>, vector<2x64xf32>,
    %c0_221 = arith.constant 0 : index
    %c0_222 = arith.constant 0 : index
    %645 = vector.load %arg36[%c0_221, %c0_222] : memref<64x256xf32, #tpu.memory_space<vmem>>, vector<64x256xf32>
    %cst_223 = arith.constant dense<0.000000e+00> : vector<2x256xf32>
    %646 = tpu.matmul %620, %645, %cst_223 {dimension_numbers = #tpu.dot_dimension_numbers<[1], [0], [0], [1], [0, 0, 1, 1], [], []>} : vector<2x64xf32>, vector<64x256xf32>, vector<2x256xf32> -> vector<2x256xf32>
    %647 = arith.addf %514, %646 : vector<2x256xf32>
    %648 = arith.negf %647 : vector<2x256xf32>
    %649 = math.exp %648 : vector<2x256xf32>
    %cst_224 = arith.constant 1.000000e+00 : f32
    %650 = vector.broadcast %cst_224 : f32 to vector<2x256xf32>
    %651 = arith.addf %650, %649 : vector<2x256xf32>
    %652 = arith.divf %650, %651 : vector<2x256xf32>
    %653 = vector.extract_strided_slice %652 {offsets = [0, 0], sizes = [2, 64], strides = [1, 1]} : vector<2x256xf32> to vector<2x64xf32>
    %654 = vector.extract_strided_slice %652 {offsets = [0, 64], sizes = [2, 64], strides = [1, 1]} : vector<2x256xf32> to vector<2x64xf32>
    %655 = vector.extract_strided_slice %652 {offsets = [0, 192], sizes = [2, 64], strides = [1, 1]} : vector<2x256xf32> to vector<2x64xf32>
    %656 = vector.extract_strided_slice %647 {offsets = [0, 128], sizes = [2, 64], strides = [1, 1]} : vector<2x256xf32> to vector<2x64xf32>
    %657 = math.tanh %656 : vector<2x64xf32>
    %658 = arith.mulf %654, %618 : vector<2x64xf32>
    %659 = arith.mulf %653, %657 : vector<2x64xf32>
    %660 = arith.addf %658, %659 : vector<2x64xf32>
    %661 = math.tanh %660 : vector<2x64xf32>
    %662 = arith.mulf %655, %661 : vector<2x64xf32>
    %c0_225 = arith.constant 0 : index
    %c0_226 = arith.constant 0 : index
    %663 = vector.load %arg37[%c0_225, %c0_226] : memref<64x256xf32, #tpu.memory_space<vmem>>, vector<64x256xf32>
    %cst_227 = arith.constant dense<0.000000e+00> : vector<2x256xf32>
    %664 = tpu.matmul %662, %663, %cst_227 {dimension_numbers = #tpu.dot_dimension_numbers<[1], [0], [0], [1], [0, 0, 1, 1], [], []>} : vector<2x64xf32>, vector<64x256xf32>, vector<2x256xf32> -> vector<2x256xf32>
    %c0_228 = arith.constant 0 : index
    %c0_229 = arith.constant 0 : index
    %665 = vector.load %arg38[%c0_228, %c0_229] : memref<64x256xf32, #tpu.memory_space<vmem>>, vector<64x256xf32>
    %cst_230 = arith.constant dense<0.000000e+00> : vector<2x256xf32>
    %666 = tpu.matmul %643, %665, %cst_230 {dimension_numbers = #tpu.dot_dimension_numbers<[1], [0], [0], [1], [0, 0, 1, 1], [], []>} : vector<2x64xf32>, vector<64x256xf32>, vector<2x256xf32> -> vector<2x256xf32>
    %667 = arith.addf %664, %666 : vector<2x256xf32>
    %c0_231 = arith.constant 0 : index
    %c0_232 = arith.constant 0 : index
    %668 = vector.load %arg19[%c0_231, %c0_232] : memref<1x256xf32, #tpu.memory_space<vmem>>, vector<1x256xf32>
    %669 = vector.broadcast %668 : vector<1x256xf32> to vector<2x256xf32>
    %670 = arith.addf %667, %669 : vector<2x256xf32>
    %671 = arith.negf %670 : vector<2x256xf32>
    %672 = math.exp %671 : vector<2x256xf32>
    %cst_233 = arith.constant 1.000000e+00 : f32
    %673 = vector.broadcast %cst_233 : f32 to vector<2x256xf32>
    %674 = arith.addf %673, %672 : vector<2x256xf32>
    %675 = arith.divf %673, %674 : vector<2x256xf32>
    %676 = vector.extract_strided_slice %675 {offsets = [0, 0], sizes = [2, 64], strides = [1, 1]} : vector<2x256xf32> to vector<2x64xf32>
    %677 = vector.extract_strided_slice %675 {offsets = [0, 64], sizes = [2, 64], strides = [1, 1]} : vector<2x256xf32> to vector<2x64xf32>
    %678 = vector.extract_strided_slice %675 {offsets = [0, 192], sizes = [2, 64], strides = [1, 1]} : vector<2x256xf32> to vector<2x64xf32>
    %679 = vector.extract_strided_slice %670 {offsets = [0, 128], sizes = [2, 64], strides = [1, 1]} : vector<2x256xf32> to vector<2x64xf32>
    %680 = math.tanh %679 : vector<2x64xf32>
    %681 = arith.mulf %677, %641 : vector<2x64xf32>
    %682 = arith.mulf %676, %680 : vector<2x64xf32>
    %683 = arith.addf %681, %682 : vector<2x64xf32>
    %684 = math.tanh %683 : vector<2x64xf32>
    %685 = arith.mulf %678, %684 : vector<2x64xf32>
    %c6_234 = arith.constant 6 : index
    %c0_235 = arith.constant 0 : index
    %686 = vector.load %arg33[%c6_234, %c0_235] : memref<16x64xf32, #tpu.memory_space<vmem>>, vector<2x64xf32>
    tpu.vector_store %arg33[%c6_234, %c0_235], %685 {strides = array<i32>} : memref<16x64xf32, #tpu.memory_space<vmem>>, vector<2x64xf32>,
    %c0_236 = arith.constant 0 : index
    %c0_237 = arith.constant 0 : index
    %687 = vector.load %arg36[%c0_236, %c0_237] : memref<64x256xf32, #tpu.memory_space<vmem>>, vector<64x256xf32>
    %cst_238 = arith.constant dense<0.000000e+00> : vector<2x256xf32>
    %688 = tpu.matmul %662, %687, %cst_238 {dimension_numbers = #tpu.dot_dimension_numbers<[1], [0], [0], [1], [0, 0, 1, 1], [], []>} : vector<2x64xf32>, vector<64x256xf32>, vector<2x256xf32> -> vector<2x256xf32>
    %689 = arith.addf %514, %688 : vector<2x256xf32>
    %690 = arith.negf %689 : vector<2x256xf32>
    %691 = math.exp %690 : vector<2x256xf32>
    %cst_239 = arith.constant 1.000000e+00 : f32
    %692 = vector.broadcast %cst_239 : f32 to vector<2x256xf32>
    %693 = arith.addf %692, %691 : vector<2x256xf32>
    %694 = arith.divf %692, %693 : vector<2x256xf32>
    %695 = vector.extract_strided_slice %694 {offsets = [0, 0], sizes = [2, 64], strides = [1, 1]} : vector<2x256xf32> to vector<2x64xf32>
    %696 = vector.extract_strided_slice %694 {offsets = [0, 64], sizes = [2, 64], strides = [1, 1]} : vector<2x256xf32> to vector<2x64xf32>
    %697 = vector.extract_strided_slice %694 {offsets = [0, 192], sizes = [2, 64], strides = [1, 1]} : vector<2x256xf32> to vector<2x64xf32>
    %698 = vector.extract_strided_slice %689 {offsets = [0, 128], sizes = [2, 64], strides = [1, 1]} : vector<2x256xf32> to vector<2x64xf32>
    %699 = math.tanh %698 : vector<2x64xf32>
    %700 = arith.mulf %696, %660 : vector<2x64xf32>
    %701 = arith.mulf %695, %699 : vector<2x64xf32>
    %702 = arith.addf %700, %701 : vector<2x64xf32>
    %703 = math.tanh %702 : vector<2x64xf32>
    %704 = arith.mulf %697, %703 : vector<2x64xf32>
    %c0_240 = arith.constant 0 : index
    %c0_241 = arith.constant 0 : index
    %705 = vector.load %arg37[%c0_240, %c0_241] : memref<64x256xf32, #tpu.memory_space<vmem>>, vector<64x256xf32>
    %cst_242 = arith.constant dense<0.000000e+00> : vector<2x256xf32>
    %706 = tpu.matmul %704, %705, %cst_242 {dimension_numbers = #tpu.dot_dimension_numbers<[1], [0], [0], [1], [0, 0, 1, 1], [], []>} : vector<2x64xf32>, vector<64x256xf32>, vector<2x256xf32> -> vector<2x256xf32>
    %c0_243 = arith.constant 0 : index
    %c0_244 = arith.constant 0 : index
    %707 = vector.load %arg38[%c0_243, %c0_244] : memref<64x256xf32, #tpu.memory_space<vmem>>, vector<64x256xf32>
    %cst_245 = arith.constant dense<0.000000e+00> : vector<2x256xf32>
    %708 = tpu.matmul %685, %707, %cst_245 {dimension_numbers = #tpu.dot_dimension_numbers<[1], [0], [0], [1], [0, 0, 1, 1], [], []>} : vector<2x64xf32>, vector<64x256xf32>, vector<2x256xf32> -> vector<2x256xf32>
    %709 = arith.addf %706, %708 : vector<2x256xf32>
    %c0_246 = arith.constant 0 : index
    %c0_247 = arith.constant 0 : index
    %710 = vector.load %arg19[%c0_246, %c0_247] : memref<1x256xf32, #tpu.memory_space<vmem>>, vector<1x256xf32>
    %711 = vector.broadcast %710 : vector<1x256xf32> to vector<2x256xf32>
    %712 = arith.addf %709, %711 : vector<2x256xf32>
    %713 = arith.negf %712 : vector<2x256xf32>
    %714 = math.exp %713 : vector<2x256xf32>
    %cst_248 = arith.constant 1.000000e+00 : f32
    %715 = vector.broadcast %cst_248 : f32 to vector<2x256xf32>
    %716 = arith.addf %715, %714 : vector<2x256xf32>
    %717 = arith.divf %715, %716 : vector<2x256xf32>
    %718 = vector.extract_strided_slice %717 {offsets = [0, 0], sizes = [2, 64], strides = [1, 1]} : vector<2x256xf32> to vector<2x64xf32>
    %719 = vector.extract_strided_slice %717 {offsets = [0, 64], sizes = [2, 64], strides = [1, 1]} : vector<2x256xf32> to vector<2x64xf32>
    %720 = vector.extract_strided_slice %717 {offsets = [0, 192], sizes = [2, 64], strides = [1, 1]} : vector<2x256xf32> to vector<2x64xf32>
    %721 = vector.extract_strided_slice %712 {offsets = [0, 128], sizes = [2, 64], strides = [1, 1]} : vector<2x256xf32> to vector<2x64xf32>
    %722 = math.tanh %721 : vector<2x64xf32>
    %723 = arith.mulf %719, %683 : vector<2x64xf32>
    %724 = arith.mulf %718, %722 : vector<2x64xf32>
    %725 = arith.addf %723, %724 : vector<2x64xf32>
    %726 = math.tanh %725 : vector<2x64xf32>
    %727 = arith.mulf %720, %726 : vector<2x64xf32>
    %c8_249 = arith.constant 8 : index
    %c0_250 = arith.constant 0 : index
    %728 = vector.load %arg33[%c8_249, %c0_250] : memref<16x64xf32, #tpu.memory_space<vmem>>, vector<2x64xf32>
    tpu.vector_store %arg33[%c8_249, %c0_250], %727 {strides = array<i32>} : memref<16x64xf32, #tpu.memory_space<vmem>>, vector<2x64xf32>,
    %c0_251 = arith.constant 0 : index
    %c0_252 = arith.constant 0 : index
    %729 = vector.load %arg36[%c0_251, %c0_252] : memref<64x256xf32, #tpu.memory_space<vmem>>, vector<64x256xf32>
    %cst_253 = arith.constant dense<0.000000e+00> : vector<2x256xf32>
    %730 = tpu.matmul %704, %729, %cst_253 {dimension_numbers = #tpu.dot_dimension_numbers<[1], [0], [0], [1], [0, 0, 1, 1], [], []>} : vector<2x64xf32>, vector<64x256xf32>, vector<2x256xf32> -> vector<2x256xf32>
    %731 = arith.addf %514, %730 : vector<2x256xf32>
    %732 = arith.negf %731 : vector<2x256xf32>
    %733 = math.exp %732 : vector<2x256xf32>
    %cst_254 = arith.constant 1.000000e+00 : f32
    %734 = vector.broadcast %cst_254 : f32 to vector<2x256xf32>
    %735 = arith.addf %734, %733 : vector<2x256xf32>
    %736 = arith.divf %734, %735 : vector<2x256xf32>
    %737 = vector.extract_strided_slice %736 {offsets = [0, 0], sizes = [2, 64], strides = [1, 1]} : vector<2x256xf32> to vector<2x64xf32>
    %738 = vector.extract_strided_slice %736 {offsets = [0, 64], sizes = [2, 64], strides = [1, 1]} : vector<2x256xf32> to vector<2x64xf32>
    %739 = vector.extract_strided_slice %736 {offsets = [0, 192], sizes = [2, 64], strides = [1, 1]} : vector<2x256xf32> to vector<2x64xf32>
    %740 = vector.extract_strided_slice %731 {offsets = [0, 128], sizes = [2, 64], strides = [1, 1]} : vector<2x256xf32> to vector<2x64xf32>
    %741 = math.tanh %740 : vector<2x64xf32>
    %742 = arith.mulf %738, %702 : vector<2x64xf32>
    %743 = arith.mulf %737, %741 : vector<2x64xf32>
    %744 = arith.addf %742, %743 : vector<2x64xf32>
    %745 = math.tanh %744 : vector<2x64xf32>
    %746 = arith.mulf %739, %745 : vector<2x64xf32>
    %c0_255 = arith.constant 0 : index
    %c0_256 = arith.constant 0 : index
    %747 = vector.load %arg37[%c0_255, %c0_256] : memref<64x256xf32, #tpu.memory_space<vmem>>, vector<64x256xf32>
    %cst_257 = arith.constant dense<0.000000e+00> : vector<2x256xf32>
    %748 = tpu.matmul %746, %747, %cst_257 {dimension_numbers = #tpu.dot_dimension_numbers<[1], [0], [0], [1], [0, 0, 1, 1], [], []>} : vector<2x64xf32>, vector<64x256xf32>, vector<2x256xf32> -> vector<2x256xf32>
    %c0_258 = arith.constant 0 : index
    %c0_259 = arith.constant 0 : index
    %749 = vector.load %arg38[%c0_258, %c0_259] : memref<64x256xf32, #tpu.memory_space<vmem>>, vector<64x256xf32>
    %cst_260 = arith.constant dense<0.000000e+00> : vector<2x256xf32>
    %750 = tpu.matmul %727, %749, %cst_260 {dimension_numbers = #tpu.dot_dimension_numbers<[1], [0], [0], [1], [0, 0, 1, 1], [], []>} : vector<2x64xf32>, vector<64x256xf32>, vector<2x256xf32> -> vector<2x256xf32>
    %751 = arith.addf %748, %750 : vector<2x256xf32>
    %c0_261 = arith.constant 0 : index
    %c0_262 = arith.constant 0 : index
    %752 = vector.load %arg19[%c0_261, %c0_262] : memref<1x256xf32, #tpu.memory_space<vmem>>, vector<1x256xf32>
    %753 = vector.broadcast %752 : vector<1x256xf32> to vector<2x256xf32>
    %754 = arith.addf %751, %753 : vector<2x256xf32>
    %755 = arith.negf %754 : vector<2x256xf32>
    %756 = math.exp %755 : vector<2x256xf32>
    %cst_263 = arith.constant 1.000000e+00 : f32
    %757 = vector.broadcast %cst_263 : f32 to vector<2x256xf32>
    %758 = arith.addf %757, %756 : vector<2x256xf32>
    %759 = arith.divf %757, %758 : vector<2x256xf32>
    %760 = vector.extract_strided_slice %759 {offsets = [0, 0], sizes = [2, 64], strides = [1, 1]} : vector<2x256xf32> to vector<2x64xf32>
    %761 = vector.extract_strided_slice %759 {offsets = [0, 64], sizes = [2, 64], strides = [1, 1]} : vector<2x256xf32> to vector<2x64xf32>
    %762 = vector.extract_strided_slice %759 {offsets = [0, 192], sizes = [2, 64], strides = [1, 1]} : vector<2x256xf32> to vector<2x64xf32>
    %763 = vector.extract_strided_slice %754 {offsets = [0, 128], sizes = [2, 64], strides = [1, 1]} : vector<2x256xf32> to vector<2x64xf32>
    %764 = math.tanh %763 : vector<2x64xf32>
    %765 = arith.mulf %761, %725 : vector<2x64xf32>
    %766 = arith.mulf %760, %764 : vector<2x64xf32>
    %767 = arith.addf %765, %766 : vector<2x64xf32>
    %768 = math.tanh %767 : vector<2x64xf32>
    %769 = arith.mulf %762, %768 : vector<2x64xf32>
    %c10_264 = arith.constant 10 : index
    %c0_265 = arith.constant 0 : index
    %770 = vector.load %arg33[%c10_264, %c0_265] : memref<16x64xf32, #tpu.memory_space<vmem>>, vector<2x64xf32>
    tpu.vector_store %arg33[%c10_264, %c0_265], %769 {strides = array<i32>} : memref<16x64xf32, #tpu.memory_space<vmem>>, vector<2x64xf32>,
    %c0_266 = arith.constant 0 : index
    %c0_267 = arith.constant 0 : index
    %771 = vector.load %arg36[%c0_266, %c0_267] : memref<64x256xf32, #tpu.memory_space<vmem>>, vector<64x256xf32>
    %cst_268 = arith.constant dense<0.000000e+00> : vector<2x256xf32>
    %772 = tpu.matmul %746, %771, %cst_268 {dimension_numbers = #tpu.dot_dimension_numbers<[1], [0], [0], [1], [0, 0, 1, 1], [], []>} : vector<2x64xf32>, vector<64x256xf32>, vector<2x256xf32> -> vector<2x256xf32>
    %773 = arith.addf %514, %772 : vector<2x256xf32>
    %774 = arith.negf %773 : vector<2x256xf32>
    %775 = math.exp %774 : vector<2x256xf32>
    %cst_269 = arith.constant 1.000000e+00 : f32
    %776 = vector.broadcast %cst_269 : f32 to vector<2x256xf32>
    %777 = arith.addf %776, %775 : vector<2x256xf32>
    %778 = arith.divf %776, %777 : vector<2x256xf32>
    %779 = vector.extract_strided_slice %778 {offsets = [0, 0], sizes = [2, 64], strides = [1, 1]} : vector<2x256xf32> to vector<2x64xf32>
    %780 = vector.extract_strided_slice %778 {offsets = [0, 64], sizes = [2, 64], strides = [1, 1]} : vector<2x256xf32> to vector<2x64xf32>
    %781 = vector.extract_strided_slice %778 {offsets = [0, 192], sizes = [2, 64], strides = [1, 1]} : vector<2x256xf32> to vector<2x64xf32>
    %782 = vector.extract_strided_slice %773 {offsets = [0, 128], sizes = [2, 64], strides = [1, 1]} : vector<2x256xf32> to vector<2x64xf32>
    %783 = math.tanh %782 : vector<2x64xf32>
    %784 = arith.mulf %780, %744 : vector<2x64xf32>
    %785 = arith.mulf %779, %783 : vector<2x64xf32>
    %786 = arith.addf %784, %785 : vector<2x64xf32>
    %787 = math.tanh %786 : vector<2x64xf32>
    %788 = arith.mulf %781, %787 : vector<2x64xf32>
    %c0_270 = arith.constant 0 : index
    %c0_271 = arith.constant 0 : index
    %789 = vector.load %arg37[%c0_270, %c0_271] : memref<64x256xf32, #tpu.memory_space<vmem>>, vector<64x256xf32>
    %cst_272 = arith.constant dense<0.000000e+00> : vector<2x256xf32>
    %790 = tpu.matmul %788, %789, %cst_272 {dimension_numbers = #tpu.dot_dimension_numbers<[1], [0], [0], [1], [0, 0, 1, 1], [], []>} : vector<2x64xf32>, vector<64x256xf32>, vector<2x256xf32> -> vector<2x256xf32>
    %c0_273 = arith.constant 0 : index
    %c0_274 = arith.constant 0 : index
    %791 = vector.load %arg38[%c0_273, %c0_274] : memref<64x256xf32, #tpu.memory_space<vmem>>, vector<64x256xf32>
    %cst_275 = arith.constant dense<0.000000e+00> : vector<2x256xf32>
    %792 = tpu.matmul %769, %791, %cst_275 {dimension_numbers = #tpu.dot_dimension_numbers<[1], [0], [0], [1], [0, 0, 1, 1], [], []>} : vector<2x64xf32>, vector<64x256xf32>, vector<2x256xf32> -> vector<2x256xf32>
    %793 = arith.addf %790, %792 : vector<2x256xf32>
    %c0_276 = arith.constant 0 : index
    %c0_277 = arith.constant 0 : index
    %794 = vector.load %arg19[%c0_276, %c0_277] : memref<1x256xf32, #tpu.memory_space<vmem>>, vector<1x256xf32>
    %795 = vector.broadcast %794 : vector<1x256xf32> to vector<2x256xf32>
    %796 = arith.addf %793, %795 : vector<2x256xf32>
    %797 = arith.negf %796 : vector<2x256xf32>
    %798 = math.exp %797 : vector<2x256xf32>
    %cst_278 = arith.constant 1.000000e+00 : f32
    %799 = vector.broadcast %cst_278 : f32 to vector<2x256xf32>
    %800 = arith.addf %799, %798 : vector<2x256xf32>
    %801 = arith.divf %799, %800 : vector<2x256xf32>
    %802 = vector.extract_strided_slice %801 {offsets = [0, 0], sizes = [2, 64], strides = [1, 1]} : vector<2x256xf32> to vector<2x64xf32>
    %803 = vector.extract_strided_slice %801 {offsets = [0, 64], sizes = [2, 64], strides = [1, 1]} : vector<2x256xf32> to vector<2x64xf32>
    %804 = vector.extract_strided_slice %801 {offsets = [0, 192], sizes = [2, 64], strides = [1, 1]} : vector<2x256xf32> to vector<2x64xf32>
    %805 = vector.extract_strided_slice %796 {offsets = [0, 128], sizes = [2, 64], strides = [1, 1]} : vector<2x256xf32> to vector<2x64xf32>
    %806 = math.tanh %805 : vector<2x64xf32>
    %807 = arith.mulf %803, %767 : vector<2x64xf32>
    %808 = arith.mulf %802, %806 : vector<2x64xf32>
    %809 = arith.addf %807, %808 : vector<2x64xf32>
    %810 = math.tanh %809 : vector<2x64xf32>
    %811 = arith.mulf %804, %810 : vector<2x64xf32>
    %c12_279 = arith.constant 12 : index
    %c0_280 = arith.constant 0 : index
    %812 = vector.load %arg33[%c12_279, %c0_280] : memref<16x64xf32, #tpu.memory_space<vmem>>, vector<2x64xf32>
    tpu.vector_store %arg33[%c12_279, %c0_280], %811 {strides = array<i32>} : memref<16x64xf32, #tpu.memory_space<vmem>>, vector<2x64xf32>,
    %c0_281 = arith.constant 0 : index
    %c0_282 = arith.constant 0 : index
    %813 = vector.load %arg36[%c0_281, %c0_282] : memref<64x256xf32, #tpu.memory_space<vmem>>, vector<64x256xf32>
    %cst_283 = arith.constant dense<0.000000e+00> : vector<2x256xf32>
    %814 = tpu.matmul %788, %813, %cst_283 {dimension_numbers = #tpu.dot_dimension_numbers<[1], [0], [0], [1], [0, 0, 1, 1], [], []>} : vector<2x64xf32>, vector<64x256xf32>, vector<2x256xf32> -> vector<2x256xf32>
    %815 = arith.addf %514, %814 : vector<2x256xf32>
    %816 = arith.negf %815 : vector<2x256xf32>
    %817 = math.exp %816 : vector<2x256xf32>
    %cst_284 = arith.constant 1.000000e+00 : f32
    %818 = vector.broadcast %cst_284 : f32 to vector<2x256xf32>
    %819 = arith.addf %818, %817 : vector<2x256xf32>
    %820 = arith.divf %818, %819 : vector<2x256xf32>
    %821 = vector.extract_strided_slice %820 {offsets = [0, 0], sizes = [2, 64], strides = [1, 1]} : vector<2x256xf32> to vector<2x64xf32>
    %822 = vector.extract_strided_slice %820 {offsets = [0, 64], sizes = [2, 64], strides = [1, 1]} : vector<2x256xf32> to vector<2x64xf32>
    %823 = vector.extract_strided_slice %820 {offsets = [0, 192], sizes = [2, 64], strides = [1, 1]} : vector<2x256xf32> to vector<2x64xf32>
    %824 = vector.extract_strided_slice %815 {offsets = [0, 128], sizes = [2, 64], strides = [1, 1]} : vector<2x256xf32> to vector<2x64xf32>
    %825 = math.tanh %824 : vector<2x64xf32>
    %826 = arith.mulf %822, %786 : vector<2x64xf32>
    %827 = arith.mulf %821, %825 : vector<2x64xf32>
    %828 = arith.addf %826, %827 : vector<2x64xf32>
    %829 = math.tanh %828 : vector<2x64xf32>
    %830 = arith.mulf %823, %829 : vector<2x64xf32>
    %c0_285 = arith.constant 0 : index
    %c0_286 = arith.constant 0 : index
    %831 = vector.load %arg37[%c0_285, %c0_286] : memref<64x256xf32, #tpu.memory_space<vmem>>, vector<64x256xf32>
    %cst_287 = arith.constant dense<0.000000e+00> : vector<2x256xf32>
    %832 = tpu.matmul %830, %831, %cst_287 {dimension_numbers = #tpu.dot_dimension_numbers<[1], [0], [0], [1], [0, 0, 1, 1], [], []>} : vector<2x64xf32>, vector<64x256xf32>, vector<2x256xf32> -> vector<2x256xf32>
    %c0_288 = arith.constant 0 : index
    %c0_289 = arith.constant 0 : index
    %833 = vector.load %arg38[%c0_288, %c0_289] : memref<64x256xf32, #tpu.memory_space<vmem>>, vector<64x256xf32>
    %cst_290 = arith.constant dense<0.000000e+00> : vector<2x256xf32>
    %834 = tpu.matmul %811, %833, %cst_290 {dimension_numbers = #tpu.dot_dimension_numbers<[1], [0], [0], [1], [0, 0, 1, 1], [], []>} : vector<2x64xf32>, vector<64x256xf32>, vector<2x256xf32> -> vector<2x256xf32>
    %835 = arith.addf %832, %834 : vector<2x256xf32>
    %c0_291 = arith.constant 0 : index
    %c0_292 = arith.constant 0 : index
    %836 = vector.load %arg19[%c0_291, %c0_292] : memref<1x256xf32, #tpu.memory_space<vmem>>, vector<1x256xf32>
    %837 = vector.broadcast %836 : vector<1x256xf32> to vector<2x256xf32>
    %838 = arith.addf %835, %837 : vector<2x256xf32>
    %839 = arith.negf %838 : vector<2x256xf32>
    %840 = math.exp %839 : vector<2x256xf32>
    %cst_293 = arith.constant 1.000000e+00 : f32
    %841 = vector.broadcast %cst_293 : f32 to vector<2x256xf32>
    %842 = arith.addf %841, %840 : vector<2x256xf32>
    %843 = arith.divf %841, %842 : vector<2x256xf32>
    %844 = vector.extract_strided_slice %843 {offsets = [0, 0], sizes = [2, 64], strides = [1, 1]} : vector<2x256xf32> to vector<2x64xf32>
    %845 = vector.extract_strided_slice %843 {offsets = [0, 64], sizes = [2, 64], strides = [1, 1]} : vector<2x256xf32> to vector<2x64xf32>
    %846 = vector.extract_strided_slice %843 {offsets = [0, 192], sizes = [2, 64], strides = [1, 1]} : vector<2x256xf32> to vector<2x64xf32>
    %847 = vector.extract_strided_slice %838 {offsets = [0, 128], sizes = [2, 64], strides = [1, 1]} : vector<2x256xf32> to vector<2x64xf32>
    %848 = math.tanh %847 : vector<2x64xf32>
    %849 = arith.mulf %845, %809 : vector<2x64xf32>
    %850 = arith.mulf %844, %848 : vector<2x64xf32>
    %851 = arith.addf %849, %850 : vector<2x64xf32>
    %852 = math.tanh %851 : vector<2x64xf32>
    %853 = arith.mulf %846, %852 : vector<2x64xf32>
    %c14_294 = arith.constant 14 : index
    %c0_295 = arith.constant 0 : index
    %854 = vector.load %arg33[%c14_294, %c0_295] : memref<16x64xf32, #tpu.memory_space<vmem>>, vector<2x64xf32>
    tpu.vector_store %arg33[%c14_294, %c0_295], %853 {strides = array<i32>} : memref<16x64xf32, #tpu.memory_space<vmem>>, vector<2x64xf32>,
    %c0_296 = arith.constant 0 : index
    %c0_297 = arith.constant 0 : index
    %855 = vector.load %arg33[%c0_296, %c0_297] : memref<16x64xf32, #tpu.memory_space<vmem>>, vector<16x64xf32>
    %c0_298 = arith.constant 0 : index
    %c0_299 = arith.constant 0 : index
    %856 = vector.load %arg39[%c0_298, %c0_299] : memref<64x32xf32, #tpu.memory_space<vmem>>, vector<64x32xf32>
    %cst_300 = arith.constant dense<0.000000e+00> : vector<16x32xf32>
    %857 = tpu.matmul %855, %856, %cst_300 {dimension_numbers = #tpu.dot_dimension_numbers<[1], [0], [0], [1], [0, 0, 1, 1], [], []>} : vector<16x64xf32>, vector<64x32xf32>, vector<16x32xf32> -> vector<16x32xf32>
    %c0_301 = arith.constant 0 : index
    %c0_302 = arith.constant 0 : index
    %858 = vector.load %arg20[%c0_301, %c0_302] : memref<1x32xf32, #tpu.memory_space<vmem>>, vector<1x32xf32>
    %859 = vector.broadcast %858 : vector<1x32xf32> to vector<16x32xf32>
    %860 = arith.addf %857, %859 : vector<16x32xf32>
    %cst_303 = arith.constant dense<0.000000e+00> : vector<16xf32>
    %861 = vector.multi_reduction <add>, %860, %cst_303 [1] : vector<16x32xf32> to vector<16xf32>
    %862 = vector.shape_cast %861 : vector<16xf32> to vector<16x1xf32>
    %cst_304 = arith.constant 3.200000e+01 : f32
    %863 = vector.broadcast %cst_304 : f32 to vector<16x1xf32>
    %864 = arith.divf %862, %863 : vector<16x1xf32>
    %865 = vector.broadcast %864 : vector<16x1xf32> to vector<16x32xf32>
    %866 = arith.subf %860, %865 : vector<16x32xf32>
    %867 = vector.broadcast %864 : vector<16x1xf32> to vector<16x32xf32>
    %868 = arith.subf %860, %867 : vector<16x32xf32>
    %869 = arith.mulf %866, %868 : vector<16x32xf32>
    %cst_305 = arith.constant dense<0.000000e+00> : vector<16xf32>
    %870 = vector.multi_reduction <add>, %869, %cst_305 [1] : vector<16x32xf32> to vector<16xf32>
    %871 = vector.shape_cast %870 : vector<16xf32> to vector<16x1xf32>
    %cst_306 = arith.constant 3.200000e+01 : f32
    %872 = vector.broadcast %cst_306 : f32 to vector<16x1xf32>
    %873 = arith.divf %871, %872 : vector<16x1xf32>
    %874 = vector.broadcast %864 : vector<16x1xf32> to vector<16x32xf32>
    %875 = arith.subf %860, %874 : vector<16x32xf32>
    %cst_307 = arith.constant 9.99999974E-6 : f32
    %876 = vector.broadcast %cst_307 : f32 to vector<16x1xf32>
    %877 = arith.addf %873, %876 : vector<16x1xf32>
    %878 = math.rsqrt %877 : vector<16x1xf32>
    %879 = vector.broadcast %878 : vector<16x1xf32> to vector<16x32xf32>
    %880 = arith.mulf %875, %879 : vector<16x32xf32>
    %c0_308 = arith.constant 0 : index
    %c0_309 = arith.constant 0 : index
    %881 = vector.load %arg21[%c0_308, %c0_309] : memref<1x32xf32, #tpu.memory_space<vmem>>, vector<1x32xf32>
    %882 = vector.broadcast %881 : vector<1x32xf32> to vector<16x32xf32>
    %883 = arith.mulf %880, %882 : vector<16x32xf32>
    %c0_310 = arith.constant 0 : index
    %c0_311 = arith.constant 0 : index
    %884 = vector.load %arg22[%c0_310, %c0_311] : memref<1x32xf32, #tpu.memory_space<vmem>>, vector<1x32xf32>
    %885 = vector.broadcast %884 : vector<1x32xf32> to vector<16x32xf32>
    %886 = arith.addf %883, %885 : vector<16x32xf32>
    %c0_312 = arith.constant 0 : index
    %c0_313 = arith.constant 0 : index
    %887 = vector.load %arg23[%c0_312, %c0_313] : memref<32x128xf32, #tpu.memory_space<vmem>>, vector<32x128xf32>
    %cst_314 = arith.constant dense<0.000000e+00> : vector<16x128xf32>
    %888 = tpu.matmul %886, %887, %cst_314 {dimension_numbers = #tpu.dot_dimension_numbers<[1], [0], [0], [1], [0, 0, 1, 1], [], []>} : vector<16x32xf32>, vector<32x128xf32>, vector<16x128xf32> -> vector<16x128xf32>
    %c0_315 = arith.constant 0 : index
    %c0_316 = arith.constant 0 : index
    %889 = vector.load %arg24[%c0_315, %c0_316] : memref<1x128xf32, #tpu.memory_space<vmem>>, vector<1x128xf32>
    %890 = vector.broadcast %889 : vector<1x128xf32> to vector<16x128xf32>
    %891 = arith.addf %888, %890 : vector<16x128xf32>
    %c0_317 = arith.constant 0 : index
    %c0_318 = arith.constant 0 : index
    %892 = vector.load %arg31[%c0_317, %c0_318] : memref<16x128xf32, #tpu.memory_space<vmem>>, vector<16x128xf32>
    tpu.vector_store %arg31[%c0_317, %c0_318], %891 {strides = array<i32>} : memref<16x128xf32, #tpu.memory_space<vmem>>, vector<16x128xf32>,
    return
  }
}

</mosaic_0001>

<llo_original>
// kernel: model_forward.1
$region0: #{model_forward.1}
  #allocation0 [shape = 'u32[]', space=smem, size = 0x4, offset = 0x4, fixed_abs, tag = 'smem constant byte address 0x4 - core index']
  #allocation1 [shape = 'u32[144,128]{1,0:T(1,128)}', space=vmem, size = 0x12000, scoped, tag = 'internal scratch']
  #allocation2 [shape = 'f32[16,32]{1,0:T(8,128)}', space=vmem, size = 0x2000, scoped, tag = 'scratch operand']
  #allocation3 [shape = 'f32[16,64]{1,0:T(8,128)}', space=vmem, size = 0x2000, scoped, tag = 'scratch operand']
  #allocation4 [shape = 'f32[32,256]{1,0:T(8,128)}', space=vmem, size = 0x8000, scoped, tag = 'scratch operand']
  #allocation5 [shape = 'f32[32,256]{1,0:T(8,128)}', space=vmem, size = 0x8000, scoped, tag = 'scratch operand']
  #allocation6 [shape = 'f32[64,256]{1,0:T(8,128)}', space=vmem, size = 0x10000, scoped, tag = 'scratch operand']
  #allocation7 [shape = 'f32[64,256]{1,0:T(8,128)}', space=vmem, size = 0x10000, scoped, tag = 'scratch operand']
  #allocation8 [shape = 'f32[64,256]{1,0:T(8,128)}', space=vmem, size = 0x10000, scoped, tag = 'scratch operand']
  #allocation9 [shape = 'f32[64,32]{1,0:T(8,128)}', space=vmem, size = 0x8000, scoped, tag = 'scratch operand']
  #allocation10 [shape = 's32[6]{0}', space=sflag, size = 0x18, scoped, tag = 'scratch operand']
  #allocation11 [shape = 'f32[1,1]{1,0:T(1,128)S(1)}', space=vmem, size = 0x200, scoped, tag = 'scoped memory for model_forward.1']
  #allocation32 [shape = 's32[]', space=sflag, size = 0x4, offset = 0, fixed_abs, tag = 'sflag constant byte address 0x0 - dummy sync flag']
  #allocation33 [shape = 's32[]', space=sflag, size = 0x4, offset = 0, fixed_abs, tag = 'sflag constant byte address 0x0 - dummy sync flag']
  #allocation34 [shape = 's32[]', space=sflag, size = 0x4, offset = 0, fixed_abs, tag = 'sflag constant byte address 0x0 - dummy sync flag']
  #allocation35 [shape = 's32[]', space=sflag, size = 0x4, offset = 0, fixed_abs, tag = 'sflag constant byte address 0x0 - dummy sync flag']
  #allocation36 [shape = 's32[]', space=sflag, size = 0x4, offset = 0, fixed_abs, tag = 'sflag constant byte address 0x0 - dummy sync flag']
  #allocation37 [shape = 's32[]', space=sflag, size = 0x4, offset = 0, fixed_abs, tag = 'sflag constant byte address 0x0 - dummy sync flag']
  #allocation38 [shape = 'u32[]', space=smem, size = 0x4, offset = 0x44, fixed_abs, tag = 'smem constant byte address 0x44 - assertion arg 0']
  #allocation39 [shape = 'u32[]', space=smem, size = 0x4, offset = 0x48, fixed_abs, tag = 'smem constant byte address 0x48 - assertion arg 1']
  #allocation40 [shape = 's32[]', space=sflag, size = 0x4, offset = 0, fixed_abs, tag = 'sflag constant byte address 0x0 - dummy sync flag']
  %s0 = inlined_call_operand.smem [shape: u32[32], index: -1, kind: input, shape index: {}]
  %s1 = sld [smem:[%s0]]
  %s2 = scalar_lea.smem %s0, 1
  %s3 = sld [smem:[%s2]]
  %s4 = scalar_lea.smem %s0, 2
  %s5 = sld [smem:[%s4]]
  %s6 = scalar_lea.smem %s0, 3
  %s7 = sld [smem:[%s6]]
  %s8 = scalar_lea.smem %s0, 4
  %s9 = sld [smem:[%s8]]
  %s10 = scalar_lea.smem %s0, 5
  %s11 = sld [smem:[%s10]]
  %s12 = scalar_lea.smem %s0, 6
  %s13 = sld [smem:[%s12]]
  %s14 = scalar_lea.smem %s0, 7
  %s15 = sld [smem:[%s14]]
  %s16 = scalar_lea.smem %s0, 8
  %s17 = sld [smem:[%s16]]
  %s18 = scalar_lea.smem %s0, 9
  %s19 = sld [smem:[%s18]]
  %s20 = scalar_lea.smem %s0, 10
  %s21 = sld [smem:[%s20]]
  %s22 = scalar_lea.smem %s0, 11
  %s23 = sld [smem:[%s22]]
  %s24 = scalar_lea.smem %s0, 12
  %s25 = sld [smem:[%s24]]
  %s26 = scalar_lea.smem %s0, 13
  %s27 = sld [smem:[%s26]]
  %s28 = scalar_lea.smem %s0, 14
  %s29 = sld [smem:[%s28]]
  %s30 = scalar_lea.smem %s0, 15
  %s31 = sld [smem:[%s30]]
  %s32 = scalar_lea.smem %s0, 16
  %s33 = sld [smem:[%s32]]
  %s34 = scalar_lea.smem %s0, 17
  %s35 = sld [smem:[%s34]]
  %s36 = scalar_lea.smem %s0, 18
  %s37 = sld [smem:[%s36]]
  %s38 = scalar_lea.smem %s0, 19
  %s39 = sld [smem:[%s38]]
  %s40 = scalar_lea.smem %s0, 20
  %s41 = sld [smem:[%s40]]
  %s42 = scalar_lea.smem %s0, 21
  %s43 = sld [smem:[%s42]]
  %s44 = scalar_lea.smem %s0, 22
  %s45 = sld [smem:[%s44]]
  %s46 = scalar_lea.smem %s0, 23
  %s47 = sld [smem:[%s46]]
  %s48 = scalar_lea.smem %s0, 24
  %s49 = sld [smem:[%s48]]
  %s50 = scalar_lea.smem %s0, 25
  %s51 = sld [smem:[%s50]]
  %s52 = scalar_lea.smem %s0, 26
  %s53 = sld [smem:[%s52]]
  %s54 = scalar_lea.smem %s0, 27
  %s55 = sld [smem:[%s54]]
  %s56 = scalar_lea.smem %s0, 28
  %s57 = sld [smem:[%s56]]
  %s58 = scalar_lea.smem %s0, 29
  %s59 = sld [smem:[%s58]]
  %s60 = scalar_lea.smem %s0, 30
  %s61 = sld [smem:[%s60]]
  %s62 = scalar_lea.smem %s0, 31
  %s63 = sld [smem:[%s62]]
  %s64 = sld [smem:[#allocation0]]
  $region336: #{model_forward.1} parent=0
    _
  %s66 = ssub.s32 1, %s64
  %s67 = scalar_select 0, %s66, %s64
  %v68 = vstv %s33
  %69 = vst [vmem:[#allocation11] sm:$0x1] %v68
  $region1: #{model_forward.1} parent=0
    #allocation12 [shape = 'u8[16384]{0}', space=vmem, size = 0x4000, scoped, tag = 'input window, operand 3, single buffered']
    #allocation13 [shape = 's32[1]{0}', space=sflag, size = 0x4, scoped, tag = 'scoped memory for model_forward.1']
    #allocation14 [shape = 'u8[16384]{0}', space=vmem, size = 0x4000, scoped, tag = 'input window, operand 5, single buffered']
    #allocation15 [shape = 's32[1]{0}', space=sflag, size = 0x4, scoped, tag = 'scoped memory for model_forward.1']
    #allocation16 [shape = 'u8[16384]{0}', space=vmem, size = 0x4000, scoped, tag = 'input window, operand 6, single buffered']
    #allocation17 [shape = 'u8[512]{0}', space=vmem, size = 0x400, scoped, tag = 'input window, operand 7, single buffered']
    #allocation18 [shape = 's32[1]{0}', space=sflag, size = 0x4, scoped, tag = 'scoped memory for model_forward.1']
    #allocation19 [shape = 'u8[512]{0}', space=vmem, size = 0x400, scoped, tag = 'input window, operand 9, single buffered']
    #allocation20 [shape = 'u8[16384]{0}', space=vmem, size = 0x4000, scoped, tag = 'input window, operand 10, single buffered']
    #allocation21 [shape = 's32[1]{0}', space=sflag, size = 0x4, scoped, tag = 'scoped memory for model_forward.1']
    #allocation22 [shape = 'u8[512]{0}', space=vmem, size = 0x400, scoped, tag = 'input window, operand 11, single buffered']
    #allocation23 [shape = 'u8[512]{0}', space=vmem, size = 0x400, scoped, tag = 'input window, operand 14, single buffered']
    #allocation24 [shape = 's32[1]{0}', space=sflag, size = 0x4, scoped, tag = 'scoped memory for model_forward.1']
    #allocation25 [shape = 'u8[512]{0}', space=vmem, size = 0x400, scoped, tag = 'input window, operand 15, single buffered']
    #allocation26 [shape = 'u8[1024]{0}', space=vmem, size = 0x400, scoped, tag = 'input window, operand 18, single buffered']
    #allocation27 [shape = 's32[1]{0}', space=sflag, size = 0x4, scoped, tag = 'scoped memory for model_forward.1']
    #allocation28 [shape = 'u8[1024]{0}', space=vmem, size = 0x400, scoped, tag = 'input window, operand 19, single buffered']
    #allocation29 [shape = 'u8[512]{0}', space=vmem, size = 0x400, scoped, tag = 'input window, operand 21, single buffered']
    #allocation30 [shape = 's32[1]{0}', space=sflag, size = 0x4, scoped, tag = 'scoped memory for model_forward.1']
    #allocation31 [shape = 'u8[512]{0}', space=vmem, size = 0x400, scoped, tag = 'input window, operand 22, single buffered']
    %70 = vsyncpa [#allocation13], 0
    %71 = vsyncpa [#allocation15], 0
    %72 = vsyncpa [#allocation18], 0
    %73 = vsyncpa [#allocation21], 0
    %74 = vsyncpa [#allocation24], 0
    %75 = vsyncpa [#allocation27], 0
    %76 = vsyncpa [#allocation30], 0
    // Predicated region
    $region2: #{model_forward.1} parent=1 // pred_check
      _
    $region3: #{model_forward.1} parent=1 // pred_check_branch
      %78 = sbr.rel (0) target = $region5
    $region4: #{model_forward.1} parent=1 // pred_region
      _
    $region5: #{model_forward.1} parent=1 // pred_fallthru
      _
    // Predicated region
    $region6: #{model_forward.1} parent=1 // pred_check
      _
    $region7: #{model_forward.1} parent=1 // pred_check_branch
      %80 = sbr.rel (0) target = $region9
    $region8: #{model_forward.1} parent=1 // pred_region
      _
    $region9: #{model_forward.1} parent=1 // pred_fallthru
      _
    // Predicated region
    $region10: #{model_forward.1} parent=1 // pred_check
      _
    $region11: #{model_forward.1} parent=1 // pred_check_branch
      %82 = sbr.rel (0) target = $region13
    $region12: #{model_forward.1} parent=1 // pred_region
      _
    $region13: #{model_forward.1} parent=1 // pred_fallthru
      _
    // Predicated region
    $region14: #{model_forward.1} parent=1 // pred_check
      _
    $region15: #{model_forward.1} parent=1 // pred_check_branch
      %84 = sbr.rel (0) target = $region17
    $region16: #{model_forward.1} parent=1 // pred_region
      %s86 = ssub.s32 512, 512
      %87 = vsyncadd [#allocation13], %s86
      %s88 = sshll.u32 [#allocation12], 4
      %s89 = int_to_ptr.vmem [resolvable:$true] %s88
      %94 = dma.hbm_to_vmem [thread:$0]  %s7, 512, %s89, [#allocation13], 128, 128, 8
    $region17: #{model_forward.1} parent=1 // pred_fallthru
      _
    // Predicated region
    $region18: #{model_forward.1} parent=1 // pred_check
      _
    $region19: #{model_forward.1} parent=1 // pred_check_branch
      %96 = sbr.rel (0) target = $region21
    $region20: #{model_forward.1} parent=1 // pred_region
      _
    $region21: #{model_forward.1} parent=1 // pred_fallthru
      _
    // Predicated region
    $region22: #{model_forward.1} parent=1 // pred_check
      _
    $region23: #{model_forward.1} parent=1 // pred_check_branch
      %98 = sbr.rel (0) target = $region25
    $region24: #{model_forward.1} parent=1 // pred_region
      %s100 = ssub.s32 512, 512
      %101 = vsyncadd [#allocation15], %s100
      %s102 = sshll.u32 [#allocation14], 4
      %s103 = int_to_ptr.vmem [resolvable:$true] %s102
      %108 = dma.hbm_to_vmem [thread:$0]  %s11, 512, %s103, [#allocation15], 128, 128, 8
    $region25: #{model_forward.1} parent=1 // pred_fallthru
      _
    // Predicated region
    $region26: #{model_forward.1} parent=1 // pred_check
      _
    $region27: #{model_forward.1} parent=1 // pred_check_branch
      %110 = sbr.rel (0) target = $region29
    $region28: #{model_forward.1} parent=1 // pred_region
      %s112 = ssub.s32 512, 512
      %113 = vsyncadd [#allocation15], %s112
      %s114 = sshll.u32 [#allocation16], 4
      %s115 = int_to_ptr.vmem [resolvable:$true] %s114
      %120 = dma.hbm_to_vmem [thread:$0]  %s13, 512, %s115, [#allocation15], 128, 128, 8
    $region29: #{model_forward.1} parent=1 // pred_fallthru
      _
    // Predicated region
    $region30: #{model_forward.1} parent=1 // pred_check
      _
    $region31: #{model_forward.1} parent=1 // pred_check_branch
      %122 = sbr.rel (0) target = $region33
    $region32: #{model_forward.1} parent=1 // pred_region
      %s124 = ssub.s32 16, 16
      %125 = vsyncadd [#allocation18], %s124
      %s127 = sshll.u32 [#allocation17], 4
      %s128 = int_to_ptr.vmem [resolvable:$true] %s127
      %130 = dma.hbm_to_vmem [thread:$0]  %s15, 16, %s128, [#allocation18]
    $region33: #{model_forward.1} parent=1 // pred_fallthru
      _
    // Predicated region
    $region34: #{model_forward.1} parent=1 // pred_check
      _
    $region35: #{model_forward.1} parent=1 // pred_check_branch
      %132 = sbr.rel (0) target = $region37
    $region36: #{model_forward.1} parent=1 // pred_region
      _
    $region37: #{model_forward.1} parent=1 // pred_fallthru
      _
    // Predicated region
    $region38: #{model_forward.1} parent=1 // pred_check
      _
    $region39: #{model_forward.1} parent=1 // pred_check_branch
      %134 = sbr.rel (0) target = $region41
    $region40: #{model_forward.1} parent=1 // pred_region
      %s136 = ssub.s32 16, 16
      %137 = vsyncadd [#allocation18], %s136
      %s139 = sshll.u32 [#allocation19], 4
      %s140 = int_to_ptr.vmem [resolvable:$true] %s139
      %142 = dma.hbm_to_vmem [thread:$0]  %s19, 16, %s140, [#allocation18]
    $region41: #{model_forward.1} parent=1 // pred_fallthru
      _
    // Predicated region
    $region42: #{model_forward.1} parent=1 // pred_check
      _
    $region43: #{model_forward.1} parent=1 // pred_check_branch
      %144 = sbr.rel (0) target = $region45
    $region44: #{model_forward.1} parent=1 // pred_region
      %s146 = ssub.s32 512, 512
      %147 = vsyncadd [#allocation21], %s146
      %s148 = sshll.u32 [#allocation20], 4
      %s149 = int_to_ptr.vmem [resolvable:$true] %s148
      %154 = dma.hbm_to_vmem [thread:$0]  %s21, 512, %s149, [#allocation21], 128, 128, 8
    $region45: #{model_forward.1} parent=1 // pred_fallthru
      _
    // Predicated region
    $region46: #{model_forward.1} parent=1 // pred_check
      _
    $region47: #{model_forward.1} parent=1 // pred_check_branch
      %156 = sbr.rel (0) target = $region49
    $region48: #{model_forward.1} parent=1 // pred_region
      %s158 = ssub.s32 16, 16
      %159 = vsyncadd [#allocation21], %s158
      %s161 = sshll.u32 [#allocation22], 4
      %s162 = int_to_ptr.vmem [resolvable:$true] %s161
      %164 = dma.hbm_to_vmem [thread:$0]  %s23, 16, %s162, [#allocation21]
    $region49: #{model_forward.1} parent=1 // pred_fallthru
      _
    // Predicated region
    $region50: #{model_forward.1} parent=1 // pred_check
      _
    $region51: #{model_forward.1} parent=1 // pred_check_branch
      %166 = sbr.rel (0) target = $region53
    $region52: #{model_forward.1} parent=1 // pred_region
      _
    $region53: #{model_forward.1} parent=1 // pred_fallthru
      _
    // Predicated region
    $region54: #{model_forward.1} parent=1 // pred_check
      _
    $region55: #{model_forward.1} parent=1 // pred_check_branch
      %168 = sbr.rel (0) target = $region57
    $region56: #{model_forward.1} parent=1 // pred_region
      _
    $region57: #{model_forward.1} parent=1 // pred_fallthru
      _
    // Predicated region
    $region58: #{model_forward.1} parent=1 // pred_check
      _
    $region59: #{model_forward.1} parent=1 // pred_check_branch
      %170 = sbr.rel (0) target = $region61
    $region60: #{model_forward.1} parent=1 // pred_region
      %s172 = ssub.s32 16, 16
      %173 = vsyncadd [#allocation24], %s172
      %s175 = sshll.u32 [#allocation23], 4
      %s176 = int_to_ptr.vmem [resolvable:$true] %s175
      %178 = dma.hbm_to_vmem [thread:$0]  %s29, 16, %s176, [#allocation24]
    $region61: #{model_forward.1} parent=1 // pred_fallthru
      _
    // Predicated region
    $region62: #{model_forward.1} parent=1 // pred_check
      _
    $region63: #{model_forward.1} parent=1 // pred_check_branch
      %180 = sbr.rel (0) target = $region65
    $region64: #{model_forward.1} parent=1 // pred_region
      %s182 = ssub.s32 16, 16
      %183 = vsyncadd [#allocation24], %s182
      %s185 = sshll.u32 [#allocation25], 4
      %s186 = int_to_ptr.vmem [resolvable:$true] %s185
      %188 = dma.hbm_to_vmem [thread:$0]  %s31, 16, %s186, [#allocation24]
    $region65: #{model_forward.1} parent=1 // pred_fallthru
      _
    // Predicated region
    $region66: #{model_forward.1} parent=1 // pred_check
      _
    $region67: #{model_forward.1} parent=1 // pred_check_branch
      %190 = sbr.rel (0) target = $region69
    $region68: #{model_forward.1} parent=1 // pred_region
      _
    $region69: #{model_forward.1} parent=1 // pred_fallthru
      _
    // Predicated region
    $region70: #{model_forward.1} parent=1 // pred_check
      _
    $region71: #{model_forward.1} parent=1 // pred_check_branch
      %192 = sbr.rel (0) target = $region73
    $region72: #{model_forward.1} parent=1 // pred_region
      _
    $region73: #{model_forward.1} parent=1 // pred_fallthru
      _
    // Predicated region
    $region74: #{model_forward.1} parent=1 // pred_check
      _
    $region75: #{model_forward.1} parent=1 // pred_check_branch
      %194 = sbr.rel (0) target = $region77
    $region76: #{model_forward.1} parent=1 // pred_region
      %s196 = ssub.s32 32, 32
      %197 = vsyncadd [#allocation27], %s196
      %s199 = sshll.u32 [#allocation26], 4
      %s200 = int_to_ptr.vmem [resolvable:$true] %s199
      %202 = dma.hbm_to_vmem [thread:$0]  %s37, 32, %s200, [#allocation27]
    $region77: #{model_forward.1} parent=1 // pred_fallthru
      _
    // Predicated region
    $region78: #{model_forward.1} parent=1 // pred_check
      _
    $region79: #{model_forward.1} parent=1 // pred_check_branch
      %204 = sbr.rel (0) target = $region81
    $region80: #{model_forward.1} parent=1 // pred_region
      %s206 = ssub.s32 32, 32
      %207 = vsyncadd [#allocation27], %s206
      %s209 = sshll.u32 [#allocation28], 4
      %s210 = int_to_ptr.vmem [resolvable:$true] %s209
      %212 = dma.hbm_to_vmem [thread:$0]  %s39, 32, %s210, [#allocation27]
    $region81: #{model_forward.1} parent=1 // pred_fallthru
      _
    // Predicated region
    $region82: #{model_forward.1} parent=1 // pred_check
      _
    $region83: #{model_forward.1} parent=1 // pred_check_branch
      %214 = sbr.rel (0) target = $region85
    $region84: #{model_forward.1} parent=1 // pred_region
      _
    $region85: #{model_forward.1} parent=1 // pred_fallthru
      _
    // Predicated region
    $region86: #{model_forward.1} parent=1 // pred_check
      _
    $region87: #{model_forward.1} parent=1 // pred_check_branch
      %216 = sbr.rel (0) target = $region89
    $region88: #{model_forward.1} parent=1 // pred_region
      %s218 = ssub.s32 16, 16
      %219 = vsyncadd [#allocation30], %s218
      %s221 = sshll.u32 [#allocation29], 4
      %s222 = int_to_ptr.vmem [resolvable:$true] %s221
      %224 = dma.hbm_to_vmem [thread:$0]  %s43, 16, %s222, [#allocation30]
    $region89: #{model_forward.1} parent=1 // pred_fallthru
      _
    // Predicated region
    $region90: #{model_forward.1} parent=1 // pred_check
      _
    $region91: #{model_forward.1} parent=1 // pred_check_branch
      %226 = sbr.rel (0) target = $region93
    $region92: #{model_forward.1} parent=1 // pred_region
      %s228 = ssub.s32 16, 16
      %229 = vsyncadd [#allocation30], %s228
      %s231 = sshll.u32 [#allocation31], 4
      %s232 = int_to_ptr.vmem [resolvable:$true] %s231
      %234 = dma.hbm_to_vmem [thread:$0]  %s45, 16, %s232, [#allocation30]
    $region93: #{model_forward.1} parent=1 // pred_fallthru
      _
    // Predicated region
    $region94: #{model_forward.1} parent=1 // pred_check
      _
    $region95: #{model_forward.1} parent=1 // pred_check_branch
      %236 = sbr.rel (0) target = $region97
    $region96: #{model_forward.1} parent=1 // pred_region
      _
    $region97: #{model_forward.1} parent=1 // pred_fallthru
      _
    // Predicated region
    $region98: #{model_forward.1} parent=1 // pred_check
      _
    $region99: #{model_forward.1} parent=1 // pred_check_branch
      %238 = sbr.rel (0) target = $region101
    $region100: #{model_forward.1} parent=1 // pred_region
      _
    $region101: #{model_forward.1} parent=1 // pred_fallthru
      _
    // Predicated region
    $region102: #{model_forward.1} parent=1 // pred_check
      _
    $region103: #{model_forward.1} parent=1 // pred_check_branch
      %240 = sbr.rel (0) target = $region105
    $region104: #{model_forward.1} parent=1 // pred_region
      %241 = dma.done [#allocation13], 512
    $region105: #{model_forward.1} parent=1 // pred_fallthru
      _
    // Predicated region
    $region106: #{model_forward.1} parent=1 // pred_check
      _
    $region107: #{model_forward.1} parent=1 // pred_check_branch
      %243 = sbr.rel (0) target = $region109
    $region108: #{model_forward.1} parent=1 // pred_region
      %244 = dma.done [#allocation15], 512
    $region109: #{model_forward.1} parent=1 // pred_fallthru
      _
    // Predicated region
    $region110: #{model_forward.1} parent=1 // pred_check
      _
    $region111: #{model_forward.1} parent=1 // pred_check_branch
      %246 = sbr.rel (0) target = $region113
    $region112: #{model_forward.1} parent=1 // pred_region
      %247 = dma.done [#allocation15], 512
    $region113: #{model_forward.1} parent=1 // pred_fallthru
      _
    // Predicated region
    $region114: #{model_forward.1} parent=1 // pred_check
      _
    $region115: #{model_forward.1} parent=1 // pred_check_branch
      %249 = sbr.rel (0) target = $region117
    $region116: #{model_forward.1} parent=1 // pred_region
      %250 = dma.done [#allocation18], 16
    $region117: #{model_forward.1} parent=1 // pred_fallthru
      _
    // Predicated region
    $region118: #{model_forward.1} parent=1 // pred_check
      _
    $region119: #{model_forward.1} parent=1 // pred_check_branch
      %252 = sbr.rel (0) target = $region121
    $region120: #{model_forward.1} parent=1 // pred_region
      %253 = dma.done [#allocation18], 16
    $region121: #{model_forward.1} parent=1 // pred_fallthru
      _
    // Predicated region
    $region122: #{model_forward.1} parent=1 // pred_check
      _
    $region123: #{model_forward.1} parent=1 // pred_check_branch
      %255 = sbr.rel (0) target = $region125
    $region124: #{model_forward.1} parent=1 // pred_region
      %256 = dma.done [#allocation21], 512
    $region125: #{model_forward.1} parent=1 // pred_fallthru
      _
    // Predicated region
    $region126: #{model_forward.1} parent=1 // pred_check
      _
    $region127: #{model_forward.1} parent=1 // pred_check_branch
      %258 = sbr.rel (0) target = $region129
    $region128: #{model_forward.1} parent=1 // pred_region
      %259 = dma.done [#allocation21], 16
    $region129: #{model_forward.1} parent=1 // pred_fallthru
      _
    // Predicated region
    $region130: #{model_forward.1} parent=1 // pred_check
      _
    $region131: #{model_forward.1} parent=1 // pred_check_branch
      %261 = sbr.rel (0) target = $region133
    $region132: #{model_forward.1} parent=1 // pred_region
      %262 = dma.done [#allocation24], 16
    $region133: #{model_forward.1} parent=1 // pred_fallthru
      _
    // Predicated region
    $region134: #{model_forward.1} parent=1 // pred_check
      _
    $region135: #{model_forward.1} parent=1 // pred_check_branch
      %264 = sbr.rel (0) target = $region137
    $region136: #{model_forward.1} parent=1 // pred_region
      %265 = dma.done [#allocation24], 16
    $region137: #{model_forward.1} parent=1 // pred_fallthru
      _
    // Predicated region
    $region138: #{model_forward.1} parent=1 // pred_check
      _
    $region139: #{model_forward.1} parent=1 // pred_check_branch
      %267 = sbr.rel (0) target = $region141
    $region140: #{model_forward.1} parent=1 // pred_region
      %268 = dma.done [#allocation27], 32
    $region141: #{model_forward.1} parent=1 // pred_fallthru
      _
    // Predicated region
    $region142: #{model_forward.1} parent=1 // pred_check
      _
    $region143: #{model_forward.1} parent=1 // pred_check_branch
      %270 = sbr.rel (0) target = $region145
    $region144: #{model_forward.1} parent=1 // pred_region
      %271 = dma.done [#allocation27], 32
    $region145: #{model_forward.1} parent=1 // pred_fallthru
      _
    // Predicated region
    $region146: #{model_forward.1} parent=1 // pred_check
      _
    $region147: #{model_forward.1} parent=1 // pred_check_branch
      %273 = sbr.rel (0) target = $region149
    $region148: #{model_forward.1} parent=1 // pred_region
      %274 = dma.done [#allocation30], 16
    $region149: #{model_forward.1} parent=1 // pred_fallthru
      _
    // Predicated region
    $region150: #{model_forward.1} parent=1 // pred_check
      _
    $region151: #{model_forward.1} parent=1 // pred_check_branch
      %276 = sbr.rel (0) target = $region153
    $region152: #{model_forward.1} parent=1 // pred_region
      %277 = dma.done [#allocation30], 16
    $region153: #{model_forward.1} parent=1 // pred_fallthru
      _
    %p279 = scmp.lt.u32.totalorder 64, 8
    %p280 = pneg %p279
    // Predicated region
    $region154: #{model_forward.1} parent=1 // pred_check
      _
    $region155: #{model_forward.1} parent=1 // pred_check_branch
      %282 = sbr.rel (%p279) target = $region157
    $region156: #{model_forward.1} parent=1 // pred_region
      %s298 = sand.u32 64, 7
      %p299 = scmp.eq.s32.totalorder %s298, 0
      // Predicated region
      $region169: #{model_forward.1} parent=156 // pred_check
        %p300 = pneg %p299
      $region170: #{model_forward.1} parent=156 // pred_check_branch
        %302 = sbr.rel (%p300) target = $region172
      $region171: #{model_forward.1} parent=156 // pred_region
        loop: start=0, step=1, limit=1
        $region173: #{model_forward.1} parent=171 // loop_pre_header
          _
        $region174: #{model_forward.1} parent=171 // loop_header
          %s304 = sphi 0, %s308
          %p305 = scmp.ge.s32.totalorder %s304, 1
          %s309 = sphi %s51, %s51
          %s310 = sphi [#allocation4], [#allocation4]
        $region175: #{model_forward.1} parent=171 // loop_header_branch
          %307 = sbr.rel (%p305) target = $region179
        $region176: #{model_forward.1} parent=171 // loop_body
          %v311 = vld [vmem:[%s309] sm:$0xff]
          %312 = vst [vmem:[%s310] sm:$0xff] %v311
          %v313 = vld [vmem:[%s309 + $0x8] sm:$0xff]
          %314 = vst [vmem:[%s310 + $0x8] sm:$0xff] %v313
          %v315 = vld [vmem:[%s309 + $0x10] sm:$0xff]
          %316 = vst [vmem:[%s310 + $0x10] sm:$0xff] %v315
          %v317 = vld [vmem:[%s309 + $0x18] sm:$0xff]
          %318 = vst [vmem:[%s310 + $0x18] sm:$0xff] %v317
          %v319 = vld [vmem:[%s309 + $0x20] sm:$0xff]
          %320 = vst [vmem:[%s310 + $0x20] sm:$0xff] %v319
          %v321 = vld [vmem:[%s309 + $0x28] sm:$0xff]
          %322 = vst [vmem:[%s310 + $0x28] sm:$0xff] %v321
          %v323 = vld [vmem:[%s309 + $0x30] sm:$0xff]
          %324 = vst [vmem:[%s310 + $0x30] sm:$0xff] %v323
          %v325 = vld [vmem:[%s309 + $0x38] sm:$0xff]
          %326 = vst [vmem:[%s310 + $0x38] sm:$0xff] %v325
        $region177: #{model_forward.1} parent=171 // loop_footer
          %s308 = sadd.s32 1, %s304
        $region178: #{model_forward.1} parent=171 // loop_footer_branch
          %303 = sbr.rel target = $region174
        $region179: #{model_forward.1} parent=171 // loop_exit
          _
      $region172: #{model_forward.1} parent=156 // pred_fallthru
        _
      %p327 = pneg %p299
      // Predicated region
      $region180: #{model_forward.1} parent=156 // pred_check
        _
      $region181: #{model_forward.1} parent=156 // pred_check_branch
        %329 = sbr.rel (%p299) target = $region183
      $region182: #{model_forward.1} parent=156 // pred_region
        %s330 = sand.u32 64, 7
      $region183: #{model_forward.1} parent=156 // pred_fallthru
        _
    $region157: #{model_forward.1} parent=1 // pred_fallthru
      _
    // Predicated region
    $region158: #{model_forward.1} parent=1 // pred_check
      %p283 = pneg %p279
    $region159: #{model_forward.1} parent=1 // pred_check_branch
      %285 = sbr.rel (%p283) target = $region161
    $region160: #{model_forward.1} parent=1 // pred_region
      %s286 = sshll.u32 1, 64
      %s287 = ssub.s32 %s286, 1
      loop: start=0, step=1, limit=1
      $region162: #{model_forward.1} parent=160 // loop_pre_header
        _
      $region163: #{model_forward.1} parent=160 // loop_header
        %s289 = sphi 0, %s293
        %p290 = scmp.ge.s32.totalorder %s289, 1
        %s294 = sphi %s51, %s51
        %s295 = sphi [#allocation4], [#allocation4]
      $region164: #{model_forward.1} parent=160 // loop_header_branch
        %292 = sbr.rel (%p290) target = $region168
      $region165: #{model_forward.1} parent=160 // loop_body
        %v296 = vld [vmem:[%s294] sm:%s287]
        %297 = vst [vmem:[%s295] sm:%s287] %v296
      $region166: #{model_forward.1} parent=160 // loop_footer
        %s293 = sadd.s32 1, %s289
      $region167: #{model_forward.1} parent=160 // loop_footer_branch
        %288 = sbr.rel target = $region163
      $region168: #{model_forward.1} parent=160 // loop_exit
        _
    $region161: #{model_forward.1} parent=1 // pred_fallthru
      _
    // Predicated region
    $region184: #{model_forward.1} parent=1 // pred_check
      _
    $region185: #{model_forward.1} parent=1 // pred_check_branch
      %333 = sbr.rel (0) target = $region187
    $region186: #{model_forward.1} parent=1 // pred_region
      %334 = vsyncadd [#allocation10], 1024
    $region187: #{model_forward.1} parent=1 // pred_fallthru
      _
    %s335 = scalar_lea.sflag [#allocation10], 1
    %p337 = scmp.lt.u32.totalorder 64, 8
    %p338 = pneg %p337
    // Predicated region
    $region188: #{model_forward.1} parent=1 // pred_check
      _
    $region189: #{model_forward.1} parent=1 // pred_check_branch
      %340 = sbr.rel (%p337) target = $region191
    $region190: #{model_forward.1} parent=1 // pred_region
      %s356 = sand.u32 64, 7
      %p357 = scmp.eq.s32.totalorder %s356, 0
      // Predicated region
      $region203: #{model_forward.1} parent=190 // pred_check
        %p358 = pneg %p357
      $region204: #{model_forward.1} parent=190 // pred_check_branch
        %360 = sbr.rel (%p358) target = $region206
      $region205: #{model_forward.1} parent=190 // pred_region
        loop: start=0, step=1, limit=1
        $region207: #{model_forward.1} parent=205 // loop_pre_header
          _
        $region208: #{model_forward.1} parent=205 // loop_header
          %s362 = sphi 0, %s366
          %p363 = scmp.ge.s32.totalorder %s362, 1
          %s367 = sphi %s53, %s53
          %s368 = sphi [#allocation5], [#allocation5]
        $region209: #{model_forward.1} parent=205 // loop_header_branch
          %365 = sbr.rel (%p363) target = $region213
        $region210: #{model_forward.1} parent=205 // loop_body
          %v369 = vld [vmem:[%s367] sm:$0xff]
          %370 = vst [vmem:[%s368] sm:$0xff] %v369
          %v371 = vld [vmem:[%s367 + $0x8] sm:$0xff]
          %372 = vst [vmem:[%s368 + $0x8] sm:$0xff] %v371
          %v373 = vld [vmem:[%s367 + $0x10] sm:$0xff]
          %374 = vst [vmem:[%s368 + $0x10] sm:$0xff] %v373
          %v375 = vld [vmem:[%s367 + $0x18] sm:$0xff]
          %376 = vst [vmem:[%s368 + $0x18] sm:$0xff] %v375
          %v377 = vld [vmem:[%s367 + $0x20] sm:$0xff]
          %378 = vst [vmem:[%s368 + $0x20] sm:$0xff] %v377
          %v379 = vld [vmem:[%s367 + $0x28] sm:$0xff]
          %380 = vst [vmem:[%s368 + $0x28] sm:$0xff] %v379
          %v381 = vld [vmem:[%s367 + $0x30] sm:$0xff]
          %382 = vst [vmem:[%s368 + $0x30] sm:$0xff] %v381
          %v383 = vld [vmem:[%s367 + $0x38] sm:$0xff]
          %384 = vst [vmem:[%s368 + $0x38] sm:$0xff] %v383
        $region211: #{model_forward.1} parent=205 // loop_footer
          %s366 = sadd.s32 1, %s362
        $region212: #{model_forward.1} parent=205 // loop_footer_branch
          %361 = sbr.rel target = $region208
        $region213: #{model_forward.1} parent=205 // loop_exit
          _
      $region206: #{model_forward.1} parent=190 // pred_fallthru
        _
      %p385 = pneg %p357
      // Predicated region
      $region214: #{model_forward.1} parent=190 // pred_check
        _
      $region215: #{model_forward.1} parent=190 // pred_check_branch
        %387 = sbr.rel (%p357) target = $region217
      $region216: #{model_forward.1} parent=190 // pred_region
        %s388 = sand.u32 64, 7
      $region217: #{model_forward.1} parent=190 // pred_fallthru
        _
    $region191: #{model_forward.1} parent=1 // pred_fallthru
      _
    // Predicated region
    $region192: #{model_forward.1} parent=1 // pred_check
      %p341 = pneg %p337
    $region193: #{model_forward.1} parent=1 // pred_check_branch
      %343 = sbr.rel (%p341) target = $region195
    $region194: #{model_forward.1} parent=1 // pred_region
      %s344 = sshll.u32 1, 64
      %s345 = ssub.s32 %s344, 1
      loop: start=0, step=1, limit=1
      $region196: #{model_forward.1} parent=194 // loop_pre_header
        _
      $region197: #{model_forward.1} parent=194 // loop_header
        %s347 = sphi 0, %s351
        %p348 = scmp.ge.s32.totalorder %s347, 1
        %s352 = sphi %s53, %s53
        %s353 = sphi [#allocation5], [#allocation5]
      $region198: #{model_forward.1} parent=194 // loop_header_branch
        %350 = sbr.rel (%p348) target = $region202
      $region199: #{model_forward.1} parent=194 // loop_body
        %v354 = vld [vmem:[%s352] sm:%s345]
        %355 = vst [vmem:[%s353] sm:%s345] %v354
      $region200: #{model_forward.1} parent=194 // loop_footer
        %s351 = sadd.s32 1, %s347
      $region201: #{model_forward.1} parent=194 // loop_footer_branch
        %346 = sbr.rel target = $region197
      $region202: #{model_forward.1} parent=194 // loop_exit
        _
    $region195: #{model_forward.1} parent=1 // pred_fallthru
      _
    // Predicated region
    $region218: #{model_forward.1} parent=1 // pred_check
      _
    $region219: #{model_forward.1} parent=1 // pred_check_branch
      %391 = sbr.rel (0) target = $region221
    $region220: #{model_forward.1} parent=1 // pred_region
      %392 = vsyncadd %s335, 1024
    $region221: #{model_forward.1} parent=1 // pred_fallthru
      _
    %s393 = scalar_lea.sflag [#allocation10], 2
    %p395 = scmp.lt.u32.totalorder 128, 8
    %p396 = pneg %p395
    // Predicated region
    $region222: #{model_forward.1} parent=1 // pred_check
      _
    $region223: #{model_forward.1} parent=1 // pred_check_branch
      %398 = sbr.rel (%p395) target = $region225
    $region224: #{model_forward.1} parent=1 // pred_region
      %s414 = sand.u32 128, 7
      %p415 = scmp.eq.s32.totalorder %s414, 0
      // Predicated region
      $region237: #{model_forward.1} parent=224 // pred_check
        %p416 = pneg %p415
      $region238: #{model_forward.1} parent=224 // pred_check_branch
        %418 = sbr.rel (%p416) target = $region240
      $region239: #{model_forward.1} parent=224 // pred_region
        loop: start=0, step=1, limit=1
        $region241: #{model_forward.1} parent=239 // loop_pre_header
          _
        $region242: #{model_forward.1} parent=239 // loop_header
          %s420 = sphi 0, %s424
          %p421 = scmp.ge.s32.totalorder %s420, 1
          %s425 = sphi %s55, %s55
          %s426 = sphi [#allocation6], [#allocation6]
        $region243: #{model_forward.1} parent=239 // loop_header_branch
          %423 = sbr.rel (%p421) target = $region247
        $region244: #{model_forward.1} parent=239 // loop_body
          %v427 = vld [vmem:[%s425] sm:$0xff]
          %428 = vst [vmem:[%s426] sm:$0xff] %v427
          %v429 = vld [vmem:[%s425 + $0x8] sm:$0xff]
          %430 = vst [vmem:[%s426 + $0x8] sm:$0xff] %v429
          %v431 = vld [vmem:[%s425 + $0x10] sm:$0xff]
          %432 = vst [vmem:[%s426 + $0x10] sm:$0xff] %v431
          %v433 = vld [vmem:[%s425 + $0x18] sm:$0xff]
          %434 = vst [vmem:[%s426 + $0x18] sm:$0xff] %v433
          %v435 = vld [vmem:[%s425 + $0x20] sm:$0xff]
          %436 = vst [vmem:[%s426 + $0x20] sm:$0xff] %v435
          %v437 = vld [vmem:[%s425 + $0x28] sm:$0xff]
          %438 = vst [vmem:[%s426 + $0x28] sm:$0xff] %v437
          %v439 = vld [vmem:[%s425 + $0x30] sm:$0xff]
          %440 = vst [vmem:[%s426 + $0x30] sm:$0xff] %v439
          %v441 = vld [vmem:[%s425 + $0x38] sm:$0xff]
          %442 = vst [vmem:[%s426 + $0x38] sm:$0xff] %v441
          %v443 = vld [vmem:[%s425 + $0x40] sm:$0xff]
          %444 = vst [vmem:[%s426 + $0x40] sm:$0xff] %v443
          %v445 = vld [vmem:[%s425 + $0x48] sm:$0xff]
          %446 = vst [vmem:[%s426 + $0x48] sm:$0xff] %v445
          %v447 = vld [vmem:[%s425 + $0x50] sm:$0xff]
          %448 = vst [vmem:[%s426 + $0x50] sm:$0xff] %v447
          %v449 = vld [vmem:[%s425 + $0x58] sm:$0xff]
          %450 = vst [vmem:[%s426 + $0x58] sm:$0xff] %v449
          %v451 = vld [vmem:[%s425 + $0x60] sm:$0xff]
          %452 = vst [vmem:[%s426 + $0x60] sm:$0xff] %v451
          %v453 = vld [vmem:[%s425 + $0x68] sm:$0xff]
          %454 = vst [vmem:[%s426 + $0x68] sm:$0xff] %v453
          %v455 = vld [vmem:[%s425 + $0x70] sm:$0xff]
          %456 = vst [vmem:[%s426 + $0x70] sm:$0xff] %v455
          %v457 = vld [vmem:[%s425 + $0x78] sm:$0xff]
          %458 = vst [vmem:[%s426 + $0x78] sm:$0xff] %v457
        $region245: #{model_forward.1} parent=239 // loop_footer
          %s424 = sadd.s32 1, %s420
        $region246: #{model_forward.1} parent=239 // loop_footer_branch
          %419 = sbr.rel target = $region242
        $region247: #{model_forward.1} parent=239 // loop_exit
          _
      $region240: #{model_forward.1} parent=224 // pred_fallthru
        _
      %p459 = pneg %p415
      // Predicated region
      $region248: #{model_forward.1} parent=224 // pred_check
        _
      $region249: #{model_forward.1} parent=224 // pred_check_branch
        %461 = sbr.rel (%p415) target = $region251
      $region250: #{model_forward.1} parent=224 // pred_region
        %s462 = sand.u32 128, 7
      $region251: #{model_forward.1} parent=224 // pred_fallthru
        _
    $region225: #{model_forward.1} parent=1 // pred_fallthru
      _
    // Predicated region
    $region226: #{model_forward.1} parent=1 // pred_check
      %p399 = pneg %p395
    $region227: #{model_forward.1} parent=1 // pred_check_branch
      %401 = sbr.rel (%p399) target = $region229
    $region228: #{model_forward.1} parent=1 // pred_region
      %s402 = sshll.u32 1, 128
      %s403 = ssub.s32 %s402, 1
      loop: start=0, step=1, limit=1
      $region230: #{model_forward.1} parent=228 // loop_pre_header
        _
      $region231: #{model_forward.1} parent=228 // loop_header
        %s405 = sphi 0, %s409
        %p406 = scmp.ge.s32.totalorder %s405, 1
        %s410 = sphi %s55, %s55
        %s411 = sphi [#allocation6], [#allocation6]
      $region232: #{model_forward.1} parent=228 // loop_header_branch
        %408 = sbr.rel (%p406) target = $region236
      $region233: #{model_forward.1} parent=228 // loop_body
        %v412 = vld [vmem:[%s410] sm:%s403]
        %413 = vst [vmem:[%s411] sm:%s403] %v412
      $region234: #{model_forward.1} parent=228 // loop_footer
        %s409 = sadd.s32 1, %s405
      $region235: #{model_forward.1} parent=228 // loop_footer_branch
        %404 = sbr.rel target = $region231
      $region236: #{model_forward.1} parent=228 // loop_exit
        _
    $region229: #{model_forward.1} parent=1 // pred_fallthru
      _
    // Predicated region
    $region252: #{model_forward.1} parent=1 // pred_check
      _
    $region253: #{model_forward.1} parent=1 // pred_check_branch
      %465 = sbr.rel (0) target = $region255
    $region254: #{model_forward.1} parent=1 // pred_region
      %466 = vsyncadd %s393, 2048
    $region255: #{model_forward.1} parent=1 // pred_fallthru
      _
    %s467 = scalar_lea.sflag [#allocation10], 3
    %p469 = scmp.lt.u32.totalorder 128, 8
    %p470 = pneg %p469
    // Predicated region
    $region256: #{model_forward.1} parent=1 // pred_check
      _
    $region257: #{model_forward.1} parent=1 // pred_check_branch
      %472 = sbr.rel (%p469) target = $region259
    $region258: #{model_forward.1} parent=1 // pred_region
      %s488 = sand.u32 128, 7
      %p489 = scmp.eq.s32.totalorder %s488, 0
      // Predicated region
      $region271: #{model_forward.1} parent=258 // pred_check
        %p490 = pneg %p489
      $region272: #{model_forward.1} parent=258 // pred_check_branch
        %492 = sbr.rel (%p490) target = $region274
      $region273: #{model_forward.1} parent=258 // pred_region
        loop: start=0, step=1, limit=1
        $region275: #{model_forward.1} parent=273 // loop_pre_header
          _
        $region276: #{model_forward.1} parent=273 // loop_header
          %s494 = sphi 0, %s498
          %p495 = scmp.ge.s32.totalorder %s494, 1
          %s499 = sphi %s57, %s57
          %s500 = sphi [#allocation7], [#allocation7]
        $region277: #{model_forward.1} parent=273 // loop_header_branch
          %497 = sbr.rel (%p495) target = $region281
        $region278: #{model_forward.1} parent=273 // loop_body
          %v501 = vld [vmem:[%s499] sm:$0xff]
          %502 = vst [vmem:[%s500] sm:$0xff] %v501
          %v503 = vld [vmem:[%s499 + $0x8] sm:$0xff]
          %504 = vst [vmem:[%s500 + $0x8] sm:$0xff] %v503
          %v505 = vld [vmem:[%s499 + $0x10] sm:$0xff]
          %506 = vst [vmem:[%s500 + $0x10] sm:$0xff] %v505
          %v507 = vld [vmem:[%s499 + $0x18] sm:$0xff]
          %508 = vst [vmem:[%s500 + $0x18] sm:$0xff] %v507
          %v509 = vld [vmem:[%s499 + $0x20] sm:$0xff]
          %510 = vst [vmem:[%s500 + $0x20] sm:$0xff] %v509
          %v511 = vld [vmem:[%s499 + $0x28] sm:$0xff]
          %512 = vst [vmem:[%s500 + $0x28] sm:$0xff] %v511
          %v513 = vld [vmem:[%s499 + $0x30] sm:$0xff]
          %514 = vst [vmem:[%s500 + $0x30] sm:$0xff] %v513
          %v515 = vld [vmem:[%s499 + $0x38] sm:$0xff]
          %516 = vst [vmem:[%s500 + $0x38] sm:$0xff] %v515
          %v517 = vld [vmem:[%s499 + $0x40] sm:$0xff]
          %518 = vst [vmem:[%s500 + $0x40] sm:$0xff] %v517
          %v519 = vld [vmem:[%s499 + $0x48] sm:$0xff]
          %520 = vst [vmem:[%s500 + $0x48] sm:$0xff] %v519
          %v521 = vld [vmem:[%s499 + $0x50] sm:$0xff]
          %522 = vst [vmem:[%s500 + $0x50] sm:$0xff] %v521
          %v523 = vld [vmem:[%s499 + $0x58] sm:$0xff]
          %524 = vst [vmem:[%s500 + $0x58] sm:$0xff] %v523
          %v525 = vld [vmem:[%s499 + $0x60] sm:$0xff]
          %526 = vst [vmem:[%s500 + $0x60] sm:$0xff] %v525
          %v527 = vld [vmem:[%s499 + $0x68] sm:$0xff]
          %528 = vst [vmem:[%s500 + $0x68] sm:$0xff] %v527
          %v529 = vld [vmem:[%s499 + $0x70] sm:$0xff]
          %530 = vst [vmem:[%s500 + $0x70] sm:$0xff] %v529
          %v531 = vld [vmem:[%s499 + $0x78] sm:$0xff]
          %532 = vst [vmem:[%s500 + $0x78] sm:$0xff] %v531
        $region279: #{model_forward.1} parent=273 // loop_footer
          %s498 = sadd.s32 1, %s494
        $region280: #{model_forward.1} parent=273 // loop_footer_branch
          %493 = sbr.rel target = $region276
        $region281: #{model_forward.1} parent=273 // loop_exit
          _
      $region274: #{model_forward.1} parent=258 // pred_fallthru
        _
      %p533 = pneg %p489
      // Predicated region
      $region282: #{model_forward.1} parent=258 // pred_check
        _
      $region283: #{model_forward.1} parent=258 // pred_check_branch
        %535 = sbr.rel (%p489) target = $region285
      $region284: #{model_forward.1} parent=258 // pred_region
        %s536 = sand.u32 128, 7
      $region285: #{model_forward.1} parent=258 // pred_fallthru
        _
    $region259: #{model_forward.1} parent=1 // pred_fallthru
      _
    // Predicated region
    $region260: #{model_forward.1} parent=1 // pred_check
      %p473 = pneg %p469
    $region261: #{model_forward.1} parent=1 // pred_check_branch
      %475 = sbr.rel (%p473) target = $region263
    $region262: #{model_forward.1} parent=1 // pred_region
      %s476 = sshll.u32 1, 128
      %s477 = ssub.s32 %s476, 1
      loop: start=0, step=1, limit=1
      $region264: #{model_forward.1} parent=262 // loop_pre_header
        _
      $region265: #{model_forward.1} parent=262 // loop_header
        %s479 = sphi 0, %s483
        %p480 = scmp.ge.s32.totalorder %s479, 1
        %s484 = sphi %s57, %s57
        %s485 = sphi [#allocation7], [#allocation7]
      $region266: #{model_forward.1} parent=262 // loop_header_branch
        %482 = sbr.rel (%p480) target = $region270
      $region267: #{model_forward.1} parent=262 // loop_body
        %v486 = vld [vmem:[%s484] sm:%s477]
        %487 = vst [vmem:[%s485] sm:%s477] %v486
      $region268: #{model_forward.1} parent=262 // loop_footer
        %s483 = sadd.s32 1, %s479
      $region269: #{model_forward.1} parent=262 // loop_footer_branch
        %478 = sbr.rel target = $region265
      $region270: #{model_forward.1} parent=262 // loop_exit
        _
    $region263: #{model_forward.1} parent=1 // pred_fallthru
      _
    // Predicated region
    $region286: #{model_forward.1} parent=1 // pred_check
      _
    $region287: #{model_forward.1} parent=1 // pred_check_branch
      %539 = sbr.rel (0) target = $region289
    $region288: #{model_forward.1} parent=1 // pred_region
      %540 = vsyncadd %s467, 2048
    $region289: #{model_forward.1} parent=1 // pred_fallthru
      _
    %s541 = scalar_lea.sflag [#allocation10], 4
    // Predicated region
    $region290: #{model_forward.1} parent=1 // pred_check
      _
    $region291: #{model_forward.1} parent=1 // pred_check_branch
      %543 = sbr.rel target = $region293
    $region292: #{model_forward.1} parent=1 // pred_region
      %544 = sst [smem:[#allocation38]] [#allocation37]
      %545 = sst [smem:[#allocation39]] [#allocation36]
    $region293: #{model_forward.1} parent=1 // pred_fallthru
      _
    %547 = shalt.err (0)
    %s549 = sshll.u32 [#allocation8], 4
    %s550 = int_to_ptr.vmem [resolvable:$true] %s549
    %552 = dma.hbm_to_vmem [thread:$0]  %s59, 2048, %s550, %s541
    %s553 = scalar_lea.sflag [#allocation10], 5
    %p555 = scmp.lt.u32.totalorder 64, 8
    %p556 = pneg %p555
    // Predicated region
    $region294: #{model_forward.1} parent=1 // pred_check
      _
    $region295: #{model_forward.1} parent=1 // pred_check_branch
      %558 = sbr.rel (%p555) target = $region297
    $region296: #{model_forward.1} parent=1 // pred_region
      %s574 = sand.u32 64, 7
      %p575 = scmp.eq.s32.totalorder %s574, 0
      // Predicated region
      $region309: #{model_forward.1} parent=296 // pred_check
        %p576 = pneg %p575
      $region310: #{model_forward.1} parent=296 // pred_check_branch
        %578 = sbr.rel (%p576) target = $region312
      $region311: #{model_forward.1} parent=296 // pred_region
        loop: start=0, step=1, limit=1
        $region313: #{model_forward.1} parent=311 // loop_pre_header
          _
        $region314: #{model_forward.1} parent=311 // loop_header
          %s580 = sphi 0, %s584
          %p581 = scmp.ge.s32.totalorder %s580, 1
          %s585 = sphi %s61, %s61
          %s586 = sphi [#allocation9], [#allocation9]
        $region315: #{model_forward.1} parent=311 // loop_header_branch
          %583 = sbr.rel (%p581) target = $region319
        $region316: #{model_forward.1} parent=311 // loop_body
          %v587 = vld [vmem:[%s585] sm:$0xff]
          %588 = vst [vmem:[%s586] sm:$0xff] %v587
          %v589 = vld [vmem:[%s585 + $0x8] sm:$0xff]
          %590 = vst [vmem:[%s586 + $0x8] sm:$0xff] %v589
          %v591 = vld [vmem:[%s585 + $0x10] sm:$0xff]
          %592 = vst [vmem:[%s586 + $0x10] sm:$0xff] %v591
          %v593 = vld [vmem:[%s585 + $0x18] sm:$0xff]
          %594 = vst [vmem:[%s586 + $0x18] sm:$0xff] %v593
          %v595 = vld [vmem:[%s585 + $0x20] sm:$0xff]
          %596 = vst [vmem:[%s586 + $0x20] sm:$0xff] %v595
          %v597 = vld [vmem:[%s585 + $0x28] sm:$0xff]
          %598 = vst [vmem:[%s586 + $0x28] sm:$0xff] %v597
          %v599 = vld [vmem:[%s585 + $0x30] sm:$0xff]
          %600 = vst [vmem:[%s586 + $0x30] sm:$0xff] %v599
          %v601 = vld [vmem:[%s585 + $0x38] sm:$0xff]
          %602 = vst [vmem:[%s586 + $0x38] sm:$0xff] %v601
        $region317: #{model_forward.1} parent=311 // loop_footer
          %s584 = sadd.s32 1, %s580
        $region318: #{model_forward.1} parent=311 // loop_footer_branch
          %579 = sbr.rel target = $region314
        $region319: #{model_forward.1} parent=311 // loop_exit
          _
      $region312: #{model_forward.1} parent=296 // pred_fallthru
        _
      %p603 = pneg %p575
      // Predicated region
      $region320: #{model_forward.1} parent=296 // pred_check
        _
      $region321: #{model_forward.1} parent=296 // pred_check_branch
        %605 = sbr.rel (%p575) target = $region323
      $region322: #{model_forward.1} parent=296 // pred_region
        %s606 = sand.u32 64, 7
      $region323: #{model_forward.1} parent=296 // pred_fallthru
        _
    $region297: #{model_forward.1} parent=1 // pred_fallthru
      _
    // Predicated region
    $region298: #{model_forward.1} parent=1 // pred_check
      %p559 = pneg %p555
    $region299: #{model_forward.1} parent=1 // pred_check_branch
      %561 = sbr.rel (%p559) target = $region301
    $region300: #{model_forward.1} parent=1 // pred_region
      %s562 = sshll.u32 1, 64
      %s563 = ssub.s32 %s562, 1
      loop: start=0, step=1, limit=1
      $region302: #{model_forward.1} parent=300 // loop_pre_header
        _
      $region303: #{model_forward.1} parent=300 // loop_header
        %s565 = sphi 0, %s569
        %p566 = scmp.ge.s32.totalorder %s565, 1
        %s570 = sphi %s61, %s61
        %s571 = sphi [#allocation9], [#allocation9]
      $region304: #{model_forward.1} parent=300 // loop_header_branch
        %568 = sbr.rel (%p566) target = $region308
      $region305: #{model_forward.1} parent=300 // loop_body
        %v572 = vld [vmem:[%s570] sm:%s563]
        %573 = vst [vmem:[%s571] sm:%s563] %v572
      $region306: #{model_forward.1} parent=300 // loop_footer
        %s569 = sadd.s32 1, %s565
      $region307: #{model_forward.1} parent=300 // loop_footer_branch
        %564 = sbr.rel target = $region303
      $region308: #{model_forward.1} parent=300 // loop_exit
        _
    $region301: #{model_forward.1} parent=1 // pred_fallthru
      _
    // Predicated region
    $region324: #{model_forward.1} parent=1 // pred_check
      _
    $region325: #{model_forward.1} parent=1 // pred_check_branch
      %609 = sbr.rel (0) target = $region327
    $region326: #{model_forward.1} parent=1 // pred_region
      %610 = vsyncadd %s553, 1024
    $region327: #{model_forward.1} parent=1 // pred_fallthru
      _
    %v611 = vld [vmem:[%s1] sm:$0xff]
    %v612 = vld [vmem:[%s1 + $0x8] sm:$0xff]
    %v613 = vld [vmem:[%s1 + $0x10] sm:$0xff]
    %v614 = vld [vmem:[%s1 + $0x18] sm:$0xff]
    %v615 = vld [vmem:[%s1 + $0x20] sm:$0xff]
    %v616 = vld [vmem:[%s1 + $0x28] sm:$0xff]
    %v617 = vld [vmem:[%s1 + $0x30] sm:$0xff]
    %v618 = vld [vmem:[%s1 + $0x38] sm:$0xff]
    %v619 = vld [vmem:[%s1 + $0x40] sm:$0xff]
    %v620 = vld [vmem:[%s1 + $0x48] sm:$0xff]
    %v621 = vld [vmem:[%s5] sm:$0xff]
    %v622 = vld [vmem:[%s5 + $0x8] sm:$0xff]
    %v623 = vld [vmem:[%s5 + $0x10] sm:$0xff]
    %v624 = vld [vmem:[%s5 + $0x18] sm:$0xff]
    %v625 = vld [vmem:[%s5 + $0x20] sm:$0xff]
    %v626 = vld [vmem:[%s5 + $0x28] sm:$0xff]
    %v627 = vld [vmem:[%s5 + $0x30] sm:$0xff]
    %v628 = vld [vmem:[%s5 + $0x38] sm:$0xff]
    %v629 = vld [vmem:[%s5 + $0x40] sm:$0xff]
    %v630 = vld [vmem:[%s5 + $0x48] sm:$0xff]
    %v631 = vld [vmem:[%s5 + $0x50] sm:$0xff]
    %v632 = vld [vmem:[%s5 + $0x58] sm:$0xff]
    %v633 = vld [vmem:[%s5 + $0x60] sm:$0xff]
    %v634 = vld [vmem:[%s5 + $0x68] sm:$0xff]
    %v635 = vld [vmem:[%s5 + $0x70] sm:$0xff]
    %v636 = vld [vmem:[%s5 + $0x78] sm:$0xff]
    %v637 = vld [vmem:[%s5 + $0x80] sm:$0xff]
    %v638 = vld [vmem:[%s5 + $0x88] sm:$0xff]
    %v639 = vld [vmem:[%s5 + $0x90] sm:$0xff]
    %v640 = vld [vmem:[%s5 + $0x98] sm:$0xff]
    %v641 = vld [vmem:[%s5 + $0xa0] sm:$0xff]
    %v642 = vld [vmem:[%s5 + $0xa8] sm:$0xff]
    %v643 = vld [vmem:[%s5 + $0xb0] sm:$0xff]
    %v644 = vld [vmem:[%s5 + $0xb8] sm:$0xff]
    %v645 = vld [vmem:[%s5 + $0xc0] sm:$0xff]
    %v646 = vld [vmem:[%s5 + $0xc8] sm:$0xff]
    %v647 = vld [vmem:[%s5 + $0xd0] sm:$0xff]
    %v648 = vld [vmem:[%s5 + $0xd8] sm:$0xff]
    %v649 = vld [vmem:[%s5 + $0xe0] sm:$0xff]
    %v650 = vld [vmem:[%s5 + $0xe8] sm:$0xff]
    %v651 = vld [vmem:[%s5 + $0xf0] sm:$0xff]
    %v652 = vld [vmem:[%s5 + $0xf8] sm:$0xff]
    %v653 = vld [vmem:[%s5 + $0x100] sm:$0xff]
    %v654 = vld [vmem:[%s5 + $0x108] sm:$0xff]
    %v655 = vld [vmem:[%s5 + $0x110] sm:$0xff]
    %v656 = vld [vmem:[%s5 + $0x118] sm:$0xff]
    %v657 = vld [vmem:[%s5 + $0x120] sm:$0xff]
    %v658 = vld [vmem:[%s5 + $0x128] sm:$0xff]
    %v659 = vld [vmem:[%s5 + $0x130] sm:$0xff]
    %v660 = vld [vmem:[%s5 + $0x138] sm:$0xff]
    %v661 = vld [vmem:[%s5 + $0x140] sm:$0xff]
    %v662 = vld [vmem:[%s5 + $0x148] sm:$0xff]
    %v663 = vld [vmem:[%s5 + $0x150] sm:$0xff]
    %v664 = vld [vmem:[%s5 + $0x158] sm:$0xff]
    %v665 = vld [vmem:[%s5 + $0x160] sm:$0xff]
    %v666 = vld [vmem:[%s5 + $0x168] sm:$0xff]
    %v667 = vld [vmem:[%s5 + $0x170] sm:$0xff]
    %v668 = vld [vmem:[%s5 + $0x178] sm:$0xff]
    %v669 = vld [vmem:[%s5 + $0x180] sm:$0xff]
    %v670 = vld [vmem:[%s5 + $0x188] sm:$0xff]
    %v671 = vld [vmem:[%s5 + $0x190] sm:$0xff]
    %v672 = vld [vmem:[%s5 + $0x198] sm:$0xff]
    %v673 = vld [vmem:[%s5 + $0x1a0] sm:$0xff]
    %v674 = vld [vmem:[%s5 + $0x1a8] sm:$0xff]
    %v675 = vld [vmem:[%s5 + $0x1b0] sm:$0xff]
    %v676 = vld [vmem:[%s5 + $0x1b8] sm:$0xff]
    %v677 = vld [vmem:[%s5 + $0x1c0] sm:$0xff]
    %v678 = vld [vmem:[%s5 + $0x1c8] sm:$0xff]
    %v679 = vld [vmem:[%s5 + $0x1d0] sm:$0xff]
    %v680 = vld [vmem:[%s5 + $0x1d8] sm:$0xff]
    %v681 = vld [vmem:[%s5 + $0x1e0] sm:$0xff]
    %v682 = vld [vmem:[%s5 + $0x1e8] sm:$0xff]
    %v683 = vld [vmem:[%s5 + $0x1f0] sm:$0xff]
    %v684 = vld [vmem:[%s5 + $0x1f8] sm:$0xff]
    %v685 = vld [vmem:[%s5 + $0x200] sm:$0xff]
    %v686 = vld [vmem:[%s5 + $0x208] sm:$0xff]
    %v687 = vld [vmem:[%s5 + $0x210] sm:$0xff]
    %v688 = vld [vmem:[%s5 + $0x218] sm:$0xff]
    %v689 = vld [vmem:[%s5 + $0x220] sm:$0xff]
    %v690 = vld [vmem:[%s5 + $0x228] sm:$0xff]
    %v691 = vld [vmem:[%s5 + $0x230] sm:$0xff]
    %v692 = vld [vmem:[%s5 + $0x238] sm:$0xff]
    %v693 = vld [vmem:[%s5 + $0x240] sm:$0xff]
    %v694 = vld [vmem:[%s5 + $0x248] sm:$0xff]
    %v695 = vld [vmem:[%s5 + $0x250] sm:$0xff]
    %v696 = vld [vmem:[%s5 + $0x258] sm:$0xff]
    %v697 = vld [vmem:[%s5 + $0x260] sm:$0xff]
    %v698 = vld [vmem:[%s5 + $0x268] sm:$0xff]
    %v699 = vld [vmem:[%s5 + $0x270] sm:$0xff]
    %v700 = vld [vmem:[%s5 + $0x278] sm:$0xff]
    %v701 = vld [vmem:[%s9] sm:$0x1]
    %v703 = vlaneseq
    %v704 = vshrl.u32 %v703, 7
    %v705 = vsub.s32 0, %v704
    %v706 = vrot.slane %v701, %v705
    %708 = vmatprep.subr.mxu0 0.0
    %709 = vmatpush1.msra.mxu0 %v636
    %710 = vmatprep.subr.mxu0 0.0
    %711 = vmatpush1.msra.mxu0 %v635
    %712 = vmatprep.subr.mxu0 0.0
    %713 = vmatpush1.msra.mxu0 %v634
    %714 = vmatprep.subr.mxu0 0.0
    %715 = vmatpush1.msra.mxu0 %v633
    %716 = vmatprep.subr.mxu0 0.0
    %717 = vmatpush1.msra.mxu0 %v632
    %718 = vmatprep.subr.mxu0 0.0
    %719 = vmatpush1.msra.mxu0 %v631
    %720 = vmatprep.subr.mxu0 0.0
    %721 = vmatpush1.msra.mxu0 %v630
    %722 = vmatprep.subr.mxu0 0.0
    %723 = vmatpush1.msra.mxu0 %v629
    %724 = vmatprep.subr.mxu0 0.0
    %725 = vmatpush1.msra.mxu0 %v628
    %726 = vmatprep.subr.mxu0 0.0
    %727 = vmatpush1.msra.mxu0 %v627
    %728 = vmatprep.subr.mxu0 0.0
    %729 = vmatpush1.msra.mxu0 %v626
    %730 = vmatprep.subr.mxu0 0.0
    %731 = vmatpush1.msra.mxu0 %v625
    %732 = vmatprep.subr.mxu0 0.0
    %733 = vmatpush1.msra.mxu0 %v624
    %734 = vmatprep.subr.mxu0 0.0
    %735 = vmatpush1.msra.mxu0 %v623
    %736 = vmatprep.subr.mxu0 0.0
    %737 = vmatpush1.msra.mxu0 %v622
    %738 = vmatprep.subr.mxu0 0.0
    %739 = vmatpush1.msra.mxu0 %v621
    %740 = vmatprep.subr.mxu0 0.0
    %741 = vmatpush2.msra.mxu0 %v652
    %742 = vmatprep.subr.mxu0 0.0
    %743 = vmatpush2.msra.mxu0 %v651
    %744 = vmatprep.subr.mxu0 0.0
    %745 = vmatpush2.msra.mxu0 %v650
    %746 = vmatprep.subr.mxu0 0.0
    %747 = vmatpush2.msra.mxu0 %v649
    %748 = vmatprep.subr.mxu0 0.0
    %749 = vmatpush2.msra.mxu0 %v648
    %750 = vmatprep.subr.mxu0 0.0
    %751 = vmatpush2.msra.mxu0 %v647
    %752 = vmatprep.subr.mxu0 0.0
    %753 = vmatpush2.msra.mxu0 %v646
    %754 = vmatprep.subr.mxu0 0.0
    %755 = vmatpush2.msra.mxu0 %v645
    %756 = vmatprep.subr.mxu0 0.0
    %757 = vmatpush2.msra.mxu0 %v644
    %758 = vmatprep.subr.mxu0 0.0
    %759 = vmatpush2.msra.mxu0 %v643
    %760 = vmatprep.subr.mxu0 0.0
    %761 = vmatpush2.msra.mxu0 %v642
    %762 = vmatprep.subr.mxu0 0.0
    %763 = vmatpush2.msra.mxu0 %v641
    %764 = vmatprep.subr.mxu0 0.0
    %765 = vmatpush2.msra.mxu0 %v640
    %766 = vmatprep.subr.mxu0 0.0
    %767 = vmatpush2.msra.mxu0 %v639
    %768 = vmatprep.subr.mxu0 0.0
    %769 = vmatpush2.msra.mxu0 %v638
    %770 = vmatprep.subr.mxu0 0.0
    %771 = vmatpush2.msra.mxu0 %v637
    %772 = vmatprep.mubr.f32.mxu0 %v612
    %773 = vmatmul.mubr.f32.gmra.mxu0 %v611
    %v774 = vpop.f32.mrf.mxu0
    %v775 = vadd.f32 %v706, %v774
    %v776 = vpop.f32.mrf.mxu0
    %777 = vmatprep.mubr.f32.mxu0 %v617
    %778 = vmatmul.mubr.f32.gmra.mxu0 %v616
    %v779 = vpop.f32.mrf.mxu0
    %v780 = vadd.f32 %v706, %v779
    %v781 = vpop.f32.mrf.mxu0
    %782 = vdwg.mxu0
    %783 = vmatprep.subr.mxu0 0.0
    %784 = vmatpush1.msra.mxu0 %v668
    %785 = vmatprep.subr.mxu0 0.0
    %786 = vmatpush1.msra.mxu0 %v667
    %787 = vmatprep.subr.mxu0 0.0
    %788 = vmatpush1.msra.mxu0 %v666
    %789 = vmatprep.subr.mxu0 0.0
    %790 = vmatpush1.msra.mxu0 %v665
    %791 = vmatprep.subr.mxu0 0.0
    %792 = vmatpush1.msra.mxu0 %v664
    %793 = vmatprep.subr.mxu0 0.0
    %794 = vmatpush1.msra.mxu0 %v663
    %795 = vmatprep.subr.mxu0 0.0
    %796 = vmatpush1.msra.mxu0 %v662
    %797 = vmatprep.subr.mxu0 0.0
    %798 = vmatpush1.msra.mxu0 %v661
    %799 = vmatprep.subr.mxu0 0.0
    %800 = vmatpush1.msra.mxu0 %v660
    %801 = vmatprep.subr.mxu0 0.0
    %802 = vmatpush1.msra.mxu0 %v659
    %803 = vmatprep.subr.mxu0 0.0
    %804 = vmatpush1.msra.mxu0 %v658
    %805 = vmatprep.subr.mxu0 0.0
    %806 = vmatpush1.msra.mxu0 %v657
    %807 = vmatprep.subr.mxu0 0.0
    %808 = vmatpush1.msra.mxu0 %v656
    %809 = vmatprep.subr.mxu0 0.0
    %810 = vmatpush1.msra.mxu0 %v655
    %811 = vmatprep.subr.mxu0 0.0
    %812 = vmatpush1.msra.mxu0 %v654
    %813 = vmatprep.subr.mxu0 0.0
    %814 = vmatpush1.msra.mxu0 %v653
    %815 = vmatprep.subr.mxu0 0.0
    %816 = vmatpush2.msra.mxu0 %v684
    %817 = vmatprep.subr.mxu0 0.0
    %818 = vmatpush2.msra.mxu0 %v683
    %819 = vmatprep.subr.mxu0 0.0
    %820 = vmatpush2.msra.mxu0 %v682
    %821 = vmatprep.subr.mxu0 0.0
    %822 = vmatpush2.msra.mxu0 %v681
    %823 = vmatprep.subr.mxu0 0.0
    %824 = vmatpush2.msra.mxu0 %v680
    %825 = vmatprep.subr.mxu0 0.0
    %826 = vmatpush2.msra.mxu0 %v679
    %827 = vmatprep.subr.mxu0 0.0
    %828 = vmatpush2.msra.mxu0 %v678
    %829 = vmatprep.subr.mxu0 0.0
    %830 = vmatpush2.msra.mxu0 %v677
    %831 = vmatprep.subr.mxu0 0.0
    %832 = vmatpush2.msra.mxu0 %v676
    %833 = vmatprep.subr.mxu0 0.0
    %834 = vmatpush2.msra.mxu0 %v675
    %835 = vmatprep.subr.mxu0 0.0
    %836 = vmatpush2.msra.mxu0 %v674
    %837 = vmatprep.subr.mxu0 0.0
    %838 = vmatpush2.msra.mxu0 %v673
    %839 = vmatprep.subr.mxu0 0.0
    %840 = vmatpush2.msra.mxu0 %v672
    %841 = vmatprep.subr.mxu0 0.0
    %842 = vmatpush2.msra.mxu0 %v671
    %843 = vmatprep.subr.mxu0 0.0
    %844 = vmatpush2.msra.mxu0 %v670
    %845 = vmatprep.subr.mxu0 0.0
    %846 = vmatpush2.msra.mxu0 %v669
    %847 = vmatprep.mubr.f32.mxu0 %v614
    %848 = vmatmul.mubr.f32.gmra.mxu0 %v613
    %v849 = vpop.f32.mrf.mxu0
    %v850 = vadd.f32 %v775, %v849
    %v851 = vpop.f32.mrf.mxu0
    %852 = vmatprep.mubr.f32.mxu0 %v619
    %853 = vmatmul.mubr.f32.gmra.mxu0 %v618
    %v854 = vpop.f32.mrf.mxu0
    %v855 = vadd.f32 %v780, %v854
    %v856 = vpop.f32.mrf.mxu0
    %857 = vdwg.mxu0
    %858 = vmatprep.subr.mxu0 0.0
    %859 = vmatpush1.msra.mxu0 %v700
    %860 = vmatprep.subr.mxu0 0.0
    %861 = vmatpush1.msra.mxu0 %v699
    %862 = vmatprep.subr.mxu0 0.0
    %863 = vmatpush1.msra.mxu0 %v698
    %864 = vmatprep.subr.mxu0 0.0
    %865 = vmatpush1.msra.mxu0 %v697
    %866 = vmatprep.subr.mxu0 0.0
    %867 = vmatpush1.msra.mxu0 %v696
    %868 = vmatprep.subr.mxu0 0.0
    %869 = vmatpush1.msra.mxu0 %v695
    %870 = vmatprep.subr.mxu0 0.0
    %871 = vmatpush1.msra.mxu0 %v694
    %872 = vmatprep.subr.mxu0 0.0
    %873 = vmatpush1.msra.mxu0 %v693
    %874 = vmatprep.subr.mxu0 0.0
    %875 = vmatpush1.msra.mxu0 %v692
    %876 = vmatprep.subr.mxu0 0.0
    %877 = vmatpush1.msra.mxu0 %v691
    %878 = vmatprep.subr.mxu0 0.0
    %879 = vmatpush1.msra.mxu0 %v690
    %880 = vmatprep.subr.mxu0 0.0
    %881 = vmatpush1.msra.mxu0 %v689
    %882 = vmatprep.subr.mxu0 0.0
    %883 = vmatpush1.msra.mxu0 %v688
    %884 = vmatprep.subr.mxu0 0.0
    %885 = vmatpush1.msra.mxu0 %v687
    %886 = vmatprep.subr.mxu0 0.0
    %887 = vmatpush1.msra.mxu0 %v686
    %888 = vmatprep.subr.mxu0 0.0
    %889 = vmatpush1.msra.mxu0 %v685
    %890 = vmatprep.subr.mxu0 0.0
    %891 = vmatpush2.msra.mxu0 0.0
    %892 = vmatprep.subr.mxu0 0.0
    %893 = vmatpush2.msra.mxu0 0.0
    %894 = vmatprep.subr.mxu0 0.0
    %895 = vmatpush2.msra.mxu0 0.0
    %896 = vmatprep.subr.mxu0 0.0
    %897 = vmatpush2.msra.mxu0 0.0
    %898 = vmatprep.subr.mxu0 0.0
    %899 = vmatpush2.msra.mxu0 0.0
    %900 = vmatprep.subr.mxu0 0.0
    %901 = vmatpush2.msra.mxu0 0.0
    %902 = vmatprep.subr.mxu0 0.0
    %903 = vmatpush2.msra.mxu0 0.0
    %904 = vmatprep.subr.mxu0 0.0
    %905 = vmatpush2.msra.mxu0 0.0
    %906 = vmatprep.subr.mxu0 0.0
    %907 = vmatpush2.msra.mxu0 0.0
    %908 = vmatprep.subr.mxu0 0.0
    %909 = vmatpush2.msra.mxu0 0.0
    %910 = vmatprep.subr.mxu0 0.0
    %911 = vmatpush2.msra.mxu0 0.0
    %912 = vmatprep.subr.mxu0 0.0
    %913 = vmatpush2.msra.mxu0 0.0
    %914 = vmatprep.subr.mxu0 0.0
    %915 = vmatpush2.msra.mxu0 0.0
    %916 = vmatprep.subr.mxu0 0.0
    %917 = vmatpush2.msra.mxu0 0.0
    %918 = vmatprep.subr.mxu0 0.0
    %919 = vmatpush2.msra.mxu0 0.0
    %920 = vmatprep.subr.mxu0 0.0
    %921 = vmatpush2.msra.mxu0 0.0
    %922 = vmatprep.mubr.f32.mxu0 0.0
    %923 = vmatmul.mubr.f32.gmra.mxu0 %v615
    %v924 = vpop.f32.mrf.mxu0
    %v925 = vadd.f32 %v850, %v924
    %v926 = vpop.f32.mrf.mxu0
    %927 = vmatprep.mubr.f32.mxu0 0.0
    %928 = vmatmul.mubr.f32.gmra.mxu0 %v620
    %v929 = vpop.f32.mrf.mxu0
    %v930 = vadd.f32 %v855, %v929
    %v931 = vpop.f32.mrf.mxu0
    %932 = vdwg.mxu0
    %v933 = vld [vmem:[#allocation12] sm:$0xff]
    %v934 = vld [vmem:[#allocation12 + $0x8] sm:$0xff]
    %v935 = vld [vmem:[#allocation12 + $0x10] sm:$0xff]
    %v936 = vld [vmem:[#allocation12 + $0x18] sm:$0xff]
    %vm937 = vcmask 261120
    %v939 = vsel %vm937, 0.0, 0
    %941 = vmatprep.subr.mxu0 0.0
    %942 = vmatpush1.msra.mxu0 0.0
    %943 = vmatprep.subr.mxu0 0.0
    %944 = vmatpush1.msra.mxu0 0.0
    %945 = vmatprep.subr.mxu0 0.0
    %946 = vmatpush1.msra.mxu0 0.0
    %947 = vmatprep.subr.mxu0 0.0
    %948 = vmatpush1.msra.mxu0 0.0
    %949 = vmatprep.subr.mxu0 0.0
    %950 = vmatpush1.msra.mxu0 0.0
    %951 = vmatprep.subr.mxu0 0.0
    %952 = vmatpush1.msra.mxu0 0.0
    %953 = vmatprep.subr.mxu0 0.0
    %954 = vmatpush1.msra.mxu0 0.0
    %955 = vmatprep.subr.mxu0 0.0
    %956 = vmatpush1.msra.mxu0 0.0
    %957 = vmatprep.subr.mxu0 0.0
    %958 = vmatpush1.msra.mxu0 0.0
    %959 = vmatprep.subr.mxu0 0.0
    %960 = vmatpush1.msra.mxu0 0.0
    %961 = vmatprep.subr.mxu0 0.0
    %962 = vmatpush1.msra.mxu0 0.0
    %963 = vmatprep.subr.mxu0 0.0
    %964 = vmatpush1.msra.mxu0 0.0
    %965 = vmatprep.subr.mxu0 0.0
    %966 = vmatpush1.msra.mxu0 %v936
    %967 = vmatprep.subr.mxu0 0.0
    %968 = vmatpush1.msra.mxu0 %v935
    %969 = vmatprep.subr.mxu0 0.0
    %970 = vmatpush1.msra.mxu0 %v934
    %971 = vmatprep.subr.mxu0 0.0
    %972 = vmatpush1.msra.mxu0 %v933
    %973 = vmatprep.subr.mxu0 0.0
    %974 = vmatpush2.msra.mxu0 0.0
    %975 = vmatprep.subr.mxu0 0.0
    %976 = vmatpush2.msra.mxu0 0.0
    %977 = vmatprep.subr.mxu0 0.0
    %978 = vmatpush2.msra.mxu0 0.0
    %979 = vmatprep.subr.mxu0 0.0
    %980 = vmatpush2.msra.mxu0 0.0
    %981 = vmatprep.subr.mxu0 0.0
    %982 = vmatpush2.msra.mxu0 0.0
    %983 = vmatprep.subr.mxu0 0.0
    %984 = vmatpush2.msra.mxu0 0.0
    %985 = vmatprep.subr.mxu0 0.0
    %986 = vmatpush2.msra.mxu0 0.0
    %987 = vmatprep.subr.mxu0 0.0
    %988 = vmatpush2.msra.mxu0 0.0
    %989 = vmatprep.subr.mxu0 0.0
    %990 = vmatpush2.msra.mxu0 0.0
    %991 = vmatprep.subr.mxu0 0.0
    %992 = vmatpush2.msra.mxu0 0.0
    %993 = vmatprep.subr.mxu0 0.0
    %994 = vmatpush2.msra.mxu0 0.0
    %995 = vmatprep.subr.mxu0 0.0
    %996 = vmatpush2.msra.mxu0 0.0
    %997 = vmatprep.subr.mxu0 0.0
    %998 = vmatpush2.msra.mxu0 0.0
    %999 = vmatprep.subr.mxu0 0.0
    %1000 = vmatpush2.msra.mxu0 0.0
    %1001 = vmatprep.subr.mxu0 0.0
    %1002 = vmatpush2.msra.mxu0 0.0
    %1003 = vmatprep.subr.mxu0 0.0
    %1004 = vmatpush2.msra.mxu0 0.0
    %1005 = vmatprep.mubr.f32.mxu0 0.0
    %1006 = vmatmul.mubr.f32.gmra.mxu0 %v939
    %v1007 = vpop.f32.mrf.mxu0
    %v1008 = vadd.f32 0.0, %v1007
    %v1009 = vpop.f32.mrf.mxu0
    %1010 = vdwg.mxu0
    %v1011 = vadd.f32 %v925, %v1008
    %v1012 = vxor.u32 %v1011, 2147483648
    %v1013 = vmul.f32 %v1012, 1.442695
    %v1014 = vpow.pop %v1013
    %v1015 = vadd.f32 %v1014, 1.0
    %v1016 = vrcp.pop %v1015
    %v1017 = vmul.f32 1.0, %v1016
    %v1018 = vtanh.pop %v1011
    %v1019 = vmul.f32 %v1017, 0.0
    %1021 = vrot.lane.b32.xlu0 %v1018, 64
    %v1022 = vpop.permute.xlu0 %1021
    %v1024 = vmul.f32 %v1017, %v1022
    %1026 = vrot.lane.b32.xlu0 %v1024, 32
    %v1027 = vpop.permute.xlu0 %1026
    %v1029 = vadd.f32 %v1019, %v1027
    %v1030 = vtanh.pop %v1029
    %1032 = vrot.lane.b32.xlu0 %v1030, 64
    %v1033 = vpop.permute.xlu0 %1032
    %v1035 = vmul.f32 %v1017, %v1033
    %v1036 = vld [vmem:[#allocation14] sm:$0xff]
    %v1037 = vld [vmem:[#allocation14 + $0x8] sm:$0xff]
    %v1038 = vld [vmem:[#allocation14 + $0x10] sm:$0xff]
    %v1039 = vld [vmem:[#allocation14 + $0x18] sm:$0xff]
    %v1040 = vld [vmem:[#allocation16] sm:$0xff]
    %v1041 = vld [vmem:[#allocation16 + $0x8] sm:$0xff]
    %v1042 = vld [vmem:[#allocation16 + $0x10] sm:$0xff]
    %v1043 = vld [vmem:[#allocation16 + $0x18] sm:$0xff]
    %1044 = vmatprep.subr.mxu0 0.0
    %1045 = vmatpush1.msra.mxu0 0.0
    %1046 = vmatprep.subr.mxu0 0.0
    %1047 = vmatpush1.msra.mxu0 0.0
    %1048 = vmatprep.subr.mxu0 0.0
    %1049 = vmatpush1.msra.mxu0 0.0
    %1050 = vmatprep.subr.mxu0 0.0
    %1051 = vmatpush1.msra.mxu0 0.0
    %1052 = vmatprep.subr.mxu0 0.0
    %1053 = vmatpush1.msra.mxu0 0.0
    %1054 = vmatprep.subr.mxu0 0.0
    %1055 = vmatpush1.msra.mxu0 0.0
    %1056 = vmatprep.subr.mxu0 0.0
    %1057 = vmatpush1.msra.mxu0 0.0
    %1058 = vmatprep.subr.mxu0 0.0
    %1059 = vmatpush1.msra.mxu0 0.0
    %1060 = vmatprep.subr.mxu0 0.0
    %1061 = vmatpush1.msra.mxu0 0.0
    %1062 = vmatprep.subr.mxu0 0.0
    %1063 = vmatpush1.msra.mxu0 0.0
    %1064 = vmatprep.subr.mxu0 0.0
    %1065 = vmatpush1.msra.mxu0 0.0
    %1066 = vmatprep.subr.mxu0 0.0
    %1067 = vmatpush1.msra.mxu0 0.0
    %1068 = vmatprep.subr.mxu0 0.0
    %1069 = vmatpush1.msra.mxu0 %v1043
    %1070 = vmatprep.subr.mxu0 0.0
    %1071 = vmatpush1.msra.mxu0 %v1042
    %1072 = vmatprep.subr.mxu0 0.0
    %1073 = vmatpush1.msra.mxu0 %v1041
    %1074 = vmatprep.subr.mxu0 0.0
    %1075 = vmatpush1.msra.mxu0 %v1040
    %1076 = vmatprep.subr.mxu0 0.0
    %1077 = vmatpush2.msra.mxu0 0.0
    %1078 = vmatprep.subr.mxu0 0.0
    %1079 = vmatpush2.msra.mxu0 0.0
    %1080 = vmatprep.subr.mxu0 0.0
    %1081 = vmatpush2.msra.mxu0 0.0
    %1082 = vmatprep.subr.mxu0 0.0
    %1083 = vmatpush2.msra.mxu0 0.0
    %1084 = vmatprep.subr.mxu0 0.0
    %1085 = vmatpush2.msra.mxu0 0.0
    %1086 = vmatprep.subr.mxu0 0.0
    %1087 = vmatpush2.msra.mxu0 0.0
    %1088 = vmatprep.subr.mxu0 0.0
    %1089 = vmatpush2.msra.mxu0 0.0
    %1090 = vmatprep.subr.mxu0 0.0
    %1091 = vmatpush2.msra.mxu0 0.0
    %1092 = vmatprep.subr.mxu0 0.0
    %1093 = vmatpush2.msra.mxu0 0.0
    %1094 = vmatprep.subr.mxu0 0.0
    %1095 = vmatpush2.msra.mxu0 0.0
    %1096 = vmatprep.subr.mxu0 0.0
    %1097 = vmatpush2.msra.mxu0 0.0
    %1098 = vmatprep.subr.mxu0 0.0
    %1099 = vmatpush2.msra.mxu0 0.0
    %1100 = vmatprep.subr.mxu0 0.0
    %1101 = vmatpush2.msra.mxu0 0.0
    %1102 = vmatprep.subr.mxu0 0.0
    %1103 = vmatpush2.msra.mxu0 0.0
    %1104 = vmatprep.subr.mxu0 0.0
    %1105 = vmatpush2.msra.mxu0 0.0
    %1106 = vmatprep.subr.mxu0 0.0
    %1107 = vmatpush2.msra.mxu0 0.0
    %1108 = vmatprep.mubr.f32.mxu0 0.0
    %1109 = vmatmul.mubr.f32.gmra.mxu0 %v939
    %v1110 = vpop.f32.mrf.mxu0
    %v1111 = vadd.f32 0.0, %v1110
    %v1112 = vpop.f32.mrf.mxu0
    %1113 = vdwg.mxu0
    %1115 = vrot.lane.b32.xlu0 %v1035, 32
    %v1116 = vpop.permute.xlu0 %1115
    %v1117 = vsel %vm937, %v1116, 0
    %1119 = vmatprep.subr.mxu0 0.0
    %1120 = vmatpush1.msra.mxu0 0.0
    %1121 = vmatprep.subr.mxu0 0.0
    %1122 = vmatpush1.msra.mxu0 0.0
    %1123 = vmatprep.subr.mxu0 0.0
    %1124 = vmatpush1.msra.mxu0 0.0
    %1125 = vmatprep.subr.mxu0 0.0
    %1126 = vmatpush1.msra.mxu0 0.0
    %1127 = vmatprep.subr.mxu0 0.0
    %1128 = vmatpush1.msra.mxu0 0.0
    %1129 = vmatprep.subr.mxu0 0.0
    %1130 = vmatpush1.msra.mxu0 0.0
    %1131 = vmatprep.subr.mxu0 0.0
    %1132 = vmatpush1.msra.mxu0 0.0
    %1133 = vmatprep.subr.mxu0 0.0
    %1134 = vmatpush1.msra.mxu0 0.0
    %1135 = vmatprep.subr.mxu0 0.0
    %1136 = vmatpush1.msra.mxu0 0.0
    %1137 = vmatprep.subr.mxu0 0.0
    %1138 = vmatpush1.msra.mxu0 0.0
    %1139 = vmatprep.subr.mxu0 0.0
    %1140 = vmatpush1.msra.mxu0 0.0
    %1141 = vmatprep.subr.mxu0 0.0
    %1142 = vmatpush1.msra.mxu0 0.0
    %1143 = vmatprep.subr.mxu0 0.0
    %1144 = vmatpush1.msra.mxu0 %v1039
    %1145 = vmatprep.subr.mxu0 0.0
    %1146 = vmatpush1.msra.mxu0 %v1038
    %1147 = vmatprep.subr.mxu0 0.0
    %1148 = vmatpush1.msra.mxu0 %v1037
    %1149 = vmatprep.subr.mxu0 0.0
    %1150 = vmatpush1.msra.mxu0 %v1036
    %1151 = vmatprep.subr.mxu0 0.0
    %1152 = vmatpush2.msra.mxu0 0.0
    %1153 = vmatprep.subr.mxu0 0.0
    %1154 = vmatpush2.msra.mxu0 0.0
    %1155 = vmatprep.subr.mxu0 0.0
    %1156 = vmatpush2.msra.mxu0 0.0
    %1157 = vmatprep.subr.mxu0 0.0
    %1158 = vmatpush2.msra.mxu0 0.0
    %1159 = vmatprep.subr.mxu0 0.0
    %1160 = vmatpush2.msra.mxu0 0.0
    %1161 = vmatprep.subr.mxu0 0.0
    %1162 = vmatpush2.msra.mxu0 0.0
    %1163 = vmatprep.subr.mxu0 0.0
    %1164 = vmatpush2.msra.mxu0 0.0
    %1165 = vmatprep.subr.mxu0 0.0
    %1166 = vmatpush2.msra.mxu0 0.0
    %1167 = vmatprep.subr.mxu0 0.0
    %1168 = vmatpush2.msra.mxu0 0.0
    %1169 = vmatprep.subr.mxu0 0.0
    %1170 = vmatpush2.msra.mxu0 0.0
    %1171 = vmatprep.subr.mxu0 0.0
    %1172 = vmatpush2.msra.mxu0 0.0
    %1173 = vmatprep.subr.mxu0 0.0
    %1174 = vmatpush2.msra.mxu0 0.0
    %1175 = vmatprep.subr.mxu0 0.0
    %1176 = vmatpush2.msra.mxu0 0.0
    %1177 = vmatprep.subr.mxu0 0.0
    %1178 = vmatpush2.msra.mxu0 0.0
    %1179 = vmatprep.subr.mxu0 0.0
    %1180 = vmatpush2.msra.mxu0 0.0
    %1181 = vmatprep.subr.mxu0 0.0
    %1182 = vmatpush2.msra.mxu0 0.0
    %1183 = vmatprep.mubr.f32.mxu0 0.0
    %1184 = vmatmul.mubr.f32.gmra.mxu0 %v1117
    %v1185 = vpop.f32.mrf.mxu0
    %v1186 = vadd.f32 %v1111, %v1185
    %v1187 = vpop.f32.mrf.mxu0
    %1188 = vdwg.mxu0
    %v1189 = vld [vmem:[#allocation17] sm:$0x1]
    %v1191 = vlaneseq
    %v1192 = vshrl.u32 %v1191, 7
    %v1193 = vsub.s32 0, %v1192
    %v1194 = vrot.slane %v1189, %v1193
    %v1196 = vadd.f32 %v1186, %v1194
    %v1197 = vxor.u32 %v1196, 2147483648
    %v1198 = vmul.f32 %v1197, 1.442695
    %v1199 = vpow.pop %v1198
    %v1200 = vadd.f32 %v1199, 1.0
    %v1201 = vrcp.pop %v1200
    %v1202 = vmul.f32 1.0, %v1201
    %v1203 = vtanh.pop %v1196
    %v1204 = vmul.f32 %v1202, 0.0
    %1206 = vrot.lane.b32.xlu0 %v1203, 64
    %v1207 = vpop.permute.xlu0 %1206
    %v1209 = vmul.f32 %v1202, %v1207
    %1211 = vrot.lane.b32.xlu0 %v1209, 32
    %v1212 = vpop.permute.xlu0 %1211
    %v1214 = vadd.f32 %v1204, %v1212
    %v1215 = vtanh.pop %v1214
    %1217 = vrot.lane.b32.xlu0 %v1215, 64
    %v1218 = vpop.permute.xlu0 %1217
    %v1220 = vmul.f32 %v1202, %v1218
    %v1221 = vtanh.pop %v1220
    %1223 = vrot.lane.b32.xlu0 %v1221, 32
    %v1224 = vpop.permute.xlu0 %1223
    %vm1226 = vcmask 254976
    %1227 = vst.msk [vmem:[#allocation2] sm:$0x3] %vm1226, %v1224
    %v1228 = vld [vmem:[#allocation12] sm:$0xff]
    %v1229 = vld [vmem:[#allocation12 + $0x8] sm:$0xff]
    %v1230 = vld [vmem:[#allocation12 + $0x10] sm:$0xff]
    %v1231 = vld [vmem:[#allocation12 + $0x18] sm:$0xff]
    %1232 = vmatprep.subr.mxu0 0.0
    %1233 = vmatpush1.msra.mxu0 0.0
    %1234 = vmatprep.subr.mxu0 0.0
    %1235 = vmatpush1.msra.mxu0 0.0
    %1236 = vmatprep.subr.mxu0 0.0
    %1237 = vmatpush1.msra.mxu0 0.0
    %1238 = vmatprep.subr.mxu0 0.0
    %1239 = vmatpush1.msra.mxu0 0.0
    %1240 = vmatprep.subr.mxu0 0.0
    %1241 = vmatpush1.msra.mxu0 0.0
    %1242 = vmatprep.subr.mxu0 0.0
    %1243 = vmatpush1.msra.mxu0 0.0
    %1244 = vmatprep.subr.mxu0 0.0
    %1245 = vmatpush1.msra.mxu0 0.0
    %1246 = vmatprep.subr.mxu0 0.0
    %1247 = vmatpush1.msra.mxu0 0.0
    %1248 = vmatprep.subr.mxu0 0.0
    %1249 = vmatpush1.msra.mxu0 0.0
    %1250 = vmatprep.subr.mxu0 0.0
    %1251 = vmatpush1.msra.mxu0 0.0
    %1252 = vmatprep.subr.mxu0 0.0
    %1253 = vmatpush1.msra.mxu0 0.0
    %1254 = vmatprep.subr.mxu0 0.0
    %1255 = vmatpush1.msra.mxu0 0.0
    %1256 = vmatprep.subr.mxu0 0.0
    %1257 = vmatpush1.msra.mxu0 %v1231
    %1258 = vmatprep.subr.mxu0 0.0
    %1259 = vmatpush1.msra.mxu0 %v1230
    %1260 = vmatprep.subr.mxu0 0.0
    %1261 = vmatpush1.msra.mxu0 %v1229
    %1262 = vmatprep.subr.mxu0 0.0
    %1263 = vmatpush1.msra.mxu0 %v1228
    %1264 = vmatprep.subr.mxu0 0.0
    %1265 = vmatpush2.msra.mxu0 0.0
    %1266 = vmatprep.subr.mxu0 0.0
    %1267 = vmatpush2.msra.mxu0 0.0
    %1268 = vmatprep.subr.mxu0 0.0
    %1269 = vmatpush2.msra.mxu0 0.0
    %1270 = vmatprep.subr.mxu0 0.0
    %1271 = vmatpush2.msra.mxu0 0.0
    %1272 = vmatprep.subr.mxu0 0.0
    %1273 = vmatpush2.msra.mxu0 0.0
    %1274 = vmatprep.subr.mxu0 0.0
    %1275 = vmatpush2.msra.mxu0 0.0
    %1276 = vmatprep.subr.mxu0 0.0
    %1277 = vmatpush2.msra.mxu0 0.0
    %1278 = vmatprep.subr.mxu0 0.0
    %1279 = vmatpush2.msra.mxu0 0.0
    %1280 = vmatprep.subr.mxu0 0.0
    %1281 = vmatpush2.msra.mxu0 0.0
    %1282 = vmatprep.subr.mxu0 0.0
    %1283 = vmatpush2.msra.mxu0 0.0
    %1284 = vmatprep.subr.mxu0 0.0
    %1285 = vmatpush2.msra.mxu0 0.0
    %1286 = vmatprep.subr.mxu0 0.0
    %1287 = vmatpush2.msra.mxu0 0.0
    %1288 = vmatprep.subr.mxu0 0.0
    %1289 = vmatpush2.msra.mxu0 0.0
    %1290 = vmatprep.subr.mxu0 0.0
    %1291 = vmatpush2.msra.mxu0 0.0
    %1292 = vmatprep.subr.mxu0 0.0
    %1293 = vmatpush2.msra.mxu0 0.0
    %1294 = vmatprep.subr.mxu0 0.0
    %1295 = vmatpush2.msra.mxu0 0.0
    %1296 = vmatprep.mubr.f32.mxu0 0.0
    %1297 = vmatmul.mubr.f32.gmra.mxu0 %v1117
    %v1298 = vpop.f32.mrf.mxu0
    %v1299 = vadd.f32 0.0, %v1298
    %v1300 = vpop.f32.mrf.mxu0
    %1301 = vdwg.mxu0
    %v1303 = vrot.slane %v1299, 6
    %v1305 = vadd.f32 %v925, %v1303
    %v1306 = vxor.u32 %v1305, 2147483648
    %v1307 = vmul.f32 %v1306, 1.442695
    %v1308 = vpow.pop %v1307
    %v1309 = vadd.f32 %v1308, 1.0
    %v1310 = vrcp.pop %v1309
    %v1311 = vmul.f32 1.0, %v1310
    %v1312 = vtanh.pop %v1305
    %v1314 = vrot.slane %v1029, 6
    %v1316 = vmul.f32 %v1311, %v1314
    %1318 = vrot.lane.b32.xlu0 %v1312, 64
    %v1319 = vpop.permute.xlu0 %1318
    %v1321 = vmul.f32 %v1311, %v1319
    %1323 = vrot.lane.b32.xlu0 %v1321, 32
    %v1324 = vpop.permute.xlu0 %1323
    %v1326 = vadd.f32 %v1316, %v1324
    %v1327 = vtanh.pop %v1326
    %1329 = vrot.lane.b32.xlu0 %v1327, 64
    %v1330 = vpop.permute.xlu0 %1329
    %v1332 = vmul.f32 %v1311, %v1330
    %v1333 = vld [vmem:[#allocation14] sm:$0xff]
    %v1334 = vld [vmem:[#allocation14 + $0x8] sm:$0xff]
    %v1335 = vld [vmem:[#allocation14 + $0x10] sm:$0xff]
    %v1336 = vld [vmem:[#allocation14 + $0x18] sm:$0xff]
    %v1337 = vld [vmem:[#allocation16] sm:$0xff]
    %v1338 = vld [vmem:[#allocation16 + $0x8] sm:$0xff]
    %v1339 = vld [vmem:[#allocation16 + $0x10] sm:$0xff]
    %v1340 = vld [vmem:[#allocation16 + $0x18] sm:$0xff]
    %1342 = vrot.lane.b32.xlu0 %v1220, 32
    %v1343 = vpop.permute.xlu0 %1342
    %v1344 = vsel %vm937, %v1343, 0
    %1346 = vmatprep.subr.mxu0 0.0
    %1347 = vmatpush1.msra.mxu0 0.0
    %1348 = vmatprep.subr.mxu0 0.0
    %1349 = vmatpush1.msra.mxu0 0.0
    %1350 = vmatprep.subr.mxu0 0.0
    %1351 = vmatpush1.msra.mxu0 0.0
    %1352 = vmatprep.subr.mxu0 0.0
    %1353 = vmatpush1.msra.mxu0 0.0
    %1354 = vmatprep.subr.mxu0 0.0
    %1355 = vmatpush1.msra.mxu0 0.0
    %1356 = vmatprep.subr.mxu0 0.0
    %1357 = vmatpush1.msra.mxu0 0.0
    %1358 = vmatprep.subr.mxu0 0.0
    %1359 = vmatpush1.msra.mxu0 0.0
    %1360 = vmatprep.subr.mxu0 0.0
    %1361 = vmatpush1.msra.mxu0 0.0
    %1362 = vmatprep.subr.mxu0 0.0
    %1363 = vmatpush1.msra.mxu0 0.0
    %1364 = vmatprep.subr.mxu0 0.0
    %1365 = vmatpush1.msra.mxu0 0.0
    %1366 = vmatprep.subr.mxu0 0.0
    %1367 = vmatpush1.msra.mxu0 0.0
    %1368 = vmatprep.subr.mxu0 0.0
    %1369 = vmatpush1.msra.mxu0 0.0
    %1370 = vmatprep.subr.mxu0 0.0
    %1371 = vmatpush1.msra.mxu0 %v1340
    %1372 = vmatprep.subr.mxu0 0.0
    %1373 = vmatpush1.msra.mxu0 %v1339
    %1374 = vmatprep.subr.mxu0 0.0
    %1375 = vmatpush1.msra.mxu0 %v1338
    %1376 = vmatprep.subr.mxu0 0.0
    %1377 = vmatpush1.msra.mxu0 %v1337
    %1378 = vmatprep.subr.mxu0 0.0
    %1379 = vmatpush2.msra.mxu0 0.0
    %1380 = vmatprep.subr.mxu0 0.0
    %1381 = vmatpush2.msra.mxu0 0.0
    %1382 = vmatprep.subr.mxu0 0.0
    %1383 = vmatpush2.msra.mxu0 0.0
    %1384 = vmatprep.subr.mxu0 0.0
    %1385 = vmatpush2.msra.mxu0 0.0
    %1386 = vmatprep.subr.mxu0 0.0
    %1387 = vmatpush2.msra.mxu0 0.0
    %1388 = vmatprep.subr.mxu0 0.0
    %1389 = vmatpush2.msra.mxu0 0.0
    %1390 = vmatprep.subr.mxu0 0.0
    %1391 = vmatpush2.msra.mxu0 0.0
    %1392 = vmatprep.subr.mxu0 0.0
    %1393 = vmatpush2.msra.mxu0 0.0
    %1394 = vmatprep.subr.mxu0 0.0
    %1395 = vmatpush2.msra.mxu0 0.0
    %1396 = vmatprep.subr.mxu0 0.0
    %1397 = vmatpush2.msra.mxu0 0.0
    %1398 = vmatprep.subr.mxu0 0.0
    %1399 = vmatpush2.msra.mxu0 0.0
    %1400 = vmatprep.subr.mxu0 0.0
    %1401 = vmatpush2.msra.mxu0 0.0
    %1402 = vmatprep.subr.mxu0 0.0
    %1403 = vmatpush2.msra.mxu0 0.0
    %1404 = vmatprep.subr.mxu0 0.0
    %1405 = vmatpush2.msra.mxu0 0.0
    %1406 = vmatprep.subr.mxu0 0.0
    %1407 = vmatpush2.msra.mxu0 0.0
    %1408 = vmatprep.subr.mxu0 0.0
    %1409 = vmatpush2.msra.mxu0 0.0
    %1410 = vmatprep.mubr.f32.mxu0 0.0
    %1411 = vmatmul.mubr.f32.gmra.mxu0 %v1344
    %v1412 = vpop.f32.mrf.mxu0
    %v1413 = vadd.f32 0.0, %v1412
    %v1414 = vpop.f32.mrf.mxu0
    %1415 = vdwg.mxu0
    %v1417 = vrot.slane %v1332, 2
    %1418 = vrot.lane.b32.xlu0 %v1417, 32
    %v1419 = vpop.permute.xlu0 %1418
    %v1420 = vsel %vm937, %v1419, 0
    %1422 = vmatprep.subr.mxu0 0.0
    %1423 = vmatpush1.msra.mxu0 0.0
    %1424 = vmatprep.subr.mxu0 0.0
    %1425 = vmatpush1.msra.mxu0 0.0
    %1426 = vmatprep.subr.mxu0 0.0
    %1427 = vmatpush1.msra.mxu0 0.0
    %1428 = vmatprep.subr.mxu0 0.0
    %1429 = vmatpush1.msra.mxu0 0.0
    %1430 = vmatprep.subr.mxu0 0.0
    %1431 = vmatpush1.msra.mxu0 0.0
    %1432 = vmatprep.subr.mxu0 0.0
    %1433 = vmatpush1.msra.mxu0 0.0
    %1434 = vmatprep.subr.mxu0 0.0
    %1435 = vmatpush1.msra.mxu0 0.0
    %1436 = vmatprep.subr.mxu0 0.0
    %1437 = vmatpush1.msra.mxu0 0.0
    %1438 = vmatprep.subr.mxu0 0.0
    %1439 = vmatpush1.msra.mxu0 0.0
    %1440 = vmatprep.subr.mxu0 0.0
    %1441 = vmatpush1.msra.mxu0 0.0
    %1442 = vmatprep.subr.mxu0 0.0
    %1443 = vmatpush1.msra.mxu0 0.0
    %1444 = vmatprep.subr.mxu0 0.0
    %1445 = vmatpush1.msra.mxu0 0.0
    %1446 = vmatprep.subr.mxu0 0.0
    %1447 = vmatpush1.msra.mxu0 %v1336
    %1448 = vmatprep.subr.mxu0 0.0
    %1449 = vmatpush1.msra.mxu0 %v1335
    %1450 = vmatprep.subr.mxu0 0.0
    %1451 = vmatpush1.msra.mxu0 %v1334
    %1452 = vmatprep.subr.mxu0 0.0
    %1453 = vmatpush1.msra.mxu0 %v1333
    %1454 = vmatprep.subr.mxu0 0.0
    %1455 = vmatpush2.msra.mxu0 0.0
    %1456 = vmatprep.subr.mxu0 0.0
    %1457 = vmatpush2.msra.mxu0 0.0
    %1458 = vmatprep.subr.mxu0 0.0
    %1459 = vmatpush2.msra.mxu0 0.0
    %1460 = vmatprep.subr.mxu0 0.0
    %1461 = vmatpush2.msra.mxu0 0.0
    %1462 = vmatprep.subr.mxu0 0.0
    %1463 = vmatpush2.msra.mxu0 0.0
    %1464 = vmatprep.subr.mxu0 0.0
    %1465 = vmatpush2.msra.mxu0 0.0
    %1466 = vmatprep.subr.mxu0 0.0
    %1467 = vmatpush2.msra.mxu0 0.0
    %1468 = vmatprep.subr.mxu0 0.0
    %1469 = vmatpush2.msra.mxu0 0.0
    %1470 = vmatprep.subr.mxu0 0.0
    %1471 = vmatpush2.msra.mxu0 0.0
    %1472 = vmatprep.subr.mxu0 0.0
    %1473 = vmatpush2.msra.mxu0 0.0
    %1474 = vmatprep.subr.mxu0 0.0
    %1475 = vmatpush2.msra.mxu0 0.0
    %1476 = vmatprep.subr.mxu0 0.0
    %1477 = vmatpush2.msra.mxu0 0.0
    %1478 = vmatprep.subr.mxu0 0.0
    %1479 = vmatpush2.msra.mxu0 0.0
    %1480 = vmatprep.subr.mxu0 0.0
    %1481 = vmatpush2.msra.mxu0 0.0
    %1482 = vmatprep.subr.mxu0 0.0
    %1483 = vmatpush2.msra.mxu0 0.0
    %1484 = vmatprep.subr.mxu0 0.0
    %1485 = vmatpush2.msra.mxu0 0.0
    %1486 = vmatprep.mubr.f32.mxu0 0.0
    %1487 = vmatmul.mubr.f32.gmra.mxu0 %v1420
    %v1488 = vpop.f32.mrf.mxu0
    %v1489 = vadd.f32 %v1413, %v1488
    %v1490 = vpop.f32.mrf.mxu0
    %1491 = vdwg.mxu0
    %v1492 = vld [vmem:[#allocation17] sm:$0x1]
    %v1494 = vlaneseq
    %v1495 = vshrl.u32 %v1494, 7
    %v1496 = vsub.s32 0, %v1495
    %v1497 = vrot.slane %v1492, %v1496
    %v1499 = vadd.f32 %v1489, %v1497
    %v1500 = vxor.u32 %v1499, 2147483648
    %v1501 = vmul.f32 %v1500, 1.442695
    %v1502 = vpow.pop %v1501
    %v1503 = vadd.f32 %v1502, 1.0
    %v1504 = vrcp.pop %v1503
    %v1505 = vmul.f32 1.0, %v1504
    %v1506 = vtanh.pop %v1499
    %v1507 = vmul.f32 %v1505, %v1214
    %1509 = vrot.lane.b32.xlu0 %v1506, 64
    %v1510 = vpop.permute.xlu0 %1509
    %v1512 = vmul.f32 %v1505, %v1510
    %1514 = vrot.lane.b32.xlu0 %v1512, 32
    %v1515 = vpop.permute.xlu0 %1514
    %v1517 = vadd.f32 %v1507, %v1515
    %v1518 = vtanh.pop %v1517
    %1520 = vrot.lane.b32.xlu0 %v1518, 64
    %v1521 = vpop.permute.xlu0 %1520
    %v1523 = vmul.f32 %v1505, %v1521
    %v1524 = vtanh.pop %v1523
    %1526 = vrot.lane.b32.xlu0 %v1524, 32
    %v1527 = vpop.permute.xlu0 %1526
    %1529 = vst.msk [vmem:[#allocation2 + $0x2] sm:$0x3] %vm1226, %v1527
    %v1530 = vld [vmem:[#allocation12] sm:$0xff]
    %v1531 = vld [vmem:[#allocation12 + $0x8] sm:$0xff]
    %v1532 = vld [vmem:[#allocation12 + $0x10] sm:$0xff]
    %v1533 = vld [vmem:[#allocation12 + $0x18] sm:$0xff]
    %1534 = vmatprep.subr.mxu0 0.0
    %1535 = vmatpush1.msra.mxu0 0.0
    %1536 = vmatprep.subr.mxu0 0.0
    %1537 = vmatpush1.msra.mxu0 0.0
    %1538 = vmatprep.subr.mxu0 0.0
    %1539 = vmatpush1.msra.mxu0 0.0
    %1540 = vmatprep.subr.mxu0 0.0
    %1541 = vmatpush1.msra.mxu0 0.0
    %1542 = vmatprep.subr.mxu0 0.0
    %1543 = vmatpush1.msra.mxu0 0.0
    %1544 = vmatprep.subr.mxu0 0.0
    %1545 = vmatpush1.msra.mxu0 0.0
    %1546 = vmatprep.subr.mxu0 0.0
    %1547 = vmatpush1.msra.mxu0 0.0
    %1548 = vmatprep.subr.mxu0 0.0
    %1549 = vmatpush1.msra.mxu0 0.0
    %1550 = vmatprep.subr.mxu0 0.0
    %1551 = vmatpush1.msra.mxu0 0.0
    %1552 = vmatprep.subr.mxu0 0.0
    %1553 = vmatpush1.msra.mxu0 0.0
    %1554 = vmatprep.subr.mxu0 0.0
    %1555 = vmatpush1.msra.mxu0 0.0
    %1556 = vmatprep.subr.mxu0 0.0
    %1557 = vmatpush1.msra.mxu0 0.0
    %1558 = vmatprep.subr.mxu0 0.0
    %1559 = vmatpush1.msra.mxu0 %v1533
    %1560 = vmatprep.subr.mxu0 0.0
    %1561 = vmatpush1.msra.mxu0 %v1532
    %1562 = vmatprep.subr.mxu0 0.0
    %1563 = vmatpush1.msra.mxu0 %v1531
    %1564 = vmatprep.subr.mxu0 0.0
    %1565 = vmatpush1.msra.mxu0 %v1530
    %1566 = vmatprep.subr.mxu0 0.0
    %1567 = vmatpush2.msra.mxu0 0.0
    %1568 = vmatprep.subr.mxu0 0.0
    %1569 = vmatpush2.msra.mxu0 0.0
    %1570 = vmatprep.subr.mxu0 0.0
    %1571 = vmatpush2.msra.mxu0 0.0
    %1572 = vmatprep.subr.mxu0 0.0
    %1573 = vmatpush2.msra.mxu0 0.0
    %1574 = vmatprep.subr.mxu0 0.0
    %1575 = vmatpush2.msra.mxu0 0.0
    %1576 = vmatprep.subr.mxu0 0.0
    %1577 = vmatpush2.msra.mxu0 0.0
    %1578 = vmatprep.subr.mxu0 0.0
    %1579 = vmatpush2.msra.mxu0 0.0
    %1580 = vmatprep.subr.mxu0 0.0
    %1581 = vmatpush2.msra.mxu0 0.0
    %1582 = vmatprep.subr.mxu0 0.0
    %1583 = vmatpush2.msra.mxu0 0.0
    %1584 = vmatprep.subr.mxu0 0.0
    %1585 = vmatpush2.msra.mxu0 0.0
    %1586 = vmatprep.subr.mxu0 0.0
    %1587 = vmatpush2.msra.mxu0 0.0
    %1588 = vmatprep.subr.mxu0 0.0
    %1589 = vmatpush2.msra.mxu0 0.0
    %1590 = vmatprep.subr.mxu0 0.0
    %1591 = vmatpush2.msra.mxu0 0.0
    %1592 = vmatprep.subr.mxu0 0.0
    %1593 = vmatpush2.msra.mxu0 0.0
    %1594 = vmatprep.subr.mxu0 0.0
    %1595 = vmatpush2.msra.mxu0 0.0
    %1596 = vmatprep.subr.mxu0 0.0
    %1597 = vmatpush2.msra.mxu0 0.0
    %1598 = vmatprep.mubr.f32.mxu0 0.0
    %1599 = vmatmul.mubr.f32.gmra.mxu0 %v1420
    %v1600 = vpop.f32.mrf.mxu0
    %v1601 = vadd.f32 0.0, %v1600
    %v1602 = vpop.f32.mrf.mxu0
    %1603 = vdwg.mxu0
    %v1605 = vrot.slane %v1601, 4
    %v1607 = vadd.f32 %v925, %v1605
    %v1608 = vxor.u32 %v1607, 2147483648
    %v1609 = vmul.f32 %v1608, 1.442695
    %v1610 = vpow.pop %v1609
    %v1611 = vadd.f32 %v1610, 1.0
    %v1612 = vrcp.pop %v1611
    %v1613 = vmul.f32 1.0, %v1612
    %v1614 = vtanh.pop %v1607
    %v1616 = vrot.slane %v1326, 6
    %v1618 = vmul.f32 %v1613, %v1616
    %1620 = vrot.lane.b32.xlu0 %v1614, 64
    %v1621 = vpop.permute.xlu0 %1620
    %v1623 = vmul.f32 %v1613, %v1621
    %1625 = vrot.lane.b32.xlu0 %v1623, 32
    %v1626 = vpop.permute.xlu0 %1625
    %v1628 = vadd.f32 %v1618, %v1626
    %v1629 = vtanh.pop %v1628
    %1631 = vrot.lane.b32.xlu0 %v1629, 64
    %v1632 = vpop.permute.xlu0 %1631
    %v1634 = vmul.f32 %v1613, %v1632
    %v1635 = vld [vmem:[#allocation14] sm:$0xff]
    %v1636 = vld [vmem:[#allocation14 + $0x8] sm:$0xff]
    %v1637 = vld [vmem:[#allocation14 + $0x10] sm:$0xff]
    %v1638 = vld [vmem:[#allocation14 + $0x18] sm:$0xff]
    %v1639 = vld [vmem:[#allocation16] sm:$0xff]
    %v1640 = vld [vmem:[#allocation16 + $0x8] sm:$0xff]
    %v1641 = vld [vmem:[#allocation16 + $0x10] sm:$0xff]
    %v1642 = vld [vmem:[#allocation16 + $0x18] sm:$0xff]
    %1644 = vrot.lane.b32.xlu0 %v1523, 32
    %v1645 = vpop.permute.xlu0 %1644
    %v1646 = vsel %vm937, %v1645, 0
    %1648 = vmatprep.subr.mxu0 0.0
    %1649 = vmatpush1.msra.mxu0 0.0
    %1650 = vmatprep.subr.mxu0 0.0
    %1651 = vmatpush1.msra.mxu0 0.0
    %1652 = vmatprep.subr.mxu0 0.0
    %1653 = vmatpush1.msra.mxu0 0.0
    %1654 = vmatprep.subr.mxu0 0.0
    %1655 = vmatpush1.msra.mxu0 0.0
    %1656 = vmatprep.subr.mxu0 0.0
    %1657 = vmatpush1.msra.mxu0 0.0
    %1658 = vmatprep.subr.mxu0 0.0
    %1659 = vmatpush1.msra.mxu0 0.0
    %1660 = vmatprep.subr.mxu0 0.0
    %1661 = vmatpush1.msra.mxu0 0.0
    %1662 = vmatprep.subr.mxu0 0.0
    %1663 = vmatpush1.msra.mxu0 0.0
    %1664 = vmatprep.subr.mxu0 0.0
    %1665 = vmatpush1.msra.mxu0 0.0
    %1666 = vmatprep.subr.mxu0 0.0
    %1667 = vmatpush1.msra.mxu0 0.0
    %1668 = vmatprep.subr.mxu0 0.0
    %1669 = vmatpush1.msra.mxu0 0.0
    %1670 = vmatprep.subr.mxu0 0.0
    %1671 = vmatpush1.msra.mxu0 0.0
    %1672 = vmatprep.subr.mxu0 0.0
    %1673 = vmatpush1.msra.mxu0 %v1642
    %1674 = vmatprep.subr.mxu0 0.0
    %1675 = vmatpush1.msra.mxu0 %v1641
    %1676 = vmatprep.subr.mxu0 0.0
    %1677 = vmatpush1.msra.mxu0 %v1640
    %1678 = vmatprep.subr.mxu0 0.0
    %1679 = vmatpush1.msra.mxu0 %v1639
    %1680 = vmatprep.subr.mxu0 0.0
    %1681 = vmatpush2.msra.mxu0 0.0
    %1682 = vmatprep.subr.mxu0 0.0
    %1683 = vmatpush2.msra.mxu0 0.0
    %1684 = vmatprep.subr.mxu0 0.0
    %1685 = vmatpush2.msra.mxu0 0.0
    %1686 = vmatprep.subr.mxu0 0.0
    %1687 = vmatpush2.msra.mxu0 0.0
    %1688 = vmatprep.subr.mxu0 0.0
    %1689 = vmatpush2.msra.mxu0 0.0
    %1690 = vmatprep.subr.mxu0 0.0
    %1691 = vmatpush2.msra.mxu0 0.0
    %1692 = vmatprep.subr.mxu0 0.0
    %1693 = vmatpush2.msra.mxu0 0.0
    %1694 = vmatprep.subr.mxu0 0.0
    %1695 = vmatpush2.msra.mxu0 0.0
    %1696 = vmatprep.subr.mxu0 0.0
    %1697 = vmatpush2.msra.mxu0 0.0
    %1698 = vmatprep.subr.mxu0 0.0
    %1699 = vmatpush2.msra.mxu0 0.0
    %1700 = vmatprep.subr.mxu0 0.0
    %1701 = vmatpush2.msra.mxu0 0.0
    %1702 = vmatprep.subr.mxu0 0.0
    %1703 = vmatpush2.msra.mxu0 0.0
    %1704 = vmatprep.subr.mxu0 0.0
    %1705 = vmatpush2.msra.mxu0 0.0
    %1706 = vmatprep.subr.mxu0 0.0
    %1707 = vmatpush2.msra.mxu0 0.0
    %1708 = vmatprep.subr.mxu0 0.0
    %1709 = vmatpush2.msra.mxu0 0.0
    %1710 = vmatprep.subr.mxu0 0.0
    %1711 = vmatpush2.msra.mxu0 0.0
    %1712 = vmatprep.mubr.f32.mxu0 0.0
    %1713 = vmatmul.mubr.f32.gmra.mxu0 %v1646
    %v1714 = vpop.f32.mrf.mxu0
    %v1715 = vadd.f32 0.0, %v1714
    %v1716 = vpop.f32.mrf.mxu0
    %1717 = vdwg.mxu0
    %v1719 = vrot.slane %v1634, 4
    %1720 = vrot.lane.b32.xlu0 %v1719, 32
    %v1721 = vpop.permute.xlu0 %1720
    %v1722 = vsel %vm937, %v1721, 0
    %1724 = vmatprep.subr.mxu0 0.0
    %1725 = vmatpush1.msra.mxu0 0.0
    %1726 = vmatprep.subr.mxu0 0.0
    %1727 = vmatpush1.msra.mxu0 0.0
    %1728 = vmatprep.subr.mxu0 0.0
    %1729 = vmatpush1.msra.mxu0 0.0
    %1730 = vmatprep.subr.mxu0 0.0
    %1731 = vmatpush1.msra.mxu0 0.0
    %1732 = vmatprep.subr.mxu0 0.0
    %1733 = vmatpush1.msra.mxu0 0.0
    %1734 = vmatprep.subr.mxu0 0.0
    %1735 = vmatpush1.msra.mxu0 0.0
    %1736 = vmatprep.subr.mxu0 0.0
    %1737 = vmatpush1.msra.mxu0 0.0
    %1738 = vmatprep.subr.mxu0 0.0
    %1739 = vmatpush1.msra.mxu0 0.0
    %1740 = vmatprep.subr.mxu0 0.0
    %1741 = vmatpush1.msra.mxu0 0.0
    %1742 = vmatprep.subr.mxu0 0.0
    %1743 = vmatpush1.msra.mxu0 0.0
    %1744 = vmatprep.subr.mxu0 0.0
    %1745 = vmatpush1.msra.mxu0 0.0
    %1746 = vmatprep.subr.mxu0 0.0
    %1747 = vmatpush1.msra.mxu0 0.0
    %1748 = vmatprep.subr.mxu0 0.0
    %1749 = vmatpush1.msra.mxu0 %v1638
    %1750 = vmatprep.subr.mxu0 0.0
    %1751 = vmatpush1.msra.mxu0 %v1637
    %1752 = vmatprep.subr.mxu0 0.0
    %1753 = vmatpush1.msra.mxu0 %v1636
    %1754 = vmatprep.subr.mxu0 0.0
    %1755 = vmatpush1.msra.mxu0 %v1635
    %1756 = vmatprep.subr.mxu0 0.0
    %1757 = vmatpush2.msra.mxu0 0.0
    %1758 = vmatprep.subr.mxu0 0.0
    %1759 = vmatpush2.msra.mxu0 0.0
    %1760 = vmatprep.subr.mxu0 0.0
    %1761 = vmatpush2.msra.mxu0 0.0
    %1762 = vmatprep.subr.mxu0 0.0
    %1763 = vmatpush2.msra.mxu0 0.0
    %1764 = vmatprep.subr.mxu0 0.0
    %1765 = vmatpush2.msra.mxu0 0.0
    %1766 = vmatprep.subr.mxu0 0.0
    %1767 = vmatpush2.msra.mxu0 0.0
    %1768 = vmatprep.subr.mxu0 0.0
    %1769 = vmatpush2.msra.mxu0 0.0
    %1770 = vmatprep.subr.mxu0 0.0
    %1771 = vmatpush2.msra.mxu0 0.0
    %1772 = vmatprep.subr.mxu0 0.0
    %1773 = vmatpush2.msra.mxu0 0.0
    %1774 = vmatprep.subr.mxu0 0.0
    %1775 = vmatpush2.msra.mxu0 0.0
    %1776 = vmatprep.subr.mxu0 0.0
    %1777 = vmatpush2.msra.mxu0 0.0
    %1778 = vmatprep.subr.mxu0 0.0
    %1779 = vmatpush2.msra.mxu0 0.0
    %1780 = vmatprep.subr.mxu0 0.0
    %1781 = vmatpush2.msra.mxu0 0.0
    %1782 = vmatprep.subr.mxu0 0.0
    %1783 = vmatpush2.msra.mxu0 0.0
    %1784 = vmatprep.subr.mxu0 0.0
    %1785 = vmatpush2.msra.mxu0 0.0
    %1786 = vmatprep.subr.mxu0 0.0
    %1787 = vmatpush2.msra.mxu0 0.0
    %1788 = vmatprep.mubr.f32.mxu0 0.0
    %1789 = vmatmul.mubr.f32.gmra.mxu0 %v1722
    %v1790 = vpop.f32.mrf.mxu0
    %v1791 = vadd.f32 %v1715, %v1790
    %v1792 = vpop.f32.mrf.mxu0
    %1793 = vdwg.mxu0
    %v1794 = vld [vmem:[#allocation17] sm:$0x1]
    %v1796 = vlaneseq
    %v1797 = vshrl.u32 %v1796, 7
    %v1798 = vsub.s32 0, %v1797
    %v1799 = vrot.slane %v1794, %v1798
    %v1801 = vadd.f32 %v1791, %v1799
    %v1802 = vxor.u32 %v1801, 2147483648
    %v1803 = vmul.f32 %v1802, 1.442695
    %v1804 = vpow.pop %v1803
    %v1805 = vadd.f32 %v1804, 1.0
    %v1806 = vrcp.pop %v1805
    %v1807 = vmul.f32 1.0, %v1806
    %v1808 = vtanh.pop %v1801
    %v1809 = vmul.f32 %v1807, %v1517
    %1811 = vrot.lane.b32.xlu0 %v1808, 64
    %v1812 = vpop.permute.xlu0 %1811
    %v1814 = vmul.f32 %v1807, %v1812
    %1816 = vrot.lane.b32.xlu0 %v1814, 32
    %v1817 = vpop.permute.xlu0 %1816
    %v1819 = vadd.f32 %v1809, %v1817
    %v1820 = vtanh.pop %v1819
    %1822 = vrot.lane.b32.xlu0 %v1820, 64
    %v1823 = vpop.permute.xlu0 %1822
    %v1825 = vmul.f32 %v1807, %v1823
    %v1826 = vtanh.pop %v1825
    %1828 = vrot.lane.b32.xlu0 %v1826, 32
    %v1829 = vpop.permute.xlu0 %1828
    %1831 = vst.msk [vmem:[#allocation2 + $0x4] sm:$0x3] %vm1226, %v1829
    %v1832 = vld [vmem:[#allocation12] sm:$0xff]
    %v1833 = vld [vmem:[#allocation12 + $0x8] sm:$0xff]
    %v1834 = vld [vmem:[#allocation12 + $0x10] sm:$0xff]
    %v1835 = vld [vmem:[#allocation12 + $0x18] sm:$0xff]
    %1836 = vmatprep.subr.mxu0 0.0
    %1837 = vmatpush1.msra.mxu0 0.0
    %1838 = vmatprep.subr.mxu0 0.0
    %1839 = vmatpush1.msra.mxu0 0.0
    %1840 = vmatprep.subr.mxu0 0.0
    %1841 = vmatpush1.msra.mxu0 0.0
    %1842 = vmatprep.subr.mxu0 0.0
    %1843 = vmatpush1.msra.mxu0 0.0
    %1844 = vmatprep.subr.mxu0 0.0
    %1845 = vmatpush1.msra.mxu0 0.0
    %1846 = vmatprep.subr.mxu0 0.0
    %1847 = vmatpush1.msra.mxu0 0.0
    %1848 = vmatprep.subr.mxu0 0.0
    %1849 = vmatpush1.msra.mxu0 0.0
    %1850 = vmatprep.subr.mxu0 0.0
    %1851 = vmatpush1.msra.mxu0 0.0
    %1852 = vmatprep.subr.mxu0 0.0
    %1853 = vmatpush1.msra.mxu0 0.0
    %1854 = vmatprep.subr.mxu0 0.0
    %1855 = vmatpush1.msra.mxu0 0.0
    %1856 = vmatprep.subr.mxu0 0.0
    %1857 = vmatpush1.msra.mxu0 0.0
    %1858 = vmatprep.subr.mxu0 0.0
    %1859 = vmatpush1.msra.mxu0 0.0
    %1860 = vmatprep.subr.mxu0 0.0
    %1861 = vmatpush1.msra.mxu0 %v1835
    %1862 = vmatprep.subr.mxu0 0.0
    %1863 = vmatpush1.msra.mxu0 %v1834
    %1864 = vmatprep.subr.mxu0 0.0
    %1865 = vmatpush1.msra.mxu0 %v1833
    %1866 = vmatprep.subr.mxu0 0.0
    %1867 = vmatpush1.msra.mxu0 %v1832
    %1868 = vmatprep.subr.mxu0 0.0
    %1869 = vmatpush2.msra.mxu0 0.0
    %1870 = vmatprep.subr.mxu0 0.0
    %1871 = vmatpush2.msra.mxu0 0.0
    %1872 = vmatprep.subr.mxu0 0.0
    %1873 = vmatpush2.msra.mxu0 0.0
    %1874 = vmatprep.subr.mxu0 0.0
    %1875 = vmatpush2.msra.mxu0 0.0
    %1876 = vmatprep.subr.mxu0 0.0
    %1877 = vmatpush2.msra.mxu0 0.0
    %1878 = vmatprep.subr.mxu0 0.0
    %1879 = vmatpush2.msra.mxu0 0.0
    %1880 = vmatprep.subr.mxu0 0.0
    %1881 = vmatpush2.msra.mxu0 0.0
    %1882 = vmatprep.subr.mxu0 0.0
    %1883 = vmatpush2.msra.mxu0 0.0
    %1884 = vmatprep.subr.mxu0 0.0
    %1885 = vmatpush2.msra.mxu0 0.0
    %1886 = vmatprep.subr.mxu0 0.0
    %1887 = vmatpush2.msra.mxu0 0.0
    %1888 = vmatprep.subr.mxu0 0.0
    %1889 = vmatpush2.msra.mxu0 0.0
    %1890 = vmatprep.subr.mxu0 0.0
    %1891 = vmatpush2.msra.mxu0 0.0
    %1892 = vmatprep.subr.mxu0 0.0
    %1893 = vmatpush2.msra.mxu0 0.0
    %1894 = vmatprep.subr.mxu0 0.0
    %1895 = vmatpush2.msra.mxu0 0.0
    %1896 = vmatprep.subr.mxu0 0.0
    %1897 = vmatpush2.msra.mxu0 0.0
    %1898 = vmatprep.subr.mxu0 0.0
    %1899 = vmatpush2.msra.mxu0 0.0
    %1900 = vmatprep.mubr.f32.mxu0 0.0
    %1901 = vmatmul.mubr.f32.gmra.mxu0 %v1722
    %v1902 = vpop.f32.mrf.mxu0
    %v1903 = vadd.f32 0.0, %v1902
    %v1904 = vpop.f32.mrf.mxu0
    %1905 = vdwg.mxu0
    %v1907 = vrot.slane %v1903, 2
    %v1909 = vadd.f32 %v925, %v1907
    %v1910 = vxor.u32 %v1909, 2147483648
    %v1911 = vmul.f32 %v1910, 1.442695
    %v1912 = vpow.pop %v1911
    %v1913 = vadd.f32 %v1912, 1.0
    %v1914 = vrcp.pop %v1913
    %v1915 = vmul.f32 1.0, %v1914
    %v1916 = vtanh.pop %v1909
    %v1918 = vrot.slane %v1628, 6
    %v1920 = vmul.f32 %v1915, %v1918
    %1922 = vrot.lane.b32.xlu0 %v1916, 64
    %v1923 = vpop.permute.xlu0 %1922
    %v1925 = vmul.f32 %v1915, %v1923
    %1927 = vrot.lane.b32.xlu0 %v1925, 32
    %v1928 = vpop.permute.xlu0 %1927
    %v1930 = vadd.f32 %v1920, %v1928
    %v1931 = vtanh.pop %v1930
    %1933 = vrot.lane.b32.xlu0 %v1931, 64
    %v1934 = vpop.permute.xlu0 %1933
    %v1936 = vmul.f32 %v1915, %v1934
    %v1937 = vld [vmem:[#allocation14] sm:$0xff]
    %v1938 = vld [vmem:[#allocation14 + $0x8] sm:$0xff]
    %v1939 = vld [vmem:[#allocation14 + $0x10] sm:$0xff]
    %v1940 = vld [vmem:[#allocation14 + $0x18] sm:$0xff]
    %v1941 = vld [vmem:[#allocation16] sm:$0xff]
    %v1942 = vld [vmem:[#allocation16 + $0x8] sm:$0xff]
    %v1943 = vld [vmem:[#allocation16 + $0x10] sm:$0xff]
    %v1944 = vld [vmem:[#allocation16 + $0x18] sm:$0xff]
    %1946 = vrot.lane.b32.xlu0 %v1825, 32
    %v1947 = vpop.permute.xlu0 %1946
    %v1948 = vsel %vm937, %v1947, 0
    %1950 = vmatprep.subr.mxu0 0.0
    %1951 = vmatpush1.msra.mxu0 0.0
    %1952 = vmatprep.subr.mxu0 0.0
    %1953 = vmatpush1.msra.mxu0 0.0
    %1954 = vmatprep.subr.mxu0 0.0
    %1955 = vmatpush1.msra.mxu0 0.0
    %1956 = vmatprep.subr.mxu0 0.0
    %1957 = vmatpush1.msra.mxu0 0.0
    %1958 = vmatprep.subr.mxu0 0.0
    %1959 = vmatpush1.msra.mxu0 0.0
    %1960 = vmatprep.subr.mxu0 0.0
    %1961 = vmatpush1.msra.mxu0 0.0
    %1962 = vmatprep.subr.mxu0 0.0
    %1963 = vmatpush1.msra.mxu0 0.0
    %1964 = vmatprep.subr.mxu0 0.0
    %1965 = vmatpush1.msra.mxu0 0.0
    %1966 = vmatprep.subr.mxu0 0.0
    %1967 = vmatpush1.msra.mxu0 0.0
    %1968 = vmatprep.subr.mxu0 0.0
    %1969 = vmatpush1.msra.mxu0 0.0
    %1970 = vmatprep.subr.mxu0 0.0
    %1971 = vmatpush1.msra.mxu0 0.0
    %1972 = vmatprep.subr.mxu0 0.0
    %1973 = vmatpush1.msra.mxu0 0.0
    %1974 = vmatprep.subr.mxu0 0.0
    %1975 = vmatpush1.msra.mxu0 %v1944
    %1976 = vmatprep.subr.mxu0 0.0
    %1977 = vmatpush1.msra.mxu0 %v1943
    %1978 = vmatprep.subr.mxu0 0.0
    %1979 = vmatpush1.msra.mxu0 %v1942
    %1980 = vmatprep.subr.mxu0 0.0
    %1981 = vmatpush1.msra.mxu0 %v1941
    %1982 = vmatprep.subr.mxu0 0.0
    %1983 = vmatpush2.msra.mxu0 0.0
    %1984 = vmatprep.subr.mxu0 0.0
    %1985 = vmatpush2.msra.mxu0 0.0
    %1986 = vmatprep.subr.mxu0 0.0
    %1987 = vmatpush2.msra.mxu0 0.0
    %1988 = vmatprep.subr.mxu0 0.0
    %1989 = vmatpush2.msra.mxu0 0.0
    %1990 = vmatprep.subr.mxu0 0.0
    %1991 = vmatpush2.msra.mxu0 0.0
    %1992 = vmatprep.subr.mxu0 0.0
    %1993 = vmatpush2.msra.mxu0 0.0
    %1994 = vmatprep.subr.mxu0 0.0
    %1995 = vmatpush2.msra.mxu0 0.0
    %1996 = vmatprep.subr.mxu0 0.0
    %1997 = vmatpush2.msra.mxu0 0.0
    %1998 = vmatprep.subr.mxu0 0.0
    %1999 = vmatpush2.msra.mxu0 0.0
    %2000 = vmatprep.subr.mxu0 0.0
    %2001 = vmatpush2.msra.mxu0 0.0
    %2002 = vmatprep.subr.mxu0 0.0
    %2003 = vmatpush2.msra.mxu0 0.0
    %2004 = vmatprep.subr.mxu0 0.0
    %2005 = vmatpush2.msra.mxu0 0.0
    %2006 = vmatprep.subr.mxu0 0.0
    %2007 = vmatpush2.msra.mxu0 0.0
    %2008 = vmatprep.subr.mxu0 0.0
    %2009 = vmatpush2.msra.mxu0 0.0
    %2010 = vmatprep.subr.mxu0 0.0
    %2011 = vmatpush2.msra.mxu0 0.0
    %2012 = vmatprep.subr.mxu0 0.0
    %2013 = vmatpush2.msra.mxu0 0.0
    %2014 = vmatprep.mubr.f32.mxu0 0.0
    %2015 = vmatmul.mubr.f32.gmra.mxu0 %v1948
    %v2016 = vpop.f32.mrf.mxu0
    %v2017 = vadd.f32 0.0, %v2016
    %v2018 = vpop.f32.mrf.mxu0
    %2019 = vdwg.mxu0
    %v2021 = vrot.slane %v1936, 6
    %2022 = vrot.lane.b32.xlu0 %v2021, 32
    %v2023 = vpop.permute.xlu0 %2022
    %v2024 = vsel %vm937, %v2023, 0
    %2026 = vmatprep.subr.mxu0 0.0
    %2027 = vmatpush1.msra.mxu0 0.0
    %2028 = vmatprep.subr.mxu0 0.0
    %2029 = vmatpush1.msra.mxu0 0.0
    %2030 = vmatprep.subr.mxu0 0.0
    %2031 = vmatpush1.msra.mxu0 0.0
    %2032 = vmatprep.subr.mxu0 0.0
    %2033 = vmatpush1.msra.mxu0 0.0
    %2034 = vmatprep.subr.mxu0 0.0
    %2035 = vmatpush1.msra.mxu0 0.0
    %2036 = vmatprep.subr.mxu0 0.0
    %2037 = vmatpush1.msra.mxu0 0.0
    %2038 = vmatprep.subr.mxu0 0.0
    %2039 = vmatpush1.msra.mxu0 0.0
    %2040 = vmatprep.subr.mxu0 0.0
    %2041 = vmatpush1.msra.mxu0 0.0
    %2042 = vmatprep.subr.mxu0 0.0
    %2043 = vmatpush1.msra.mxu0 0.0
    %2044 = vmatprep.subr.mxu0 0.0
    %2045 = vmatpush1.msra.mxu0 0.0
    %2046 = vmatprep.subr.mxu0 0.0
    %2047 = vmatpush1.msra.mxu0 0.0
    %2048 = vmatprep.subr.mxu0 0.0
    %2049 = vmatpush1.msra.mxu0 0.0
    %2050 = vmatprep.subr.mxu0 0.0
    %2051 = vmatpush1.msra.mxu0 %v1940
    %2052 = vmatprep.subr.mxu0 0.0
    %2053 = vmatpush1.msra.mxu0 %v1939
    %2054 = vmatprep.subr.mxu0 0.0
    %2055 = vmatpush1.msra.mxu0 %v1938
    %2056 = vmatprep.subr.mxu0 0.0
    %2057 = vmatpush1.msra.mxu0 %v1937
    %2058 = vmatprep.subr.mxu0 0.0
    %2059 = vmatpush2.msra.mxu0 0.0
    %2060 = vmatprep.subr.mxu0 0.0
    %2061 = vmatpush2.msra.mxu0 0.0
    %2062 = vmatprep.subr.mxu0 0.0
    %2063 = vmatpush2.msra.mxu0 0.0
    %2064 = vmatprep.subr.mxu0 0.0
    %2065 = vmatpush2.msra.mxu0 0.0
    %2066 = vmatprep.subr.mxu0 0.0
    %2067 = vmatpush2.msra.mxu0 0.0
    %2068 = vmatprep.subr.mxu0 0.0
    %2069 = vmatpush2.msra.mxu0 0.0
    %2070 = vmatprep.subr.mxu0 0.0
    %2071 = vmatpush2.msra.mxu0 0.0
    %2072 = vmatprep.subr.mxu0 0.0
    %2073 = vmatpush2.msra.mxu0 0.0
    %2074 = vmatprep.subr.mxu0 0.0
    %2075 = vmatpush2.msra.mxu0 0.0
    %2076 = vmatprep.subr.mxu0 0.0
    %2077 = vmatpush2.msra.mxu0 0.0
    %2078 = vmatprep.subr.mxu0 0.0
    %2079 = vmatpush2.msra.mxu0 0.0
    %2080 = vmatprep.subr.mxu0 0.0
    %2081 = vmatpush2.msra.mxu0 0.0
    %2082 = vmatprep.subr.mxu0 0.0
    %2083 = vmatpush2.msra.mxu0 0.0
    %2084 = vmatprep.subr.mxu0 0.0
    %2085 = vmatpush2.msra.mxu0 0.0
    %2086 = vmatprep.subr.mxu0 0.0
    %2087 = vmatpush2.msra.mxu0 0.0
    %2088 = vmatprep.subr.mxu0 0.0
    %2089 = vmatpush2.msra.mxu0 0.0
    %2090 = vmatprep.mubr.f32.mxu0 0.0
    %2091 = vmatmul.mubr.f32.gmra.mxu0 %v2024
    %v2092 = vpop.f32.mrf.mxu0
    %v2093 = vadd.f32 %v2017, %v2092
    %v2094 = vpop.f32.mrf.mxu0
    %2095 = vdwg.mxu0
    %v2096 = vld [vmem:[#allocation17] sm:$0x1]
    %v2098 = vlaneseq
    %v2099 = vshrl.u32 %v2098, 7
    %v2100 = vsub.s32 0, %v2099
    %v2101 = vrot.slane %v2096, %v2100
    %v2103 = vadd.f32 %v2093, %v2101
    %v2104 = vxor.u32 %v2103, 2147483648
    %v2105 = vmul.f32 %v2104, 1.442695
    %v2106 = vpow.pop %v2105
    %v2107 = vadd.f32 %v2106, 1.0
    %v2108 = vrcp.pop %v2107
    %v2109 = vmul.f32 1.0, %v2108
    %v2110 = vtanh.pop %v2103
    %v2111 = vmul.f32 %v2109, %v1819
    %2113 = vrot.lane.b32.xlu0 %v2110, 64
    %v2114 = vpop.permute.xlu0 %2113
    %v2116 = vmul.f32 %v2109, %v2114
    %2118 = vrot.lane.b32.xlu0 %v2116, 32
    %v2119 = vpop.permute.xlu0 %2118
    %v2121 = vadd.f32 %v2111, %v2119
    %v2122 = vtanh.pop %v2121
    %2124 = vrot.lane.b32.xlu0 %v2122, 64
    %v2125 = vpop.permute.xlu0 %2124
    %v2127 = vmul.f32 %v2109, %v2125
    %v2128 = vtanh.pop %v2127
    %2130 = vrot.lane.b32.xlu0 %v2128, 32
    %v2131 = vpop.permute.xlu0 %2130
    %2133 = vst.msk [vmem:[#allocation2 + $0x6] sm:$0x3] %vm1226, %v2131
    %v2134 = vld [vmem:[#allocation12] sm:$0xff]
    %v2135 = vld [vmem:[#allocation12 + $0x8] sm:$0xff]
    %v2136 = vld [vmem:[#allocation12 + $0x10] sm:$0xff]
    %v2137 = vld [vmem:[#allocation12 + $0x18] sm:$0xff]
    %2138 = vmatprep.subr.mxu0 0.0
    %2139 = vmatpush1.msra.mxu0 0.0
    %2140 = vmatprep.subr.mxu0 0.0
    %2141 = vmatpush1.msra.mxu0 0.0
    %2142 = vmatprep.subr.mxu0 0.0
    %2143 = vmatpush1.msra.mxu0 0.0
    %2144 = vmatprep.subr.mxu0 0.0
    %2145 = vmatpush1.msra.mxu0 0.0
    %2146 = vmatprep.subr.mxu0 0.0
    %2147 = vmatpush1.msra.mxu0 0.0
    %2148 = vmatprep.subr.mxu0 0.0
    %2149 = vmatpush1.msra.mxu0 0.0
    %2150 = vmatprep.subr.mxu0 0.0
    %2151 = vmatpush1.msra.mxu0 0.0
    %2152 = vmatprep.subr.mxu0 0.0
    %2153 = vmatpush1.msra.mxu0 0.0
    %2154 = vmatprep.subr.mxu0 0.0
    %2155 = vmatpush1.msra.mxu0 0.0
    %2156 = vmatprep.subr.mxu0 0.0
    %2157 = vmatpush1.msra.mxu0 0.0
    %2158 = vmatprep.subr.mxu0 0.0
    %2159 = vmatpush1.msra.mxu0 0.0
    %2160 = vmatprep.subr.mxu0 0.0
    %2161 = vmatpush1.msra.mxu0 0.0
    %2162 = vmatprep.subr.mxu0 0.0
    %2163 = vmatpush1.msra.mxu0 %v2137
    %2164 = vmatprep.subr.mxu0 0.0
    %2165 = vmatpush1.msra.mxu0 %v2136
    %2166 = vmatprep.subr.mxu0 0.0
    %2167 = vmatpush1.msra.mxu0 %v2135
    %2168 = vmatprep.subr.mxu0 0.0
    %2169 = vmatpush1.msra.mxu0 %v2134
    %2170 = vmatprep.subr.mxu0 0.0
    %2171 = vmatpush2.msra.mxu0 0.0
    %2172 = vmatprep.subr.mxu0 0.0
    %2173 = vmatpush2.msra.mxu0 0.0
    %2174 = vmatprep.subr.mxu0 0.0
    %2175 = vmatpush2.msra.mxu0 0.0
    %2176 = vmatprep.subr.mxu0 0.0
    %2177 = vmatpush2.msra.mxu0 0.0
    %2178 = vmatprep.subr.mxu0 0.0
    %2179 = vmatpush2.msra.mxu0 0.0
    %2180 = vmatprep.subr.mxu0 0.0
    %2181 = vmatpush2.msra.mxu0 0.0
    %2182 = vmatprep.subr.mxu0 0.0
    %2183 = vmatpush2.msra.mxu0 0.0
    %2184 = vmatprep.subr.mxu0 0.0
    %2185 = vmatpush2.msra.mxu0 0.0
    %2186 = vmatprep.subr.mxu0 0.0
    %2187 = vmatpush2.msra.mxu0 0.0
    %2188 = vmatprep.subr.mxu0 0.0
    %2189 = vmatpush2.msra.mxu0 0.0
    %2190 = vmatprep.subr.mxu0 0.0
    %2191 = vmatpush2.msra.mxu0 0.0
    %2192 = vmatprep.subr.mxu0 0.0
    %2193 = vmatpush2.msra.mxu0 0.0
    %2194 = vmatprep.subr.mxu0 0.0
    %2195 = vmatpush2.msra.mxu0 0.0
    %2196 = vmatprep.subr.mxu0 0.0
    %2197 = vmatpush2.msra.mxu0 0.0
    %2198 = vmatprep.subr.mxu0 0.0
    %2199 = vmatpush2.msra.mxu0 0.0
    %2200 = vmatprep.subr.mxu0 0.0
    %2201 = vmatpush2.msra.mxu0 0.0
    %2202 = vmatprep.mubr.f32.mxu0 0.0
    %2203 = vmatmul.mubr.f32.gmra.mxu0 %v2024
    %v2204 = vpop.f32.mrf.mxu0
    %v2205 = vadd.f32 0.0, %v2204
    %v2206 = vpop.f32.mrf.mxu0
    %2207 = vdwg.mxu0
    %v2208 = vadd.f32 %v930, %v2205
    %v2209 = vxor.u32 %v2208, 2147483648
    %v2210 = vmul.f32 %v2209, 1.442695
    %v2211 = vpow.pop %v2210
    %v2212 = vadd.f32 %v2211, 1.0
    %v2213 = vrcp.pop %v2212
    %v2214 = vmul.f32 1.0, %v2213
    %v2215 = vtanh.pop %v2208
    %v2217 = vrot.slane %v1930, 6
    %v2219 = vmul.f32 %v2214, %v2217
    %2221 = vrot.lane.b32.xlu0 %v2215, 64
    %v2222 = vpop.permute.xlu0 %2221
    %v2224 = vmul.f32 %v2214, %v2222
    %2226 = vrot.lane.b32.xlu0 %v2224, 32
    %v2227 = vpop.permute.xlu0 %2226
    %v2229 = vadd.f32 %v2219, %v2227
    %v2230 = vtanh.pop %v2229
    %2232 = vrot.lane.b32.xlu0 %v2230, 64
    %v2233 = vpop.permute.xlu0 %2232
    %v2235 = vmul.f32 %v2214, %v2233
    %v2236 = vld [vmem:[#allocation14] sm:$0xff]
    %v2237 = vld [vmem:[#allocation14 + $0x8] sm:$0xff]
    %v2238 = vld [vmem:[#allocation14 + $0x10] sm:$0xff]
    %v2239 = vld [vmem:[#allocation14 + $0x18] sm:$0xff]
    %v2240 = vld [vmem:[#allocation16] sm:$0xff]
    %v2241 = vld [vmem:[#allocation16 + $0x8] sm:$0xff]
    %v2242 = vld [vmem:[#allocation16 + $0x10] sm:$0xff]
    %v2243 = vld [vmem:[#allocation16 + $0x18] sm:$0xff]
    %2245 = vrot.lane.b32.xlu0 %v2127, 32
    %v2246 = vpop.permute.xlu0 %2245
    %v2247 = vsel %vm937, %v2246, 0
    %2249 = vmatprep.subr.mxu0 0.0
    %2250 = vmatpush1.msra.mxu0 0.0
    %2251 = vmatprep.subr.mxu0 0.0
    %2252 = vmatpush1.msra.mxu0 0.0
    %2253 = vmatprep.subr.mxu0 0.0
    %2254 = vmatpush1.msra.mxu0 0.0
    %2255 = vmatprep.subr.mxu0 0.0
    %2256 = vmatpush1.msra.mxu0 0.0
    %2257 = vmatprep.subr.mxu0 0.0
    %2258 = vmatpush1.msra.mxu0 0.0
    %2259 = vmatprep.subr.mxu0 0.0
    %2260 = vmatpush1.msra.mxu0 0.0
    %2261 = vmatprep.subr.mxu0 0.0
    %2262 = vmatpush1.msra.mxu0 0.0
    %2263 = vmatprep.subr.mxu0 0.0
    %2264 = vmatpush1.msra.mxu0 0.0
    %2265 = vmatprep.subr.mxu0 0.0
    %2266 = vmatpush1.msra.mxu0 0.0
    %2267 = vmatprep.subr.mxu0 0.0
    %2268 = vmatpush1.msra.mxu0 0.0
    %2269 = vmatprep.subr.mxu0 0.0
    %2270 = vmatpush1.msra.mxu0 0.0
    %2271 = vmatprep.subr.mxu0 0.0
    %2272 = vmatpush1.msra.mxu0 0.0
    %2273 = vmatprep.subr.mxu0 0.0
    %2274 = vmatpush1.msra.mxu0 %v2243
    %2275 = vmatprep.subr.mxu0 0.0
    %2276 = vmatpush1.msra.mxu0 %v2242
    %2277 = vmatprep.subr.mxu0 0.0
    %2278 = vmatpush1.msra.mxu0 %v2241
    %2279 = vmatprep.subr.mxu0 0.0
    %2280 = vmatpush1.msra.mxu0 %v2240
    %2281 = vmatprep.subr.mxu0 0.0
    %2282 = vmatpush2.msra.mxu0 0.0
    %2283 = vmatprep.subr.mxu0 0.0
    %2284 = vmatpush2.msra.mxu0 0.0
    %2285 = vmatprep.subr.mxu0 0.0
    %2286 = vmatpush2.msra.mxu0 0.0
    %2287 = vmatprep.subr.mxu0 0.0
    %2288 = vmatpush2.msra.mxu0 0.0
    %2289 = vmatprep.subr.mxu0 0.0
    %2290 = vmatpush2.msra.mxu0 0.0
    %2291 = vmatprep.subr.mxu0 0.0
    %2292 = vmatpush2.msra.mxu0 0.0
    %2293 = vmatprep.subr.mxu0 0.0
    %2294 = vmatpush2.msra.mxu0 0.0
    %2295 = vmatprep.subr.mxu0 0.0
    %2296 = vmatpush2.msra.mxu0 0.0
    %2297 = vmatprep.subr.mxu0 0.0
    %2298 = vmatpush2.msra.mxu0 0.0
    %2299 = vmatprep.subr.mxu0 0.0
    %2300 = vmatpush2.msra.mxu0 0.0
    %2301 = vmatprep.subr.mxu0 0.0
    %2302 = vmatpush2.msra.mxu0 0.0
    %2303 = vmatprep.subr.mxu0 0.0
    %2304 = vmatpush2.msra.mxu0 0.0
    %2305 = vmatprep.subr.mxu0 0.0
    %2306 = vmatpush2.msra.mxu0 0.0
    %2307 = vmatprep.subr.mxu0 0.0
    %2308 = vmatpush2.msra.mxu0 0.0
    %2309 = vmatprep.subr.mxu0 0.0
    %2310 = vmatpush2.msra.mxu0 0.0
    %2311 = vmatprep.subr.mxu0 0.0
    %2312 = vmatpush2.msra.mxu0 0.0
    %2313 = vmatprep.mubr.f32.mxu0 0.0
    %2314 = vmatmul.mubr.f32.gmra.mxu0 %v2247
    %v2315 = vpop.f32.mrf.mxu0
    %v2316 = vadd.f32 0.0, %v2315
    %v2317 = vpop.f32.mrf.mxu0
    %2318 = vdwg.mxu0
    %2320 = vrot.lane.b32.xlu0 %v2235, 32
    %v2321 = vpop.permute.xlu0 %2320
    %v2322 = vsel %vm937, %v2321, 0
    %2324 = vmatprep.subr.mxu0 0.0
    %2325 = vmatpush1.msra.mxu0 0.0
    %2326 = vmatprep.subr.mxu0 0.0
    %2327 = vmatpush1.msra.mxu0 0.0
    %2328 = vmatprep.subr.mxu0 0.0
    %2329 = vmatpush1.msra.mxu0 0.0
    %2330 = vmatprep.subr.mxu0 0.0
    %2331 = vmatpush1.msra.mxu0 0.0
    %2332 = vmatprep.subr.mxu0 0.0
    %2333 = vmatpush1.msra.mxu0 0.0
    %2334 = vmatprep.subr.mxu0 0.0
    %2335 = vmatpush1.msra.mxu0 0.0
    %2336 = vmatprep.subr.mxu0 0.0
    %2337 = vmatpush1.msra.mxu0 0.0
    %2338 = vmatprep.subr.mxu0 0.0
    %2339 = vmatpush1.msra.mxu0 0.0
    %2340 = vmatprep.subr.mxu0 0.0
    %2341 = vmatpush1.msra.mxu0 0.0
    %2342 = vmatprep.subr.mxu0 0.0
    %2343 = vmatpush1.msra.mxu0 0.0
    %2344 = vmatprep.subr.mxu0 0.0
    %2345 = vmatpush1.msra.mxu0 0.0
    %2346 = vmatprep.subr.mxu0 0.0
    %2347 = vmatpush1.msra.mxu0 0.0
    %2348 = vmatprep.subr.mxu0 0.0
    %2349 = vmatpush1.msra.mxu0 %v2239
    %2350 = vmatprep.subr.mxu0 0.0
    %2351 = vmatpush1.msra.mxu0 %v2238
    %2352 = vmatprep.subr.mxu0 0.0
    %2353 = vmatpush1.msra.mxu0 %v2237
    %2354 = vmatprep.subr.mxu0 0.0
    %2355 = vmatpush1.msra.mxu0 %v2236
    %2356 = vmatprep.subr.mxu0 0.0
    %2357 = vmatpush2.msra.mxu0 0.0
    %2358 = vmatprep.subr.mxu0 0.0
    %2359 = vmatpush2.msra.mxu0 0.0
    %2360 = vmatprep.subr.mxu0 0.0
    %2361 = vmatpush2.msra.mxu0 0.0
    %2362 = vmatprep.subr.mxu0 0.0
    %2363 = vmatpush2.msra.mxu0 0.0
    %2364 = vmatprep.subr.mxu0 0.0
    %2365 = vmatpush2.msra.mxu0 0.0
    %2366 = vmatprep.subr.mxu0 0.0
    %2367 = vmatpush2.msra.mxu0 0.0
    %2368 = vmatprep.subr.mxu0 0.0
    %2369 = vmatpush2.msra.mxu0 0.0
    %2370 = vmatprep.subr.mxu0 0.0
    %2371 = vmatpush2.msra.mxu0 0.0
    %2372 = vmatprep.subr.mxu0 0.0
    %2373 = vmatpush2.msra.mxu0 0.0
    %2374 = vmatprep.subr.mxu0 0.0
    %2375 = vmatpush2.msra.mxu0 0.0
    %2376 = vmatprep.subr.mxu0 0.0
    %2377 = vmatpush2.msra.mxu0 0.0
    %2378 = vmatprep.subr.mxu0 0.0
    %2379 = vmatpush2.msra.mxu0 0.0
    %2380 = vmatprep.subr.mxu0 0.0
    %2381 = vmatpush2.msra.mxu0 0.0
    %2382 = vmatprep.subr.mxu0 0.0
    %2383 = vmatpush2.msra.mxu0 0.0
    %2384 = vmatprep.subr.mxu0 0.0
    %2385 = vmatpush2.msra.mxu0 0.0
    %2386 = vmatprep.subr.mxu0 0.0
    %2387 = vmatpush2.msra.mxu0 0.0
    %2388 = vmatprep.mubr.f32.mxu0 0.0
    %2389 = vmatmul.mubr.f32.gmra.mxu0 %v2322
    %v2390 = vpop.f32.mrf.mxu0
    %v2391 = vadd.f32 %v2316, %v2390
    %v2392 = vpop.f32.mrf.mxu0
    %2393 = vdwg.mxu0
    %v2394 = vld [vmem:[#allocation17] sm:$0x1]
    %v2396 = vlaneseq
    %v2397 = vshrl.u32 %v2396, 7
    %v2398 = vsub.s32 0, %v2397
    %v2399 = vrot.slane %v2394, %v2398
    %v2401 = vadd.f32 %v2391, %v2399
    %v2402 = vxor.u32 %v2401, 2147483648
    %v2403 = vmul.f32 %v2402, 1.442695
    %v2404 = vpow.pop %v2403
    %v2405 = vadd.f32 %v2404, 1.0
    %v2406 = vrcp.pop %v2405
    %v2407 = vmul.f32 1.0, %v2406
    %v2408 = vtanh.pop %v2401
    %v2409 = vmul.f32 %v2407, %v2121
    %2411 = vrot.lane.b32.xlu0 %v2408, 64
    %v2412 = vpop.permute.xlu0 %2411
    %v2414 = vmul.f32 %v2407, %v2412
    %2416 = vrot.lane.b32.xlu0 %v2414, 32
    %v2417 = vpop.permute.xlu0 %2416
    %v2419 = vadd.f32 %v2409, %v2417
    %v2420 = vtanh.pop %v2419
    %2422 = vrot.lane.b32.xlu0 %v2420, 64
    %v2423 = vpop.permute.xlu0 %2422
    %v2425 = vmul.f32 %v2407, %v2423
    %v2426 = vtanh.pop %v2425
    %2428 = vrot.lane.b32.xlu0 %v2426, 32
    %v2429 = vpop.permute.xlu0 %2428
    %2431 = vst.msk [vmem:[#allocation2 + $0x8] sm:$0x3] %vm1226, %v2429
    %v2432 = vld [vmem:[#allocation12] sm:$0xff]
    %v2433 = vld [vmem:[#allocation12 + $0x8] sm:$0xff]
    %v2434 = vld [vmem:[#allocation12 + $0x10] sm:$0xff]
    %v2435 = vld [vmem:[#allocation12 + $0x18] sm:$0xff]
    %2436 = vmatprep.subr.mxu0 0.0
    %2437 = vmatpush1.msra.mxu0 0.0
    %2438 = vmatprep.subr.mxu0 0.0
    %2439 = vmatpush1.msra.mxu0 0.0
    %2440 = vmatprep.subr.mxu0 0.0
    %2441 = vmatpush1.msra.mxu0 0.0
    %2442 = vmatprep.subr.mxu0 0.0
    %2443 = vmatpush1.msra.mxu0 0.0
    %2444 = vmatprep.subr.mxu0 0.0
    %2445 = vmatpush1.msra.mxu0 0.0
    %2446 = vmatprep.subr.mxu0 0.0
    %2447 = vmatpush1.msra.mxu0 0.0
    %2448 = vmatprep.subr.mxu0 0.0
    %2449 = vmatpush1.msra.mxu0 0.0
    %2450 = vmatprep.subr.mxu0 0.0
    %2451 = vmatpush1.msra.mxu0 0.0
    %2452 = vmatprep.subr.mxu0 0.0
    %2453 = vmatpush1.msra.mxu0 0.0
    %2454 = vmatprep.subr.mxu0 0.0
    %2455 = vmatpush1.msra.mxu0 0.0
    %2456 = vmatprep.subr.mxu0 0.0
    %2457 = vmatpush1.msra.mxu0 0.0
    %2458 = vmatprep.subr.mxu0 0.0
    %2459 = vmatpush1.msra.mxu0 0.0
    %2460 = vmatprep.subr.mxu0 0.0
    %2461 = vmatpush1.msra.mxu0 %v2435
    %2462 = vmatprep.subr.mxu0 0.0
    %2463 = vmatpush1.msra.mxu0 %v2434
    %2464 = vmatprep.subr.mxu0 0.0
    %2465 = vmatpush1.msra.mxu0 %v2433
    %2466 = vmatprep.subr.mxu0 0.0
    %2467 = vmatpush1.msra.mxu0 %v2432
    %2468 = vmatprep.subr.mxu0 0.0
    %2469 = vmatpush2.msra.mxu0 0.0
    %2470 = vmatprep.subr.mxu0 0.0
    %2471 = vmatpush2.msra.mxu0 0.0
    %2472 = vmatprep.subr.mxu0 0.0
    %2473 = vmatpush2.msra.mxu0 0.0
    %2474 = vmatprep.subr.mxu0 0.0
    %2475 = vmatpush2.msra.mxu0 0.0
    %2476 = vmatprep.subr.mxu0 0.0
    %2477 = vmatpush2.msra.mxu0 0.0
    %2478 = vmatprep.subr.mxu0 0.0
    %2479 = vmatpush2.msra.mxu0 0.0
    %2480 = vmatprep.subr.mxu0 0.0
    %2481 = vmatpush2.msra.mxu0 0.0
    %2482 = vmatprep.subr.mxu0 0.0
    %2483 = vmatpush2.msra.mxu0 0.0
    %2484 = vmatprep.subr.mxu0 0.0
    %2485 = vmatpush2.msra.mxu0 0.0
    %2486 = vmatprep.subr.mxu0 0.0
    %2487 = vmatpush2.msra.mxu0 0.0
    %2488 = vmatprep.subr.mxu0 0.0
    %2489 = vmatpush2.msra.mxu0 0.0
    %2490 = vmatprep.subr.mxu0 0.0
    %2491 = vmatpush2.msra.mxu0 0.0
    %2492 = vmatprep.subr.mxu0 0.0
    %2493 = vmatpush2.msra.mxu0 0.0
    %2494 = vmatprep.subr.mxu0 0.0
    %2495 = vmatpush2.msra.mxu0 0.0
    %2496 = vmatprep.subr.mxu0 0.0
    %2497 = vmatpush2.msra.mxu0 0.0
    %2498 = vmatprep.subr.mxu0 0.0
    %2499 = vmatpush2.msra.mxu0 0.0
    %2500 = vmatprep.mubr.f32.mxu0 0.0
    %2501 = vmatmul.mubr.f32.gmra.mxu0 %v2322
    %v2502 = vpop.f32.mrf.mxu0
    %v2503 = vadd.f32 0.0, %v2502
    %v2504 = vpop.f32.mrf.mxu0
    %2505 = vdwg.mxu0
    %v2507 = vrot.slane %v2503, 6
    %v2509 = vadd.f32 %v930, %v2507
    %v2510 = vxor.u32 %v2509, 2147483648
    %v2511 = vmul.f32 %v2510, 1.442695
    %v2512 = vpow.pop %v2511
    %v2513 = vadd.f32 %v2512, 1.0
    %v2514 = vrcp.pop %v2513
    %v2515 = vmul.f32 1.0, %v2514
    %v2516 = vtanh.pop %v2509
    %v2518 = vrot.slane %v2229, 6
    %v2520 = vmul.f32 %v2515, %v2518
    %2522 = vrot.lane.b32.xlu0 %v2516, 64
    %v2523 = vpop.permute.xlu0 %2522
    %v2525 = vmul.f32 %v2515, %v2523
    %2527 = vrot.lane.b32.xlu0 %v2525, 32
    %v2528 = vpop.permute.xlu0 %2527
    %v2530 = vadd.f32 %v2520, %v2528
    %v2531 = vtanh.pop %v2530
    %2533 = vrot.lane.b32.xlu0 %v2531, 64
    %v2534 = vpop.permute.xlu0 %2533
    %v2536 = vmul.f32 %v2515, %v2534
    %v2537 = vld [vmem:[#allocation14] sm:$0xff]
    %v2538 = vld [vmem:[#allocation14 + $0x8] sm:$0xff]
    %v2539 = vld [vmem:[#allocation14 + $0x10] sm:$0xff]
    %v2540 = vld [vmem:[#allocation14 + $0x18] sm:$0xff]
    %v2541 = vld [vmem:[#allocation16] sm:$0xff]
    %v2542 = vld [vmem:[#allocation16 + $0x8] sm:$0xff]
    %v2543 = vld [vmem:[#allocation16 + $0x10] sm:$0xff]
    %v2544 = vld [vmem:[#allocation16 + $0x18] sm:$0xff]
    %2546 = vrot.lane.b32.xlu0 %v2425, 32
    %v2547 = vpop.permute.xlu0 %2546
    %v2548 = vsel %vm937, %v2547, 0
    %2550 = vmatprep.subr.mxu0 0.0
    %2551 = vmatpush1.msra.mxu0 0.0
    %2552 = vmatprep.subr.mxu0 0.0
    %2553 = vmatpush1.msra.mxu0 0.0
    %2554 = vmatprep.subr.mxu0 0.0
    %2555 = vmatpush1.msra.mxu0 0.0
    %2556 = vmatprep.subr.mxu0 0.0
    %2557 = vmatpush1.msra.mxu0 0.0
    %2558 = vmatprep.subr.mxu0 0.0
    %2559 = vmatpush1.msra.mxu0 0.0
    %2560 = vmatprep.subr.mxu0 0.0
    %2561 = vmatpush1.msra.mxu0 0.0
    %2562 = vmatprep.subr.mxu0 0.0
    %2563 = vmatpush1.msra.mxu0 0.0
    %2564 = vmatprep.subr.mxu0 0.0
    %2565 = vmatpush1.msra.mxu0 0.0
    %2566 = vmatprep.subr.mxu0 0.0
    %2567 = vmatpush1.msra.mxu0 0.0
    %2568 = vmatprep.subr.mxu0 0.0
    %2569 = vmatpush1.msra.mxu0 0.0
    %2570 = vmatprep.subr.mxu0 0.0
    %2571 = vmatpush1.msra.mxu0 0.0
    %2572 = vmatprep.subr.mxu0 0.0
    %2573 = vmatpush1.msra.mxu0 0.0
    %2574 = vmatprep.subr.mxu0 0.0
    %2575 = vmatpush1.msra.mxu0 %v2544
    %2576 = vmatprep.subr.mxu0 0.0
    %2577 = vmatpush1.msra.mxu0 %v2543
    %2578 = vmatprep.subr.mxu0 0.0
    %2579 = vmatpush1.msra.mxu0 %v2542
    %2580 = vmatprep.subr.mxu0 0.0
    %2581 = vmatpush1.msra.mxu0 %v2541
    %2582 = vmatprep.subr.mxu0 0.0
    %2583 = vmatpush2.msra.mxu0 0.0
    %2584 = vmatprep.subr.mxu0 0.0
    %2585 = vmatpush2.msra.mxu0 0.0
    %2586 = vmatprep.subr.mxu0 0.0
    %2587 = vmatpush2.msra.mxu0 0.0
    %2588 = vmatprep.subr.mxu0 0.0
    %2589 = vmatpush2.msra.mxu0 0.0
    %2590 = vmatprep.subr.mxu0 0.0
    %2591 = vmatpush2.msra.mxu0 0.0
    %2592 = vmatprep.subr.mxu0 0.0
    %2593 = vmatpush2.msra.mxu0 0.0
    %2594 = vmatprep.subr.mxu0 0.0
    %2595 = vmatpush2.msra.mxu0 0.0
    %2596 = vmatprep.subr.mxu0 0.0
    %2597 = vmatpush2.msra.mxu0 0.0
    %2598 = vmatprep.subr.mxu0 0.0
    %2599 = vmatpush2.msra.mxu0 0.0
    %2600 = vmatprep.subr.mxu0 0.0
    %2601 = vmatpush2.msra.mxu0 0.0
    %2602 = vmatprep.subr.mxu0 0.0
    %2603 = vmatpush2.msra.mxu0 0.0
    %2604 = vmatprep.subr.mxu0 0.0
    %2605 = vmatpush2.msra.mxu0 0.0
    %2606 = vmatprep.subr.mxu0 0.0
    %2607 = vmatpush2.msra.mxu0 0.0
    %2608 = vmatprep.subr.mxu0 0.0
    %2609 = vmatpush2.msra.mxu0 0.0
    %2610 = vmatprep.subr.mxu0 0.0
    %2611 = vmatpush2.msra.mxu0 0.0
    %2612 = vmatprep.subr.mxu0 0.0
    %2613 = vmatpush2.msra.mxu0 0.0
    %2614 = vmatprep.mubr.f32.mxu0 0.0
    %2615 = vmatmul.mubr.f32.gmra.mxu0 %v2548
    %v2616 = vpop.f32.mrf.mxu0
    %v2617 = vadd.f32 0.0, %v2616
    %v2618 = vpop.f32.mrf.mxu0
    %2619 = vdwg.mxu0
    %v2621 = vrot.slane %v2536, 2
    %2622 = vrot.lane.b32.xlu0 %v2621, 32
    %v2623 = vpop.permute.xlu0 %2622
    %v2624 = vsel %vm937, %v2623, 0
    %2626 = vmatprep.subr.mxu0 0.0
    %2627 = vmatpush1.msra.mxu0 0.0
    %2628 = vmatprep.subr.mxu0 0.0
    %2629 = vmatpush1.msra.mxu0 0.0
    %2630 = vmatprep.subr.mxu0 0.0
    %2631 = vmatpush1.msra.mxu0 0.0
    %2632 = vmatprep.subr.mxu0 0.0
    %2633 = vmatpush1.msra.mxu0 0.0
    %2634 = vmatprep.subr.mxu0 0.0
    %2635 = vmatpush1.msra.mxu0 0.0
    %2636 = vmatprep.subr.mxu0 0.0
    %2637 = vmatpush1.msra.mxu0 0.0
    %2638 = vmatprep.subr.mxu0 0.0
    %2639 = vmatpush1.msra.mxu0 0.0
    %2640 = vmatprep.subr.mxu0 0.0
    %2641 = vmatpush1.msra.mxu0 0.0
    %2642 = vmatprep.subr.mxu0 0.0
    %2643 = vmatpush1.msra.mxu0 0.0
    %2644 = vmatprep.subr.mxu0 0.0
    %2645 = vmatpush1.msra.mxu0 0.0
    %2646 = vmatprep.subr.mxu0 0.0
    %2647 = vmatpush1.msra.mxu0 0.0
    %2648 = vmatprep.subr.mxu0 0.0
    %2649 = vmatpush1.msra.mxu0 0.0
    %2650 = vmatprep.subr.mxu0 0.0
    %2651 = vmatpush1.msra.mxu0 %v2540
    %2652 = vmatprep.subr.mxu0 0.0
    %2653 = vmatpush1.msra.mxu0 %v2539
    %2654 = vmatprep.subr.mxu0 0.0
    %2655 = vmatpush1.msra.mxu0 %v2538
    %2656 = vmatprep.subr.mxu0 0.0
    %2657 = vmatpush1.msra.mxu0 %v2537
    %2658 = vmatprep.subr.mxu0 0.0
    %2659 = vmatpush2.msra.mxu0 0.0
    %2660 = vmatprep.subr.mxu0 0.0
    %2661 = vmatpush2.msra.mxu0 0.0
    %2662 = vmatprep.subr.mxu0 0.0
    %2663 = vmatpush2.msra.mxu0 0.0
    %2664 = vmatprep.subr.mxu0 0.0
    %2665 = vmatpush2.msra.mxu0 0.0
    %2666 = vmatprep.subr.mxu0 0.0
    %2667 = vmatpush2.msra.mxu0 0.0
    %2668 = vmatprep.subr.mxu0 0.0
    %2669 = vmatpush2.msra.mxu0 0.0
    %2670 = vmatprep.subr.mxu0 0.0
    %2671 = vmatpush2.msra.mxu0 0.0
    %2672 = vmatprep.subr.mxu0 0.0
    %2673 = vmatpush2.msra.mxu0 0.0
    %2674 = vmatprep.subr.mxu0 0.0
    %2675 = vmatpush2.msra.mxu0 0.0
    %2676 = vmatprep.subr.mxu0 0.0
    %2677 = vmatpush2.msra.mxu0 0.0
    %2678 = vmatprep.subr.mxu0 0.0
    %2679 = vmatpush2.msra.mxu0 0.0
    %2680 = vmatprep.subr.mxu0 0.0
    %2681 = vmatpush2.msra.mxu0 0.0
    %2682 = vmatprep.subr.mxu0 0.0
    %2683 = vmatpush2.msra.mxu0 0.0
    %2684 = vmatprep.subr.mxu0 0.0
    %2685 = vmatpush2.msra.mxu0 0.0
    %2686 = vmatprep.subr.mxu0 0.0
    %2687 = vmatpush2.msra.mxu0 0.0
    %2688 = vmatprep.subr.mxu0 0.0
    %2689 = vmatpush2.msra.mxu0 0.0
    %2690 = vmatprep.mubr.f32.mxu0 0.0
    %2691 = vmatmul.mubr.f32.gmra.mxu0 %v2624
    %v2692 = vpop.f32.mrf.mxu0
    %v2693 = vadd.f32 %v2617, %v2692
    %v2694 = vpop.f32.mrf.mxu0
    %2695 = vdwg.mxu0
    %v2696 = vld [vmem:[#allocation17] sm:$0x1]
    %v2698 = vlaneseq
    %v2699 = vshrl.u32 %v2698, 7
    %v2700 = vsub.s32 0, %v2699
    %v2701 = vrot.slane %v2696, %v2700
    %v2703 = vadd.f32 %v2693, %v2701
    %v2704 = vxor.u32 %v2703, 2147483648
    %v2705 = vmul.f32 %v2704, 1.442695
    %v2706 = vpow.pop %v2705
    %v2707 = vadd.f32 %v2706, 1.0
    %v2708 = vrcp.pop %v2707
    %v2709 = vmul.f32 1.0, %v2708
    %v2710 = vtanh.pop %v2703
    %v2711 = vmul.f32 %v2709, %v2419
    %2713 = vrot.lane.b32.xlu0 %v2710, 64
    %v2714 = vpop.permute.xlu0 %2713
    %v2716 = vmul.f32 %v2709, %v2714
    %2718 = vrot.lane.b32.xlu0 %v2716, 32
    %v2719 = vpop.permute.xlu0 %2718
    %v2721 = vadd.f32 %v2711, %v2719
    %v2722 = vtanh.pop %v2721
    %2724 = vrot.lane.b32.xlu0 %v2722, 64
    %v2725 = vpop.permute.xlu0 %2724
    %v2727 = vmul.f32 %v2709, %v2725
    %v2728 = vtanh.pop %v2727
    %2730 = vrot.lane.b32.xlu0 %v2728, 32
    %v2731 = vpop.permute.xlu0 %2730
    %2733 = vst.msk [vmem:[#allocation2 + $0xa] sm:$0x3] %vm1226, %v2731
    %v2734 = vld [vmem:[#allocation12] sm:$0xff]
    %v2735 = vld [vmem:[#allocation12 + $0x8] sm:$0xff]
    %v2736 = vld [vmem:[#allocation12 + $0x10] sm:$0xff]
    %v2737 = vld [vmem:[#allocation12 + $0x18] sm:$0xff]
    %2738 = vmatprep.subr.mxu0 0.0
    %2739 = vmatpush1.msra.mxu0 0.0
    %2740 = vmatprep.subr.mxu0 0.0
    %2741 = vmatpush1.msra.mxu0 0.0
    %2742 = vmatprep.subr.mxu0 0.0
    %2743 = vmatpush1.msra.mxu0 0.0
    %2744 = vmatprep.subr.mxu0 0.0
    %2745 = vmatpush1.msra.mxu0 0.0
    %2746 = vmatprep.subr.mxu0 0.0
    %2747 = vmatpush1.msra.mxu0 0.0
    %2748 = vmatprep.subr.mxu0 0.0
    %2749 = vmatpush1.msra.mxu0 0.0
    %2750 = vmatprep.subr.mxu0 0.0
    %2751 = vmatpush1.msra.mxu0 0.0
    %2752 = vmatprep.subr.mxu0 0.0
    %2753 = vmatpush1.msra.mxu0 0.0
    %2754 = vmatprep.subr.mxu0 0.0
    %2755 = vmatpush1.msra.mxu0 0.0
    %2756 = vmatprep.subr.mxu0 0.0
    %2757 = vmatpush1.msra.mxu0 0.0
    %2758 = vmatprep.subr.mxu0 0.0
    %2759 = vmatpush1.msra.mxu0 0.0
    %2760 = vmatprep.subr.mxu0 0.0
    %2761 = vmatpush1.msra.mxu0 0.0
    %2762 = vmatprep.subr.mxu0 0.0
    %2763 = vmatpush1.msra.mxu0 %v2737
    %2764 = vmatprep.subr.mxu0 0.0
    %2765 = vmatpush1.msra.mxu0 %v2736
    %2766 = vmatprep.subr.mxu0 0.0
    %2767 = vmatpush1.msra.mxu0 %v2735
    %2768 = vmatprep.subr.mxu0 0.0
    %2769 = vmatpush1.msra.mxu0 %v2734
    %2770 = vmatprep.subr.mxu0 0.0
    %2771 = vmatpush2.msra.mxu0 0.0
    %2772 = vmatprep.subr.mxu0 0.0
    %2773 = vmatpush2.msra.mxu0 0.0
    %2774 = vmatprep.subr.mxu0 0.0
    %2775 = vmatpush2.msra.mxu0 0.0
    %2776 = vmatprep.subr.mxu0 0.0
    %2777 = vmatpush2.msra.mxu0 0.0
    %2778 = vmatprep.subr.mxu0 0.0
    %2779 = vmatpush2.msra.mxu0 0.0
    %2780 = vmatprep.subr.mxu0 0.0
    %2781 = vmatpush2.msra.mxu0 0.0
    %2782 = vmatprep.subr.mxu0 0.0
    %2783 = vmatpush2.msra.mxu0 0.0
    %2784 = vmatprep.subr.mxu0 0.0
    %2785 = vmatpush2.msra.mxu0 0.0
    %2786 = vmatprep.subr.mxu0 0.0
    %2787 = vmatpush2.msra.mxu0 0.0
    %2788 = vmatprep.subr.mxu0 0.0
    %2789 = vmatpush2.msra.mxu0 0.0
    %2790 = vmatprep.subr.mxu0 0.0
    %2791 = vmatpush2.msra.mxu0 0.0
    %2792 = vmatprep.subr.mxu0 0.0
    %2793 = vmatpush2.msra.mxu0 0.0
    %2794 = vmatprep.subr.mxu0 0.0
    %2795 = vmatpush2.msra.mxu0 0.0
    %2796 = vmatprep.subr.mxu0 0.0
    %2797 = vmatpush2.msra.mxu0 0.0
    %2798 = vmatprep.subr.mxu0 0.0
    %2799 = vmatpush2.msra.mxu0 0.0
    %2800 = vmatprep.subr.mxu0 0.0
    %2801 = vmatpush2.msra.mxu0 0.0
    %2802 = vmatprep.mubr.f32.mxu0 0.0
    %2803 = vmatmul.mubr.f32.gmra.mxu0 %v2624
    %v2804 = vpop.f32.mrf.mxu0
    %v2805 = vadd.f32 0.0, %v2804
    %v2806 = vpop.f32.mrf.mxu0
    %2807 = vdwg.mxu0
    %v2809 = vrot.slane %v2805, 4
    %v2811 = vadd.f32 %v930, %v2809
    %v2812 = vxor.u32 %v2811, 2147483648
    %v2813 = vmul.f32 %v2812, 1.442695
    %v2814 = vpow.pop %v2813
    %v2815 = vadd.f32 %v2814, 1.0
    %v2816 = vrcp.pop %v2815
    %v2817 = vmul.f32 1.0, %v2816
    %v2818 = vtanh.pop %v2811
    %v2820 = vrot.slane %v2530, 6
    %v2822 = vmul.f32 %v2817, %v2820
    %2824 = vrot.lane.b32.xlu0 %v2818, 64
    %v2825 = vpop.permute.xlu0 %2824
    %v2827 = vmul.f32 %v2817, %v2825
    %2829 = vrot.lane.b32.xlu0 %v2827, 32
    %v2830 = vpop.permute.xlu0 %2829
    %v2832 = vadd.f32 %v2822, %v2830
    %v2833 = vtanh.pop %v2832
    %2835 = vrot.lane.b32.xlu0 %v2833, 64
    %v2836 = vpop.permute.xlu0 %2835
    %v2838 = vmul.f32 %v2817, %v2836
    %v2839 = vld [vmem:[#allocation14] sm:$0xff]
    %v2840 = vld [vmem:[#allocation14 + $0x8] sm:$0xff]
    %v2841 = vld [vmem:[#allocation14 + $0x10] sm:$0xff]
    %v2842 = vld [vmem:[#allocation14 + $0x18] sm:$0xff]
    %v2843 = vld [vmem:[#allocation16] sm:$0xff]
    %v2844 = vld [vmem:[#allocation16 + $0x8] sm:$0xff]
    %v2845 = vld [vmem:[#allocation16 + $0x10] sm:$0xff]
    %v2846 = vld [vmem:[#allocation16 + $0x18] sm:$0xff]
    %2848 = vrot.lane.b32.xlu0 %v2727, 32
    %v2849 = vpop.permute.xlu0 %2848
    %v2850 = vsel %vm937, %v2849, 0
    %2852 = vmatprep.subr.mxu0 0.0
    %2853 = vmatpush1.msra.mxu0 0.0
    %2854 = vmatprep.subr.mxu0 0.0
    %2855 = vmatpush1.msra.mxu0 0.0
    %2856 = vmatprep.subr.mxu0 0.0
    %2857 = vmatpush1.msra.mxu0 0.0
    %2858 = vmatprep.subr.mxu0 0.0
    %2859 = vmatpush1.msra.mxu0 0.0
    %2860 = vmatprep.subr.mxu0 0.0
    %2861 = vmatpush1.msra.mxu0 0.0
    %2862 = vmatprep.subr.mxu0 0.0
    %2863 = vmatpush1.msra.mxu0 0.0
    %2864 = vmatprep.subr.mxu0 0.0
    %2865 = vmatpush1.msra.mxu0 0.0
    %2866 = vmatprep.subr.mxu0 0.0
    %2867 = vmatpush1.msra.mxu0 0.0
    %2868 = vmatprep.subr.mxu0 0.0
    %2869 = vmatpush1.msra.mxu0 0.0
    %2870 = vmatprep.subr.mxu0 0.0
    %2871 = vmatpush1.msra.mxu0 0.0
    %2872 = vmatprep.subr.mxu0 0.0
    %2873 = vmatpush1.msra.mxu0 0.0
    %2874 = vmatprep.subr.mxu0 0.0
    %2875 = vmatpush1.msra.mxu0 0.0
    %2876 = vmatprep.subr.mxu0 0.0
    %2877 = vmatpush1.msra.mxu0 %v2846
    %2878 = vmatprep.subr.mxu0 0.0
    %2879 = vmatpush1.msra.mxu0 %v2845
    %2880 = vmatprep.subr.mxu0 0.0
    %2881 = vmatpush1.msra.mxu0 %v2844
    %2882 = vmatprep.subr.mxu0 0.0
    %2883 = vmatpush1.msra.mxu0 %v2843
    %2884 = vmatprep.subr.mxu0 0.0
    %2885 = vmatpush2.msra.mxu0 0.0
    %2886 = vmatprep.subr.mxu0 0.0
    %2887 = vmatpush2.msra.mxu0 0.0
    %2888 = vmatprep.subr.mxu0 0.0
    %2889 = vmatpush2.msra.mxu0 0.0
    %2890 = vmatprep.subr.mxu0 0.0
    %2891 = vmatpush2.msra.mxu0 0.0
    %2892 = vmatprep.subr.mxu0 0.0
    %2893 = vmatpush2.msra.mxu0 0.0
    %2894 = vmatprep.subr.mxu0 0.0
    %2895 = vmatpush2.msra.mxu0 0.0
    %2896 = vmatprep.subr.mxu0 0.0
    %2897 = vmatpush2.msra.mxu0 0.0
    %2898 = vmatprep.subr.mxu0 0.0
    %2899 = vmatpush2.msra.mxu0 0.0
    %2900 = vmatprep.subr.mxu0 0.0
    %2901 = vmatpush2.msra.mxu0 0.0
    %2902 = vmatprep.subr.mxu0 0.0
    %2903 = vmatpush2.msra.mxu0 0.0
    %2904 = vmatprep.subr.mxu0 0.0
    %2905 = vmatpush2.msra.mxu0 0.0
    %2906 = vmatprep.subr.mxu0 0.0
    %2907 = vmatpush2.msra.mxu0 0.0
    %2908 = vmatprep.subr.mxu0 0.0
    %2909 = vmatpush2.msra.mxu0 0.0
    %2910 = vmatprep.subr.mxu0 0.0
    %2911 = vmatpush2.msra.mxu0 0.0
    %2912 = vmatprep.subr.mxu0 0.0
    %2913 = vmatpush2.msra.mxu0 0.0
    %2914 = vmatprep.subr.mxu0 0.0
    %2915 = vmatpush2.msra.mxu0 0.0
    %2916 = vmatprep.mubr.f32.mxu0 0.0
    %2917 = vmatmul.mubr.f32.gmra.mxu0 %v2850
    %v2918 = vpop.f32.mrf.mxu0
    %v2919 = vadd.f32 0.0, %v2918
    %v2920 = vpop.f32.mrf.mxu0
    %2921 = vdwg.mxu0
    %v2923 = vrot.slane %v2838, 4
    %2924 = vrot.lane.b32.xlu0 %v2923, 32
    %v2925 = vpop.permute.xlu0 %2924
    %v2926 = vsel %vm937, %v2925, 0
    %2928 = vmatprep.subr.mxu0 0.0
    %2929 = vmatpush1.msra.mxu0 0.0
    %2930 = vmatprep.subr.mxu0 0.0
    %2931 = vmatpush1.msra.mxu0 0.0
    %2932 = vmatprep.subr.mxu0 0.0
    %2933 = vmatpush1.msra.mxu0 0.0
    %2934 = vmatprep.subr.mxu0 0.0
    %2935 = vmatpush1.msra.mxu0 0.0
    %2936 = vmatprep.subr.mxu0 0.0
    %2937 = vmatpush1.msra.mxu0 0.0
    %2938 = vmatprep.subr.mxu0 0.0
    %2939 = vmatpush1.msra.mxu0 0.0
    %2940 = vmatprep.subr.mxu0 0.0
    %2941 = vmatpush1.msra.mxu0 0.0
    %2942 = vmatprep.subr.mxu0 0.0
    %2943 = vmatpush1.msra.mxu0 0.0
    %2944 = vmatprep.subr.mxu0 0.0
    %2945 = vmatpush1.msra.mxu0 0.0
    %2946 = vmatprep.subr.mxu0 0.0
    %2947 = vmatpush1.msra.mxu0 0.0
    %2948 = vmatprep.subr.mxu0 0.0
    %2949 = vmatpush1.msra.mxu0 0.0
    %2950 = vmatprep.subr.mxu0 0.0
    %2951 = vmatpush1.msra.mxu0 0.0
    %2952 = vmatprep.subr.mxu0 0.0
    %2953 = vmatpush1.msra.mxu0 %v2842
    %2954 = vmatprep.subr.mxu0 0.0
    %2955 = vmatpush1.msra.mxu0 %v2841
    %2956 = vmatprep.subr.mxu0 0.0
    %2957 = vmatpush1.msra.mxu0 %v2840
    %2958 = vmatprep.subr.mxu0 0.0
    %2959 = vmatpush1.msra.mxu0 %v2839
    %2960 = vmatprep.subr.mxu0 0.0
    %2961 = vmatpush2.msra.mxu0 0.0
    %2962 = vmatprep.subr.mxu0 0.0
    %2963 = vmatpush2.msra.mxu0 0.0
    %2964 = vmatprep.subr.mxu0 0.0
    %2965 = vmatpush2.msra.mxu0 0.0
    %2966 = vmatprep.subr.mxu0 0.0
    %2967 = vmatpush2.msra.mxu0 0.0
    %2968 = vmatprep.subr.mxu0 0.0
    %2969 = vmatpush2.msra.mxu0 0.0
    %2970 = vmatprep.subr.mxu0 0.0
    %2971 = vmatpush2.msra.mxu0 0.0
    %2972 = vmatprep.subr.mxu0 0.0
    %2973 = vmatpush2.msra.mxu0 0.0
    %2974 = vmatprep.subr.mxu0 0.0
    %2975 = vmatpush2.msra.mxu0 0.0
    %2976 = vmatprep.subr.mxu0 0.0
    %2977 = vmatpush2.msra.mxu0 0.0
    %2978 = vmatprep.subr.mxu0 0.0
    %2979 = vmatpush2.msra.mxu0 0.0
    %2980 = vmatprep.subr.mxu0 0.0
    %2981 = vmatpush2.msra.mxu0 0.0
    %2982 = vmatprep.subr.mxu0 0.0
    %2983 = vmatpush2.msra.mxu0 0.0
    %2984 = vmatprep.subr.mxu0 0.0
    %2985 = vmatpush2.msra.mxu0 0.0
    %2986 = vmatprep.subr.mxu0 0.0
    %2987 = vmatpush2.msra.mxu0 0.0
    %2988 = vmatprep.subr.mxu0 0.0
    %2989 = vmatpush2.msra.mxu0 0.0
    %2990 = vmatprep.subr.mxu0 0.0
    %2991 = vmatpush2.msra.mxu0 0.0
    %2992 = vmatprep.mubr.f32.mxu0 0.0
    %2993 = vmatmul.mubr.f32.gmra.mxu0 %v2926
    %v2994 = vpop.f32.mrf.mxu0
    %v2995 = vadd.f32 %v2919, %v2994
    %v2996 = vpop.f32.mrf.mxu0
    %2997 = vdwg.mxu0
    %v2998 = vld [vmem:[#allocation17] sm:$0x1]
    %v3000 = vlaneseq
    %v3001 = vshrl.u32 %v3000, 7
    %v3002 = vsub.s32 0, %v3001
    %v3003 = vrot.slane %v2998, %v3002
    %v3005 = vadd.f32 %v2995, %v3003
    %v3006 = vxor.u32 %v3005, 2147483648
    %v3007 = vmul.f32 %v3006, 1.442695
    %v3008 = vpow.pop %v3007
    %v3009 = vadd.f32 %v3008, 1.0
    %v3010 = vrcp.pop %v3009
    %v3011 = vmul.f32 1.0, %v3010
    %v3012 = vtanh.pop %v3005
    %v3013 = vmul.f32 %v3011, %v2721
    %3015 = vrot.lane.b32.xlu0 %v3012, 64
    %v3016 = vpop.permute.xlu0 %3015
    %v3018 = vmul.f32 %v3011, %v3016
    %3020 = vrot.lane.b32.xlu0 %v3018, 32
    %v3021 = vpop.permute.xlu0 %3020
    %v3023 = vadd.f32 %v3013, %v3021
    %v3024 = vtanh.pop %v3023
    %3026 = vrot.lane.b32.xlu0 %v3024, 64
    %v3027 = vpop.permute.xlu0 %3026
    %v3029 = vmul.f32 %v3011, %v3027
    %v3030 = vtanh.pop %v3029
    %3032 = vrot.lane.b32.xlu0 %v3030, 32
    %v3033 = vpop.permute.xlu0 %3032
    %3035 = vst.msk [vmem:[#allocation2 + $0xc] sm:$0x3] %vm1226, %v3033
    %v3036 = vld [vmem:[#allocation12] sm:$0xff]
    %v3037 = vld [vmem:[#allocation12 + $0x8] sm:$0xff]
    %v3038 = vld [vmem:[#allocation12 + $0x10] sm:$0xff]
    %v3039 = vld [vmem:[#allocation12 + $0x18] sm:$0xff]
    %3040 = vmatprep.subr.mxu0 0.0
    %3041 = vmatpush1.msra.mxu0 0.0
    %3042 = vmatprep.subr.mxu0 0.0
    %3043 = vmatpush1.msra.mxu0 0.0
    %3044 = vmatprep.subr.mxu0 0.0
    %3045 = vmatpush1.msra.mxu0 0.0
    %3046 = vmatprep.subr.mxu0 0.0
    %3047 = vmatpush1.msra.mxu0 0.0
    %3048 = vmatprep.subr.mxu0 0.0
    %3049 = vmatpush1.msra.mxu0 0.0
    %3050 = vmatprep.subr.mxu0 0.0
    %3051 = vmatpush1.msra.mxu0 0.0
    %3052 = vmatprep.subr.mxu0 0.0
    %3053 = vmatpush1.msra.mxu0 0.0
    %3054 = vmatprep.subr.mxu0 0.0
    %3055 = vmatpush1.msra.mxu0 0.0
    %3056 = vmatprep.subr.mxu0 0.0
    %3057 = vmatpush1.msra.mxu0 0.0
    %3058 = vmatprep.subr.mxu0 0.0
    %3059 = vmatpush1.msra.mxu0 0.0
    %3060 = vmatprep.subr.mxu0 0.0
    %3061 = vmatpush1.msra.mxu0 0.0
    %3062 = vmatprep.subr.mxu0 0.0
    %3063 = vmatpush1.msra.mxu0 0.0
    %3064 = vmatprep.subr.mxu0 0.0
    %3065 = vmatpush1.msra.mxu0 %v3039
    %3066 = vmatprep.subr.mxu0 0.0
    %3067 = vmatpush1.msra.mxu0 %v3038
    %3068 = vmatprep.subr.mxu0 0.0
    %3069 = vmatpush1.msra.mxu0 %v3037
    %3070 = vmatprep.subr.mxu0 0.0
    %3071 = vmatpush1.msra.mxu0 %v3036
    %3072 = vmatprep.subr.mxu0 0.0
    %3073 = vmatpush2.msra.mxu0 0.0
    %3074 = vmatprep.subr.mxu0 0.0
    %3075 = vmatpush2.msra.mxu0 0.0
    %3076 = vmatprep.subr.mxu0 0.0
    %3077 = vmatpush2.msra.mxu0 0.0
    %3078 = vmatprep.subr.mxu0 0.0
    %3079 = vmatpush2.msra.mxu0 0.0
    %3080 = vmatprep.subr.mxu0 0.0
    %3081 = vmatpush2.msra.mxu0 0.0
    %3082 = vmatprep.subr.mxu0 0.0
    %3083 = vmatpush2.msra.mxu0 0.0
    %3084 = vmatprep.subr.mxu0 0.0
    %3085 = vmatpush2.msra.mxu0 0.0
    %3086 = vmatprep.subr.mxu0 0.0
    %3087 = vmatpush2.msra.mxu0 0.0
    %3088 = vmatprep.subr.mxu0 0.0
    %3089 = vmatpush2.msra.mxu0 0.0
    %3090 = vmatprep.subr.mxu0 0.0
    %3091 = vmatpush2.msra.mxu0 0.0
    %3092 = vmatprep.subr.mxu0 0.0
    %3093 = vmatpush2.msra.mxu0 0.0
    %3094 = vmatprep.subr.mxu0 0.0
    %3095 = vmatpush2.msra.mxu0 0.0
    %3096 = vmatprep.subr.mxu0 0.0
    %3097 = vmatpush2.msra.mxu0 0.0
    %3098 = vmatprep.subr.mxu0 0.0
    %3099 = vmatpush2.msra.mxu0 0.0
    %3100 = vmatprep.subr.mxu0 0.0
    %3101 = vmatpush2.msra.mxu0 0.0
    %3102 = vmatprep.subr.mxu0 0.0
    %3103 = vmatpush2.msra.mxu0 0.0
    %3104 = vmatprep.mubr.f32.mxu0 0.0
    %3105 = vmatmul.mubr.f32.gmra.mxu0 %v2926
    %v3106 = vpop.f32.mrf.mxu0
    %v3107 = vadd.f32 0.0, %v3106
    %v3108 = vpop.f32.mrf.mxu0
    %3109 = vdwg.mxu0
    %v3111 = vrot.slane %v3107, 2
    %v3113 = vadd.f32 %v930, %v3111
    %v3114 = vxor.u32 %v3113, 2147483648
    %v3115 = vmul.f32 %v3114, 1.442695
    %v3116 = vpow.pop %v3115
    %v3117 = vadd.f32 %v3116, 1.0
    %v3118 = vrcp.pop %v3117
    %v3119 = vmul.f32 1.0, %v3118
    %v3120 = vtanh.pop %v3113
    %v3122 = vrot.slane %v2832, 6
    %v3124 = vmul.f32 %v3119, %v3122
    %3126 = vrot.lane.b32.xlu0 %v3120, 64
    %v3127 = vpop.permute.xlu0 %3126
    %v3129 = vmul.f32 %v3119, %v3127
    %3131 = vrot.lane.b32.xlu0 %v3129, 32
    %v3132 = vpop.permute.xlu0 %3131
    %v3134 = vadd.f32 %v3124, %v3132
    %v3135 = vtanh.pop %v3134
    %3137 = vrot.lane.b32.xlu0 %v3135, 64
    %v3138 = vpop.permute.xlu0 %3137
    %v3140 = vmul.f32 %v3119, %v3138
    %v3141 = vld [vmem:[#allocation14] sm:$0xff]
    %v3142 = vld [vmem:[#allocation14 + $0x8] sm:$0xff]
    %v3143 = vld [vmem:[#allocation14 + $0x10] sm:$0xff]
    %v3144 = vld [vmem:[#allocation14 + $0x18] sm:$0xff]
    %v3145 = vld [vmem:[#allocation16] sm:$0xff]
    %v3146 = vld [vmem:[#allocation16 + $0x8] sm:$0xff]
    %v3147 = vld [vmem:[#allocation16 + $0x10] sm:$0xff]
    %v3148 = vld [vmem:[#allocation16 + $0x18] sm:$0xff]
    %3150 = vrot.lane.b32.xlu0 %v3029, 32
    %v3151 = vpop.permute.xlu0 %3150
    %v3152 = vsel %vm937, %v3151, 0
    %3154 = vmatprep.subr.mxu0 0.0
    %3155 = vmatpush1.msra.mxu0 0.0
    %3156 = vmatprep.subr.mxu0 0.0
    %3157 = vmatpush1.msra.mxu0 0.0
    %3158 = vmatprep.subr.mxu0 0.0
    %3159 = vmatpush1.msra.mxu0 0.0
    %3160 = vmatprep.subr.mxu0 0.0
    %3161 = vmatpush1.msra.mxu0 0.0
    %3162 = vmatprep.subr.mxu0 0.0
    %3163 = vmatpush1.msra.mxu0 0.0
    %3164 = vmatprep.subr.mxu0 0.0
    %3165 = vmatpush1.msra.mxu0 0.0
    %3166 = vmatprep.subr.mxu0 0.0
    %3167 = vmatpush1.msra.mxu0 0.0
    %3168 = vmatprep.subr.mxu0 0.0
    %3169 = vmatpush1.msra.mxu0 0.0
    %3170 = vmatprep.subr.mxu0 0.0
    %3171 = vmatpush1.msra.mxu0 0.0
    %3172 = vmatprep.subr.mxu0 0.0
    %3173 = vmatpush1.msra.mxu0 0.0
    %3174 = vmatprep.subr.mxu0 0.0
    %3175 = vmatpush1.msra.mxu0 0.0
    %3176 = vmatprep.subr.mxu0 0.0
    %3177 = vmatpush1.msra.mxu0 0.0
    %3178 = vmatprep.subr.mxu0 0.0
    %3179 = vmatpush1.msra.mxu0 %v3148
    %3180 = vmatprep.subr.mxu0 0.0
    %3181 = vmatpush1.msra.mxu0 %v3147
    %3182 = vmatprep.subr.mxu0 0.0
    %3183 = vmatpush1.msra.mxu0 %v3146
    %3184 = vmatprep.subr.mxu0 0.0
    %3185 = vmatpush1.msra.mxu0 %v3145
    %3186 = vmatprep.subr.mxu0 0.0
    %3187 = vmatpush2.msra.mxu0 0.0
    %3188 = vmatprep.subr.mxu0 0.0
    %3189 = vmatpush2.msra.mxu0 0.0
    %3190 = vmatprep.subr.mxu0 0.0
    %3191 = vmatpush2.msra.mxu0 0.0
    %3192 = vmatprep.subr.mxu0 0.0
    %3193 = vmatpush2.msra.mxu0 0.0
    %3194 = vmatprep.subr.mxu0 0.0
    %3195 = vmatpush2.msra.mxu0 0.0
    %3196 = vmatprep.subr.mxu0 0.0
    %3197 = vmatpush2.msra.mxu0 0.0
    %3198 = vmatprep.subr.mxu0 0.0
    %3199 = vmatpush2.msra.mxu0 0.0
    %3200 = vmatprep.subr.mxu0 0.0
    %3201 = vmatpush2.msra.mxu0 0.0
    %3202 = vmatprep.subr.mxu0 0.0
    %3203 = vmatpush2.msra.mxu0 0.0
    %3204 = vmatprep.subr.mxu0 0.0
    %3205 = vmatpush2.msra.mxu0 0.0
    %3206 = vmatprep.subr.mxu0 0.0
    %3207 = vmatpush2.msra.mxu0 0.0
    %3208 = vmatprep.subr.mxu0 0.0
    %3209 = vmatpush2.msra.mxu0 0.0
    %3210 = vmatprep.subr.mxu0 0.0
    %3211 = vmatpush2.msra.mxu0 0.0
    %3212 = vmatprep.subr.mxu0 0.0
    %3213 = vmatpush2.msra.mxu0 0.0
    %3214 = vmatprep.subr.mxu0 0.0
    %3215 = vmatpush2.msra.mxu0 0.0
    %3216 = vmatprep.subr.mxu0 0.0
    %3217 = vmatpush2.msra.mxu0 0.0
    %3218 = vmatprep.mubr.f32.mxu0 0.0
    %3219 = vmatmul.mubr.f32.gmra.mxu0 %v3152
    %v3220 = vpop.f32.mrf.mxu0
    %v3221 = vadd.f32 0.0, %v3220
    %v3222 = vpop.f32.mrf.mxu0
    %3223 = vdwg.mxu0
    %v3225 = vrot.slane %v3140, 6
    %3226 = vrot.lane.b32.xlu0 %v3225, 32
    %v3227 = vpop.permute.xlu0 %3226
    %v3228 = vsel %vm937, %v3227, 0
    %3230 = vmatprep.subr.mxu0 0.0
    %3231 = vmatpush1.msra.mxu0 0.0
    %3232 = vmatprep.subr.mxu0 0.0
    %3233 = vmatpush1.msra.mxu0 0.0
    %3234 = vmatprep.subr.mxu0 0.0
    %3235 = vmatpush1.msra.mxu0 0.0
    %3236 = vmatprep.subr.mxu0 0.0
    %3237 = vmatpush1.msra.mxu0 0.0
    %3238 = vmatprep.subr.mxu0 0.0
    %3239 = vmatpush1.msra.mxu0 0.0
    %3240 = vmatprep.subr.mxu0 0.0
    %3241 = vmatpush1.msra.mxu0 0.0
    %3242 = vmatprep.subr.mxu0 0.0
    %3243 = vmatpush1.msra.mxu0 0.0
    %3244 = vmatprep.subr.mxu0 0.0
    %3245 = vmatpush1.msra.mxu0 0.0
    %3246 = vmatprep.subr.mxu0 0.0
    %3247 = vmatpush1.msra.mxu0 0.0
    %3248 = vmatprep.subr.mxu0 0.0
    %3249 = vmatpush1.msra.mxu0 0.0
    %3250 = vmatprep.subr.mxu0 0.0
    %3251 = vmatpush1.msra.mxu0 0.0
    %3252 = vmatprep.subr.mxu0 0.0
    %3253 = vmatpush1.msra.mxu0 0.0
    %3254 = vmatprep.subr.mxu0 0.0
    %3255 = vmatpush1.msra.mxu0 %v3144
    %3256 = vmatprep.subr.mxu0 0.0
    %3257 = vmatpush1.msra.mxu0 %v3143
    %3258 = vmatprep.subr.mxu0 0.0
    %3259 = vmatpush1.msra.mxu0 %v3142
    %3260 = vmatprep.subr.mxu0 0.0
    %3261 = vmatpush1.msra.mxu0 %v3141
    %3262 = vmatprep.subr.mxu0 0.0
    %3263 = vmatpush2.msra.mxu0 0.0
    %3264 = vmatprep.subr.mxu0 0.0
    %3265 = vmatpush2.msra.mxu0 0.0
    %3266 = vmatprep.subr.mxu0 0.0
    %3267 = vmatpush2.msra.mxu0 0.0
    %3268 = vmatprep.subr.mxu0 0.0
    %3269 = vmatpush2.msra.mxu0 0.0
    %3270 = vmatprep.subr.mxu0 0.0
    %3271 = vmatpush2.msra.mxu0 0.0
    %3272 = vmatprep.subr.mxu0 0.0
    %3273 = vmatpush2.msra.mxu0 0.0
    %3274 = vmatprep.subr.mxu0 0.0
    %3275 = vmatpush2.msra.mxu0 0.0
    %3276 = vmatprep.subr.mxu0 0.0
    %3277 = vmatpush2.msra.mxu0 0.0
    %3278 = vmatprep.subr.mxu0 0.0
    %3279 = vmatpush2.msra.mxu0 0.0
    %3280 = vmatprep.subr.mxu0 0.0
    %3281 = vmatpush2.msra.mxu0 0.0
    %3282 = vmatprep.subr.mxu0 0.0
    %3283 = vmatpush2.msra.mxu0 0.0
    %3284 = vmatprep.subr.mxu0 0.0
    %3285 = vmatpush2.msra.mxu0 0.0
    %3286 = vmatprep.subr.mxu0 0.0
    %3287 = vmatpush2.msra.mxu0 0.0
    %3288 = vmatprep.subr.mxu0 0.0
    %3289 = vmatpush2.msra.mxu0 0.0
    %3290 = vmatprep.subr.mxu0 0.0
    %3291 = vmatpush2.msra.mxu0 0.0
    %3292 = vmatprep.subr.mxu0 0.0
    %3293 = vmatpush2.msra.mxu0 0.0
    %3294 = vmatprep.mubr.f32.mxu0 0.0
    %3295 = vmatmul.mubr.f32.gmra.mxu0 %v3228
    %v3296 = vpop.f32.mrf.mxu0
    %v3297 = vadd.f32 %v3221, %v3296
    %v3298 = vpop.f32.mrf.mxu0
    %3299 = vdwg.mxu0
    %v3300 = vld [vmem:[#allocation17] sm:$0x1]
    %v3302 = vlaneseq
    %v3303 = vshrl.u32 %v3302, 7
    %v3304 = vsub.s32 0, %v3303
    %v3305 = vrot.slane %v3300, %v3304
    %v3307 = vadd.f32 %v3297, %v3305
    %v3308 = vxor.u32 %v3307, 2147483648
    %v3309 = vmul.f32 %v3308, 1.442695
    %v3310 = vpow.pop %v3309
    %v3311 = vadd.f32 %v3310, 1.0
    %v3312 = vrcp.pop %v3311
    %v3313 = vmul.f32 1.0, %v3312
    %v3314 = vtanh.pop %v3307
    %v3315 = vmul.f32 %v3313, %v3023
    %3317 = vrot.lane.b32.xlu0 %v3314, 64
    %v3318 = vpop.permute.xlu0 %3317
    %v3320 = vmul.f32 %v3313, %v3318
    %3322 = vrot.lane.b32.xlu0 %v3320, 32
    %v3323 = vpop.permute.xlu0 %3322
    %v3325 = vadd.f32 %v3315, %v3323
    %v3326 = vtanh.pop %v3325
    %3328 = vrot.lane.b32.xlu0 %v3326, 64
    %v3329 = vpop.permute.xlu0 %3328
    %v3331 = vmul.f32 %v3313, %v3329
    %v3332 = vtanh.pop %v3331
    %3334 = vrot.lane.b32.xlu0 %v3332, 32
    %v3335 = vpop.permute.xlu0 %3334
    %3337 = vst.msk [vmem:[#allocation2 + $0xe] sm:$0x3] %vm1226, %v3335
    %v3338 = vld [vmem:[%s3] sm:$0x3]
    %v3339 = vld [vmem:[%s17] sm:$0xff]
    %v3340 = vld [vmem:[%s17 + $0x8] sm:$0xff]
    %v3341 = vld [vmem:[%s17 + $0x10] sm:$0xff]
    %v3342 = vld [vmem:[%s17 + $0x18] sm:$0xff]
    %v3343 = vld [vmem:[%s17 + $0x20] sm:$0xff]
    %v3344 = vld [vmem:[%s17 + $0x28] sm:$0xff]
    %v3345 = vld [vmem:[#allocation19] sm:$0x1]
    %v3347 = vlaneseq
    %v3348 = vshrl.u32 %v3347, 7
    %v3349 = vsub.s32 0, %v3348
    %v3350 = vrot.slane %v3345, %v3349
    %vm3352 = vcmask 392192
    %v3354 = vsel %vm3352, %v3338, 0
    %3356 = vmatprep.subr.mxu0 0.0
    %3357 = vmatpush1.msra.mxu0 0.0
    %3358 = vmatprep.subr.mxu0 0.0
    %3359 = vmatpush1.msra.mxu0 0.0
    %3360 = vmatprep.subr.mxu0 0.0
    %3361 = vmatpush1.msra.mxu0 0.0
    %3362 = vmatprep.subr.mxu0 0.0
    %3363 = vmatpush1.msra.mxu0 0.0
    %3364 = vmatprep.subr.mxu0 0.0
    %3365 = vmatpush1.msra.mxu0 0.0
    %3366 = vmatprep.subr.mxu0 0.0
    %3367 = vmatpush1.msra.mxu0 0.0
    %3368 = vmatprep.subr.mxu0 0.0
    %3369 = vmatpush1.msra.mxu0 0.0
    %3370 = vmatprep.subr.mxu0 0.0
    %3371 = vmatpush1.msra.mxu0 0.0
    %3372 = vmatprep.subr.mxu0 0.0
    %3373 = vmatpush1.msra.mxu0 0.0
    %3374 = vmatprep.subr.mxu0 0.0
    %3375 = vmatpush1.msra.mxu0 0.0
    %3376 = vmatprep.subr.mxu0 0.0
    %3377 = vmatpush1.msra.mxu0 %v3344
    %3378 = vmatprep.subr.mxu0 0.0
    %3379 = vmatpush1.msra.mxu0 %v3343
    %3380 = vmatprep.subr.mxu0 0.0
    %3381 = vmatpush1.msra.mxu0 %v3342
    %3382 = vmatprep.subr.mxu0 0.0
    %3383 = vmatpush1.msra.mxu0 %v3341
    %3384 = vmatprep.subr.mxu0 0.0
    %3385 = vmatpush1.msra.mxu0 %v3340
    %3386 = vmatprep.subr.mxu0 0.0
    %3387 = vmatpush1.msra.mxu0 %v3339
    %3388 = vmatprep.subr.mxu0 0.0
    %3389 = vmatpush2.msra.mxu0 0.0
    %3390 = vmatprep.subr.mxu0 0.0
    %3391 = vmatpush2.msra.mxu0 0.0
    %3392 = vmatprep.subr.mxu0 0.0
    %3393 = vmatpush2.msra.mxu0 0.0
    %3394 = vmatprep.subr.mxu0 0.0
    %3395 = vmatpush2.msra.mxu0 0.0
    %3396 = vmatprep.subr.mxu0 0.0
    %3397 = vmatpush2.msra.mxu0 0.0
    %3398 = vmatprep.subr.mxu0 0.0
    %3399 = vmatpush2.msra.mxu0 0.0
    %3400 = vmatprep.subr.mxu0 0.0
    %3401 = vmatpush2.msra.mxu0 0.0
    %3402 = vmatprep.subr.mxu0 0.0
    %3403 = vmatpush2.msra.mxu0 0.0
    %3404 = vmatprep.subr.mxu0 0.0
    %3405 = vmatpush2.msra.mxu0 0.0
    %3406 = vmatprep.subr.mxu0 0.0
    %3407 = vmatpush2.msra.mxu0 0.0
    %3408 = vmatprep.subr.mxu0 0.0
    %3409 = vmatpush2.msra.mxu0 0.0
    %3410 = vmatprep.subr.mxu0 0.0
    %3411 = vmatpush2.msra.mxu0 0.0
    %3412 = vmatprep.subr.mxu0 0.0
    %3413 = vmatpush2.msra.mxu0 0.0
    %3414 = vmatprep.subr.mxu0 0.0
    %3415 = vmatpush2.msra.mxu0 0.0
    %3416 = vmatprep.subr.mxu0 0.0
    %3417 = vmatpush2.msra.mxu0 0.0
    %3418 = vmatprep.subr.mxu0 0.0
    %3419 = vmatpush2.msra.mxu0 0.0
    %3420 = vmatprep.mubr.f32.mxu0 0.0
    %3421 = vmatmul.mubr.f32.gmra.mxu0 %v3354
    %v3422 = vpop.f32.mrf.mxu0
    %v3423 = vadd.f32 %v3350, %v3422
    %v3424 = vpop.f32.mrf.mxu0
    %3425 = vdwg.mxu0
    %v3426 = vtanh.pop %v3423
    %v3427 = vld [vmem:[#allocation20] sm:$0xff]
    %v3428 = vld [vmem:[#allocation20 + $0x8] sm:$0xff]
    %v3429 = vld [vmem:[#allocation20 + $0x10] sm:$0xff]
    %v3430 = vld [vmem:[#allocation20 + $0x18] sm:$0xff]
    %v3431 = vld [vmem:[#allocation22] sm:$0x1]
    %v3433 = vlaneseq
    %v3434 = vshrl.u32 %v3433, 7
    %v3435 = vsub.s32 0, %v3434
    %v3436 = vrot.slane %v3431, %v3435
    %v3439 = vsel %vm937, %v3426, 0
    %3441 = vmatprep.subr.mxu0 0.0
    %3442 = vmatpush1.msra.mxu0 0.0
    %3443 = vmatprep.subr.mxu0 0.0
    %3444 = vmatpush1.msra.mxu0 0.0
    %3445 = vmatprep.subr.mxu0 0.0
    %3446 = vmatpush1.msra.mxu0 0.0
    %3447 = vmatprep.subr.mxu0 0.0
    %3448 = vmatpush1.msra.mxu0 0.0
    %3449 = vmatprep.subr.mxu0 0.0
    %3450 = vmatpush1.msra.mxu0 0.0
    %3451 = vmatprep.subr.mxu0 0.0
    %3452 = vmatpush1.msra.mxu0 0.0
    %3453 = vmatprep.subr.mxu0 0.0
    %3454 = vmatpush1.msra.mxu0 0.0
    %3455 = vmatprep.subr.mxu0 0.0
    %3456 = vmatpush1.msra.mxu0 0.0
    %3457 = vmatprep.subr.mxu0 0.0
    %3458 = vmatpush1.msra.mxu0 0.0
    %3459 = vmatprep.subr.mxu0 0.0
    %3460 = vmatpush1.msra.mxu0 0.0
    %3461 = vmatprep.subr.mxu0 0.0
    %3462 = vmatpush1.msra.mxu0 0.0
    %3463 = vmatprep.subr.mxu0 0.0
    %3464 = vmatpush1.msra.mxu0 0.0
    %3465 = vmatprep.subr.mxu0 0.0
    %3466 = vmatpush1.msra.mxu0 %v3430
    %3467 = vmatprep.subr.mxu0 0.0
    %3468 = vmatpush1.msra.mxu0 %v3429
    %3469 = vmatprep.subr.mxu0 0.0
    %3470 = vmatpush1.msra.mxu0 %v3428
    %3471 = vmatprep.subr.mxu0 0.0
    %3472 = vmatpush1.msra.mxu0 %v3427
    %3473 = vmatprep.subr.mxu0 0.0
    %3474 = vmatpush2.msra.mxu0 0.0
    %3475 = vmatprep.subr.mxu0 0.0
    %3476 = vmatpush2.msra.mxu0 0.0
    %3477 = vmatprep.subr.mxu0 0.0
    %3478 = vmatpush2.msra.mxu0 0.0
    %3479 = vmatprep.subr.mxu0 0.0
    %3480 = vmatpush2.msra.mxu0 0.0
    %3481 = vmatprep.subr.mxu0 0.0
    %3482 = vmatpush2.msra.mxu0 0.0
    %3483 = vmatprep.subr.mxu0 0.0
    %3484 = vmatpush2.msra.mxu0 0.0
    %3485 = vmatprep.subr.mxu0 0.0
    %3486 = vmatpush2.msra.mxu0 0.0
    %3487 = vmatprep.subr.mxu0 0.0
    %3488 = vmatpush2.msra.mxu0 0.0
    %3489 = vmatprep.subr.mxu0 0.0
    %3490 = vmatpush2.msra.mxu0 0.0
    %3491 = vmatprep.subr.mxu0 0.0
    %3492 = vmatpush2.msra.mxu0 0.0
    %3493 = vmatprep.subr.mxu0 0.0
    %3494 = vmatpush2.msra.mxu0 0.0
    %3495 = vmatprep.subr.mxu0 0.0
    %3496 = vmatpush2.msra.mxu0 0.0
    %3497 = vmatprep.subr.mxu0 0.0
    %3498 = vmatpush2.msra.mxu0 0.0
    %3499 = vmatprep.subr.mxu0 0.0
    %3500 = vmatpush2.msra.mxu0 0.0
    %3501 = vmatprep.subr.mxu0 0.0
    %3502 = vmatpush2.msra.mxu0 0.0
    %3503 = vmatprep.subr.mxu0 0.0
    %3504 = vmatpush2.msra.mxu0 0.0
    %3505 = vmatprep.mubr.f32.mxu0 0.0
    %3506 = vmatmul.mubr.f32.gmra.mxu0 %v3439
    %v3507 = vpop.f32.mrf.mxu0
    %v3508 = vadd.f32 %v3436, %v3507
    %v3509 = vpop.f32.mrf.mxu0
    %3510 = vdwg.mxu0
    %v3511 = vtanh.pop %v3508
    %v3512 = vld [vmem:[#allocation2] sm:$0xff]
    %v3513 = vld [vmem:[#allocation2 + $0x8] sm:$0xff]
    %v3514 = vld [vmem:[%s25] sm:$0xff]
    %v3515 = vld [vmem:[%s25 + $0x8] sm:$0xff]
    %v3516 = vld [vmem:[%s25 + $0x10] sm:$0xff]
    %v3517 = vld [vmem:[%s25 + $0x18] sm:$0xff]
    %v3518 = vld [vmem:[%s27] sm:$0xff]
    %v3519 = vld [vmem:[%s27 + $0x8] sm:$0xff]
    %v3520 = vld [vmem:[%s27 + $0x10] sm:$0xff]
    %v3521 = vld [vmem:[%s27 + $0x18] sm:$0xff]
    %v3522 = vld [vmem:[#allocation23] sm:$0x1]
    %v3524 = vlaneseq
    %v3525 = vshrl.u32 %v3524, 7
    %v3526 = vsub.s32 0, %v3525
    %v3527 = vrot.slane %v3522, %v3526
    %v3530 = vsel %vm937, %v3511, 0
    %3532 = vmatprep.subr.mxu0 0.0
    %3533 = vmatpush1.msra.mxu0 0.0
    %3534 = vmatprep.subr.mxu0 0.0
    %3535 = vmatpush1.msra.mxu0 0.0
    %3536 = vmatprep.subr.mxu0 0.0
    %3537 = vmatpush1.msra.mxu0 0.0
    %3538 = vmatprep.subr.mxu0 0.0
    %3539 = vmatpush1.msra.mxu0 0.0
    %3540 = vmatprep.subr.mxu0 0.0
    %3541 = vmatpush1.msra.mxu0 0.0
    %3542 = vmatprep.subr.mxu0 0.0
    %3543 = vmatpush1.msra.mxu0 0.0
    %3544 = vmatprep.subr.mxu0 0.0
    %3545 = vmatpush1.msra.mxu0 0.0
    %3546 = vmatprep.subr.mxu0 0.0
    %3547 = vmatpush1.msra.mxu0 0.0
    %3548 = vmatprep.subr.mxu0 0.0
    %3549 = vmatpush1.msra.mxu0 0.0
    %3550 = vmatprep.subr.mxu0 0.0
    %3551 = vmatpush1.msra.mxu0 0.0
    %3552 = vmatprep.subr.mxu0 0.0
    %3553 = vmatpush1.msra.mxu0 0.0
    %3554 = vmatprep.subr.mxu0 0.0
    %3555 = vmatpush1.msra.mxu0 0.0
    %3556 = vmatprep.subr.mxu0 0.0
    %3557 = vmatpush1.msra.mxu0 %v3521
    %3558 = vmatprep.subr.mxu0 0.0
    %3559 = vmatpush1.msra.mxu0 %v3520
    %3560 = vmatprep.subr.mxu0 0.0
    %3561 = vmatpush1.msra.mxu0 %v3519
    %3562 = vmatprep.subr.mxu0 0.0
    %3563 = vmatpush1.msra.mxu0 %v3518
    %3564 = vmatprep.subr.mxu0 0.0
    %3565 = vmatpush2.msra.mxu0 0.0
    %3566 = vmatprep.subr.mxu0 0.0
    %3567 = vmatpush2.msra.mxu0 0.0
    %3568 = vmatprep.subr.mxu0 0.0
    %3569 = vmatpush2.msra.mxu0 0.0
    %3570 = vmatprep.subr.mxu0 0.0
    %3571 = vmatpush2.msra.mxu0 0.0
    %3572 = vmatprep.subr.mxu0 0.0
    %3573 = vmatpush2.msra.mxu0 0.0
    %3574 = vmatprep.subr.mxu0 0.0
    %3575 = vmatpush2.msra.mxu0 0.0
    %3576 = vmatprep.subr.mxu0 0.0
    %3577 = vmatpush2.msra.mxu0 0.0
    %3578 = vmatprep.subr.mxu0 0.0
    %3579 = vmatpush2.msra.mxu0 0.0
    %3580 = vmatprep.subr.mxu0 0.0
    %3581 = vmatpush2.msra.mxu0 0.0
    %3582 = vmatprep.subr.mxu0 0.0
    %3583 = vmatpush2.msra.mxu0 0.0
    %3584 = vmatprep.subr.mxu0 0.0
    %3585 = vmatpush2.msra.mxu0 0.0
    %3586 = vmatprep.subr.mxu0 0.0
    %3587 = vmatpush2.msra.mxu0 0.0
    %3588 = vmatprep.subr.mxu0 0.0
    %3589 = vmatpush2.msra.mxu0 0.0
    %3590 = vmatprep.subr.mxu0 0.0
    %3591 = vmatpush2.msra.mxu0 0.0
    %3592 = vmatprep.subr.mxu0 0.0
    %3593 = vmatpush2.msra.mxu0 0.0
    %3594 = vmatprep.subr.mxu0 0.0
    %3595 = vmatpush2.msra.mxu0 0.0
    %3596 = vmatprep.mubr.f32.mxu0 0.0
    %3597 = vmatmul.mubr.f32.gmra.mxu0 %v3530
    %v3598 = vpop.f32.mrf.mxu0
    %v3599 = vadd.f32 %v3527, %v3598
    %v3600 = vpop.f32.mrf.mxu0
    %3601 = vdwg.mxu0
    %v3602 = vld [vmem:[%s35] sm:$0xff]
    %v3603 = vld [vmem:[%s35 + $0x8] sm:$0xff]
    %vm3604 = vcmask 15360
    %v3606 = vsel %vm3604, %v3602, 0
    %v3609 = vsel %vm3604, %v3603, 0
    %vm3611 = vcmask 1041408
    %v3613 = vsel %vm3611, %v3599, 0
    %3615 = vmatprep.subr.mxu0 0.0
    %3616 = vmatpush1.msra.mxu0 0.0
    %3617 = vmatprep.subr.mxu0 0.0
    %3618 = vmatpush1.msra.mxu0 0.0
    %3619 = vmatprep.subr.mxu0 0.0
    %3620 = vmatpush1.msra.mxu0 0.0
    %3621 = vmatprep.subr.mxu0 0.0
    %3622 = vmatpush1.msra.mxu0 0.0
    %3623 = vmatprep.subr.mxu0 0.0
    %3624 = vmatpush1.msra.mxu0 0.0
    %3625 = vmatprep.subr.mxu0 0.0
    %3626 = vmatpush1.msra.mxu0 0.0
    %3627 = vmatprep.subr.mxu0 0.0
    %3628 = vmatpush1.msra.mxu0 0.0
    %3629 = vmatprep.subr.mxu0 0.0
    %3630 = vmatpush1.msra.mxu0 0.0
    %3631 = vmatprep.subr.mxu0 0.0
    %3632 = vmatpush1.msra.mxu0 0.0
    %3633 = vmatprep.subr.mxu0 0.0
    %3634 = vmatpush1.msra.mxu0 0.0
    %3635 = vmatprep.subr.mxu0 0.0
    %3636 = vmatpush1.msra.mxu0 0.0
    %3637 = vmatprep.subr.mxu0 0.0
    %3638 = vmatpush1.msra.mxu0 0.0
    %3639 = vmatprep.subr.mxu0 0.0
    %3640 = vmatpush1.msra.mxu0 0.0
    %3641 = vmatprep.subr.mxu0 0.0
    %3642 = vmatpush1.msra.mxu0 0.0
    %3643 = vmatprep.subr.mxu0 0.0
    %3644 = vmatpush1.msra.mxu0 0.0
    %3645 = vmatprep.subr.mxu0 0.0
    %3646 = vmatpush1.msra.mxu0 %v3613
    %3647 = vmatprep.subr.mxu0 0.0
    %3648 = vmatpush2.msra.mxu0 0.0
    %3649 = vmatprep.subr.mxu0 0.0
    %3650 = vmatpush2.msra.mxu0 0.0
    %3651 = vmatprep.subr.mxu0 0.0
    %3652 = vmatpush2.msra.mxu0 0.0
    %3653 = vmatprep.subr.mxu0 0.0
    %3654 = vmatpush2.msra.mxu0 0.0
    %3655 = vmatprep.subr.mxu0 0.0
    %3656 = vmatpush2.msra.mxu0 0.0
    %3657 = vmatprep.subr.mxu0 0.0
    %3658 = vmatpush2.msra.mxu0 0.0
    %3659 = vmatprep.subr.mxu0 0.0
    %3660 = vmatpush2.msra.mxu0 0.0
    %3661 = vmatprep.subr.mxu0 0.0
    %3662 = vmatpush2.msra.mxu0 0.0
    %3663 = vmatprep.subr.mxu0 0.0
    %3664 = vmatpush2.msra.mxu0 0.0
    %3665 = vmatprep.subr.mxu0 0.0
    %3666 = vmatpush2.msra.mxu0 0.0
    %3667 = vmatprep.subr.mxu0 0.0
    %3668 = vmatpush2.msra.mxu0 0.0
    %3669 = vmatprep.subr.mxu0 0.0
    %3670 = vmatpush2.msra.mxu0 0.0
    %3671 = vmatprep.subr.mxu0 0.0
    %3672 = vmatpush2.msra.mxu0 0.0
    %3673 = vmatprep.subr.mxu0 0.0
    %3674 = vmatpush2.msra.mxu0 0.0
    %3675 = vmatprep.subr.mxu0 0.0
    %3676 = vmatpush2.msra.mxu0 0.0
    %3677 = vmatprep.subr.mxu0 0.0
    %3678 = vmatpush2.msra.mxu0 0.0
    %3679 = vmatprep.mubr.f32.mxu0 0.0
    %3680 = vmatmul.mubr.f32.gmra.mxu0 %v3606
    %v3681 = vpop.f32.mrf.mxu0
    %v3682 = vadd.f32 0.0, %v3681
    %v3683 = vpop.f32.mrf.mxu0
    %3684 = vmatprep.mubr.f32.mxu0 0.0
    %3685 = vmatmul.mubr.f32.gmra.mxu0 %v3609
    %v3686 = vpop.f32.mrf.mxu0
    %v3687 = vadd.f32 0.0, %v3686
    %v3688 = vpop.f32.mrf.mxu0
    %3689 = vdwg.mxu0
    %v3691 = vsel %vm937, %v3512, 0
    %v3694 = vsel %vm937, %v3513, 0
    %3696 = vmatprep.subr.mxu0 0.0
    %3697 = vmatpush1.msra.mxu0 0.0
    %3698 = vmatprep.subr.mxu0 0.0
    %3699 = vmatpush1.msra.mxu0 0.0
    %3700 = vmatprep.subr.mxu0 0.0
    %3701 = vmatpush1.msra.mxu0 0.0
    %3702 = vmatprep.subr.mxu0 0.0
    %3703 = vmatpush1.msra.mxu0 0.0
    %3704 = vmatprep.subr.mxu0 0.0
    %3705 = vmatpush1.msra.mxu0 0.0
    %3706 = vmatprep.subr.mxu0 0.0
    %3707 = vmatpush1.msra.mxu0 0.0
    %3708 = vmatprep.subr.mxu0 0.0
    %3709 = vmatpush1.msra.mxu0 0.0
    %3710 = vmatprep.subr.mxu0 0.0
    %3711 = vmatpush1.msra.mxu0 0.0
    %3712 = vmatprep.subr.mxu0 0.0
    %3713 = vmatpush1.msra.mxu0 0.0
    %3714 = vmatprep.subr.mxu0 0.0
    %3715 = vmatpush1.msra.mxu0 0.0
    %3716 = vmatprep.subr.mxu0 0.0
    %3717 = vmatpush1.msra.mxu0 0.0
    %3718 = vmatprep.subr.mxu0 0.0
    %3719 = vmatpush1.msra.mxu0 0.0
    %3720 = vmatprep.subr.mxu0 0.0
    %3721 = vmatpush1.msra.mxu0 %v3517
    %3722 = vmatprep.subr.mxu0 0.0
    %3723 = vmatpush1.msra.mxu0 %v3516
    %3724 = vmatprep.subr.mxu0 0.0
    %3725 = vmatpush1.msra.mxu0 %v3515
    %3726 = vmatprep.subr.mxu0 0.0
    %3727 = vmatpush1.msra.mxu0 %v3514
    %3728 = vmatprep.subr.mxu0 0.0
    %3729 = vmatpush2.msra.mxu0 0.0
    %3730 = vmatprep.subr.mxu0 0.0
    %3731 = vmatpush2.msra.mxu0 0.0
    %3732 = vmatprep.subr.mxu0 0.0
    %3733 = vmatpush2.msra.mxu0 0.0
    %3734 = vmatprep.subr.mxu0 0.0
    %3735 = vmatpush2.msra.mxu0 0.0
    %3736 = vmatprep.subr.mxu0 0.0
    %3737 = vmatpush2.msra.mxu0 0.0
    %3738 = vmatprep.subr.mxu0 0.0
    %3739 = vmatpush2.msra.mxu0 0.0
    %3740 = vmatprep.subr.mxu0 0.0
    %3741 = vmatpush2.msra.mxu0 0.0
    %3742 = vmatprep.subr.mxu0 0.0
    %3743 = vmatpush2.msra.mxu0 0.0
    %3744 = vmatprep.subr.mxu0 0.0
    %3745 = vmatpush2.msra.mxu0 0.0
    %3746 = vmatprep.subr.mxu0 0.0
    %3747 = vmatpush2.msra.mxu0 0.0
    %3748 = vmatprep.subr.mxu0 0.0
    %3749 = vmatpush2.msra.mxu0 0.0
    %3750 = vmatprep.subr.mxu0 0.0
    %3751 = vmatpush2.msra.mxu0 0.0
    %3752 = vmatprep.subr.mxu0 0.0
    %3753 = vmatpush2.msra.mxu0 0.0
    %3754 = vmatprep.subr.mxu0 0.0
    %3755 = vmatpush2.msra.mxu0 0.0
    %3756 = vmatprep.subr.mxu0 0.0
    %3757 = vmatpush2.msra.mxu0 0.0
    %3758 = vmatprep.subr.mxu0 0.0
    %3759 = vmatpush2.msra.mxu0 0.0
    %3760 = vmatprep.mubr.f32.mxu0 0.0
    %3761 = vmatmul.mubr.f32.gmra.mxu0 %v3691
    %v3762 = vpop.f32.mrf.mxu0
    %v3763 = vadd.f32 %v3682, %v3762
    %v3764 = vpop.f32.mrf.mxu0
    %3765 = vmatprep.mubr.f32.mxu0 0.0
    %3766 = vmatmul.mubr.f32.gmra.mxu0 %v3694
    %v3767 = vpop.f32.mrf.mxu0
    %v3768 = vadd.f32 %v3687, %v3767
    %v3769 = vpop.f32.mrf.mxu0
    %3770 = vdwg.mxu0
    %v3771 = vtanh.pop %v3763
    %v3772 = vtanh.pop %v3768
    %v3773 = vld [vmem:[#allocation25] sm:$0x1]
    %v3775 = vlaneseq
    %v3776 = vshrl.u32 %v3775, 7
    %v3777 = vsub.s32 0, %v3776
    %v3778 = vrot.slane %v3773, %v3777
    %v3780 = vmul.f32 %v3771, %v3778
    %v3781 = vmul.f32 %v3772, %v3778
    %vm3782 = vcmask 523264
    %v3783 = vsel %vm3782, %v3780, 0.0
    %3784 = vadd.xlane.f32.xlu0 %v3783
    %v3785 = vpop.xlane.xlu0 %3784
    %v3786 = vsel %vm3782, %v3781, 0.0
    %3787 = vadd.xlane.f32.xlu0 %v3786
    %v3788 = vpop.xlane.xlu0 %3787
    %v3789 = vld [vmem:[#allocation11] sm:$0x1]
    %v3791 = vlaneseq
    %v3792 = vshrl.u32 %v3791, 7
    %v3793 = vsub.s32 0, %v3792
    %v3794 = vrot.slane %v3789, %v3793
    %v3796 = vadd.f32 %v3785, %v3794
    %v3797 = vadd.f32 %v3788, %v3794
    %v3799 = vrot.slane %v3796, 2
    %v3801 = vmax.f32 %v3796, %v3799
    %v3802 = vrot.slane %v3796, 4
    %v3804 = vmax.f32 %v3801, %v3802
    %v3805 = vrot.slane %v3796, 6
    %v3807 = vmax.f32 %v3804, %v3805
    %v3808 = vmax.f32 %v3807, %v3797
    %v3810 = vrot.slane %v3797, 2
    %v3812 = vmax.f32 %v3808, %v3810
    %v3813 = vrot.slane %v3797, 4
    %v3815 = vmax.f32 %v3812, %v3813
    %v3816 = vrot.slane %v3797, 6
    %v3818 = vmax.f32 %v3815, %v3816
    %v3820 = vsel %vm3611, %v3818, 0
    %3822 = vmatprep.subr.mxu0 0.0
    %3823 = vmatpush1.msra.mxu0 0.0
    %3824 = vmatprep.subr.mxu0 0.0
    %3825 = vmatpush1.msra.mxu0 0.0
    %3826 = vmatprep.subr.mxu0 0.0
    %3827 = vmatpush1.msra.mxu0 0.0
    %3828 = vmatprep.subr.mxu0 0.0
    %3829 = vmatpush1.msra.mxu0 0.0
    %3830 = vmatprep.subr.mxu0 0.0
    %3831 = vmatpush1.msra.mxu0 0.0
    %3832 = vmatprep.subr.mxu0 0.0
    %3833 = vmatpush1.msra.mxu0 0.0
    %3834 = vmatprep.subr.mxu0 0.0
    %3835 = vmatpush1.msra.mxu0 0.0
    %3836 = vmatprep.subr.mxu0 0.0
    %3837 = vmatpush1.msra.mxu0 0.0
    %3838 = vmatprep.subr.mxu0 0.0
    %3839 = vmatpush1.msra.mxu0 0.0
    %3840 = vmatprep.subr.mxu0 0.0
    %3841 = vmatpush1.msra.mxu0 0.0
    %3842 = vmatprep.subr.mxu0 0.0
    %3843 = vmatpush1.msra.mxu0 0.0
    %3844 = vmatprep.subr.mxu0 0.0
    %3845 = vmatpush1.msra.mxu0 0.0
    %3846 = vmatprep.subr.mxu0 0.0
    %3847 = vmatpush1.msra.mxu0 0.0
    %3848 = vmatprep.subr.mxu0 0.0
    %3849 = vmatpush1.msra.mxu0 0.0
    %3850 = vmatprep.subr.mxu0 0.0
    %3851 = vmatpush1.msra.mxu0 0.0
    %3852 = vmatprep.subr.mxu0 0.0
    %3853 = vmatpush1.msra.mxu0 %v3820
    %3854 = vmatprep.subr.mxu0 0.0
    %3855 = vmatpush2.msra.mxu0 0.0
    %3856 = vmatprep.subr.mxu0 0.0
    %3857 = vmatpush2.msra.mxu0 0.0
    %3858 = vmatprep.subr.mxu0 0.0
    %3859 = vmatpush2.msra.mxu0 0.0
    %3860 = vmatprep.subr.mxu0 0.0
    %3861 = vmatpush2.msra.mxu0 0.0
    %3862 = vmatprep.subr.mxu0 0.0
    %3863 = vmatpush2.msra.mxu0 0.0
    %3864 = vmatprep.subr.mxu0 0.0
    %3865 = vmatpush2.msra.mxu0 0.0
    %3866 = vmatprep.subr.mxu0 0.0
    %3867 = vmatpush2.msra.mxu0 0.0
    %3868 = vmatprep.subr.mxu0 0.0
    %3869 = vmatpush2.msra.mxu0 0.0
    %3870 = vmatprep.subr.mxu0 0.0
    %3871 = vmatpush2.msra.mxu0 0.0
    %3872 = vmatprep.subr.mxu0 0.0
    %3873 = vmatpush2.msra.mxu0 0.0
    %3874 = vmatprep.subr.mxu0 0.0
    %3875 = vmatpush2.msra.mxu0 0.0
    %3876 = vmatprep.subr.mxu0 0.0
    %3877 = vmatpush2.msra.mxu0 0.0
    %3878 = vmatprep.subr.mxu0 0.0
    %3879 = vmatpush2.msra.mxu0 0.0
    %3880 = vmatprep.subr.mxu0 0.0
    %3881 = vmatpush2.msra.mxu0 0.0
    %3882 = vmatprep.subr.mxu0 0.0
    %3883 = vmatpush2.msra.mxu0 0.0
    %3884 = vmatprep.subr.mxu0 0.0
    %3885 = vmatpush2.msra.mxu0 0.0
    %3886 = vmatprep.mubr.f32.mxu0 0.0
    %3887 = vmatmul.mubr.f32.gmra.mxu0 %v3606
    %v3888 = vpop.f32.mrf.mxu0
    %v3889 = vadd.f32 0.0, %v3888
    %v3890 = vpop.f32.mrf.mxu0
    %3891 = vmatprep.mubr.f32.mxu0 0.0
    %3892 = vmatmul.mubr.f32.gmra.mxu0 %v3609
    %v3893 = vpop.f32.mrf.mxu0
    %v3894 = vadd.f32 0.0, %v3893
    %v3895 = vpop.f32.mrf.mxu0
    %3896 = vdwg.mxu0
    %v3897 = vsub.f32 %v3796, %v3889
    %v3898 = vsub.f32 %v3797, %v3894
    %v3899 = vmul.f32 %v3897, 1.442695
    %v3900 = vpow.pop %v3899
    %v3901 = vmul.f32 %v3898, 1.442695
    %v3902 = vpow.pop %v3901
    %v3904 = vrot.slane %v3900, 2
    %v3906 = vadd.f32 %v3900, %v3904
    %v3907 = vrot.slane %v3900, 4
    %v3909 = vadd.f32 %v3906, %v3907
    %v3910 = vrot.slane %v3900, 6
    %v3912 = vadd.f32 %v3909, %v3910
    %v3913 = vadd.f32 %v3912, %v3902
    %v3915 = vrot.slane %v3902, 2
    %v3917 = vadd.f32 %v3913, %v3915
    %v3918 = vrot.slane %v3902, 4
    %v3920 = vadd.f32 %v3917, %v3918
    %v3921 = vrot.slane %v3902, 6
    %v3923 = vadd.f32 %v3920, %v3921
    %v3924 = vrcp.pop %v3923
    %v3925 = vmul.f32 1.0, %v3924
    %v3926 = vmul.f32 %v3900, %v3925
    %3928 = vset.pattern.permute.xlu0 0
    %3929 = vperm.xlu0 %3928, %v3926
    %v3930 = vpop.permute.xlu0 %3929
    %v3932 = vmul.f32 %v3930, %v1221
    %v3933 = vadd.f32 %v3932, 0.0
    %v3934 = vadd.f32 %v3926, 0.0
    %v3936 = vrot.slane %v3925, 6
    %v3938 = vmul.f32 %v3900, %v3936
    %3940 = vset.pattern.permute.xlu0 0
    %3941 = vperm.xlu0 %3940, %v3938
    %v3942 = vpop.permute.xlu0 %3941
    %v3944 = vrot.slane %v1524, 6
    %3945 = vrot.lane.b32.xlu0 %v3944, 32
    %v3946 = vpop.permute.xlu0 %3945
    %v3948 = vmul.f32 %v3942, %v3946
    %v3950 = vrot.slane %v3948, 2
    %3951 = vrot.lane.b32.xlu0 %v3950, 96
    %v3952 = vpop.permute.xlu0 %3951
    %v3954 = vadd.f32 %v3933, %v3952
    %v3955 = vrot.slane %v3938, 2
    %v3957 = vadd.f32 %v3934, %v3955
    %v3958 = vrot.slane %v3925, 4
    %v3960 = vmul.f32 %v3900, %v3958
    %3962 = vset.pattern.permute.xlu0 0
    %3963 = vperm.xlu0 %3962, %v3960
    %v3964 = vpop.permute.xlu0 %3963
    %v3966 = vrot.slane %v1826, 4
    %3967 = vrot.lane.b32.xlu0 %v3966, 32
    %v3968 = vpop.permute.xlu0 %3967
    %v3970 = vmul.f32 %v3964, %v3968
    %v3972 = vrot.slane %v3970, 4
    %3973 = vrot.lane.b32.xlu0 %v3972, 96
    %v3974 = vpop.permute.xlu0 %3973
    %v3976 = vadd.f32 %v3954, %v3974
    %v3977 = vrot.slane %v3960, 4
    %v3979 = vadd.f32 %v3957, %v3977
    %v3980 = vrot.slane %v3925, 2
    %v3982 = vmul.f32 %v3900, %v3980
    %3984 = vset.pattern.permute.xlu0 0
    %3985 = vperm.xlu0 %3984, %v3982
    %v3986 = vpop.permute.xlu0 %3985
    %v3988 = vrot.slane %v2128, 2
    %3989 = vrot.lane.b32.xlu0 %v3988, 32
    %v3990 = vpop.permute.xlu0 %3989
    %v3992 = vmul.f32 %v3986, %v3990
    %v3994 = vrot.slane %v3992, 6
    %3995 = vrot.lane.b32.xlu0 %v3994, 96
    %v3996 = vpop.permute.xlu0 %3995
    %v3998 = vadd.f32 %v3976, %v3996
    %v3999 = vrot.slane %v3982, 6
    %v4001 = vadd.f32 %v3979, %v3999
    %v4002 = vmul.f32 %v3902, %v3925
    %4004 = vset.pattern.permute.xlu0 0
    %4005 = vperm.xlu0 %4004, %v4002
    %v4006 = vpop.permute.xlu0 %4005
    %v4008 = vmul.f32 %v4006, %v2426
    %v4009 = vadd.f32 %v3998, %v4008
    %v4010 = vadd.f32 %v4001, %v4002
    %v4011 = vmul.f32 %v3902, %v3936
    %4013 = vset.pattern.permute.xlu0 0
    %4014 = vperm.xlu0 %4013, %v4011
    %v4015 = vpop.permute.xlu0 %4014
    %v4017 = vrot.slane %v2728, 6
    %4018 = vrot.lane.b32.xlu0 %v4017, 32
    %v4019 = vpop.permute.xlu0 %4018
    %v4021 = vmul.f32 %v4015, %v4019
    %v4023 = vrot.slane %v4021, 2
    %4024 = vrot.lane.b32.xlu0 %v4023, 96
    %v4025 = vpop.permute.xlu0 %4024
    %v4027 = vadd.f32 %v4009, %v4025
    %v4028 = vrot.slane %v4011, 2
    %v4030 = vadd.f32 %v4010, %v4028
    %v4031 = vmul.f32 %v3902, %v3958
    %4033 = vset.pattern.permute.xlu0 0
    %4034 = vperm.xlu0 %4033, %v4031
    %v4035 = vpop.permute.xlu0 %4034
    %v4037 = vrot.slane %v3030, 4
    %4038 = vrot.lane.b32.xlu0 %v4037, 32
    %v4039 = vpop.permute.xlu0 %4038
    %v4041 = vmul.f32 %v4035, %v4039
    %v4043 = vrot.slane %v4041, 4
    %4044 = vrot.lane.b32.xlu0 %v4043, 96
    %v4045 = vpop.permute.xlu0 %4044
    %v4047 = vadd.f32 %v4027, %v4045
    %v4048 = vrot.slane %v4031, 4
    %v4050 = vadd.f32 %v4030, %v4048
    %v4051 = vmul.f32 %v3902, %v3980
    %4053 = vset.pattern.permute.xlu0 0
    %4054 = vperm.xlu0 %4053, %v4051
    %v4055 = vpop.permute.xlu0 %4054
    %v4057 = vrot.slane %v3332, 2
    %4058 = vrot.lane.b32.xlu0 %v4057, 32
    %v4059 = vpop.permute.xlu0 %4058
    %v4061 = vmul.f32 %v4055, %v4059
    %v4063 = vrot.slane %v4061, 6
    %4064 = vrot.lane.b32.xlu0 %v4063, 96
    %v4065 = vpop.permute.xlu0 %4064
    %v4067 = vadd.f32 %v4047, %v4065
    %v4068 = vrot.slane %v4051, 6
    %v4070 = vadd.f32 %v4050, %v4068
    %4072 = vset.pattern.permute.xlu0 0
    %4073 = vperm.xlu0 %4072, %v4070
    %v4074 = vpop.permute.xlu0 %4073
    %v4076 = vmul.f32 %v3511, %v4074
    %s4077 = smul.u32 8, 4
    %s4078 = smul.u32 %s4077, 2
    %s4079 = sshll.u32 %s4078, 4
    %4080 = dma.done [#allocation10], %s4079
    %s4081 = sshll.u32 %s4078, 4
    %4082 = dma.done %s335, %s4081
    %s4083 = smul.u32 8, 8
    %s4084 = smul.u32 %s4083, 2
    %s4085 = sshll.u32 %s4084, 4
    %4086 = dma.done %s393, %s4085
    %s4087 = sshll.u32 %s4084, 4
    %4088 = dma.done %s467, %s4087
    %s4089 = sshll.u32 %s4084, 4
    %4090 = dma.done %s541, %s4089
    %s4091 = smul.u32 64, 1
    %s4092 = sshll.u32 %s4091, 4
    %4093 = dma.done %s553, %s4092
    %v4094 = vld [vmem:[#allocation4] sm:$0xff]
    %v4095 = vld [vmem:[#allocation4 + $0x8] sm:$0xff]
    %v4096 = vld [vmem:[#allocation4 + $0x10] sm:$0xff]
    %v4097 = vld [vmem:[#allocation4 + $0x18] sm:$0xff]
    %v4098 = vld [vmem:[#allocation4 + $0x20] sm:$0xff]
    %v4099 = vld [vmem:[#allocation4 + $0x28] sm:$0xff]
    %v4100 = vld [vmem:[#allocation4 + $0x30] sm:$0xff]
    %v4101 = vld [vmem:[#allocation4 + $0x38] sm:$0xff]
    %v4102 = vld [vmem:[#allocation5] sm:$0xff]
    %v4103 = vld [vmem:[#allocation5 + $0x8] sm:$0xff]
    %v4104 = vld [vmem:[#allocation5 + $0x10] sm:$0xff]
    %v4105 = vld [vmem:[#allocation5 + $0x18] sm:$0xff]
    %v4106 = vld [vmem:[#allocation5 + $0x20] sm:$0xff]
    %v4107 = vld [vmem:[#allocation5 + $0x28] sm:$0xff]
    %v4108 = vld [vmem:[#allocation5 + $0x30] sm:$0xff]
    %v4109 = vld [vmem:[#allocation5 + $0x38] sm:$0xff]
    %v4111 = vsel %vm937, %v4076, 0
    %4113 = vmatprep.subr.mxu0 0.0
    %4114 = vmatpush1.msra.mxu0 0.0
    %4115 = vmatprep.subr.mxu0 0.0
    %4116 = vmatpush1.msra.mxu0 0.0
    %4117 = vmatprep.subr.mxu0 0.0
    %4118 = vmatpush1.msra.mxu0 0.0
    %4119 = vmatprep.subr.mxu0 0.0
    %4120 = vmatpush1.msra.mxu0 0.0
    %4121 = vmatprep.subr.mxu0 0.0
    %4122 = vmatpush1.msra.mxu0 0.0
    %4123 = vmatprep.subr.mxu0 0.0
    %4124 = vmatpush1.msra.mxu0 0.0
    %4125 = vmatprep.subr.mxu0 0.0
    %4126 = vmatpush1.msra.mxu0 0.0
    %4127 = vmatprep.subr.mxu0 0.0
    %4128 = vmatpush1.msra.mxu0 0.0
    %4129 = vmatprep.subr.mxu0 0.0
    %4130 = vmatpush1.msra.mxu0 0.0
    %4131 = vmatprep.subr.mxu0 0.0
    %4132 = vmatpush1.msra.mxu0 0.0
    %4133 = vmatprep.subr.mxu0 0.0
    %4134 = vmatpush1.msra.mxu0 0.0
    %4135 = vmatprep.subr.mxu0 0.0
    %4136 = vmatpush1.msra.mxu0 0.0
    %4137 = vmatprep.subr.mxu0 %v4109
    %4138 = vmatpush1.msra.mxu0 %v4108
    %4139 = vmatprep.subr.mxu0 %v4107
    %4140 = vmatpush1.msra.mxu0 %v4106
    %4141 = vmatprep.subr.mxu0 %v4105
    %4142 = vmatpush1.msra.mxu0 %v4104
    %4143 = vmatprep.subr.mxu0 %v4103
    %4144 = vmatpush1.msra.mxu0 %v4102
    %4145 = vmatprep.subr.mxu0 0.0
    %4146 = vmatpush2.msra.mxu0 0.0
    %4147 = vmatprep.subr.mxu0 0.0
    %4148 = vmatpush2.msra.mxu0 0.0
    %4149 = vmatprep.subr.mxu0 0.0
    %4150 = vmatpush2.msra.mxu0 0.0
    %4151 = vmatprep.subr.mxu0 0.0
    %4152 = vmatpush2.msra.mxu0 0.0
    %4153 = vmatprep.subr.mxu0 0.0
    %4154 = vmatpush2.msra.mxu0 0.0
    %4155 = vmatprep.subr.mxu0 0.0
    %4156 = vmatpush2.msra.mxu0 0.0
    %4157 = vmatprep.subr.mxu0 0.0
    %4158 = vmatpush2.msra.mxu0 0.0
    %4159 = vmatprep.subr.mxu0 0.0
    %4160 = vmatpush2.msra.mxu0 0.0
    %4161 = vmatprep.subr.mxu0 0.0
    %4162 = vmatpush2.msra.mxu0 0.0
    %4163 = vmatprep.subr.mxu0 0.0
    %4164 = vmatpush2.msra.mxu0 0.0
    %4165 = vmatprep.subr.mxu0 0.0
    %4166 = vmatpush2.msra.mxu0 0.0
    %4167 = vmatprep.subr.mxu0 0.0
    %4168 = vmatpush2.msra.mxu0 0.0
    %4169 = vmatprep.subr.mxu0 0.0
    %4170 = vmatpush2.msra.mxu0 0.0
    %4171 = vmatprep.subr.mxu0 0.0
    %4172 = vmatpush2.msra.mxu0 0.0
    %4173 = vmatprep.subr.mxu0 0.0
    %4174 = vmatpush2.msra.mxu0 0.0
    %4175 = vmatprep.subr.mxu0 0.0
    %4176 = vmatpush2.msra.mxu0 0.0
    %4177 = vmatprep.mubr.f32.mxu0 0.0
    %4178 = vmatmul.mubr.f32.gmra.mxu0 %v4111
    %v4179 = vpop.f32.mrf.mxu0
    %v4180 = vadd.f32 0.0, %v4179
    %v4181 = vpop.f32.mrf.mxu0
    %v4182 = vadd.f32 0.0, %v4181
    %4183 = vdwg.mxu0
    %4185 = vrot.lane.b32.xlu0 %v4067, 32
    %v4186 = vpop.permute.xlu0 %4185
    %v4187 = vsel %vm937, %v4186, 0
    %4189 = vmatprep.subr.mxu0 0.0
    %4190 = vmatpush1.msra.mxu0 0.0
    %4191 = vmatprep.subr.mxu0 0.0
    %4192 = vmatpush1.msra.mxu0 0.0
    %4193 = vmatprep.subr.mxu0 0.0
    %4194 = vmatpush1.msra.mxu0 0.0
    %4195 = vmatprep.subr.mxu0 0.0
    %4196 = vmatpush1.msra.mxu0 0.0
    %4197 = vmatprep.subr.mxu0 0.0
    %4198 = vmatpush1.msra.mxu0 0.0
    %4199 = vmatprep.subr.mxu0 0.0
    %4200 = vmatpush1.msra.mxu0 0.0
    %4201 = vmatprep.subr.mxu0 0.0
    %4202 = vmatpush1.msra.mxu0 0.0
    %4203 = vmatprep.subr.mxu0 0.0
    %4204 = vmatpush1.msra.mxu0 0.0
    %4205 = vmatprep.subr.mxu0 0.0
    %4206 = vmatpush1.msra.mxu0 0.0
    %4207 = vmatprep.subr.mxu0 0.0
    %4208 = vmatpush1.msra.mxu0 0.0
    %4209 = vmatprep.subr.mxu0 0.0
    %4210 = vmatpush1.msra.mxu0 0.0
    %4211 = vmatprep.subr.mxu0 0.0
    %4212 = vmatpush1.msra.mxu0 0.0
    %4213 = vmatprep.subr.mxu0 %v4101
    %4214 = vmatpush1.msra.mxu0 %v4100
    %4215 = vmatprep.subr.mxu0 %v4099
    %4216 = vmatpush1.msra.mxu0 %v4098
    %4217 = vmatprep.subr.mxu0 %v4097
    %4218 = vmatpush1.msra.mxu0 %v4096
    %4219 = vmatprep.subr.mxu0 %v4095
    %4220 = vmatpush1.msra.mxu0 %v4094
    %4221 = vmatprep.subr.mxu0 0.0
    %4222 = vmatpush2.msra.mxu0 0.0
    %4223 = vmatprep.subr.mxu0 0.0
    %4224 = vmatpush2.msra.mxu0 0.0
    %4225 = vmatprep.subr.mxu0 0.0
    %4226 = vmatpush2.msra.mxu0 0.0
    %4227 = vmatprep.subr.mxu0 0.0
    %4228 = vmatpush2.msra.mxu0 0.0
    %4229 = vmatprep.subr.mxu0 0.0
    %4230 = vmatpush2.msra.mxu0 0.0
    %4231 = vmatprep.subr.mxu0 0.0
    %4232 = vmatpush2.msra.mxu0 0.0
    %4233 = vmatprep.subr.mxu0 0.0
    %4234 = vmatpush2.msra.mxu0 0.0
    %4235 = vmatprep.subr.mxu0 0.0
    %4236 = vmatpush2.msra.mxu0 0.0
    %4237 = vmatprep.subr.mxu0 0.0
    %4238 = vmatpush2.msra.mxu0 0.0
    %4239 = vmatprep.subr.mxu0 0.0
    %4240 = vmatpush2.msra.mxu0 0.0
    %4241 = vmatprep.subr.mxu0 0.0
    %4242 = vmatpush2.msra.mxu0 0.0
    %4243 = vmatprep.subr.mxu0 0.0
    %4244 = vmatpush2.msra.mxu0 0.0
    %4245 = vmatprep.subr.mxu0 0.0
    %4246 = vmatpush2.msra.mxu0 0.0
    %4247 = vmatprep.subr.mxu0 0.0
    %4248 = vmatpush2.msra.mxu0 0.0
    %4249 = vmatprep.subr.mxu0 0.0
    %4250 = vmatpush2.msra.mxu0 0.0
    %4251 = vmatprep.subr.mxu0 0.0
    %4252 = vmatpush2.msra.mxu0 0.0
    %4253 = vmatprep.mubr.f32.mxu0 0.0
    %4254 = vmatmul.mubr.f32.gmra.mxu0 %v4187
    %v4255 = vpop.f32.mrf.mxu0
    %v4256 = vadd.f32 %v4180, %v4255
    %v4257 = vpop.f32.mrf.mxu0
    %v4258 = vadd.f32 %v4182, %v4257
    %4259 = vdwg.mxu0
    %v4260 = vld [vmem:[#allocation26] sm:$0x3]
    %v4262 = vlaneseq
    %v4263 = vshrl.u32 %v4262, 7
    %v4264 = vsub.s32 0, %v4263
    %v4265 = vrot.slane %v4260, %v4264
    %v4266 = vlaneseq
    %v4267 = vshrl.u32 %v4266, 7
    %v4268 = vsub.s32 1, %v4267
    %v4269 = vrot.slane %v4260, %v4268
    %v4272 = vadd.f32 %v4256, %v4265
    %v4273 = vadd.f32 %v4258, %v4269
    %v4274 = vld [vmem:[#allocation6] sm:$0xff]
    %v4275 = vld [vmem:[#allocation6 + $0x8] sm:$0xff]
    %v4276 = vld [vmem:[#allocation6 + $0x10] sm:$0xff]
    %v4277 = vld [vmem:[#allocation6 + $0x18] sm:$0xff]
    %v4278 = vld [vmem:[#allocation6 + $0x20] sm:$0xff]
    %v4279 = vld [vmem:[#allocation6 + $0x28] sm:$0xff]
    %v4280 = vld [vmem:[#allocation6 + $0x30] sm:$0xff]
    %v4281 = vld [vmem:[#allocation6 + $0x38] sm:$0xff]
    %v4282 = vld [vmem:[#allocation6 + $0x40] sm:$0xff]
    %v4283 = vld [vmem:[#allocation6 + $0x48] sm:$0xff]
    %v4284 = vld [vmem:[#allocation6 + $0x50] sm:$0xff]
    %v4285 = vld [vmem:[#allocation6 + $0x58] sm:$0xff]
    %v4286 = vld [vmem:[#allocation6 + $0x60] sm:$0xff]
    %v4287 = vld [vmem:[#allocation6 + $0x68] sm:$0xff]
    %v4288 = vld [vmem:[#allocation6 + $0x70] sm:$0xff]
    %v4289 = vld [vmem:[#allocation6 + $0x78] sm:$0xff]
    %v4290 = vsel %vm3782, 0.0, 0
    %4292 = vmatprep.subr.mxu0 0.0
    %4293 = vmatpush1.msra.mxu0 0.0
    %4294 = vmatprep.subr.mxu0 0.0
    %4295 = vmatpush1.msra.mxu0 0.0
    %4296 = vmatprep.subr.mxu0 0.0
    %4297 = vmatpush1.msra.mxu0 0.0
    %4298 = vmatprep.subr.mxu0 0.0
    %4299 = vmatpush1.msra.mxu0 0.0
    %4300 = vmatprep.subr.mxu0 0.0
    %4301 = vmatpush1.msra.mxu0 0.0
    %4302 = vmatprep.subr.mxu0 0.0
    %4303 = vmatpush1.msra.mxu0 0.0
    %4304 = vmatprep.subr.mxu0 0.0
    %4305 = vmatpush1.msra.mxu0 0.0
    %4306 = vmatprep.subr.mxu0 0.0
    %4307 = vmatpush1.msra.mxu0 0.0
    %4308 = vmatprep.subr.mxu0 %v4289
    %4309 = vmatpush1.msra.mxu0 %v4288
    %4310 = vmatprep.subr.mxu0 %v4287
    %4311 = vmatpush1.msra.mxu0 %v4286
    %4312 = vmatprep.subr.mxu0 %v4285
    %4313 = vmatpush1.msra.mxu0 %v4284
    %4314 = vmatprep.subr.mxu0 %v4283
    %4315 = vmatpush1.msra.mxu0 %v4282
    %4316 = vmatprep.subr.mxu0 %v4281
    %4317 = vmatpush1.msra.mxu0 %v4280
    %4318 = vmatprep.subr.mxu0 %v4279
    %4319 = vmatpush1.msra.mxu0 %v4278
    %4320 = vmatprep.subr.mxu0 %v4277
    %4321 = vmatpush1.msra.mxu0 %v4276
    %4322 = vmatprep.subr.mxu0 %v4275
    %4323 = vmatpush1.msra.mxu0 %v4274
    %4324 = vmatprep.subr.mxu0 0.0
    %4325 = vmatpush2.msra.mxu0 0.0
    %4326 = vmatprep.subr.mxu0 0.0
    %4327 = vmatpush2.msra.mxu0 0.0
    %4328 = vmatprep.subr.mxu0 0.0
    %4329 = vmatpush2.msra.mxu0 0.0
    %4330 = vmatprep.subr.mxu0 0.0
    %4331 = vmatpush2.msra.mxu0 0.0
    %4332 = vmatprep.subr.mxu0 0.0
    %4333 = vmatpush2.msra.mxu0 0.0
    %4334 = vmatprep.subr.mxu0 0.0
    %4335 = vmatpush2.msra.mxu0 0.0
    %4336 = vmatprep.subr.mxu0 0.0
    %4337 = vmatpush2.msra.mxu0 0.0
    %4338 = vmatprep.subr.mxu0 0.0
    %4339 = vmatpush2.msra.mxu0 0.0
    %4340 = vmatprep.subr.mxu0 0.0
    %4341 = vmatpush2.msra.mxu0 0.0
    %4342 = vmatprep.subr.mxu0 0.0
    %4343 = vmatpush2.msra.mxu0 0.0
    %4344 = vmatprep.subr.mxu0 0.0
    %4345 = vmatpush2.msra.mxu0 0.0
    %4346 = vmatprep.subr.mxu0 0.0
    %4347 = vmatpush2.msra.mxu0 0.0
    %4348 = vmatprep.subr.mxu0 0.0
    %4349 = vmatpush2.msra.mxu0 0.0
    %4350 = vmatprep.subr.mxu0 0.0
    %4351 = vmatpush2.msra.mxu0 0.0
    %4352 = vmatprep.subr.mxu0 0.0
    %4353 = vmatpush2.msra.mxu0 0.0
    %4354 = vmatprep.subr.mxu0 0.0
    %4355 = vmatpush2.msra.mxu0 0.0
    %4356 = vmatprep.mubr.f32.mxu0 0.0
    %4357 = vmatmul.mubr.f32.gmra.mxu0 %v4290
    %v4358 = vpop.f32.mrf.mxu0
    %v4359 = vadd.f32 0.0, %v4358
    %v4360 = vpop.f32.mrf.mxu0
    %v4361 = vadd.f32 0.0, %v4360
    %4362 = vdwg.mxu0
    %v4363 = vadd.f32 %v4272, %v4359
    %v4364 = vadd.f32 %v4273, %v4361
    %v4365 = vxor.u32 %v4363, 2147483648
    %v4366 = vxor.u32 %v4364, 2147483648
    %v4367 = vmul.f32 %v4365, 1.442695
    %v4368 = vpow.pop %v4367
    %v4369 = vmul.f32 %v4366, 1.442695
    %v4370 = vpow.pop %v4369
    %v4371 = vadd.f32 %v4368, 1.0
    %v4372 = vadd.f32 %v4370, 1.0
    %v4373 = vrcp.pop %v4371
    %v4374 = vmul.f32 1.0, %v4373
    %v4375 = vrcp.pop %v4372
    %v4376 = vmul.f32 1.0, %v4375
    %v4377 = vtanh.pop %v4364
    %v4378 = vmul.f32 %v4374, 0.0
    %v4379 = vmul.f32 %v4374, %v4377
    %4381 = vrot.lane.b32.xlu0 %v4379, 64
    %v4382 = vpop.permute.xlu0 %4381
    %v4384 = vadd.f32 %v4378, %v4382
    %v4385 = vtanh.pop %v4384
    %v4386 = vmul.f32 %v4376, %v4385
    %v4387 = vld [vmem:[#allocation7] sm:$0xff]
    %v4388 = vld [vmem:[#allocation7 + $0x8] sm:$0xff]
    %v4389 = vld [vmem:[#allocation7 + $0x10] sm:$0xff]
    %v4390 = vld [vmem:[#allocation7 + $0x18] sm:$0xff]
    %v4391 = vld [vmem:[#allocation7 + $0x20] sm:$0xff]
    %v4392 = vld [vmem:[#allocation7 + $0x28] sm:$0xff]
    %v4393 = vld [vmem:[#allocation7 + $0x30] sm:$0xff]
    %v4394 = vld [vmem:[#allocation7 + $0x38] sm:$0xff]
    %v4395 = vld [vmem:[#allocation7 + $0x40] sm:$0xff]
    %v4396 = vld [vmem:[#allocation7 + $0x48] sm:$0xff]
    %v4397 = vld [vmem:[#allocation7 + $0x50] sm:$0xff]
    %v4398 = vld [vmem:[#allocation7 + $0x58] sm:$0xff]
    %v4399 = vld [vmem:[#allocation7 + $0x60] sm:$0xff]
    %v4400 = vld [vmem:[#allocation7 + $0x68] sm:$0xff]
    %v4401 = vld [vmem:[#allocation7 + $0x70] sm:$0xff]
    %v4402 = vld [vmem:[#allocation7 + $0x78] sm:$0xff]
    %v4403 = vld [vmem:[#allocation8] sm:$0xff]
    %v4404 = vld [vmem:[#allocation8 + $0x8] sm:$0xff]
    %v4405 = vld [vmem:[#allocation8 + $0x10] sm:$0xff]
    %v4406 = vld [vmem:[#allocation8 + $0x18] sm:$0xff]
    %v4407 = vld [vmem:[#allocation8 + $0x20] sm:$0xff]
    %v4408 = vld [vmem:[#allocation8 + $0x28] sm:$0xff]
    %v4409 = vld [vmem:[#allocation8 + $0x30] sm:$0xff]
    %v4410 = vld [vmem:[#allocation8 + $0x38] sm:$0xff]
    %v4411 = vld [vmem:[#allocation8 + $0x40] sm:$0xff]
    %v4412 = vld [vmem:[#allocation8 + $0x48] sm:$0xff]
    %v4413 = vld [vmem:[#allocation8 + $0x50] sm:$0xff]
    %v4414 = vld [vmem:[#allocation8 + $0x58] sm:$0xff]
    %v4415 = vld [vmem:[#allocation8 + $0x60] sm:$0xff]
    %v4416 = vld [vmem:[#allocation8 + $0x68] sm:$0xff]
    %v4417 = vld [vmem:[#allocation8 + $0x70] sm:$0xff]
    %v4418 = vld [vmem:[#allocation8 + $0x78] sm:$0xff]
    %4419 = vmatprep.subr.mxu0 0.0
    %4420 = vmatpush1.msra.mxu0 0.0
    %4421 = vmatprep.subr.mxu0 0.0
    %4422 = vmatpush1.msra.mxu0 0.0
    %4423 = vmatprep.subr.mxu0 0.0
    %4424 = vmatpush1.msra.mxu0 0.0
    %4425 = vmatprep.subr.mxu0 0.0
    %4426 = vmatpush1.msra.mxu0 0.0
    %4427 = vmatprep.subr.mxu0 0.0
    %4428 = vmatpush1.msra.mxu0 0.0
    %4429 = vmatprep.subr.mxu0 0.0
    %4430 = vmatpush1.msra.mxu0 0.0
    %4431 = vmatprep.subr.mxu0 0.0
    %4432 = vmatpush1.msra.mxu0 0.0
    %4433 = vmatprep.subr.mxu0 0.0
    %4434 = vmatpush1.msra.mxu0 0.0
    %4435 = vmatprep.subr.mxu0 %v4418
    %4436 = vmatpush1.msra.mxu0 %v4417
    %4437 = vmatprep.subr.mxu0 %v4416
    %4438 = vmatpush1.msra.mxu0 %v4415
    %4439 = vmatprep.subr.mxu0 %v4414
    %4440 = vmatpush1.msra.mxu0 %v4413
    %4441 = vmatprep.subr.mxu0 %v4412
    %4442 = vmatpush1.msra.mxu0 %v4411
    %4443 = vmatprep.subr.mxu0 %v4410
    %4444 = vmatpush1.msra.mxu0 %v4409
    %4445 = vmatprep.subr.mxu0 %v4408
    %4446 = vmatpush1.msra.mxu0 %v4407
    %4447 = vmatprep.subr.mxu0 %v4406
    %4448 = vmatpush1.msra.mxu0 %v4405
    %4449 = vmatprep.subr.mxu0 %v4404
    %4450 = vmatpush1.msra.mxu0 %v4403
    %4451 = vmatprep.subr.mxu0 0.0
    %4452 = vmatpush2.msra.mxu0 0.0
    %4453 = vmatprep.subr.mxu0 0.0
    %4454 = vmatpush2.msra.mxu0 0.0
    %4455 = vmatprep.subr.mxu0 0.0
    %4456 = vmatpush2.msra.mxu0 0.0
    %4457 = vmatprep.subr.mxu0 0.0
    %4458 = vmatpush2.msra.mxu0 0.0
    %4459 = vmatprep.subr.mxu0 0.0
    %4460 = vmatpush2.msra.mxu0 0.0
    %4461 = vmatprep.subr.mxu0 0.0
    %4462 = vmatpush2.msra.mxu0 0.0
    %4463 = vmatprep.subr.mxu0 0.0
    %4464 = vmatpush2.msra.mxu0 0.0
    %4465 = vmatprep.subr.mxu0 0.0
    %4466 = vmatpush2.msra.mxu0 0.0
    %4467 = vmatprep.subr.mxu0 0.0
    %4468 = vmatpush2.msra.mxu0 0.0
    %4469 = vmatprep.subr.mxu0 0.0
    %4470 = vmatpush2.msra.mxu0 0.0
    %4471 = vmatprep.subr.mxu0 0.0
    %4472 = vmatpush2.msra.mxu0 0.0
    %4473 = vmatprep.subr.mxu0 0.0
    %4474 = vmatpush2.msra.mxu0 0.0
    %4475 = vmatprep.subr.mxu0 0.0
    %4476 = vmatpush2.msra.mxu0 0.0
    %4477 = vmatprep.subr.mxu0 0.0
    %4478 = vmatpush2.msra.mxu0 0.0
    %4479 = vmatprep.subr.mxu0 0.0
    %4480 = vmatpush2.msra.mxu0 0.0
    %4481 = vmatprep.subr.mxu0 0.0
    %4482 = vmatpush2.msra.mxu0 0.0
    %4483 = vmatprep.mubr.f32.mxu0 0.0
    %4484 = vmatmul.mubr.f32.gmra.mxu0 %v4290
    %v4485 = vpop.f32.mrf.mxu0
    %v4486 = vadd.f32 0.0, %v4485
    %v4487 = vpop.f32.mrf.mxu0
    %v4488 = vadd.f32 0.0, %v4487
    %4489 = vdwg.mxu0
    %4491 = vrot.lane.b32.xlu0 %v4386, 64
    %v4492 = vpop.permute.xlu0 %4491
    %v4493 = vsel %vm3782, %v4492, 0
    %4495 = vmatprep.subr.mxu0 0.0
    %4496 = vmatpush1.msra.mxu0 0.0
    %4497 = vmatprep.subr.mxu0 0.0
    %4498 = vmatpush1.msra.mxu0 0.0
    %4499 = vmatprep.subr.mxu0 0.0
    %4500 = vmatpush1.msra.mxu0 0.0
    %4501 = vmatprep.subr.mxu0 0.0
    %4502 = vmatpush1.msra.mxu0 0.0
    %4503 = vmatprep.subr.mxu0 0.0
    %4504 = vmatpush1.msra.mxu0 0.0
    %4505 = vmatprep.subr.mxu0 0.0
    %4506 = vmatpush1.msra.mxu0 0.0
    %4507 = vmatprep.subr.mxu0 0.0
    %4508 = vmatpush1.msra.mxu0 0.0
    %4509 = vmatprep.subr.mxu0 0.0
    %4510 = vmatpush1.msra.mxu0 0.0
    %4511 = vmatprep.subr.mxu0 %v4402
    %4512 = vmatpush1.msra.mxu0 %v4401
    %4513 = vmatprep.subr.mxu0 %v4400
    %4514 = vmatpush1.msra.mxu0 %v4399
    %4515 = vmatprep.subr.mxu0 %v4398
    %4516 = vmatpush1.msra.mxu0 %v4397
    %4517 = vmatprep.subr.mxu0 %v4396
    %4518 = vmatpush1.msra.mxu0 %v4395
    %4519 = vmatprep.subr.mxu0 %v4394
    %4520 = vmatpush1.msra.mxu0 %v4393
    %4521 = vmatprep.subr.mxu0 %v4392
    %4522 = vmatpush1.msra.mxu0 %v4391
    %4523 = vmatprep.subr.mxu0 %v4390
    %4524 = vmatpush1.msra.mxu0 %v4389
    %4525 = vmatprep.subr.mxu0 %v4388
    %4526 = vmatpush1.msra.mxu0 %v4387
    %4527 = vmatprep.subr.mxu0 0.0
    %4528 = vmatpush2.msra.mxu0 0.0
    %4529 = vmatprep.subr.mxu0 0.0
    %4530 = vmatpush2.msra.mxu0 0.0
    %4531 = vmatprep.subr.mxu0 0.0
    %4532 = vmatpush2.msra.mxu0 0.0
    %4533 = vmatprep.subr.mxu0 0.0
    %4534 = vmatpush2.msra.mxu0 0.0
    %4535 = vmatprep.subr.mxu0 0.0
    %4536 = vmatpush2.msra.mxu0 0.0
    %4537 = vmatprep.subr.mxu0 0.0
    %4538 = vmatpush2.msra.mxu0 0.0
    %4539 = vmatprep.subr.mxu0 0.0
    %4540 = vmatpush2.msra.mxu0 0.0
    %4541 = vmatprep.subr.mxu0 0.0
    %4542 = vmatpush2.msra.mxu0 0.0
    %4543 = vmatprep.subr.mxu0 0.0
    %4544 = vmatpush2.msra.mxu0 0.0
    %4545 = vmatprep.subr.mxu0 0.0
    %4546 = vmatpush2.msra.mxu0 0.0
    %4547 = vmatprep.subr.mxu0 0.0
    %4548 = vmatpush2.msra.mxu0 0.0
    %4549 = vmatprep.subr.mxu0 0.0
    %4550 = vmatpush2.msra.mxu0 0.0
    %4551 = vmatprep.subr.mxu0 0.0
    %4552 = vmatpush2.msra.mxu0 0.0
    %4553 = vmatprep.subr.mxu0 0.0
    %4554 = vmatpush2.msra.mxu0 0.0
    %4555 = vmatprep.subr.mxu0 0.0
    %4556 = vmatpush2.msra.mxu0 0.0
    %4557 = vmatprep.subr.mxu0 0.0
    %4558 = vmatpush2.msra.mxu0 0.0
    %4559 = vmatprep.mubr.f32.mxu0 0.0
    %4560 = vmatmul.mubr.f32.gmra.mxu0 %v4493
    %v4561 = vpop.f32.mrf.mxu0
    %v4562 = vadd.f32 %v4486, %v4561
    %v4563 = vpop.f32.mrf.mxu0
    %v4564 = vadd.f32 %v4488, %v4563
    %4565 = vdwg.mxu0
    %v4566 = vld [vmem:[#allocation28] sm:$0x3]
    %v4568 = vlaneseq
    %v4569 = vshrl.u32 %v4568, 7
    %v4570 = vsub.s32 0, %v4569
    %v4571 = vrot.slane %v4566, %v4570
    %v4572 = vlaneseq
    %v4573 = vshrl.u32 %v4572, 7
    %v4574 = vsub.s32 1, %v4573
    %v4575 = vrot.slane %v4566, %v4574
    %v4578 = vadd.f32 %v4562, %v4571
    %v4579 = vadd.f32 %v4564, %v4575
    %v4580 = vxor.u32 %v4578, 2147483648
    %v4581 = vxor.u32 %v4579, 2147483648
    %v4582 = vmul.f32 %v4580, 1.442695
    %v4583 = vpow.pop %v4582
    %v4584 = vmul.f32 %v4581, 1.442695
    %v4585 = vpow.pop %v4584
    %v4586 = vadd.f32 %v4583, 1.0
    %v4587 = vadd.f32 %v4585, 1.0
    %v4588 = vrcp.pop %v4586
    %v4589 = vmul.f32 1.0, %v4588
    %v4590 = vrcp.pop %v4587
    %v4591 = vmul.f32 1.0, %v4590
    %v4592 = vtanh.pop %v4579
    %v4593 = vmul.f32 %v4589, 0.0
    %v4594 = vmul.f32 %v4589, %v4592
    %4596 = vrot.lane.b32.xlu0 %v4594, 64
    %v4597 = vpop.permute.xlu0 %4596
    %v4599 = vadd.f32 %v4593, %v4597
    %v4600 = vtanh.pop %v4599
    %v4601 = vmul.f32 %v4591, %v4600
    %4603 = vrot.lane.b32.xlu0 %v4601, 64
    %v4604 = vpop.permute.xlu0 %4603
    %vm4606 = vcmask 517120
    %4607 = vst.msk [vmem:[#allocation3] sm:$0x3] %vm4606, %v4604
    %v4608 = vld [vmem:[#allocation6] sm:$0xff]
    %v4609 = vld [vmem:[#allocation6 + $0x8] sm:$0xff]
    %v4610 = vld [vmem:[#allocation6 + $0x10] sm:$0xff]
    %v4611 = vld [vmem:[#allocation6 + $0x18] sm:$0xff]
    %v4612 = vld [vmem:[#allocation6 + $0x20] sm:$0xff]
    %v4613 = vld [vmem:[#allocation6 + $0x28] sm:$0xff]
    %v4614 = vld [vmem:[#allocation6 + $0x30] sm:$0xff]
    %v4615 = vld [vmem:[#allocation6 + $0x38] sm:$0xff]
    %v4616 = vld [vmem:[#allocation6 + $0x40] sm:$0xff]
    %v4617 = vld [vmem:[#allocation6 + $0x48] sm:$0xff]
    %v4618 = vld [vmem:[#allocation6 + $0x50] sm:$0xff]
    %v4619 = vld [vmem:[#allocation6 + $0x58] sm:$0xff]
    %v4620 = vld [vmem:[#allocation6 + $0x60] sm:$0xff]
    %v4621 = vld [vmem:[#allocation6 + $0x68] sm:$0xff]
    %v4622 = vld [vmem:[#allocation6 + $0x70] sm:$0xff]
    %v4623 = vld [vmem:[#allocation6 + $0x78] sm:$0xff]
    %4624 = vmatprep.subr.mxu0 0.0
    %4625 = vmatpush1.msra.mxu0 0.0
    %4626 = vmatprep.subr.mxu0 0.0
    %4627 = vmatpush1.msra.mxu0 0.0
    %4628 = vmatprep.subr.mxu0 0.0
    %4629 = vmatpush1.msra.mxu0 0.0
    %4630 = vmatprep.subr.mxu0 0.0
    %4631 = vmatpush1.msra.mxu0 0.0
    %4632 = vmatprep.subr.mxu0 0.0
    %4633 = vmatpush1.msra.mxu0 0.0
    %4634 = vmatprep.subr.mxu0 0.0
    %4635 = vmatpush1.msra.mxu0 0.0
    %4636 = vmatprep.subr.mxu0 0.0
    %4637 = vmatpush1.msra.mxu0 0.0
    %4638 = vmatprep.subr.mxu0 0.0
    %4639 = vmatpush1.msra.mxu0 0.0
    %4640 = vmatprep.subr.mxu0 %v4623
    %4641 = vmatpush1.msra.mxu0 %v4622
    %4642 = vmatprep.subr.mxu0 %v4621
    %4643 = vmatpush1.msra.mxu0 %v4620
    %4644 = vmatprep.subr.mxu0 %v4619
    %4645 = vmatpush1.msra.mxu0 %v4618
    %4646 = vmatprep.subr.mxu0 %v4617
    %4647 = vmatpush1.msra.mxu0 %v4616
    %4648 = vmatprep.subr.mxu0 %v4615
    %4649 = vmatpush1.msra.mxu0 %v4614
    %4650 = vmatprep.subr.mxu0 %v4613
    %4651 = vmatpush1.msra.mxu0 %v4612
    %4652 = vmatprep.subr.mxu0 %v4611
    %4653 = vmatpush1.msra.mxu0 %v4610
    %4654 = vmatprep.subr.mxu0 %v4609
    %4655 = vmatpush1.msra.mxu0 %v4608
    %4656 = vmatprep.subr.mxu0 0.0
    %4657 = vmatpush2.msra.mxu0 0.0
    %4658 = vmatprep.subr.mxu0 0.0
    %4659 = vmatpush2.msra.mxu0 0.0
    %4660 = vmatprep.subr.mxu0 0.0
    %4661 = vmatpush2.msra.mxu0 0.0
    %4662 = vmatprep.subr.mxu0 0.0
    %4663 = vmatpush2.msra.mxu0 0.0
    %4664 = vmatprep.subr.mxu0 0.0
    %4665 = vmatpush2.msra.mxu0 0.0
    %4666 = vmatprep.subr.mxu0 0.0
    %4667 = vmatpush2.msra.mxu0 0.0
    %4668 = vmatprep.subr.mxu0 0.0
    %4669 = vmatpush2.msra.mxu0 0.0
    %4670 = vmatprep.subr.mxu0 0.0
    %4671 = vmatpush2.msra.mxu0 0.0
    %4672 = vmatprep.subr.mxu0 0.0
    %4673 = vmatpush2.msra.mxu0 0.0
    %4674 = vmatprep.subr.mxu0 0.0
    %4675 = vmatpush2.msra.mxu0 0.0
    %4676 = vmatprep.subr.mxu0 0.0
    %4677 = vmatpush2.msra.mxu0 0.0
    %4678 = vmatprep.subr.mxu0 0.0
    %4679 = vmatpush2.msra.mxu0 0.0
    %4680 = vmatprep.subr.mxu0 0.0
    %4681 = vmatpush2.msra.mxu0 0.0
    %4682 = vmatprep.subr.mxu0 0.0
    %4683 = vmatpush2.msra.mxu0 0.0
    %4684 = vmatprep.subr.mxu0 0.0
    %4685 = vmatpush2.msra.mxu0 0.0
    %4686 = vmatprep.subr.mxu0 0.0
    %4687 = vmatpush2.msra.mxu0 0.0
    %4688 = vmatprep.mubr.f32.mxu0 0.0
    %4689 = vmatmul.mubr.f32.gmra.mxu0 %v4493
    %v4690 = vpop.f32.mrf.mxu0
    %v4691 = vadd.f32 0.0, %v4690
    %v4692 = vpop.f32.mrf.mxu0
    %v4693 = vadd.f32 0.0, %v4692
    %4694 = vdwg.mxu0
    %v4695 = vadd.f32 %v4272, %v4691
    %v4696 = vadd.f32 %v4273, %v4693
    %v4697 = vxor.u32 %v4695, 2147483648
    %v4698 = vxor.u32 %v4696, 2147483648
    %v4699 = vmul.f32 %v4697, 1.442695
    %v4700 = vpow.pop %v4699
    %v4701 = vmul.f32 %v4698, 1.442695
    %v4702 = vpow.pop %v4701
    %v4703 = vadd.f32 %v4700, 1.0
    %v4704 = vadd.f32 %v4702, 1.0
    %v4705 = vrcp.pop %v4703
    %v4706 = vmul.f32 1.0, %v4705
    %v4707 = vrcp.pop %v4704
    %v4708 = vmul.f32 1.0, %v4707
    %v4709 = vtanh.pop %v4696
    %v4710 = vmul.f32 %v4706, %v4384
    %v4711 = vmul.f32 %v4706, %v4709
    %4713 = vrot.lane.b32.xlu0 %v4711, 64
    %v4714 = vpop.permute.xlu0 %4713
    %v4716 = vadd.f32 %v4710, %v4714
    %v4717 = vtanh.pop %v4716
    %v4718 = vmul.f32 %v4708, %v4717
    %v4719 = vld [vmem:[#allocation7] sm:$0xff]
    %v4720 = vld [vmem:[#allocation7 + $0x8] sm:$0xff]
    %v4721 = vld [vmem:[#allocation7 + $0x10] sm:$0xff]
    %v4722 = vld [vmem:[#allocation7 + $0x18] sm:$0xff]
    %v4723 = vld [vmem:[#allocation7 + $0x20] sm:$0xff]
    %v4724 = vld [vmem:[#allocation7 + $0x28] sm:$0xff]
    %v4725 = vld [vmem:[#allocation7 + $0x30] sm:$0xff]
    %v4726 = vld [vmem:[#allocation7 + $0x38] sm:$0xff]
    %v4727 = vld [vmem:[#allocation7 + $0x40] sm:$0xff]
    %v4728 = vld [vmem:[#allocation7 + $0x48] sm:$0xff]
    %v4729 = vld [vmem:[#allocation7 + $0x50] sm:$0xff]
    %v4730 = vld [vmem:[#allocation7 + $0x58] sm:$0xff]
    %v4731 = vld [vmem:[#allocation7 + $0x60] sm:$0xff]
    %v4732 = vld [vmem:[#allocation7 + $0x68] sm:$0xff]
    %v4733 = vld [vmem:[#allocation7 + $0x70] sm:$0xff]
    %v4734 = vld [vmem:[#allocation7 + $0x78] sm:$0xff]
    %v4735 = vld [vmem:[#allocation8] sm:$0xff]
    %v4736 = vld [vmem:[#allocation8 + $0x8] sm:$0xff]
    %v4737 = vld [vmem:[#allocation8 + $0x10] sm:$0xff]
    %v4738 = vld [vmem:[#allocation8 + $0x18] sm:$0xff]
    %v4739 = vld [vmem:[#allocation8 + $0x20] sm:$0xff]
    %v4740 = vld [vmem:[#allocation8 + $0x28] sm:$0xff]
    %v4741 = vld [vmem:[#allocation8 + $0x30] sm:$0xff]
    %v4742 = vld [vmem:[#allocation8 + $0x38] sm:$0xff]
    %v4743 = vld [vmem:[#allocation8 + $0x40] sm:$0xff]
    %v4744 = vld [vmem:[#allocation8 + $0x48] sm:$0xff]
    %v4745 = vld [vmem:[#allocation8 + $0x50] sm:$0xff]
    %v4746 = vld [vmem:[#allocation8 + $0x58] sm:$0xff]
    %v4747 = vld [vmem:[#allocation8 + $0x60] sm:$0xff]
    %v4748 = vld [vmem:[#allocation8 + $0x68] sm:$0xff]
    %v4749 = vld [vmem:[#allocation8 + $0x70] sm:$0xff]
    %v4750 = vld [vmem:[#allocation8 + $0x78] sm:$0xff]
    %v4751 = vsel %vm3782, %v4604, 0
    %4753 = vmatprep.subr.mxu0 0.0
    %4754 = vmatpush1.msra.mxu0 0.0
    %4755 = vmatprep.subr.mxu0 0.0
    %4756 = vmatpush1.msra.mxu0 0.0
    %4757 = vmatprep.subr.mxu0 0.0
    %4758 = vmatpush1.msra.mxu0 0.0
    %4759 = vmatprep.subr.mxu0 0.0
    %4760 = vmatpush1.msra.mxu0 0.0
    %4761 = vmatprep.subr.mxu0 0.0
    %4762 = vmatpush1.msra.mxu0 0.0
    %4763 = vmatprep.subr.mxu0 0.0
    %4764 = vmatpush1.msra.mxu0 0.0
    %4765 = vmatprep.subr.mxu0 0.0
    %4766 = vmatpush1.msra.mxu0 0.0
    %4767 = vmatprep.subr.mxu0 0.0
    %4768 = vmatpush1.msra.mxu0 0.0
    %4769 = vmatprep.subr.mxu0 %v4750
    %4770 = vmatpush1.msra.mxu0 %v4749
    %4771 = vmatprep.subr.mxu0 %v4748
    %4772 = vmatpush1.msra.mxu0 %v4747
    %4773 = vmatprep.subr.mxu0 %v4746
    %4774 = vmatpush1.msra.mxu0 %v4745
    %4775 = vmatprep.subr.mxu0 %v4744
    %4776 = vmatpush1.msra.mxu0 %v4743
    %4777 = vmatprep.subr.mxu0 %v4742
    %4778 = vmatpush1.msra.mxu0 %v4741
    %4779 = vmatprep.subr.mxu0 %v4740
    %4780 = vmatpush1.msra.mxu0 %v4739
    %4781 = vmatprep.subr.mxu0 %v4738
    %4782 = vmatpush1.msra.mxu0 %v4737
    %4783 = vmatprep.subr.mxu0 %v4736
    %4784 = vmatpush1.msra.mxu0 %v4735
    %4785 = vmatprep.subr.mxu0 0.0
    %4786 = vmatpush2.msra.mxu0 0.0
    %4787 = vmatprep.subr.mxu0 0.0
    %4788 = vmatpush2.msra.mxu0 0.0
    %4789 = vmatprep.subr.mxu0 0.0
    %4790 = vmatpush2.msra.mxu0 0.0
    %4791 = vmatprep.subr.mxu0 0.0
    %4792 = vmatpush2.msra.mxu0 0.0
    %4793 = vmatprep.subr.mxu0 0.0
    %4794 = vmatpush2.msra.mxu0 0.0
    %4795 = vmatprep.subr.mxu0 0.0
    %4796 = vmatpush2.msra.mxu0 0.0
    %4797 = vmatprep.subr.mxu0 0.0
    %4798 = vmatpush2.msra.mxu0 0.0
    %4799 = vmatprep.subr.mxu0 0.0
    %4800 = vmatpush2.msra.mxu0 0.0
    %4801 = vmatprep.subr.mxu0 0.0
    %4802 = vmatpush2.msra.mxu0 0.0
    %4803 = vmatprep.subr.mxu0 0.0
    %4804 = vmatpush2.msra.mxu0 0.0
    %4805 = vmatprep.subr.mxu0 0.0
    %4806 = vmatpush2.msra.mxu0 0.0
    %4807 = vmatprep.subr.mxu0 0.0
    %4808 = vmatpush2.msra.mxu0 0.0
    %4809 = vmatprep.subr.mxu0 0.0
    %4810 = vmatpush2.msra.mxu0 0.0
    %4811 = vmatprep.subr.mxu0 0.0
    %4812 = vmatpush2.msra.mxu0 0.0
    %4813 = vmatprep.subr.mxu0 0.0
    %4814 = vmatpush2.msra.mxu0 0.0
    %4815 = vmatprep.subr.mxu0 0.0
    %4816 = vmatpush2.msra.mxu0 0.0
    %4817 = vmatprep.mubr.f32.mxu0 0.0
    %4818 = vmatmul.mubr.f32.gmra.mxu0 %v4751
    %v4819 = vpop.f32.mrf.mxu0
    %v4820 = vadd.f32 0.0, %v4819
    %v4821 = vpop.f32.mrf.mxu0
    %v4822 = vadd.f32 0.0, %v4821
    %4823 = vdwg.mxu0
    %4825 = vrot.lane.b32.xlu0 %v4718, 64
    %v4826 = vpop.permute.xlu0 %4825
    %v4827 = vsel %vm3782, %v4826, 0
    %4829 = vmatprep.subr.mxu0 0.0
    %4830 = vmatpush1.msra.mxu0 0.0
    %4831 = vmatprep.subr.mxu0 0.0
    %4832 = vmatpush1.msra.mxu0 0.0
    %4833 = vmatprep.subr.mxu0 0.0
    %4834 = vmatpush1.msra.mxu0 0.0
    %4835 = vmatprep.subr.mxu0 0.0
    %4836 = vmatpush1.msra.mxu0 0.0
    %4837 = vmatprep.subr.mxu0 0.0
    %4838 = vmatpush1.msra.mxu0 0.0
    %4839 = vmatprep.subr.mxu0 0.0
    %4840 = vmatpush1.msra.mxu0 0.0
    %4841 = vmatprep.subr.mxu0 0.0
    %4842 = vmatpush1.msra.mxu0 0.0
    %4843 = vmatprep.subr.mxu0 0.0
    %4844 = vmatpush1.msra.mxu0 0.0
    %4845 = vmatprep.subr.mxu0 %v4734
    %4846 = vmatpush1.msra.mxu0 %v4733
    %4847 = vmatprep.subr.mxu0 %v4732
    %4848 = vmatpush1.msra.mxu0 %v4731
    %4849 = vmatprep.subr.mxu0 %v4730
    %4850 = vmatpush1.msra.mxu0 %v4729
    %4851 = vmatprep.subr.mxu0 %v4728
    %4852 = vmatpush1.msra.mxu0 %v4727
    %4853 = vmatprep.subr.mxu0 %v4726
    %4854 = vmatpush1.msra.mxu0 %v4725
    %4855 = vmatprep.subr.mxu0 %v4724
    %4856 = vmatpush1.msra.mxu0 %v4723
    %4857 = vmatprep.subr.mxu0 %v4722
    %4858 = vmatpush1.msra.mxu0 %v4721
    %4859 = vmatprep.subr.mxu0 %v4720
    %4860 = vmatpush1.msra.mxu0 %v4719
    %4861 = vmatprep.subr.mxu0 0.0
    %4862 = vmatpush2.msra.mxu0 0.0
    %4863 = vmatprep.subr.mxu0 0.0
    %4864 = vmatpush2.msra.mxu0 0.0
    %4865 = vmatprep.subr.mxu0 0.0
    %4866 = vmatpush2.msra.mxu0 0.0
    %4867 = vmatprep.subr.mxu0 0.0
    %4868 = vmatpush2.msra.mxu0 0.0
    %4869 = vmatprep.subr.mxu0 0.0
    %4870 = vmatpush2.msra.mxu0 0.0
    %4871 = vmatprep.subr.mxu0 0.0
    %4872 = vmatpush2.msra.mxu0 0.0
    %4873 = vmatprep.subr.mxu0 0.0
    %4874 = vmatpush2.msra.mxu0 0.0
    %4875 = vmatprep.subr.mxu0 0.0
    %4876 = vmatpush2.msra.mxu0 0.0
    %4877 = vmatprep.subr.mxu0 0.0
    %4878 = vmatpush2.msra.mxu0 0.0
    %4879 = vmatprep.subr.mxu0 0.0
    %4880 = vmatpush2.msra.mxu0 0.0
    %4881 = vmatprep.subr.mxu0 0.0
    %4882 = vmatpush2.msra.mxu0 0.0
    %4883 = vmatprep.subr.mxu0 0.0
    %4884 = vmatpush2.msra.mxu0 0.0
    %4885 = vmatprep.subr.mxu0 0.0
    %4886 = vmatpush2.msra.mxu0 0.0
    %4887 = vmatprep.subr.mxu0 0.0
    %4888 = vmatpush2.msra.mxu0 0.0
    %4889 = vmatprep.subr.mxu0 0.0
    %4890 = vmatpush2.msra.mxu0 0.0
    %4891 = vmatprep.subr.mxu0 0.0
    %4892 = vmatpush2.msra.mxu0 0.0
    %4893 = vmatprep.mubr.f32.mxu0 0.0
    %4894 = vmatmul.mubr.f32.gmra.mxu0 %v4827
    %v4895 = vpop.f32.mrf.mxu0
    %v4896 = vadd.f32 %v4820, %v4895
    %v4897 = vpop.f32.mrf.mxu0
    %v4898 = vadd.f32 %v4822, %v4897
    %4899 = vdwg.mxu0
    %v4900 = vld [vmem:[#allocation28] sm:$0x3]
    %v4902 = vlaneseq
    %v4903 = vshrl.u32 %v4902, 7
    %v4904 = vsub.s32 0, %v4903
    %v4905 = vrot.slane %v4900, %v4904
    %v4906 = vlaneseq
    %v4907 = vshrl.u32 %v4906, 7
    %v4908 = vsub.s32 1, %v4907
    %v4909 = vrot.slane %v4900, %v4908
    %v4912 = vadd.f32 %v4896, %v4905
    %v4913 = vadd.f32 %v4898, %v4909
    %v4914 = vxor.u32 %v4912, 2147483648
    %v4915 = vxor.u32 %v4913, 2147483648
    %v4916 = vmul.f32 %v4914, 1.442695
    %v4917 = vpow.pop %v4916
    %v4918 = vmul.f32 %v4915, 1.442695
    %v4919 = vpow.pop %v4918
    %v4920 = vadd.f32 %v4917, 1.0
    %v4921 = vadd.f32 %v4919, 1.0
    %v4922 = vrcp.pop %v4920
    %v4923 = vmul.f32 1.0, %v4922
    %v4924 = vrcp.pop %v4921
    %v4925 = vmul.f32 1.0, %v4924
    %v4926 = vtanh.pop %v4913
    %v4927 = vmul.f32 %v4923, %v4599
    %v4928 = vmul.f32 %v4923, %v4926
    %4930 = vrot.lane.b32.xlu0 %v4928, 64
    %v4931 = vpop.permute.xlu0 %4930
    %v4933 = vadd.f32 %v4927, %v4931
    %v4934 = vtanh.pop %v4933
    %v4935 = vmul.f32 %v4925, %v4934
    %4937 = vrot.lane.b32.xlu0 %v4935, 64
    %v4938 = vpop.permute.xlu0 %4937
    %4940 = vst.msk [vmem:[#allocation3 + $0x2] sm:$0x3] %vm4606, %v4938
    %v4941 = vld [vmem:[#allocation6] sm:$0xff]
    %v4942 = vld [vmem:[#allocation6 + $0x8] sm:$0xff]
    %v4943 = vld [vmem:[#allocation6 + $0x10] sm:$0xff]
    %v4944 = vld [vmem:[#allocation6 + $0x18] sm:$0xff]
    %v4945 = vld [vmem:[#allocation6 + $0x20] sm:$0xff]
    %v4946 = vld [vmem:[#allocation6 + $0x28] sm:$0xff]
    %v4947 = vld [vmem:[#allocation6 + $0x30] sm:$0xff]
    %v4948 = vld [vmem:[#allocation6 + $0x38] sm:$0xff]
    %v4949 = vld [vmem:[#allocation6 + $0x40] sm:$0xff]
    %v4950 = vld [vmem:[#allocation6 + $0x48] sm:$0xff]
    %v4951 = vld [vmem:[#allocation6 + $0x50] sm:$0xff]
    %v4952 = vld [vmem:[#allocation6 + $0x58] sm:$0xff]
    %v4953 = vld [vmem:[#allocation6 + $0x60] sm:$0xff]
    %v4954 = vld [vmem:[#allocation6 + $0x68] sm:$0xff]
    %v4955 = vld [vmem:[#allocation6 + $0x70] sm:$0xff]
    %v4956 = vld [vmem:[#allocation6 + $0x78] sm:$0xff]
    %4957 = vmatprep.subr.mxu0 0.0
    %4958 = vmatpush1.msra.mxu0 0.0
    %4959 = vmatprep.subr.mxu0 0.0
    %4960 = vmatpush1.msra.mxu0 0.0
    %4961 = vmatprep.subr.mxu0 0.0
    %4962 = vmatpush1.msra.mxu0 0.0
    %4963 = vmatprep.subr.mxu0 0.0
    %4964 = vmatpush1.msra.mxu0 0.0
    %4965 = vmatprep.subr.mxu0 0.0
    %4966 = vmatpush1.msra.mxu0 0.0
    %4967 = vmatprep.subr.mxu0 0.0
    %4968 = vmatpush1.msra.mxu0 0.0
    %4969 = vmatprep.subr.mxu0 0.0
    %4970 = vmatpush1.msra.mxu0 0.0
    %4971 = vmatprep.subr.mxu0 0.0
    %4972 = vmatpush1.msra.mxu0 0.0
    %4973 = vmatprep.subr.mxu0 %v4956
    %4974 = vmatpush1.msra.mxu0 %v4955
    %4975 = vmatprep.subr.mxu0 %v4954
    %4976 = vmatpush1.msra.mxu0 %v4953
    %4977 = vmatprep.subr.mxu0 %v4952
    %4978 = vmatpush1.msra.mxu0 %v4951
    %4979 = vmatprep.subr.mxu0 %v4950
    %4980 = vmatpush1.msra.mxu0 %v4949
    %4981 = vmatprep.subr.mxu0 %v4948
    %4982 = vmatpush1.msra.mxu0 %v4947
    %4983 = vmatprep.subr.mxu0 %v4946
    %4984 = vmatpush1.msra.mxu0 %v4945
    %4985 = vmatprep.subr.mxu0 %v4944
    %4986 = vmatpush1.msra.mxu0 %v4943
    %4987 = vmatprep.subr.mxu0 %v4942
    %4988 = vmatpush1.msra.mxu0 %v4941
    %4989 = vmatprep.subr.mxu0 0.0
    %4990 = vmatpush2.msra.mxu0 0.0
    %4991 = vmatprep.subr.mxu0 0.0
    %4992 = vmatpush2.msra.mxu0 0.0
    %4993 = vmatprep.subr.mxu0 0.0
    %4994 = vmatpush2.msra.mxu0 0.0
    %4995 = vmatprep.subr.mxu0 0.0
    %4996 = vmatpush2.msra.mxu0 0.0
    %4997 = vmatprep.subr.mxu0 0.0
    %4998 = vmatpush2.msra.mxu0 0.0
    %4999 = vmatprep.subr.mxu0 0.0
    %5000 = vmatpush2.msra.mxu0 0.0
    %5001 = vmatprep.subr.mxu0 0.0
    %5002 = vmatpush2.msra.mxu0 0.0
    %5003 = vmatprep.subr.mxu0 0.0
    %5004 = vmatpush2.msra.mxu0 0.0
    %5005 = vmatprep.subr.mxu0 0.0
    %5006 = vmatpush2.msra.mxu0 0.0
    %5007 = vmatprep.subr.mxu0 0.0
    %5008 = vmatpush2.msra.mxu0 0.0
    %5009 = vmatprep.subr.mxu0 0.0
    %5010 = vmatpush2.msra.mxu0 0.0
    %5011 = vmatprep.subr.mxu0 0.0
    %5012 = vmatpush2.msra.mxu0 0.0
    %5013 = vmatprep.subr.mxu0 0.0
    %5014 = vmatpush2.msra.mxu0 0.0
    %5015 = vmatprep.subr.mxu0 0.0
    %5016 = vmatpush2.msra.mxu0 0.0
    %5017 = vmatprep.subr.mxu0 0.0
    %5018 = vmatpush2.msra.mxu0 0.0
    %5019 = vmatprep.subr.mxu0 0.0
    %5020 = vmatpush2.msra.mxu0 0.0
    %5021 = vmatprep.mubr.f32.mxu0 0.0
    %5022 = vmatmul.mubr.f32.gmra.mxu0 %v4827
    %v5023 = vpop.f32.mrf.mxu0
    %v5024 = vadd.f32 0.0, %v5023
    %v5025 = vpop.f32.mrf.mxu0
    %v5026 = vadd.f32 0.0, %v5025
    %5027 = vdwg.mxu0
    %v5028 = vadd.f32 %v4272, %v5024
    %v5029 = vadd.f32 %v4273, %v5026
    %v5030 = vxor.u32 %v5028, 2147483648
    %v5031 = vxor.u32 %v5029, 2147483648
    %v5032 = vmul.f32 %v5030, 1.442695
    %v5033 = vpow.pop %v5032
    %v5034 = vmul.f32 %v5031, 1.442695
    %v5035 = vpow.pop %v5034
    %v5036 = vadd.f32 %v5033, 1.0
    %v5037 = vadd.f32 %v5035, 1.0
    %v5038 = vrcp.pop %v5036
    %v5039 = vmul.f32 1.0, %v5038
    %v5040 = vrcp.pop %v5037
    %v5041 = vmul.f32 1.0, %v5040
    %v5042 = vtanh.pop %v5029
    %v5043 = vmul.f32 %v5039, %v4716
    %v5044 = vmul.f32 %v5039, %v5042
    %5046 = vrot.lane.b32.xlu0 %v5044, 64
    %v5047 = vpop.permute.xlu0 %5046
    %v5049 = vadd.f32 %v5043, %v5047
    %v5050 = vtanh.pop %v5049
    %v5051 = vmul.f32 %v5041, %v5050
    %v5052 = vld [vmem:[#allocation7] sm:$0xff]
    %v5053 = vld [vmem:[#allocation7 + $0x8] sm:$0xff]
    %v5054 = vld [vmem:[#allocation7 + $0x10] sm:$0xff]
    %v5055 = vld [vmem:[#allocation7 + $0x18] sm:$0xff]
    %v5056 = vld [vmem:[#allocation7 + $0x20] sm:$0xff]
    %v5057 = vld [vmem:[#allocation7 + $0x28] sm:$0xff]
    %v5058 = vld [vmem:[#allocation7 + $0x30] sm:$0xff]
    %v5059 = vld [vmem:[#allocation7 + $0x38] sm:$0xff]
    %v5060 = vld [vmem:[#allocation7 + $0x40] sm:$0xff]
    %v5061 = vld [vmem:[#allocation7 + $0x48] sm:$0xff]
    %v5062 = vld [vmem:[#allocation7 + $0x50] sm:$0xff]
    %v5063 = vld [vmem:[#allocation7 + $0x58] sm:$0xff]
    %v5064 = vld [vmem:[#allocation7 + $0x60] sm:$0xff]
    %v5065 = vld [vmem:[#allocation7 + $0x68] sm:$0xff]
    %v5066 = vld [vmem:[#allocation7 + $0x70] sm:$0xff]
    %v5067 = vld [vmem:[#allocation7 + $0x78] sm:$0xff]
    %v5068 = vld [vmem:[#allocation8] sm:$0xff]
    %v5069 = vld [vmem:[#allocation8 + $0x8] sm:$0xff]
    %v5070 = vld [vmem:[#allocation8 + $0x10] sm:$0xff]
    %v5071 = vld [vmem:[#allocation8 + $0x18] sm:$0xff]
    %v5072 = vld [vmem:[#allocation8 + $0x20] sm:$0xff]
    %v5073 = vld [vmem:[#allocation8 + $0x28] sm:$0xff]
    %v5074 = vld [vmem:[#allocation8 + $0x30] sm:$0xff]
    %v5075 = vld [vmem:[#allocation8 + $0x38] sm:$0xff]
    %v5076 = vld [vmem:[#allocation8 + $0x40] sm:$0xff]
    %v5077 = vld [vmem:[#allocation8 + $0x48] sm:$0xff]
    %v5078 = vld [vmem:[#allocation8 + $0x50] sm:$0xff]
    %v5079 = vld [vmem:[#allocation8 + $0x58] sm:$0xff]
    %v5080 = vld [vmem:[#allocation8 + $0x60] sm:$0xff]
    %v5081 = vld [vmem:[#allocation8 + $0x68] sm:$0xff]
    %v5082 = vld [vmem:[#allocation8 + $0x70] sm:$0xff]
    %v5083 = vld [vmem:[#allocation8 + $0x78] sm:$0xff]
    %v5084 = vsel %vm3782, %v4938, 0
    %5086 = vmatprep.subr.mxu0 0.0
    %5087 = vmatpush1.msra.mxu0 0.0
    %5088 = vmatprep.subr.mxu0 0.0
    %5089 = vmatpush1.msra.mxu0 0.0
    %5090 = vmatprep.subr.mxu0 0.0
    %5091 = vmatpush1.msra.mxu0 0.0
    %5092 = vmatprep.subr.mxu0 0.0
    %5093 = vmatpush1.msra.mxu0 0.0
    %5094 = vmatprep.subr.mxu0 0.0
    %5095 = vmatpush1.msra.mxu0 0.0
    %5096 = vmatprep.subr.mxu0 0.0
    %5097 = vmatpush1.msra.mxu0 0.0
    %5098 = vmatprep.subr.mxu0 0.0
    %5099 = vmatpush1.msra.mxu0 0.0
    %5100 = vmatprep.subr.mxu0 0.0
    %5101 = vmatpush1.msra.mxu0 0.0
    %5102 = vmatprep.subr.mxu0 %v5083
    %5103 = vmatpush1.msra.mxu0 %v5082
    %5104 = vmatprep.subr.mxu0 %v5081
    %5105 = vmatpush1.msra.mxu0 %v5080
    %5106 = vmatprep.subr.mxu0 %v5079
    %5107 = vmatpush1.msra.mxu0 %v5078
    %5108 = vmatprep.subr.mxu0 %v5077
    %5109 = vmatpush1.msra.mxu0 %v5076
    %5110 = vmatprep.subr.mxu0 %v5075
    %5111 = vmatpush1.msra.mxu0 %v5074
    %5112 = vmatprep.subr.mxu0 %v5073
    %5113 = vmatpush1.msra.mxu0 %v5072
    %5114 = vmatprep.subr.mxu0 %v5071
    %5115 = vmatpush1.msra.mxu0 %v5070
    %5116 = vmatprep.subr.mxu0 %v5069
    %5117 = vmatpush1.msra.mxu0 %v5068
    %5118 = vmatprep.subr.mxu0 0.0
    %5119 = vmatpush2.msra.mxu0 0.0
    %5120 = vmatprep.subr.mxu0 0.0
    %5121 = vmatpush2.msra.mxu0 0.0
    %5122 = vmatprep.subr.mxu0 0.0
    %5123 = vmatpush2.msra.mxu0 0.0
    %5124 = vmatprep.subr.mxu0 0.0
    %5125 = vmatpush2.msra.mxu0 0.0
    %5126 = vmatprep.subr.mxu0 0.0
    %5127 = vmatpush2.msra.mxu0 0.0
    %5128 = vmatprep.subr.mxu0 0.0
    %5129 = vmatpush2.msra.mxu0 0.0
    %5130 = vmatprep.subr.mxu0 0.0
    %5131 = vmatpush2.msra.mxu0 0.0
    %5132 = vmatprep.subr.mxu0 0.0
    %5133 = vmatpush2.msra.mxu0 0.0
    %5134 = vmatprep.subr.mxu0 0.0
    %5135 = vmatpush2.msra.mxu0 0.0
    %5136 = vmatprep.subr.mxu0 0.0
    %5137 = vmatpush2.msra.mxu0 0.0
    %5138 = vmatprep.subr.mxu0 0.0
    %5139 = vmatpush2.msra.mxu0 0.0
    %5140 = vmatprep.subr.mxu0 0.0
    %5141 = vmatpush2.msra.mxu0 0.0
    %5142 = vmatprep.subr.mxu0 0.0
    %5143 = vmatpush2.msra.mxu0 0.0
    %5144 = vmatprep.subr.mxu0 0.0
    %5145 = vmatpush2.msra.mxu0 0.0
    %5146 = vmatprep.subr.mxu0 0.0
    %5147 = vmatpush2.msra.mxu0 0.0
    %5148 = vmatprep.subr.mxu0 0.0
    %5149 = vmatpush2.msra.mxu0 0.0
    %5150 = vmatprep.mubr.f32.mxu0 0.0
    %5151 = vmatmul.mubr.f32.gmra.mxu0 %v5084
    %v5152 = vpop.f32.mrf.mxu0
    %v5153 = vadd.f32 0.0, %v5152
    %v5154 = vpop.f32.mrf.mxu0
    %v5155 = vadd.f32 0.0, %v5154
    %5156 = vdwg.mxu0
    %5158 = vrot.lane.b32.xlu0 %v5051, 64
    %v5159 = vpop.permute.xlu0 %5158
    %v5160 = vsel %vm3782, %v5159, 0
    %5162 = vmatprep.subr.mxu0 0.0
    %5163 = vmatpush1.msra.mxu0 0.0
    %5164 = vmatprep.subr.mxu0 0.0
    %5165 = vmatpush1.msra.mxu0 0.0
    %5166 = vmatprep.subr.mxu0 0.0
    %5167 = vmatpush1.msra.mxu0 0.0
    %5168 = vmatprep.subr.mxu0 0.0
    %5169 = vmatpush1.msra.mxu0 0.0
    %5170 = vmatprep.subr.mxu0 0.0
    %5171 = vmatpush1.msra.mxu0 0.0
    %5172 = vmatprep.subr.mxu0 0.0
    %5173 = vmatpush1.msra.mxu0 0.0
    %5174 = vmatprep.subr.mxu0 0.0
    %5175 = vmatpush1.msra.mxu0 0.0
    %5176 = vmatprep.subr.mxu0 0.0
    %5177 = vmatpush1.msra.mxu0 0.0
    %5178 = vmatprep.subr.mxu0 %v5067
    %5179 = vmatpush1.msra.mxu0 %v5066
    %5180 = vmatprep.subr.mxu0 %v5065
    %5181 = vmatpush1.msra.mxu0 %v5064
    %5182 = vmatprep.subr.mxu0 %v5063
    %5183 = vmatpush1.msra.mxu0 %v5062
    %5184 = vmatprep.subr.mxu0 %v5061
    %5185 = vmatpush1.msra.mxu0 %v5060
    %5186 = vmatprep.subr.mxu0 %v5059
    %5187 = vmatpush1.msra.mxu0 %v5058
    %5188 = vmatprep.subr.mxu0 %v5057
    %5189 = vmatpush1.msra.mxu0 %v5056
    %5190 = vmatprep.subr.mxu0 %v5055
    %5191 = vmatpush1.msra.mxu0 %v5054
    %5192 = vmatprep.subr.mxu0 %v5053
    %5193 = vmatpush1.msra.mxu0 %v5052
    %5194 = vmatprep.subr.mxu0 0.0
    %5195 = vmatpush2.msra.mxu0 0.0
    %5196 = vmatprep.subr.mxu0 0.0
    %5197 = vmatpush2.msra.mxu0 0.0
    %5198 = vmatprep.subr.mxu0 0.0
    %5199 = vmatpush2.msra.mxu0 0.0
    %5200 = vmatprep.subr.mxu0 0.0
    %5201 = vmatpush2.msra.mxu0 0.0
    %5202 = vmatprep.subr.mxu0 0.0
    %5203 = vmatpush2.msra.mxu0 0.0
    %5204 = vmatprep.subr.mxu0 0.0
    %5205 = vmatpush2.msra.mxu0 0.0
    %5206 = vmatprep.subr.mxu0 0.0
    %5207 = vmatpush2.msra.mxu0 0.0
    %5208 = vmatprep.subr.mxu0 0.0
    %5209 = vmatpush2.msra.mxu0 0.0
    %5210 = vmatprep.subr.mxu0 0.0
    %5211 = vmatpush2.msra.mxu0 0.0
    %5212 = vmatprep.subr.mxu0 0.0
    %5213 = vmatpush2.msra.mxu0 0.0
    %5214 = vmatprep.subr.mxu0 0.0
    %5215 = vmatpush2.msra.mxu0 0.0
    %5216 = vmatprep.subr.mxu0 0.0
    %5217 = vmatpush2.msra.mxu0 0.0
    %5218 = vmatprep.subr.mxu0 0.0
    %5219 = vmatpush2.msra.mxu0 0.0
    %5220 = vmatprep.subr.mxu0 0.0
    %5221 = vmatpush2.msra.mxu0 0.0
    %5222 = vmatprep.subr.mxu0 0.0
    %5223 = vmatpush2.msra.mxu0 0.0
    %5224 = vmatprep.subr.mxu0 0.0
    %5225 = vmatpush2.msra.mxu0 0.0
    %5226 = vmatprep.mubr.f32.mxu0 0.0
    %5227 = vmatmul.mubr.f32.gmra.mxu0 %v5160
    %v5228 = vpop.f32.mrf.mxu0
    %v5229 = vadd.f32 %v5153, %v5228
    %v5230 = vpop.f32.mrf.mxu0
    %v5231 = vadd.f32 %v5155, %v5230
    %5232 = vdwg.mxu0
    %v5233 = vld [vmem:[#allocation28] sm:$0x3]
    %v5235 = vlaneseq
    %v5236 = vshrl.u32 %v5235, 7
    %v5237 = vsub.s32 0, %v5236
    %v5238 = vrot.slane %v5233, %v5237
    %v5239 = vlaneseq
    %v5240 = vshrl.u32 %v5239, 7
    %v5241 = vsub.s32 1, %v5240
    %v5242 = vrot.slane %v5233, %v5241
    %v5245 = vadd.f32 %v5229, %v5238
    %v5246 = vadd.f32 %v5231, %v5242
    %v5247 = vxor.u32 %v5245, 2147483648
    %v5248 = vxor.u32 %v5246, 2147483648
    %v5249 = vmul.f32 %v5247, 1.442695
    %v5250 = vpow.pop %v5249
    %v5251 = vmul.f32 %v5248, 1.442695
    %v5252 = vpow.pop %v5251
    %v5253 = vadd.f32 %v5250, 1.0
    %v5254 = vadd.f32 %v5252, 1.0
    %v5255 = vrcp.pop %v5253
    %v5256 = vmul.f32 1.0, %v5255
    %v5257 = vrcp.pop %v5254
    %v5258 = vmul.f32 1.0, %v5257
    %v5259 = vtanh.pop %v5246
    %v5260 = vmul.f32 %v5256, %v4933
    %v5261 = vmul.f32 %v5256, %v5259
    %5263 = vrot.lane.b32.xlu0 %v5261, 64
    %v5264 = vpop.permute.xlu0 %5263
    %v5266 = vadd.f32 %v5260, %v5264
    %v5267 = vtanh.pop %v5266
    %v5268 = vmul.f32 %v5258, %v5267
    %5270 = vrot.lane.b32.xlu0 %v5268, 64
    %v5271 = vpop.permute.xlu0 %5270
    %5273 = vst.msk [vmem:[#allocation3 + $0x4] sm:$0x3] %vm4606, %v5271
    %v5274 = vld [vmem:[#allocation6] sm:$0xff]
    %v5275 = vld [vmem:[#allocation6 + $0x8] sm:$0xff]
    %v5276 = vld [vmem:[#allocation6 + $0x10] sm:$0xff]
    %v5277 = vld [vmem:[#allocation6 + $0x18] sm:$0xff]
    %v5278 = vld [vmem:[#allocation6 + $0x20] sm:$0xff]
    %v5279 = vld [vmem:[#allocation6 + $0x28] sm:$0xff]
    %v5280 = vld [vmem:[#allocation6 + $0x30] sm:$0xff]
    %v5281 = vld [vmem:[#allocation6 + $0x38] sm:$0xff]
    %v5282 = vld [vmem:[#allocation6 + $0x40] sm:$0xff]
    %v5283 = vld [vmem:[#allocation6 + $0x48] sm:$0xff]
    %v5284 = vld [vmem:[#allocation6 + $0x50] sm:$0xff]
    %v5285 = vld [vmem:[#allocation6 + $0x58] sm:$0xff]
    %v5286 = vld [vmem:[#allocation6 + $0x60] sm:$0xff]
    %v5287 = vld [vmem:[#allocation6 + $0x68] sm:$0xff]
    %v5288 = vld [vmem:[#allocation6 + $0x70] sm:$0xff]
    %v5289 = vld [vmem:[#allocation6 + $0x78] sm:$0xff]
    %5290 = vmatprep.subr.mxu0 0.0
    %5291 = vmatpush1.msra.mxu0 0.0
    %5292 = vmatprep.subr.mxu0 0.0
    %5293 = vmatpush1.msra.mxu0 0.0
    %5294 = vmatprep.subr.mxu0 0.0
    %5295 = vmatpush1.msra.mxu0 0.0
    %5296 = vmatprep.subr.mxu0 0.0
    %5297 = vmatpush1.msra.mxu0 0.0
    %5298 = vmatprep.subr.mxu0 0.0
    %5299 = vmatpush1.msra.mxu0 0.0
    %5300 = vmatprep.subr.mxu0 0.0
    %5301 = vmatpush1.msra.mxu0 0.0
    %5302 = vmatprep.subr.mxu0 0.0
    %5303 = vmatpush1.msra.mxu0 0.0
    %5304 = vmatprep.subr.mxu0 0.0
    %5305 = vmatpush1.msra.mxu0 0.0
    %5306 = vmatprep.subr.mxu0 %v5289
    %5307 = vmatpush1.msra.mxu0 %v5288
    %5308 = vmatprep.subr.mxu0 %v5287
    %5309 = vmatpush1.msra.mxu0 %v5286
    %5310 = vmatprep.subr.mxu0 %v5285
    %5311 = vmatpush1.msra.mxu0 %v5284
    %5312 = vmatprep.subr.mxu0 %v5283
    %5313 = vmatpush1.msra.mxu0 %v5282
    %5314 = vmatprep.subr.mxu0 %v5281
    %5315 = vmatpush1.msra.mxu0 %v5280
    %5316 = vmatprep.subr.mxu0 %v5279
    %5317 = vmatpush1.msra.mxu0 %v5278
    %5318 = vmatprep.subr.mxu0 %v5277
    %5319 = vmatpush1.msra.mxu0 %v5276
    %5320 = vmatprep.subr.mxu0 %v5275
    %5321 = vmatpush1.msra.mxu0 %v5274
    %5322 = vmatprep.subr.mxu0 0.0
    %5323 = vmatpush2.msra.mxu0 0.0
    %5324 = vmatprep.subr.mxu0 0.0
    %5325 = vmatpush2.msra.mxu0 0.0
    %5326 = vmatprep.subr.mxu0 0.0
    %5327 = vmatpush2.msra.mxu0 0.0
    %5328 = vmatprep.subr.mxu0 0.0
    %5329 = vmatpush2.msra.mxu0 0.0
    %5330 = vmatprep.subr.mxu0 0.0
    %5331 = vmatpush2.msra.mxu0 0.0
    %5332 = vmatprep.subr.mxu0 0.0
    %5333 = vmatpush2.msra.mxu0 0.0
    %5334 = vmatprep.subr.mxu0 0.0
    %5335 = vmatpush2.msra.mxu0 0.0
    %5336 = vmatprep.subr.mxu0 0.0
    %5337 = vmatpush2.msra.mxu0 0.0
    %5338 = vmatprep.subr.mxu0 0.0
    %5339 = vmatpush2.msra.mxu0 0.0
    %5340 = vmatprep.subr.mxu0 0.0
    %5341 = vmatpush2.msra.mxu0 0.0
    %5342 = vmatprep.subr.mxu0 0.0
    %5343 = vmatpush2.msra.mxu0 0.0
    %5344 = vmatprep.subr.mxu0 0.0
    %5345 = vmatpush2.msra.mxu0 0.0
    %5346 = vmatprep.subr.mxu0 0.0
    %5347 = vmatpush2.msra.mxu0 0.0
    %5348 = vmatprep.subr.mxu0 0.0
    %5349 = vmatpush2.msra.mxu0 0.0
    %5350 = vmatprep.subr.mxu0 0.0
    %5351 = vmatpush2.msra.mxu0 0.0
    %5352 = vmatprep.subr.mxu0 0.0
    %5353 = vmatpush2.msra.mxu0 0.0
    %5354 = vmatprep.mubr.f32.mxu0 0.0
    %5355 = vmatmul.mubr.f32.gmra.mxu0 %v5160
    %v5356 = vpop.f32.mrf.mxu0
    %v5357 = vadd.f32 0.0, %v5356
    %v5358 = vpop.f32.mrf.mxu0
    %v5359 = vadd.f32 0.0, %v5358
    %5360 = vdwg.mxu0
    %v5361 = vadd.f32 %v4272, %v5357
    %v5362 = vadd.f32 %v4273, %v5359
    %v5363 = vxor.u32 %v5361, 2147483648
    %v5364 = vxor.u32 %v5362, 2147483648
    %v5365 = vmul.f32 %v5363, 1.442695
    %v5366 = vpow.pop %v5365
    %v5367 = vmul.f32 %v5364, 1.442695
    %v5368 = vpow.pop %v5367
    %v5369 = vadd.f32 %v5366, 1.0
    %v5370 = vadd.f32 %v5368, 1.0
    %v5371 = vrcp.pop %v5369
    %v5372 = vmul.f32 1.0, %v5371
    %v5373 = vrcp.pop %v5370
    %v5374 = vmul.f32 1.0, %v5373
    %v5375 = vtanh.pop %v5362
    %v5376 = vmul.f32 %v5372, %v5049
    %v5377 = vmul.f32 %v5372, %v5375
    %5379 = vrot.lane.b32.xlu0 %v5377, 64
    %v5380 = vpop.permute.xlu0 %5379
    %v5382 = vadd.f32 %v5376, %v5380
    %v5383 = vtanh.pop %v5382
    %v5384 = vmul.f32 %v5374, %v5383
    %v5385 = vld [vmem:[#allocation7] sm:$0xff]
    %v5386 = vld [vmem:[#allocation7 + $0x8] sm:$0xff]
    %v5387 = vld [vmem:[#allocation7 + $0x10] sm:$0xff]
    %v5388 = vld [vmem:[#allocation7 + $0x18] sm:$0xff]
    %v5389 = vld [vmem:[#allocation7 + $0x20] sm:$0xff]
    %v5390 = vld [vmem:[#allocation7 + $0x28] sm:$0xff]
    %v5391 = vld [vmem:[#allocation7 + $0x30] sm:$0xff]
    %v5392 = vld [vmem:[#allocation7 + $0x38] sm:$0xff]
    %v5393 = vld [vmem:[#allocation7 + $0x40] sm:$0xff]
    %v5394 = vld [vmem:[#allocation7 + $0x48] sm:$0xff]
    %v5395 = vld [vmem:[#allocation7 + $0x50] sm:$0xff]
    %v5396 = vld [vmem:[#allocation7 + $0x58] sm:$0xff]
    %v5397 = vld [vmem:[#allocation7 + $0x60] sm:$0xff]
    %v5398 = vld [vmem:[#allocation7 + $0x68] sm:$0xff]
    %v5399 = vld [vmem:[#allocation7 + $0x70] sm:$0xff]
    %v5400 = vld [vmem:[#allocation7 + $0x78] sm:$0xff]
    %v5401 = vld [vmem:[#allocation8] sm:$0xff]
    %v5402 = vld [vmem:[#allocation8 + $0x8] sm:$0xff]
    %v5403 = vld [vmem:[#allocation8 + $0x10] sm:$0xff]
    %v5404 = vld [vmem:[#allocation8 + $0x18] sm:$0xff]
    %v5405 = vld [vmem:[#allocation8 + $0x20] sm:$0xff]
    %v5406 = vld [vmem:[#allocation8 + $0x28] sm:$0xff]
    %v5407 = vld [vmem:[#allocation8 + $0x30] sm:$0xff]
    %v5408 = vld [vmem:[#allocation8 + $0x38] sm:$0xff]
    %v5409 = vld [vmem:[#allocation8 + $0x40] sm:$0xff]
    %v5410 = vld [vmem:[#allocation8 + $0x48] sm:$0xff]
    %v5411 = vld [vmem:[#allocation8 + $0x50] sm:$0xff]
    %v5412 = vld [vmem:[#allocation8 + $0x58] sm:$0xff]
    %v5413 = vld [vmem:[#allocation8 + $0x60] sm:$0xff]
    %v5414 = vld [vmem:[#allocation8 + $0x68] sm:$0xff]
    %v5415 = vld [vmem:[#allocation8 + $0x70] sm:$0xff]
    %v5416 = vld [vmem:[#allocation8 + $0x78] sm:$0xff]
    %v5417 = vsel %vm3782, %v5271, 0
    %5419 = vmatprep.subr.mxu0 0.0
    %5420 = vmatpush1.msra.mxu0 0.0
    %5421 = vmatprep.subr.mxu0 0.0
    %5422 = vmatpush1.msra.mxu0 0.0
    %5423 = vmatprep.subr.mxu0 0.0
    %5424 = vmatpush1.msra.mxu0 0.0
    %5425 = vmatprep.subr.mxu0 0.0
    %5426 = vmatpush1.msra.mxu0 0.0
    %5427 = vmatprep.subr.mxu0 0.0
    %5428 = vmatpush1.msra.mxu0 0.0
    %5429 = vmatprep.subr.mxu0 0.0
    %5430 = vmatpush1.msra.mxu0 0.0
    %5431 = vmatprep.subr.mxu0 0.0
    %5432 = vmatpush1.msra.mxu0 0.0
    %5433 = vmatprep.subr.mxu0 0.0
    %5434 = vmatpush1.msra.mxu0 0.0
    %5435 = vmatprep.subr.mxu0 %v5416
    %5436 = vmatpush1.msra.mxu0 %v5415
    %5437 = vmatprep.subr.mxu0 %v5414
    %5438 = vmatpush1.msra.mxu0 %v5413
    %5439 = vmatprep.subr.mxu0 %v5412
    %5440 = vmatpush1.msra.mxu0 %v5411
    %5441 = vmatprep.subr.mxu0 %v5410
    %5442 = vmatpush1.msra.mxu0 %v5409
    %5443 = vmatprep.subr.mxu0 %v5408
    %5444 = vmatpush1.msra.mxu0 %v5407
    %5445 = vmatprep.subr.mxu0 %v5406
    %5446 = vmatpush1.msra.mxu0 %v5405
    %5447 = vmatprep.subr.mxu0 %v5404
    %5448 = vmatpush1.msra.mxu0 %v5403
    %5449 = vmatprep.subr.mxu0 %v5402
    %5450 = vmatpush1.msra.mxu0 %v5401
    %5451 = vmatprep.subr.mxu0 0.0
    %5452 = vmatpush2.msra.mxu0 0.0
    %5453 = vmatprep.subr.mxu0 0.0
    %5454 = vmatpush2.msra.mxu0 0.0
    %5455 = vmatprep.subr.mxu0 0.0
    %5456 = vmatpush2.msra.mxu0 0.0
    %5457 = vmatprep.subr.mxu0 0.0
    %5458 = vmatpush2.msra.mxu0 0.0
    %5459 = vmatprep.subr.mxu0 0.0
    %5460 = vmatpush2.msra.mxu0 0.0
    %5461 = vmatprep.subr.mxu0 0.0
    %5462 = vmatpush2.msra.mxu0 0.0
    %5463 = vmatprep.subr.mxu0 0.0
    %5464 = vmatpush2.msra.mxu0 0.0
    %5465 = vmatprep.subr.mxu0 0.0
    %5466 = vmatpush2.msra.mxu0 0.0
    %5467 = vmatprep.subr.mxu0 0.0
    %5468 = vmatpush2.msra.mxu0 0.0
    %5469 = vmatprep.subr.mxu0 0.0
    %5470 = vmatpush2.msra.mxu0 0.0
    %5471 = vmatprep.subr.mxu0 0.0
    %5472 = vmatpush2.msra.mxu0 0.0
    %5473 = vmatprep.subr.mxu0 0.0
    %5474 = vmatpush2.msra.mxu0 0.0
    %5475 = vmatprep.subr.mxu0 0.0
    %5476 = vmatpush2.msra.mxu0 0.0
    %5477 = vmatprep.subr.mxu0 0.0
    %5478 = vmatpush2.msra.mxu0 0.0
    %5479 = vmatprep.subr.mxu0 0.0
    %5480 = vmatpush2.msra.mxu0 0.0
    %5481 = vmatprep.subr.mxu0 0.0
    %5482 = vmatpush2.msra.mxu0 0.0
    %5483 = vmatprep.mubr.f32.mxu0 0.0
    %5484 = vmatmul.mubr.f32.gmra.mxu0 %v5417
    %v5485 = vpop.f32.mrf.mxu0
    %v5486 = vadd.f32 0.0, %v5485
    %v5487 = vpop.f32.mrf.mxu0
    %v5488 = vadd.f32 0.0, %v5487
    %5489 = vdwg.mxu0
    %5491 = vrot.lane.b32.xlu0 %v5384, 64
    %v5492 = vpop.permute.xlu0 %5491
    %v5493 = vsel %vm3782, %v5492, 0
    %5495 = vmatprep.subr.mxu0 0.0
    %5496 = vmatpush1.msra.mxu0 0.0
    %5497 = vmatprep.subr.mxu0 0.0
    %5498 = vmatpush1.msra.mxu0 0.0
    %5499 = vmatprep.subr.mxu0 0.0
    %5500 = vmatpush1.msra.mxu0 0.0
    %5501 = vmatprep.subr.mxu0 0.0
    %5502 = vmatpush1.msra.mxu0 0.0
    %5503 = vmatprep.subr.mxu0 0.0
    %5504 = vmatpush1.msra.mxu0 0.0
    %5505 = vmatprep.subr.mxu0 0.0
    %5506 = vmatpush1.msra.mxu0 0.0
    %5507 = vmatprep.subr.mxu0 0.0
    %5508 = vmatpush1.msra.mxu0 0.0
    %5509 = vmatprep.subr.mxu0 0.0
    %5510 = vmatpush1.msra.mxu0 0.0
    %5511 = vmatprep.subr.mxu0 %v5400
    %5512 = vmatpush1.msra.mxu0 %v5399
    %5513 = vmatprep.subr.mxu0 %v5398
    %5514 = vmatpush1.msra.mxu0 %v5397
    %5515 = vmatprep.subr.mxu0 %v5396
    %5516 = vmatpush1.msra.mxu0 %v5395
    %5517 = vmatprep.subr.mxu0 %v5394
    %5518 = vmatpush1.msra.mxu0 %v5393
    %5519 = vmatprep.subr.mxu0 %v5392
    %5520 = vmatpush1.msra.mxu0 %v5391
    %5521 = vmatprep.subr.mxu0 %v5390
    %5522 = vmatpush1.msra.mxu0 %v5389
    %5523 = vmatprep.subr.mxu0 %v5388
    %5524 = vmatpush1.msra.mxu0 %v5387
    %5525 = vmatprep.subr.mxu0 %v5386
    %5526 = vmatpush1.msra.mxu0 %v5385
    %5527 = vmatprep.subr.mxu0 0.0
    %5528 = vmatpush2.msra.mxu0 0.0
    %5529 = vmatprep.subr.mxu0 0.0
    %5530 = vmatpush2.msra.mxu0 0.0
    %5531 = vmatprep.subr.mxu0 0.0
    %5532 = vmatpush2.msra.mxu0 0.0
    %5533 = vmatprep.subr.mxu0 0.0
    %5534 = vmatpush2.msra.mxu0 0.0
    %5535 = vmatprep.subr.mxu0 0.0
    %5536 = vmatpush2.msra.mxu0 0.0
    %5537 = vmatprep.subr.mxu0 0.0
    %5538 = vmatpush2.msra.mxu0 0.0
    %5539 = vmatprep.subr.mxu0 0.0
    %5540 = vmatpush2.msra.mxu0 0.0
    %5541 = vmatprep.subr.mxu0 0.0
    %5542 = vmatpush2.msra.mxu0 0.0
    %5543 = vmatprep.subr.mxu0 0.0
    %5544 = vmatpush2.msra.mxu0 0.0
    %5545 = vmatprep.subr.mxu0 0.0
    %5546 = vmatpush2.msra.mxu0 0.0
    %5547 = vmatprep.subr.mxu0 0.0
    %5548 = vmatpush2.msra.mxu0 0.0
    %5549 = vmatprep.subr.mxu0 0.0
    %5550 = vmatpush2.msra.mxu0 0.0
    %5551 = vmatprep.subr.mxu0 0.0
    %5552 = vmatpush2.msra.mxu0 0.0
    %5553 = vmatprep.subr.mxu0 0.0
    %5554 = vmatpush2.msra.mxu0 0.0
    %5555 = vmatprep.subr.mxu0 0.0
    %5556 = vmatpush2.msra.mxu0 0.0
    %5557 = vmatprep.subr.mxu0 0.0
    %5558 = vmatpush2.msra.mxu0 0.0
    %5559 = vmatprep.mubr.f32.mxu0 0.0
    %5560 = vmatmul.mubr.f32.gmra.mxu0 %v5493
    %v5561 = vpop.f32.mrf.mxu0
    %v5562 = vadd.f32 %v5486, %v5561
    %v5563 = vpop.f32.mrf.mxu0
    %v5564 = vadd.f32 %v5488, %v5563
    %5565 = vdwg.mxu0
    %v5566 = vld [vmem:[#allocation28] sm:$0x3]
    %v5568 = vlaneseq
    %v5569 = vshrl.u32 %v5568, 7
    %v5570 = vsub.s32 0, %v5569
    %v5571 = vrot.slane %v5566, %v5570
    %v5572 = vlaneseq
    %v5573 = vshrl.u32 %v5572, 7
    %v5574 = vsub.s32 1, %v5573
    %v5575 = vrot.slane %v5566, %v5574
    %v5578 = vadd.f32 %v5562, %v5571
    %v5579 = vadd.f32 %v5564, %v5575
    %v5580 = vxor.u32 %v5578, 2147483648
    %v5581 = vxor.u32 %v5579, 2147483648
    %v5582 = vmul.f32 %v5580, 1.442695
    %v5583 = vpow.pop %v5582
    %v5584 = vmul.f32 %v5581, 1.442695
    %v5585 = vpow.pop %v5584
    %v5586 = vadd.f32 %v5583, 1.0
    %v5587 = vadd.f32 %v5585, 1.0
    %v5588 = vrcp.pop %v5586
    %v5589 = vmul.f32 1.0, %v5588
    %v5590 = vrcp.pop %v5587
    %v5591 = vmul.f32 1.0, %v5590
    %v5592 = vtanh.pop %v5579
    %v5593 = vmul.f32 %v5589, %v5266
    %v5594 = vmul.f32 %v5589, %v5592
    %5596 = vrot.lane.b32.xlu0 %v5594, 64
    %v5597 = vpop.permute.xlu0 %5596
    %v5599 = vadd.f32 %v5593, %v5597
    %v5600 = vtanh.pop %v5599
    %v5601 = vmul.f32 %v5591, %v5600
    %5603 = vrot.lane.b32.xlu0 %v5601, 64
    %v5604 = vpop.permute.xlu0 %5603
    %5606 = vst.msk [vmem:[#allocation3 + $0x6] sm:$0x3] %vm4606, %v5604
    %v5607 = vld [vmem:[#allocation6] sm:$0xff]
    %v5608 = vld [vmem:[#allocation6 + $0x8] sm:$0xff]
    %v5609 = vld [vmem:[#allocation6 + $0x10] sm:$0xff]
    %v5610 = vld [vmem:[#allocation6 + $0x18] sm:$0xff]
    %v5611 = vld [vmem:[#allocation6 + $0x20] sm:$0xff]
    %v5612 = vld [vmem:[#allocation6 + $0x28] sm:$0xff]
    %v5613 = vld [vmem:[#allocation6 + $0x30] sm:$0xff]
    %v5614 = vld [vmem:[#allocation6 + $0x38] sm:$0xff]
    %v5615 = vld [vmem:[#allocation6 + $0x40] sm:$0xff]
    %v5616 = vld [vmem:[#allocation6 + $0x48] sm:$0xff]
    %v5617 = vld [vmem:[#allocation6 + $0x50] sm:$0xff]
    %v5618 = vld [vmem:[#allocation6 + $0x58] sm:$0xff]
    %v5619 = vld [vmem:[#allocation6 + $0x60] sm:$0xff]
    %v5620 = vld [vmem:[#allocation6 + $0x68] sm:$0xff]
    %v5621 = vld [vmem:[#allocation6 + $0x70] sm:$0xff]
    %v5622 = vld [vmem:[#allocation6 + $0x78] sm:$0xff]
    %5623 = vmatprep.subr.mxu0 0.0
    %5624 = vmatpush1.msra.mxu0 0.0
    %5625 = vmatprep.subr.mxu0 0.0
    %5626 = vmatpush1.msra.mxu0 0.0
    %5627 = vmatprep.subr.mxu0 0.0
    %5628 = vmatpush1.msra.mxu0 0.0
    %5629 = vmatprep.subr.mxu0 0.0
    %5630 = vmatpush1.msra.mxu0 0.0
    %5631 = vmatprep.subr.mxu0 0.0
    %5632 = vmatpush1.msra.mxu0 0.0
    %5633 = vmatprep.subr.mxu0 0.0
    %5634 = vmatpush1.msra.mxu0 0.0
    %5635 = vmatprep.subr.mxu0 0.0
    %5636 = vmatpush1.msra.mxu0 0.0
    %5637 = vmatprep.subr.mxu0 0.0
    %5638 = vmatpush1.msra.mxu0 0.0
    %5639 = vmatprep.subr.mxu0 %v5622
    %5640 = vmatpush1.msra.mxu0 %v5621
    %5641 = vmatprep.subr.mxu0 %v5620
    %5642 = vmatpush1.msra.mxu0 %v5619
    %5643 = vmatprep.subr.mxu0 %v5618
    %5644 = vmatpush1.msra.mxu0 %v5617
    %5645 = vmatprep.subr.mxu0 %v5616
    %5646 = vmatpush1.msra.mxu0 %v5615
    %5647 = vmatprep.subr.mxu0 %v5614
    %5648 = vmatpush1.msra.mxu0 %v5613
    %5649 = vmatprep.subr.mxu0 %v5612
    %5650 = vmatpush1.msra.mxu0 %v5611
    %5651 = vmatprep.subr.mxu0 %v5610
    %5652 = vmatpush1.msra.mxu0 %v5609
    %5653 = vmatprep.subr.mxu0 %v5608
    %5654 = vmatpush1.msra.mxu0 %v5607
    %5655 = vmatprep.subr.mxu0 0.0
    %5656 = vmatpush2.msra.mxu0 0.0
    %5657 = vmatprep.subr.mxu0 0.0
    %5658 = vmatpush2.msra.mxu0 0.0
    %5659 = vmatprep.subr.mxu0 0.0
    %5660 = vmatpush2.msra.mxu0 0.0
    %5661 = vmatprep.subr.mxu0 0.0
    %5662 = vmatpush2.msra.mxu0 0.0
    %5663 = vmatprep.subr.mxu0 0.0
    %5664 = vmatpush2.msra.mxu0 0.0
    %5665 = vmatprep.subr.mxu0 0.0
    %5666 = vmatpush2.msra.mxu0 0.0
    %5667 = vmatprep.subr.mxu0 0.0
    %5668 = vmatpush2.msra.mxu0 0.0
    %5669 = vmatprep.subr.mxu0 0.0
    %5670 = vmatpush2.msra.mxu0 0.0
    %5671 = vmatprep.subr.mxu0 0.0
    %5672 = vmatpush2.msra.mxu0 0.0
    %5673 = vmatprep.subr.mxu0 0.0
    %5674 = vmatpush2.msra.mxu0 0.0
    %5675 = vmatprep.subr.mxu0 0.0
    %5676 = vmatpush2.msra.mxu0 0.0
    %5677 = vmatprep.subr.mxu0 0.0
    %5678 = vmatpush2.msra.mxu0 0.0
    %5679 = vmatprep.subr.mxu0 0.0
    %5680 = vmatpush2.msra.mxu0 0.0
    %5681 = vmatprep.subr.mxu0 0.0
    %5682 = vmatpush2.msra.mxu0 0.0
    %5683 = vmatprep.subr.mxu0 0.0
    %5684 = vmatpush2.msra.mxu0 0.0
    %5685 = vmatprep.subr.mxu0 0.0
    %5686 = vmatpush2.msra.mxu0 0.0
    %5687 = vmatprep.mubr.f32.mxu0 0.0
    %5688 = vmatmul.mubr.f32.gmra.mxu0 %v5493
    %v5689 = vpop.f32.mrf.mxu0
    %v5690 = vadd.f32 0.0, %v5689
    %v5691 = vpop.f32.mrf.mxu0
    %v5692 = vadd.f32 0.0, %v5691
    %5693 = vdwg.mxu0
    %v5694 = vadd.f32 %v4272, %v5690
    %v5695 = vadd.f32 %v4273, %v5692
    %v5696 = vxor.u32 %v5694, 2147483648
    %v5697 = vxor.u32 %v5695, 2147483648
    %v5698 = vmul.f32 %v5696, 1.442695
    %v5699 = vpow.pop %v5698
    %v5700 = vmul.f32 %v5697, 1.442695
    %v5701 = vpow.pop %v5700
    %v5702 = vadd.f32 %v5699, 1.0
    %v5703 = vadd.f32 %v5701, 1.0
    %v5704 = vrcp.pop %v5702
    %v5705 = vmul.f32 1.0, %v5704
    %v5706 = vrcp.pop %v5703
    %v5707 = vmul.f32 1.0, %v5706
    %v5708 = vtanh.pop %v5695
    %v5709 = vmul.f32 %v5705, %v5382
    %v5710 = vmul.f32 %v5705, %v5708
    %5712 = vrot.lane.b32.xlu0 %v5710, 64
    %v5713 = vpop.permute.xlu0 %5712
    %v5715 = vadd.f32 %v5709, %v5713
    %v5716 = vtanh.pop %v5715
    %v5717 = vmul.f32 %v5707, %v5716
    %v5718 = vld [vmem:[#allocation7] sm:$0xff]
    %v5719 = vld [vmem:[#allocation7 + $0x8] sm:$0xff]
    %v5720 = vld [vmem:[#allocation7 + $0x10] sm:$0xff]
    %v5721 = vld [vmem:[#allocation7 + $0x18] sm:$0xff]
    %v5722 = vld [vmem:[#allocation7 + $0x20] sm:$0xff]
    %v5723 = vld [vmem:[#allocation7 + $0x28] sm:$0xff]
    %v5724 = vld [vmem:[#allocation7 + $0x30] sm:$0xff]
    %v5725 = vld [vmem:[#allocation7 + $0x38] sm:$0xff]
    %v5726 = vld [vmem:[#allocation7 + $0x40] sm:$0xff]
    %v5727 = vld [vmem:[#allocation7 + $0x48] sm:$0xff]
    %v5728 = vld [vmem:[#allocation7 + $0x50] sm:$0xff]
    %v5729 = vld [vmem:[#allocation7 + $0x58] sm:$0xff]
    %v5730 = vld [vmem:[#allocation7 + $0x60] sm:$0xff]
    %v5731 = vld [vmem:[#allocation7 + $0x68] sm:$0xff]
    %v5732 = vld [vmem:[#allocation7 + $0x70] sm:$0xff]
    %v5733 = vld [vmem:[#allocation7 + $0x78] sm:$0xff]
    %v5734 = vld [vmem:[#allocation8] sm:$0xff]
    %v5735 = vld [vmem:[#allocation8 + $0x8] sm:$0xff]
    %v5736 = vld [vmem:[#allocation8 + $0x10] sm:$0xff]
    %v5737 = vld [vmem:[#allocation8 + $0x18] sm:$0xff]
    %v5738 = vld [vmem:[#allocation8 + $0x20] sm:$0xff]
    %v5739 = vld [vmem:[#allocation8 + $0x28] sm:$0xff]
    %v5740 = vld [vmem:[#allocation8 + $0x30] sm:$0xff]
    %v5741 = vld [vmem:[#allocation8 + $0x38] sm:$0xff]
    %v5742 = vld [vmem:[#allocation8 + $0x40] sm:$0xff]
    %v5743 = vld [vmem:[#allocation8 + $0x48] sm:$0xff]
    %v5744 = vld [vmem:[#allocation8 + $0x50] sm:$0xff]
    %v5745 = vld [vmem:[#allocation8 + $0x58] sm:$0xff]
    %v5746 = vld [vmem:[#allocation8 + $0x60] sm:$0xff]
    %v5747 = vld [vmem:[#allocation8 + $0x68] sm:$0xff]
    %v5748 = vld [vmem:[#allocation8 + $0x70] sm:$0xff]
    %v5749 = vld [vmem:[#allocation8 + $0x78] sm:$0xff]
    %v5750 = vsel %vm3782, %v5604, 0
    %5752 = vmatprep.subr.mxu0 0.0
    %5753 = vmatpush1.msra.mxu0 0.0
    %5754 = vmatprep.subr.mxu0 0.0
    %5755 = vmatpush1.msra.mxu0 0.0
    %5756 = vmatprep.subr.mxu0 0.0
    %5757 = vmatpush1.msra.mxu0 0.0
    %5758 = vmatprep.subr.mxu0 0.0
    %5759 = vmatpush1.msra.mxu0 0.0
    %5760 = vmatprep.subr.mxu0 0.0
    %5761 = vmatpush1.msra.mxu0 0.0
    %5762 = vmatprep.subr.mxu0 0.0
    %5763 = vmatpush1.msra.mxu0 0.0
    %5764 = vmatprep.subr.mxu0 0.0
    %5765 = vmatpush1.msra.mxu0 0.0
    %5766 = vmatprep.subr.mxu0 0.0
    %5767 = vmatpush1.msra.mxu0 0.0
    %5768 = vmatprep.subr.mxu0 %v5749
    %5769 = vmatpush1.msra.mxu0 %v5748
    %5770 = vmatprep.subr.mxu0 %v5747
    %5771 = vmatpush1.msra.mxu0 %v5746
    %5772 = vmatprep.subr.mxu0 %v5745
    %5773 = vmatpush1.msra.mxu0 %v5744
    %5774 = vmatprep.subr.mxu0 %v5743
    %5775 = vmatpush1.msra.mxu0 %v5742
    %5776 = vmatprep.subr.mxu0 %v5741
    %5777 = vmatpush1.msra.mxu0 %v5740
    %5778 = vmatprep.subr.mxu0 %v5739
    %5779 = vmatpush1.msra.mxu0 %v5738
    %5780 = vmatprep.subr.mxu0 %v5737
    %5781 = vmatpush1.msra.mxu0 %v5736
    %5782 = vmatprep.subr.mxu0 %v5735
    %5783 = vmatpush1.msra.mxu0 %v5734
    %5784 = vmatprep.subr.mxu0 0.0
    %5785 = vmatpush2.msra.mxu0 0.0
    %5786 = vmatprep.subr.mxu0 0.0
    %5787 = vmatpush2.msra.mxu0 0.0
    %5788 = vmatprep.subr.mxu0 0.0
    %5789 = vmatpush2.msra.mxu0 0.0
    %5790 = vmatprep.subr.mxu0 0.0
    %5791 = vmatpush2.msra.mxu0 0.0
    %5792 = vmatprep.subr.mxu0 0.0
    %5793 = vmatpush2.msra.mxu0 0.0
    %5794 = vmatprep.subr.mxu0 0.0
    %5795 = vmatpush2.msra.mxu0 0.0
    %5796 = vmatprep.subr.mxu0 0.0
    %5797 = vmatpush2.msra.mxu0 0.0
    %5798 = vmatprep.subr.mxu0 0.0
    %5799 = vmatpush2.msra.mxu0 0.0
    %5800 = vmatprep.subr.mxu0 0.0
    %5801 = vmatpush2.msra.mxu0 0.0
    %5802 = vmatprep.subr.mxu0 0.0
    %5803 = vmatpush2.msra.mxu0 0.0
    %5804 = vmatprep.subr.mxu0 0.0
    %5805 = vmatpush2.msra.mxu0 0.0
    %5806 = vmatprep.subr.mxu0 0.0
    %5807 = vmatpush2.msra.mxu0 0.0
    %5808 = vmatprep.subr.mxu0 0.0
    %5809 = vmatpush2.msra.mxu0 0.0
    %5810 = vmatprep.subr.mxu0 0.0
    %5811 = vmatpush2.msra.mxu0 0.0
    %5812 = vmatprep.subr.mxu0 0.0
    %5813 = vmatpush2.msra.mxu0 0.0
    %5814 = vmatprep.subr.mxu0 0.0
    %5815 = vmatpush2.msra.mxu0 0.0
    %5816 = vmatprep.mubr.f32.mxu0 0.0
    %5817 = vmatmul.mubr.f32.gmra.mxu0 %v5750
    %v5818 = vpop.f32.mrf.mxu0
    %v5819 = vadd.f32 0.0, %v5818
    %v5820 = vpop.f32.mrf.mxu0
    %v5821 = vadd.f32 0.0, %v5820
    %5822 = vdwg.mxu0
    %5824 = vrot.lane.b32.xlu0 %v5717, 64
    %v5825 = vpop.permute.xlu0 %5824
    %v5826 = vsel %vm3782, %v5825, 0
    %5828 = vmatprep.subr.mxu0 0.0
    %5829 = vmatpush1.msra.mxu0 0.0
    %5830 = vmatprep.subr.mxu0 0.0
    %5831 = vmatpush1.msra.mxu0 0.0
    %5832 = vmatprep.subr.mxu0 0.0
    %5833 = vmatpush1.msra.mxu0 0.0
    %5834 = vmatprep.subr.mxu0 0.0
    %5835 = vmatpush1.msra.mxu0 0.0
    %5836 = vmatprep.subr.mxu0 0.0
    %5837 = vmatpush1.msra.mxu0 0.0
    %5838 = vmatprep.subr.mxu0 0.0
    %5839 = vmatpush1.msra.mxu0 0.0
    %5840 = vmatprep.subr.mxu0 0.0
    %5841 = vmatpush1.msra.mxu0 0.0
    %5842 = vmatprep.subr.mxu0 0.0
    %5843 = vmatpush1.msra.mxu0 0.0
    %5844 = vmatprep.subr.mxu0 %v5733
    %5845 = vmatpush1.msra.mxu0 %v5732
    %5846 = vmatprep.subr.mxu0 %v5731
    %5847 = vmatpush1.msra.mxu0 %v5730
    %5848 = vmatprep.subr.mxu0 %v5729
    %5849 = vmatpush1.msra.mxu0 %v5728
    %5850 = vmatprep.subr.mxu0 %v5727
    %5851 = vmatpush1.msra.mxu0 %v5726
    %5852 = vmatprep.subr.mxu0 %v5725
    %5853 = vmatpush1.msra.mxu0 %v5724
    %5854 = vmatprep.subr.mxu0 %v5723
    %5855 = vmatpush1.msra.mxu0 %v5722
    %5856 = vmatprep.subr.mxu0 %v5721
    %5857 = vmatpush1.msra.mxu0 %v5720
    %5858 = vmatprep.subr.mxu0 %v5719
    %5859 = vmatpush1.msra.mxu0 %v5718
    %5860 = vmatprep.subr.mxu0 0.0
    %5861 = vmatpush2.msra.mxu0 0.0
    %5862 = vmatprep.subr.mxu0 0.0
    %5863 = vmatpush2.msra.mxu0 0.0
    %5864 = vmatprep.subr.mxu0 0.0
    %5865 = vmatpush2.msra.mxu0 0.0
    %5866 = vmatprep.subr.mxu0 0.0
    %5867 = vmatpush2.msra.mxu0 0.0
    %5868 = vmatprep.subr.mxu0 0.0
    %5869 = vmatpush2.msra.mxu0 0.0
    %5870 = vmatprep.subr.mxu0 0.0
    %5871 = vmatpush2.msra.mxu0 0.0
    %5872 = vmatprep.subr.mxu0 0.0
    %5873 = vmatpush2.msra.mxu0 0.0
    %5874 = vmatprep.subr.mxu0 0.0
    %5875 = vmatpush2.msra.mxu0 0.0
    %5876 = vmatprep.subr.mxu0 0.0
    %5877 = vmatpush2.msra.mxu0 0.0
    %5878 = vmatprep.subr.mxu0 0.0
    %5879 = vmatpush2.msra.mxu0 0.0
    %5880 = vmatprep.subr.mxu0 0.0
    %5881 = vmatpush2.msra.mxu0 0.0
    %5882 = vmatprep.subr.mxu0 0.0
    %5883 = vmatpush2.msra.mxu0 0.0
    %5884 = vmatprep.subr.mxu0 0.0
    %5885 = vmatpush2.msra.mxu0 0.0
    %5886 = vmatprep.subr.mxu0 0.0
    %5887 = vmatpush2.msra.mxu0 0.0
    %5888 = vmatprep.subr.mxu0 0.0
    %5889 = vmatpush2.msra.mxu0 0.0
    %5890 = vmatprep.subr.mxu0 0.0
    %5891 = vmatpush2.msra.mxu0 0.0
    %5892 = vmatprep.mubr.f32.mxu0 0.0
    %5893 = vmatmul.mubr.f32.gmra.mxu0 %v5826
    %v5894 = vpop.f32.mrf.mxu0
    %v5895 = vadd.f32 %v5819, %v5894
    %v5896 = vpop.f32.mrf.mxu0
    %v5897 = vadd.f32 %v5821, %v5896
    %5898 = vdwg.mxu0
    %v5899 = vld [vmem:[#allocation28] sm:$0x3]
    %v5901 = vlaneseq
    %v5902 = vshrl.u32 %v5901, 7
    %v5903 = vsub.s32 0, %v5902
    %v5904 = vrot.slane %v5899, %v5903
    %v5905 = vlaneseq
    %v5906 = vshrl.u32 %v5905, 7
    %v5907 = vsub.s32 1, %v5906
    %v5908 = vrot.slane %v5899, %v5907
    %v5911 = vadd.f32 %v5895, %v5904
    %v5912 = vadd.f32 %v5897, %v5908
    %v5913 = vxor.u32 %v5911, 2147483648
    %v5914 = vxor.u32 %v5912, 2147483648
    %v5915 = vmul.f32 %v5913, 1.442695
    %v5916 = vpow.pop %v5915
    %v5917 = vmul.f32 %v5914, 1.442695
    %v5918 = vpow.pop %v5917
    %v5919 = vadd.f32 %v5916, 1.0
    %v5920 = vadd.f32 %v5918, 1.0
    %v5921 = vrcp.pop %v5919
    %v5922 = vmul.f32 1.0, %v5921
    %v5923 = vrcp.pop %v5920
    %v5924 = vmul.f32 1.0, %v5923
    %v5925 = vtanh.pop %v5912
    %v5926 = vmul.f32 %v5922, %v5599
    %v5927 = vmul.f32 %v5922, %v5925
    %5929 = vrot.lane.b32.xlu0 %v5927, 64
    %v5930 = vpop.permute.xlu0 %5929
    %v5932 = vadd.f32 %v5926, %v5930
    %v5933 = vtanh.pop %v5932
    %v5934 = vmul.f32 %v5924, %v5933
    %5936 = vrot.lane.b32.xlu0 %v5934, 64
    %v5937 = vpop.permute.xlu0 %5936
    %5939 = vst.msk [vmem:[#allocation3 + $0x8] sm:$0x3] %vm4606, %v5937
    %v5940 = vld [vmem:[#allocation6] sm:$0xff]
    %v5941 = vld [vmem:[#allocation6 + $0x8] sm:$0xff]
    %v5942 = vld [vmem:[#allocation6 + $0x10] sm:$0xff]
    %v5943 = vld [vmem:[#allocation6 + $0x18] sm:$0xff]
    %v5944 = vld [vmem:[#allocation6 + $0x20] sm:$0xff]
    %v5945 = vld [vmem:[#allocation6 + $0x28] sm:$0xff]
    %v5946 = vld [vmem:[#allocation6 + $0x30] sm:$0xff]
    %v5947 = vld [vmem:[#allocation6 + $0x38] sm:$0xff]
    %v5948 = vld [vmem:[#allocation6 + $0x40] sm:$0xff]
    %v5949 = vld [vmem:[#allocation6 + $0x48] sm:$0xff]
    %v5950 = vld [vmem:[#allocation6 + $0x50] sm:$0xff]
    %v5951 = vld [vmem:[#allocation6 + $0x58] sm:$0xff]
    %v5952 = vld [vmem:[#allocation6 + $0x60] sm:$0xff]
    %v5953 = vld [vmem:[#allocation6 + $0x68] sm:$0xff]
    %v5954 = vld [vmem:[#allocation6 + $0x70] sm:$0xff]
    %v5955 = vld [vmem:[#allocation6 + $0x78] sm:$0xff]
    %5956 = vmatprep.subr.mxu0 0.0
    %5957 = vmatpush1.msra.mxu0 0.0
    %5958 = vmatprep.subr.mxu0 0.0
    %5959 = vmatpush1.msra.mxu0 0.0
    %5960 = vmatprep.subr.mxu0 0.0
    %5961 = vmatpush1.msra.mxu0 0.0
    %5962 = vmatprep.subr.mxu0 0.0
    %5963 = vmatpush1.msra.mxu0 0.0
    %5964 = vmatprep.subr.mxu0 0.0
    %5965 = vmatpush1.msra.mxu0 0.0
    %5966 = vmatprep.subr.mxu0 0.0
    %5967 = vmatpush1.msra.mxu0 0.0
    %5968 = vmatprep.subr.mxu0 0.0
    %5969 = vmatpush1.msra.mxu0 0.0
    %5970 = vmatprep.subr.mxu0 0.0
    %5971 = vmatpush1.msra.mxu0 0.0
    %5972 = vmatprep.subr.mxu0 %v5955
    %5973 = vmatpush1.msra.mxu0 %v5954
    %5974 = vmatprep.subr.mxu0 %v5953
    %5975 = vmatpush1.msra.mxu0 %v5952
    %5976 = vmatprep.subr.mxu0 %v5951
    %5977 = vmatpush1.msra.mxu0 %v5950
    %5978 = vmatprep.subr.mxu0 %v5949
    %5979 = vmatpush1.msra.mxu0 %v5948
    %5980 = vmatprep.subr.mxu0 %v5947
    %5981 = vmatpush1.msra.mxu0 %v5946
    %5982 = vmatprep.subr.mxu0 %v5945
    %5983 = vmatpush1.msra.mxu0 %v5944
    %5984 = vmatprep.subr.mxu0 %v5943
    %5985 = vmatpush1.msra.mxu0 %v5942
    %5986 = vmatprep.subr.mxu0 %v5941
    %5987 = vmatpush1.msra.mxu0 %v5940
    %5988 = vmatprep.subr.mxu0 0.0
    %5989 = vmatpush2.msra.mxu0 0.0
    %5990 = vmatprep.subr.mxu0 0.0
    %5991 = vmatpush2.msra.mxu0 0.0
    %5992 = vmatprep.subr.mxu0 0.0
    %5993 = vmatpush2.msra.mxu0 0.0
    %5994 = vmatprep.subr.mxu0 0.0
    %5995 = vmatpush2.msra.mxu0 0.0
    %5996 = vmatprep.subr.mxu0 0.0
    %5997 = vmatpush2.msra.mxu0 0.0
    %5998 = vmatprep.subr.mxu0 0.0
    %5999 = vmatpush2.msra.mxu0 0.0
    %6000 = vmatprep.subr.mxu0 0.0
    %6001 = vmatpush2.msra.mxu0 0.0
    %6002 = vmatprep.subr.mxu0 0.0
    %6003 = vmatpush2.msra.mxu0 0.0
    %6004 = vmatprep.subr.mxu0 0.0
    %6005 = vmatpush2.msra.mxu0 0.0
    %6006 = vmatprep.subr.mxu0 0.0
    %6007 = vmatpush2.msra.mxu0 0.0
    %6008 = vmatprep.subr.mxu0 0.0
    %6009 = vmatpush2.msra.mxu0 0.0
    %6010 = vmatprep.subr.mxu0 0.0
    %6011 = vmatpush2.msra.mxu0 0.0
    %6012 = vmatprep.subr.mxu0 0.0
    %6013 = vmatpush2.msra.mxu0 0.0
    %6014 = vmatprep.subr.mxu0 0.0
    %6015 = vmatpush2.msra.mxu0 0.0
    %6016 = vmatprep.subr.mxu0 0.0
    %6017 = vmatpush2.msra.mxu0 0.0
    %6018 = vmatprep.subr.mxu0 0.0
    %6019 = vmatpush2.msra.mxu0 0.0
    %6020 = vmatprep.mubr.f32.mxu0 0.0
    %6021 = vmatmul.mubr.f32.gmra.mxu0 %v5826
    %v6022 = vpop.f32.mrf.mxu0
    %v6023 = vadd.f32 0.0, %v6022
    %v6024 = vpop.f32.mrf.mxu0
    %v6025 = vadd.f32 0.0, %v6024
    %6026 = vdwg.mxu0
    %v6027 = vadd.f32 %v4272, %v6023
    %v6028 = vadd.f32 %v4273, %v6025
    %v6029 = vxor.u32 %v6027, 2147483648
    %v6030 = vxor.u32 %v6028, 2147483648
    %v6031 = vmul.f32 %v6029, 1.442695
    %v6032 = vpow.pop %v6031
    %v6033 = vmul.f32 %v6030, 1.442695
    %v6034 = vpow.pop %v6033
    %v6035 = vadd.f32 %v6032, 1.0
    %v6036 = vadd.f32 %v6034, 1.0
    %v6037 = vrcp.pop %v6035
    %v6038 = vmul.f32 1.0, %v6037
    %v6039 = vrcp.pop %v6036
    %v6040 = vmul.f32 1.0, %v6039
    %v6041 = vtanh.pop %v6028
    %v6042 = vmul.f32 %v6038, %v5715
    %v6043 = vmul.f32 %v6038, %v6041
    %6045 = vrot.lane.b32.xlu0 %v6043, 64
    %v6046 = vpop.permute.xlu0 %6045
    %v6048 = vadd.f32 %v6042, %v6046
    %v6049 = vtanh.pop %v6048
    %v6050 = vmul.f32 %v6040, %v6049
    %v6051 = vld [vmem:[#allocation7] sm:$0xff]
    %v6052 = vld [vmem:[#allocation7 + $0x8] sm:$0xff]
    %v6053 = vld [vmem:[#allocation7 + $0x10] sm:$0xff]
    %v6054 = vld [vmem:[#allocation7 + $0x18] sm:$0xff]
    %v6055 = vld [vmem:[#allocation7 + $0x20] sm:$0xff]
    %v6056 = vld [vmem:[#allocation7 + $0x28] sm:$0xff]
    %v6057 = vld [vmem:[#allocation7 + $0x30] sm:$0xff]
    %v6058 = vld [vmem:[#allocation7 + $0x38] sm:$0xff]
    %v6059 = vld [vmem:[#allocation7 + $0x40] sm:$0xff]
    %v6060 = vld [vmem:[#allocation7 + $0x48] sm:$0xff]
    %v6061 = vld [vmem:[#allocation7 + $0x50] sm:$0xff]
    %v6062 = vld [vmem:[#allocation7 + $0x58] sm:$0xff]
    %v6063 = vld [vmem:[#allocation7 + $0x60] sm:$0xff]
    %v6064 = vld [vmem:[#allocation7 + $0x68] sm:$0xff]
    %v6065 = vld [vmem:[#allocation7 + $0x70] sm:$0xff]
    %v6066 = vld [vmem:[#allocation7 + $0x78] sm:$0xff]
    %v6067 = vld [vmem:[#allocation8] sm:$0xff]
    %v6068 = vld [vmem:[#allocation8 + $0x8] sm:$0xff]
    %v6069 = vld [vmem:[#allocation8 + $0x10] sm:$0xff]
    %v6070 = vld [vmem:[#allocation8 + $0x18] sm:$0xff]
    %v6071 = vld [vmem:[#allocation8 + $0x20] sm:$0xff]
    %v6072 = vld [vmem:[#allocation8 + $0x28] sm:$0xff]
    %v6073 = vld [vmem:[#allocation8 + $0x30] sm:$0xff]
    %v6074 = vld [vmem:[#allocation8 + $0x38] sm:$0xff]
    %v6075 = vld [vmem:[#allocation8 + $0x40] sm:$0xff]
    %v6076 = vld [vmem:[#allocation8 + $0x48] sm:$0xff]
    %v6077 = vld [vmem:[#allocation8 + $0x50] sm:$0xff]
    %v6078 = vld [vmem:[#allocation8 + $0x58] sm:$0xff]
    %v6079 = vld [vmem:[#allocation8 + $0x60] sm:$0xff]
    %v6080 = vld [vmem:[#allocation8 + $0x68] sm:$0xff]
    %v6081 = vld [vmem:[#allocation8 + $0x70] sm:$0xff]
    %v6082 = vld [vmem:[#allocation8 + $0x78] sm:$0xff]
    %v6083 = vsel %vm3782, %v5937, 0
    %6085 = vmatprep.subr.mxu0 0.0
    %6086 = vmatpush1.msra.mxu0 0.0
    %6087 = vmatprep.subr.mxu0 0.0
    %6088 = vmatpush1.msra.mxu0 0.0
    %6089 = vmatprep.subr.mxu0 0.0
    %6090 = vmatpush1.msra.mxu0 0.0
    %6091 = vmatprep.subr.mxu0 0.0
    %6092 = vmatpush1.msra.mxu0 0.0
    %6093 = vmatprep.subr.mxu0 0.0
    %6094 = vmatpush1.msra.mxu0 0.0
    %6095 = vmatprep.subr.mxu0 0.0
    %6096 = vmatpush1.msra.mxu0 0.0
    %6097 = vmatprep.subr.mxu0 0.0
    %6098 = vmatpush1.msra.mxu0 0.0
    %6099 = vmatprep.subr.mxu0 0.0
    %6100 = vmatpush1.msra.mxu0 0.0
    %6101 = vmatprep.subr.mxu0 %v6082
    %6102 = vmatpush1.msra.mxu0 %v6081
    %6103 = vmatprep.subr.mxu0 %v6080
    %6104 = vmatpush1.msra.mxu0 %v6079
    %6105 = vmatprep.subr.mxu0 %v6078
    %6106 = vmatpush1.msra.mxu0 %v6077
    %6107 = vmatprep.subr.mxu0 %v6076
    %6108 = vmatpush1.msra.mxu0 %v6075
    %6109 = vmatprep.subr.mxu0 %v6074
    %6110 = vmatpush1.msra.mxu0 %v6073
    %6111 = vmatprep.subr.mxu0 %v6072
    %6112 = vmatpush1.msra.mxu0 %v6071
    %6113 = vmatprep.subr.mxu0 %v6070
    %6114 = vmatpush1.msra.mxu0 %v6069
    %6115 = vmatprep.subr.mxu0 %v6068
    %6116 = vmatpush1.msra.mxu0 %v6067
    %6117 = vmatprep.subr.mxu0 0.0
    %6118 = vmatpush2.msra.mxu0 0.0
    %6119 = vmatprep.subr.mxu0 0.0
    %6120 = vmatpush2.msra.mxu0 0.0
    %6121 = vmatprep.subr.mxu0 0.0
    %6122 = vmatpush2.msra.mxu0 0.0
    %6123 = vmatprep.subr.mxu0 0.0
    %6124 = vmatpush2.msra.mxu0 0.0
    %6125 = vmatprep.subr.mxu0 0.0
    %6126 = vmatpush2.msra.mxu0 0.0
    %6127 = vmatprep.subr.mxu0 0.0
    %6128 = vmatpush2.msra.mxu0 0.0
    %6129 = vmatprep.subr.mxu0 0.0
    %6130 = vmatpush2.msra.mxu0 0.0
    %6131 = vmatprep.subr.mxu0 0.0
    %6132 = vmatpush2.msra.mxu0 0.0
    %6133 = vmatprep.subr.mxu0 0.0
    %6134 = vmatpush2.msra.mxu0 0.0
    %6135 = vmatprep.subr.mxu0 0.0
    %6136 = vmatpush2.msra.mxu0 0.0
    %6137 = vmatprep.subr.mxu0 0.0
    %6138 = vmatpush2.msra.mxu0 0.0
    %6139 = vmatprep.subr.mxu0 0.0
    %6140 = vmatpush2.msra.mxu0 0.0
    %6141 = vmatprep.subr.mxu0 0.0
    %6142 = vmatpush2.msra.mxu0 0.0
    %6143 = vmatprep.subr.mxu0 0.0
    %6144 = vmatpush2.msra.mxu0 0.0
    %6145 = vmatprep.subr.mxu0 0.0
    %6146 = vmatpush2.msra.mxu0 0.0
    %6147 = vmatprep.subr.mxu0 0.0
    %6148 = vmatpush2.msra.mxu0 0.0
    %6149 = vmatprep.mubr.f32.mxu0 0.0
    %6150 = vmatmul.mubr.f32.gmra.mxu0 %v6083
    %v6151 = vpop.f32.mrf.mxu0
    %v6152 = vadd.f32 0.0, %v6151
    %v6153 = vpop.f32.mrf.mxu0
    %v6154 = vadd.f32 0.0, %v6153
    %6155 = vdwg.mxu0
    %6157 = vrot.lane.b32.xlu0 %v6050, 64
    %v6158 = vpop.permute.xlu0 %6157
    %v6159 = vsel %vm3782, %v6158, 0
    %6161 = vmatprep.subr.mxu0 0.0
    %6162 = vmatpush1.msra.mxu0 0.0
    %6163 = vmatprep.subr.mxu0 0.0
    %6164 = vmatpush1.msra.mxu0 0.0
    %6165 = vmatprep.subr.mxu0 0.0
    %6166 = vmatpush1.msra.mxu0 0.0
    %6167 = vmatprep.subr.mxu0 0.0
    %6168 = vmatpush1.msra.mxu0 0.0
    %6169 = vmatprep.subr.mxu0 0.0
    %6170 = vmatpush1.msra.mxu0 0.0
    %6171 = vmatprep.subr.mxu0 0.0
    %6172 = vmatpush1.msra.mxu0 0.0
    %6173 = vmatprep.subr.mxu0 0.0
    %6174 = vmatpush1.msra.mxu0 0.0
    %6175 = vmatprep.subr.mxu0 0.0
    %6176 = vmatpush1.msra.mxu0 0.0
    %6177 = vmatprep.subr.mxu0 %v6066
    %6178 = vmatpush1.msra.mxu0 %v6065
    %6179 = vmatprep.subr.mxu0 %v6064
    %6180 = vmatpush1.msra.mxu0 %v6063
    %6181 = vmatprep.subr.mxu0 %v6062
    %6182 = vmatpush1.msra.mxu0 %v6061
    %6183 = vmatprep.subr.mxu0 %v6060
    %6184 = vmatpush1.msra.mxu0 %v6059
    %6185 = vmatprep.subr.mxu0 %v6058
    %6186 = vmatpush1.msra.mxu0 %v6057
    %6187 = vmatprep.subr.mxu0 %v6056
    %6188 = vmatpush1.msra.mxu0 %v6055
    %6189 = vmatprep.subr.mxu0 %v6054
    %6190 = vmatpush1.msra.mxu0 %v6053
    %6191 = vmatprep.subr.mxu0 %v6052
    %6192 = vmatpush1.msra.mxu0 %v6051
    %6193 = vmatprep.subr.mxu0 0.0
    %6194 = vmatpush2.msra.mxu0 0.0
    %6195 = vmatprep.subr.mxu0 0.0
    %6196 = vmatpush2.msra.mxu0 0.0
    %6197 = vmatprep.subr.mxu0 0.0
    %6198 = vmatpush2.msra.mxu0 0.0
    %6199 = vmatprep.subr.mxu0 0.0
    %6200 = vmatpush2.msra.mxu0 0.0
    %6201 = vmatprep.subr.mxu0 0.0
    %6202 = vmatpush2.msra.mxu0 0.0
    %6203 = vmatprep.subr.mxu0 0.0
    %6204 = vmatpush2.msra.mxu0 0.0
    %6205 = vmatprep.subr.mxu0 0.0
    %6206 = vmatpush2.msra.mxu0 0.0
    %6207 = vmatprep.subr.mxu0 0.0
    %6208 = vmatpush2.msra.mxu0 0.0
    %6209 = vmatprep.subr.mxu0 0.0
    %6210 = vmatpush2.msra.mxu0 0.0
    %6211 = vmatprep.subr.mxu0 0.0
    %6212 = vmatpush2.msra.mxu0 0.0
    %6213 = vmatprep.subr.mxu0 0.0
    %6214 = vmatpush2.msra.mxu0 0.0
    %6215 = vmatprep.subr.mxu0 0.0
    %6216 = vmatpush2.msra.mxu0 0.0
    %6217 = vmatprep.subr.mxu0 0.0
    %6218 = vmatpush2.msra.mxu0 0.0
    %6219 = vmatprep.subr.mxu0 0.0
    %6220 = vmatpush2.msra.mxu0 0.0
    %6221 = vmatprep.subr.mxu0 0.0
    %6222 = vmatpush2.msra.mxu0 0.0
    %6223 = vmatprep.subr.mxu0 0.0
    %6224 = vmatpush2.msra.mxu0 0.0
    %6225 = vmatprep.mubr.f32.mxu0 0.0
    %6226 = vmatmul.mubr.f32.gmra.mxu0 %v6159
    %v6227 = vpop.f32.mrf.mxu0
    %v6228 = vadd.f32 %v6152, %v6227
    %v6229 = vpop.f32.mrf.mxu0
    %v6230 = vadd.f32 %v6154, %v6229
    %6231 = vdwg.mxu0
    %v6232 = vld [vmem:[#allocation28] sm:$0x3]
    %v6234 = vlaneseq
    %v6235 = vshrl.u32 %v6234, 7
    %v6236 = vsub.s32 0, %v6235
    %v6237 = vrot.slane %v6232, %v6236
    %v6238 = vlaneseq
    %v6239 = vshrl.u32 %v6238, 7
    %v6240 = vsub.s32 1, %v6239
    %v6241 = vrot.slane %v6232, %v6240
    %v6244 = vadd.f32 %v6228, %v6237
    %v6245 = vadd.f32 %v6230, %v6241
    %v6246 = vxor.u32 %v6244, 2147483648
    %v6247 = vxor.u32 %v6245, 2147483648
    %v6248 = vmul.f32 %v6246, 1.442695
    %v6249 = vpow.pop %v6248
    %v6250 = vmul.f32 %v6247, 1.442695
    %v6251 = vpow.pop %v6250
    %v6252 = vadd.f32 %v6249, 1.0
    %v6253 = vadd.f32 %v6251, 1.0
    %v6254 = vrcp.pop %v6252
    %v6255 = vmul.f32 1.0, %v6254
    %v6256 = vrcp.pop %v6253
    %v6257 = vmul.f32 1.0, %v6256
    %v6258 = vtanh.pop %v6245
    %v6259 = vmul.f32 %v6255, %v5932
    %v6260 = vmul.f32 %v6255, %v6258
    %6262 = vrot.lane.b32.xlu0 %v6260, 64
    %v6263 = vpop.permute.xlu0 %6262
    %v6265 = vadd.f32 %v6259, %v6263
    %v6266 = vtanh.pop %v6265
    %v6267 = vmul.f32 %v6257, %v6266
    %6269 = vrot.lane.b32.xlu0 %v6267, 64
    %v6270 = vpop.permute.xlu0 %6269
    %6272 = vst.msk [vmem:[#allocation3 + $0xa] sm:$0x3] %vm4606, %v6270
    %v6273 = vld [vmem:[#allocation6] sm:$0xff]
    %v6274 = vld [vmem:[#allocation6 + $0x8] sm:$0xff]
    %v6275 = vld [vmem:[#allocation6 + $0x10] sm:$0xff]
    %v6276 = vld [vmem:[#allocation6 + $0x18] sm:$0xff]
    %v6277 = vld [vmem:[#allocation6 + $0x20] sm:$0xff]
    %v6278 = vld [vmem:[#allocation6 + $0x28] sm:$0xff]
    %v6279 = vld [vmem:[#allocation6 + $0x30] sm:$0xff]
    %v6280 = vld [vmem:[#allocation6 + $0x38] sm:$0xff]
    %v6281 = vld [vmem:[#allocation6 + $0x40] sm:$0xff]
    %v6282 = vld [vmem:[#allocation6 + $0x48] sm:$0xff]
    %v6283 = vld [vmem:[#allocation6 + $0x50] sm:$0xff]
    %v6284 = vld [vmem:[#allocation6 + $0x58] sm:$0xff]
    %v6285 = vld [vmem:[#allocation6 + $0x60] sm:$0xff]
    %v6286 = vld [vmem:[#allocation6 + $0x68] sm:$0xff]
    %v6287 = vld [vmem:[#allocation6 + $0x70] sm:$0xff]
    %v6288 = vld [vmem:[#allocation6 + $0x78] sm:$0xff]
    %6289 = vmatprep.subr.mxu0 0.0
    %6290 = vmatpush1.msra.mxu0 0.0
    %6291 = vmatprep.subr.mxu0 0.0
    %6292 = vmatpush1.msra.mxu0 0.0
    %6293 = vmatprep.subr.mxu0 0.0
    %6294 = vmatpush1.msra.mxu0 0.0
    %6295 = vmatprep.subr.mxu0 0.0
    %6296 = vmatpush1.msra.mxu0 0.0
    %6297 = vmatprep.subr.mxu0 0.0
    %6298 = vmatpush1.msra.mxu0 0.0
    %6299 = vmatprep.subr.mxu0 0.0
    %6300 = vmatpush1.msra.mxu0 0.0
    %6301 = vmatprep.subr.mxu0 0.0
    %6302 = vmatpush1.msra.mxu0 0.0
    %6303 = vmatprep.subr.mxu0 0.0
    %6304 = vmatpush1.msra.mxu0 0.0
    %6305 = vmatprep.subr.mxu0 %v6288
    %6306 = vmatpush1.msra.mxu0 %v6287
    %6307 = vmatprep.subr.mxu0 %v6286
    %6308 = vmatpush1.msra.mxu0 %v6285
    %6309 = vmatprep.subr.mxu0 %v6284
    %6310 = vmatpush1.msra.mxu0 %v6283
    %6311 = vmatprep.subr.mxu0 %v6282
    %6312 = vmatpush1.msra.mxu0 %v6281
    %6313 = vmatprep.subr.mxu0 %v6280
    %6314 = vmatpush1.msra.mxu0 %v6279
    %6315 = vmatprep.subr.mxu0 %v6278
    %6316 = vmatpush1.msra.mxu0 %v6277
    %6317 = vmatprep.subr.mxu0 %v6276
    %6318 = vmatpush1.msra.mxu0 %v6275
    %6319 = vmatprep.subr.mxu0 %v6274
    %6320 = vmatpush1.msra.mxu0 %v6273
    %6321 = vmatprep.subr.mxu0 0.0
    %6322 = vmatpush2.msra.mxu0 0.0
    %6323 = vmatprep.subr.mxu0 0.0
    %6324 = vmatpush2.msra.mxu0 0.0
    %6325 = vmatprep.subr.mxu0 0.0
    %6326 = vmatpush2.msra.mxu0 0.0
    %6327 = vmatprep.subr.mxu0 0.0
    %6328 = vmatpush2.msra.mxu0 0.0
    %6329 = vmatprep.subr.mxu0 0.0
    %6330 = vmatpush2.msra.mxu0 0.0
    %6331 = vmatprep.subr.mxu0 0.0
    %6332 = vmatpush2.msra.mxu0 0.0
    %6333 = vmatprep.subr.mxu0 0.0
    %6334 = vmatpush2.msra.mxu0 0.0
    %6335 = vmatprep.subr.mxu0 0.0
    %6336 = vmatpush2.msra.mxu0 0.0
    %6337 = vmatprep.subr.mxu0 0.0
    %6338 = vmatpush2.msra.mxu0 0.0
    %6339 = vmatprep.subr.mxu0 0.0
    %6340 = vmatpush2.msra.mxu0 0.0
    %6341 = vmatprep.subr.mxu0 0.0
    %6342 = vmatpush2.msra.mxu0 0.0
    %6343 = vmatprep.subr.mxu0 0.0
    %6344 = vmatpush2.msra.mxu0 0.0
    %6345 = vmatprep.subr.mxu0 0.0
    %6346 = vmatpush2.msra.mxu0 0.0
    %6347 = vmatprep.subr.mxu0 0.0
    %6348 = vmatpush2.msra.mxu0 0.0
    %6349 = vmatprep.subr.mxu0 0.0
    %6350 = vmatpush2.msra.mxu0 0.0
    %6351 = vmatprep.subr.mxu0 0.0
    %6352 = vmatpush2.msra.mxu0 0.0
    %6353 = vmatprep.mubr.f32.mxu0 0.0
    %6354 = vmatmul.mubr.f32.gmra.mxu0 %v6159
    %v6355 = vpop.f32.mrf.mxu0
    %v6356 = vadd.f32 0.0, %v6355
    %v6357 = vpop.f32.mrf.mxu0
    %v6358 = vadd.f32 0.0, %v6357
    %6359 = vdwg.mxu0
    %v6360 = vadd.f32 %v4272, %v6356
    %v6361 = vadd.f32 %v4273, %v6358
    %v6362 = vxor.u32 %v6360, 2147483648
    %v6363 = vxor.u32 %v6361, 2147483648
    %v6364 = vmul.f32 %v6362, 1.442695
    %v6365 = vpow.pop %v6364
    %v6366 = vmul.f32 %v6363, 1.442695
    %v6367 = vpow.pop %v6366
    %v6368 = vadd.f32 %v6365, 1.0
    %v6369 = vadd.f32 %v6367, 1.0
    %v6370 = vrcp.pop %v6368
    %v6371 = vmul.f32 1.0, %v6370
    %v6372 = vrcp.pop %v6369
    %v6373 = vmul.f32 1.0, %v6372
    %v6374 = vtanh.pop %v6361
    %v6375 = vmul.f32 %v6371, %v6048
    %v6376 = vmul.f32 %v6371, %v6374
    %6378 = vrot.lane.b32.xlu0 %v6376, 64
    %v6379 = vpop.permute.xlu0 %6378
    %v6381 = vadd.f32 %v6375, %v6379
    %v6382 = vtanh.pop %v6381
    %v6383 = vmul.f32 %v6373, %v6382
    %v6384 = vld [vmem:[#allocation7] sm:$0xff]
    %v6385 = vld [vmem:[#allocation7 + $0x8] sm:$0xff]
    %v6386 = vld [vmem:[#allocation7 + $0x10] sm:$0xff]
    %v6387 = vld [vmem:[#allocation7 + $0x18] sm:$0xff]
    %v6388 = vld [vmem:[#allocation7 + $0x20] sm:$0xff]
    %v6389 = vld [vmem:[#allocation7 + $0x28] sm:$0xff]
    %v6390 = vld [vmem:[#allocation7 + $0x30] sm:$0xff]
    %v6391 = vld [vmem:[#allocation7 + $0x38] sm:$0xff]
    %v6392 = vld [vmem:[#allocation7 + $0x40] sm:$0xff]
    %v6393 = vld [vmem:[#allocation7 + $0x48] sm:$0xff]
    %v6394 = vld [vmem:[#allocation7 + $0x50] sm:$0xff]
    %v6395 = vld [vmem:[#allocation7 + $0x58] sm:$0xff]
    %v6396 = vld [vmem:[#allocation7 + $0x60] sm:$0xff]
    %v6397 = vld [vmem:[#allocation7 + $0x68] sm:$0xff]
    %v6398 = vld [vmem:[#allocation7 + $0x70] sm:$0xff]
    %v6399 = vld [vmem:[#allocation7 + $0x78] sm:$0xff]
    %v6400 = vld [vmem:[#allocation8] sm:$0xff]
    %v6401 = vld [vmem:[#allocation8 + $0x8] sm:$0xff]
    %v6402 = vld [vmem:[#allocation8 + $0x10] sm:$0xff]
    %v6403 = vld [vmem:[#allocation8 + $0x18] sm:$0xff]
    %v6404 = vld [vmem:[#allocation8 + $0x20] sm:$0xff]
    %v6405 = vld [vmem:[#allocation8 + $0x28] sm:$0xff]
    %v6406 = vld [vmem:[#allocation8 + $0x30] sm:$0xff]
    %v6407 = vld [vmem:[#allocation8 + $0x38] sm:$0xff]
    %v6408 = vld [vmem:[#allocation8 + $0x40] sm:$0xff]
    %v6409 = vld [vmem:[#allocation8 + $0x48] sm:$0xff]
    %v6410 = vld [vmem:[#allocation8 + $0x50] sm:$0xff]
    %v6411 = vld [vmem:[#allocation8 + $0x58] sm:$0xff]
    %v6412 = vld [vmem:[#allocation8 + $0x60] sm:$0xff]
    %v6413 = vld [vmem:[#allocation8 + $0x68] sm:$0xff]
    %v6414 = vld [vmem:[#allocation8 + $0x70] sm:$0xff]
    %v6415 = vld [vmem:[#allocation8 + $0x78] sm:$0xff]
    %v6416 = vsel %vm3782, %v6270, 0
    %6418 = vmatprep.subr.mxu0 0.0
    %6419 = vmatpush1.msra.mxu0 0.0
    %6420 = vmatprep.subr.mxu0 0.0
    %6421 = vmatpush1.msra.mxu0 0.0
    %6422 = vmatprep.subr.mxu0 0.0
    %6423 = vmatpush1.msra.mxu0 0.0
    %6424 = vmatprep.subr.mxu0 0.0
    %6425 = vmatpush1.msra.mxu0 0.0
    %6426 = vmatprep.subr.mxu0 0.0
    %6427 = vmatpush1.msra.mxu0 0.0
    %6428 = vmatprep.subr.mxu0 0.0
    %6429 = vmatpush1.msra.mxu0 0.0
    %6430 = vmatprep.subr.mxu0 0.0
    %6431 = vmatpush1.msra.mxu0 0.0
    %6432 = vmatprep.subr.mxu0 0.0
    %6433 = vmatpush1.msra.mxu0 0.0
    %6434 = vmatprep.subr.mxu0 %v6415
    %6435 = vmatpush1.msra.mxu0 %v6414
    %6436 = vmatprep.subr.mxu0 %v6413
    %6437 = vmatpush1.msra.mxu0 %v6412
    %6438 = vmatprep.subr.mxu0 %v6411
    %6439 = vmatpush1.msra.mxu0 %v6410
    %6440 = vmatprep.subr.mxu0 %v6409
    %6441 = vmatpush1.msra.mxu0 %v6408
    %6442 = vmatprep.subr.mxu0 %v6407
    %6443 = vmatpush1.msra.mxu0 %v6406
    %6444 = vmatprep.subr.mxu0 %v6405
    %6445 = vmatpush1.msra.mxu0 %v6404
    %6446 = vmatprep.subr.mxu0 %v6403
    %6447 = vmatpush1.msra.mxu0 %v6402
    %6448 = vmatprep.subr.mxu0 %v6401
    %6449 = vmatpush1.msra.mxu0 %v6400
    %6450 = vmatprep.subr.mxu0 0.0
    %6451 = vmatpush2.msra.mxu0 0.0
    %6452 = vmatprep.subr.mxu0 0.0
    %6453 = vmatpush2.msra.mxu0 0.0
    %6454 = vmatprep.subr.mxu0 0.0
    %6455 = vmatpush2.msra.mxu0 0.0
    %6456 = vmatprep.subr.mxu0 0.0
    %6457 = vmatpush2.msra.mxu0 0.0
    %6458 = vmatprep.subr.mxu0 0.0
    %6459 = vmatpush2.msra.mxu0 0.0
    %6460 = vmatprep.subr.mxu0 0.0
    %6461 = vmatpush2.msra.mxu0 0.0
    %6462 = vmatprep.subr.mxu0 0.0
    %6463 = vmatpush2.msra.mxu0 0.0
    %6464 = vmatprep.subr.mxu0 0.0
    %6465 = vmatpush2.msra.mxu0 0.0
    %6466 = vmatprep.subr.mxu0 0.0
    %6467 = vmatpush2.msra.mxu0 0.0
    %6468 = vmatprep.subr.mxu0 0.0
    %6469 = vmatpush2.msra.mxu0 0.0
    %6470 = vmatprep.subr.mxu0 0.0
    %6471 = vmatpush2.msra.mxu0 0.0
    %6472 = vmatprep.subr.mxu0 0.0
    %6473 = vmatpush2.msra.mxu0 0.0
    %6474 = vmatprep.subr.mxu0 0.0
    %6475 = vmatpush2.msra.mxu0 0.0
    %6476 = vmatprep.subr.mxu0 0.0
    %6477 = vmatpush2.msra.mxu0 0.0
    %6478 = vmatprep.subr.mxu0 0.0
    %6479 = vmatpush2.msra.mxu0 0.0
    %6480 = vmatprep.subr.mxu0 0.0
    %6481 = vmatpush2.msra.mxu0 0.0
    %6482 = vmatprep.mubr.f32.mxu0 0.0
    %6483 = vmatmul.mubr.f32.gmra.mxu0 %v6416
    %v6484 = vpop.f32.mrf.mxu0
    %v6485 = vadd.f32 0.0, %v6484
    %v6486 = vpop.f32.mrf.mxu0
    %v6487 = vadd.f32 0.0, %v6486
    %6488 = vdwg.mxu0
    %6490 = vrot.lane.b32.xlu0 %v6383, 64
    %v6491 = vpop.permute.xlu0 %6490
    %v6492 = vsel %vm3782, %v6491, 0
    %6494 = vmatprep.subr.mxu0 0.0
    %6495 = vmatpush1.msra.mxu0 0.0
    %6496 = vmatprep.subr.mxu0 0.0
    %6497 = vmatpush1.msra.mxu0 0.0
    %6498 = vmatprep.subr.mxu0 0.0
    %6499 = vmatpush1.msra.mxu0 0.0
    %6500 = vmatprep.subr.mxu0 0.0
    %6501 = vmatpush1.msra.mxu0 0.0
    %6502 = vmatprep.subr.mxu0 0.0
    %6503 = vmatpush1.msra.mxu0 0.0
    %6504 = vmatprep.subr.mxu0 0.0
    %6505 = vmatpush1.msra.mxu0 0.0
    %6506 = vmatprep.subr.mxu0 0.0
    %6507 = vmatpush1.msra.mxu0 0.0
    %6508 = vmatprep.subr.mxu0 0.0
    %6509 = vmatpush1.msra.mxu0 0.0
    %6510 = vmatprep.subr.mxu0 %v6399
    %6511 = vmatpush1.msra.mxu0 %v6398
    %6512 = vmatprep.subr.mxu0 %v6397
    %6513 = vmatpush1.msra.mxu0 %v6396
    %6514 = vmatprep.subr.mxu0 %v6395
    %6515 = vmatpush1.msra.mxu0 %v6394
    %6516 = vmatprep.subr.mxu0 %v6393
    %6517 = vmatpush1.msra.mxu0 %v6392
    %6518 = vmatprep.subr.mxu0 %v6391
    %6519 = vmatpush1.msra.mxu0 %v6390
    %6520 = vmatprep.subr.mxu0 %v6389
    %6521 = vmatpush1.msra.mxu0 %v6388
    %6522 = vmatprep.subr.mxu0 %v6387
    %6523 = vmatpush1.msra.mxu0 %v6386
    %6524 = vmatprep.subr.mxu0 %v6385
    %6525 = vmatpush1.msra.mxu0 %v6384
    %6526 = vmatprep.subr.mxu0 0.0
    %6527 = vmatpush2.msra.mxu0 0.0
    %6528 = vmatprep.subr.mxu0 0.0
    %6529 = vmatpush2.msra.mxu0 0.0
    %6530 = vmatprep.subr.mxu0 0.0
    %6531 = vmatpush2.msra.mxu0 0.0
    %6532 = vmatprep.subr.mxu0 0.0
    %6533 = vmatpush2.msra.mxu0 0.0
    %6534 = vmatprep.subr.mxu0 0.0
    %6535 = vmatpush2.msra.mxu0 0.0
    %6536 = vmatprep.subr.mxu0 0.0
    %6537 = vmatpush2.msra.mxu0 0.0
    %6538 = vmatprep.subr.mxu0 0.0
    %6539 = vmatpush2.msra.mxu0 0.0
    %6540 = vmatprep.subr.mxu0 0.0
    %6541 = vmatpush2.msra.mxu0 0.0
    %6542 = vmatprep.subr.mxu0 0.0
    %6543 = vmatpush2.msra.mxu0 0.0
    %6544 = vmatprep.subr.mxu0 0.0
    %6545 = vmatpush2.msra.mxu0 0.0
    %6546 = vmatprep.subr.mxu0 0.0
    %6547 = vmatpush2.msra.mxu0 0.0
    %6548 = vmatprep.subr.mxu0 0.0
    %6549 = vmatpush2.msra.mxu0 0.0
    %6550 = vmatprep.subr.mxu0 0.0
    %6551 = vmatpush2.msra.mxu0 0.0
    %6552 = vmatprep.subr.mxu0 0.0
    %6553 = vmatpush2.msra.mxu0 0.0
    %6554 = vmatprep.subr.mxu0 0.0
    %6555 = vmatpush2.msra.mxu0 0.0
    %6556 = vmatprep.subr.mxu0 0.0
    %6557 = vmatpush2.msra.mxu0 0.0
    %6558 = vmatprep.mubr.f32.mxu0 0.0
    %6559 = vmatmul.mubr.f32.gmra.mxu0 %v6492
    %v6560 = vpop.f32.mrf.mxu0
    %v6561 = vadd.f32 %v6485, %v6560
    %v6562 = vpop.f32.mrf.mxu0
    %v6563 = vadd.f32 %v6487, %v6562
    %6564 = vdwg.mxu0
    %v6565 = vld [vmem:[#allocation28] sm:$0x3]
    %v6567 = vlaneseq
    %v6568 = vshrl.u32 %v6567, 7
    %v6569 = vsub.s32 0, %v6568
    %v6570 = vrot.slane %v6565, %v6569
    %v6571 = vlaneseq
    %v6572 = vshrl.u32 %v6571, 7
    %v6573 = vsub.s32 1, %v6572
    %v6574 = vrot.slane %v6565, %v6573
    %v6577 = vadd.f32 %v6561, %v6570
    %v6578 = vadd.f32 %v6563, %v6574
    %v6579 = vxor.u32 %v6577, 2147483648
    %v6580 = vxor.u32 %v6578, 2147483648
    %v6581 = vmul.f32 %v6579, 1.442695
    %v6582 = vpow.pop %v6581
    %v6583 = vmul.f32 %v6580, 1.442695
    %v6584 = vpow.pop %v6583
    %v6585 = vadd.f32 %v6582, 1.0
    %v6586 = vadd.f32 %v6584, 1.0
    %v6587 = vrcp.pop %v6585
    %v6588 = vmul.f32 1.0, %v6587
    %v6589 = vrcp.pop %v6586
    %v6590 = vmul.f32 1.0, %v6589
    %v6591 = vtanh.pop %v6578
    %v6592 = vmul.f32 %v6588, %v6265
    %v6593 = vmul.f32 %v6588, %v6591
    %6595 = vrot.lane.b32.xlu0 %v6593, 64
    %v6596 = vpop.permute.xlu0 %6595
    %v6598 = vadd.f32 %v6592, %v6596
    %v6599 = vtanh.pop %v6598
    %v6600 = vmul.f32 %v6590, %v6599
    %6602 = vrot.lane.b32.xlu0 %v6600, 64
    %v6603 = vpop.permute.xlu0 %6602
    %6605 = vst.msk [vmem:[#allocation3 + $0xc] sm:$0x3] %vm4606, %v6603
    %v6606 = vld [vmem:[#allocation6] sm:$0xff]
    %v6607 = vld [vmem:[#allocation6 + $0x8] sm:$0xff]
    %v6608 = vld [vmem:[#allocation6 + $0x10] sm:$0xff]
    %v6609 = vld [vmem:[#allocation6 + $0x18] sm:$0xff]
    %v6610 = vld [vmem:[#allocation6 + $0x20] sm:$0xff]
    %v6611 = vld [vmem:[#allocation6 + $0x28] sm:$0xff]
    %v6612 = vld [vmem:[#allocation6 + $0x30] sm:$0xff]
    %v6613 = vld [vmem:[#allocation6 + $0x38] sm:$0xff]
    %v6614 = vld [vmem:[#allocation6 + $0x40] sm:$0xff]
    %v6615 = vld [vmem:[#allocation6 + $0x48] sm:$0xff]
    %v6616 = vld [vmem:[#allocation6 + $0x50] sm:$0xff]
    %v6617 = vld [vmem:[#allocation6 + $0x58] sm:$0xff]
    %v6618 = vld [vmem:[#allocation6 + $0x60] sm:$0xff]
    %v6619 = vld [vmem:[#allocation6 + $0x68] sm:$0xff]
    %v6620 = vld [vmem:[#allocation6 + $0x70] sm:$0xff]
    %v6621 = vld [vmem:[#allocation6 + $0x78] sm:$0xff]
    %6622 = vmatprep.subr.mxu0 0.0
    %6623 = vmatpush1.msra.mxu0 0.0
    %6624 = vmatprep.subr.mxu0 0.0
    %6625 = vmatpush1.msra.mxu0 0.0
    %6626 = vmatprep.subr.mxu0 0.0
    %6627 = vmatpush1.msra.mxu0 0.0
    %6628 = vmatprep.subr.mxu0 0.0
    %6629 = vmatpush1.msra.mxu0 0.0
    %6630 = vmatprep.subr.mxu0 0.0
    %6631 = vmatpush1.msra.mxu0 0.0
    %6632 = vmatprep.subr.mxu0 0.0
    %6633 = vmatpush1.msra.mxu0 0.0
    %6634 = vmatprep.subr.mxu0 0.0
    %6635 = vmatpush1.msra.mxu0 0.0
    %6636 = vmatprep.subr.mxu0 0.0
    %6637 = vmatpush1.msra.mxu0 0.0
    %6638 = vmatprep.subr.mxu0 %v6621
    %6639 = vmatpush1.msra.mxu0 %v6620
    %6640 = vmatprep.subr.mxu0 %v6619
    %6641 = vmatpush1.msra.mxu0 %v6618
    %6642 = vmatprep.subr.mxu0 %v6617
    %6643 = vmatpush1.msra.mxu0 %v6616
    %6644 = vmatprep.subr.mxu0 %v6615
    %6645 = vmatpush1.msra.mxu0 %v6614
    %6646 = vmatprep.subr.mxu0 %v6613
    %6647 = vmatpush1.msra.mxu0 %v6612
    %6648 = vmatprep.subr.mxu0 %v6611
    %6649 = vmatpush1.msra.mxu0 %v6610
    %6650 = vmatprep.subr.mxu0 %v6609
    %6651 = vmatpush1.msra.mxu0 %v6608
    %6652 = vmatprep.subr.mxu0 %v6607
    %6653 = vmatpush1.msra.mxu0 %v6606
    %6654 = vmatprep.subr.mxu0 0.0
    %6655 = vmatpush2.msra.mxu0 0.0
    %6656 = vmatprep.subr.mxu0 0.0
    %6657 = vmatpush2.msra.mxu0 0.0
    %6658 = vmatprep.subr.mxu0 0.0
    %6659 = vmatpush2.msra.mxu0 0.0
    %6660 = vmatprep.subr.mxu0 0.0
    %6661 = vmatpush2.msra.mxu0 0.0
    %6662 = vmatprep.subr.mxu0 0.0
    %6663 = vmatpush2.msra.mxu0 0.0
    %6664 = vmatprep.subr.mxu0 0.0
    %6665 = vmatpush2.msra.mxu0 0.0
    %6666 = vmatprep.subr.mxu0 0.0
    %6667 = vmatpush2.msra.mxu0 0.0
    %6668 = vmatprep.subr.mxu0 0.0
    %6669 = vmatpush2.msra.mxu0 0.0
    %6670 = vmatprep.subr.mxu0 0.0
    %6671 = vmatpush2.msra.mxu0 0.0
    %6672 = vmatprep.subr.mxu0 0.0
    %6673 = vmatpush2.msra.mxu0 0.0
    %6674 = vmatprep.subr.mxu0 0.0
    %6675 = vmatpush2.msra.mxu0 0.0
    %6676 = vmatprep.subr.mxu0 0.0
    %6677 = vmatpush2.msra.mxu0 0.0
    %6678 = vmatprep.subr.mxu0 0.0
    %6679 = vmatpush2.msra.mxu0 0.0
    %6680 = vmatprep.subr.mxu0 0.0
    %6681 = vmatpush2.msra.mxu0 0.0
    %6682 = vmatprep.subr.mxu0 0.0
    %6683 = vmatpush2.msra.mxu0 0.0
    %6684 = vmatprep.subr.mxu0 0.0
    %6685 = vmatpush2.msra.mxu0 0.0
    %6686 = vmatprep.mubr.f32.mxu0 0.0
    %6687 = vmatmul.mubr.f32.gmra.mxu0 %v6492
    %v6688 = vpop.f32.mrf.mxu0
    %v6689 = vadd.f32 0.0, %v6688
    %v6690 = vpop.f32.mrf.mxu0
    %v6691 = vadd.f32 0.0, %v6690
    %6692 = vdwg.mxu0
    %v6693 = vadd.f32 %v4272, %v6689
    %v6694 = vadd.f32 %v4273, %v6691
    %v6695 = vxor.u32 %v6693, 2147483648
    %v6696 = vxor.u32 %v6694, 2147483648
    %v6697 = vmul.f32 %v6695, 1.442695
    %v6698 = vpow.pop %v6697
    %v6699 = vmul.f32 %v6696, 1.442695
    %v6700 = vpow.pop %v6699
    %v6701 = vadd.f32 %v6698, 1.0
    %v6702 = vadd.f32 %v6700, 1.0
    %v6703 = vrcp.pop %v6701
    %v6704 = vmul.f32 1.0, %v6703
    %v6705 = vrcp.pop %v6702
    %v6706 = vmul.f32 1.0, %v6705
    %v6707 = vtanh.pop %v6694
    %v6708 = vmul.f32 %v6704, %v6381
    %v6709 = vmul.f32 %v6704, %v6707
    %6711 = vrot.lane.b32.xlu0 %v6709, 64
    %v6712 = vpop.permute.xlu0 %6711
    %v6714 = vadd.f32 %v6708, %v6712
    %v6715 = vtanh.pop %v6714
    %v6716 = vmul.f32 %v6706, %v6715
    %v6717 = vld [vmem:[#allocation7] sm:$0xff]
    %v6718 = vld [vmem:[#allocation7 + $0x8] sm:$0xff]
    %v6719 = vld [vmem:[#allocation7 + $0x10] sm:$0xff]
    %v6720 = vld [vmem:[#allocation7 + $0x18] sm:$0xff]
    %v6721 = vld [vmem:[#allocation7 + $0x20] sm:$0xff]
    %v6722 = vld [vmem:[#allocation7 + $0x28] sm:$0xff]
    %v6723 = vld [vmem:[#allocation7 + $0x30] sm:$0xff]
    %v6724 = vld [vmem:[#allocation7 + $0x38] sm:$0xff]
    %v6725 = vld [vmem:[#allocation7 + $0x40] sm:$0xff]
    %v6726 = vld [vmem:[#allocation7 + $0x48] sm:$0xff]
    %v6727 = vld [vmem:[#allocation7 + $0x50] sm:$0xff]
    %v6728 = vld [vmem:[#allocation7 + $0x58] sm:$0xff]
    %v6729 = vld [vmem:[#allocation7 + $0x60] sm:$0xff]
    %v6730 = vld [vmem:[#allocation7 + $0x68] sm:$0xff]
    %v6731 = vld [vmem:[#allocation7 + $0x70] sm:$0xff]
    %v6732 = vld [vmem:[#allocation7 + $0x78] sm:$0xff]
    %v6733 = vld [vmem:[#allocation8] sm:$0xff]
    %v6734 = vld [vmem:[#allocation8 + $0x8] sm:$0xff]
    %v6735 = vld [vmem:[#allocation8 + $0x10] sm:$0xff]
    %v6736 = vld [vmem:[#allocation8 + $0x18] sm:$0xff]
    %v6737 = vld [vmem:[#allocation8 + $0x20] sm:$0xff]
    %v6738 = vld [vmem:[#allocation8 + $0x28] sm:$0xff]
    %v6739 = vld [vmem:[#allocation8 + $0x30] sm:$0xff]
    %v6740 = vld [vmem:[#allocation8 + $0x38] sm:$0xff]
    %v6741 = vld [vmem:[#allocation8 + $0x40] sm:$0xff]
    %v6742 = vld [vmem:[#allocation8 + $0x48] sm:$0xff]
    %v6743 = vld [vmem:[#allocation8 + $0x50] sm:$0xff]
    %v6744 = vld [vmem:[#allocation8 + $0x58] sm:$0xff]
    %v6745 = vld [vmem:[#allocation8 + $0x60] sm:$0xff]
    %v6746 = vld [vmem:[#allocation8 + $0x68] sm:$0xff]
    %v6747 = vld [vmem:[#allocation8 + $0x70] sm:$0xff]
    %v6748 = vld [vmem:[#allocation8 + $0x78] sm:$0xff]
    %v6749 = vsel %vm3782, %v6603, 0
    %6751 = vmatprep.subr.mxu0 0.0
    %6752 = vmatpush1.msra.mxu0 0.0
    %6753 = vmatprep.subr.mxu0 0.0
    %6754 = vmatpush1.msra.mxu0 0.0
    %6755 = vmatprep.subr.mxu0 0.0
    %6756 = vmatpush1.msra.mxu0 0.0
    %6757 = vmatprep.subr.mxu0 0.0
    %6758 = vmatpush1.msra.mxu0 0.0
    %6759 = vmatprep.subr.mxu0 0.0
    %6760 = vmatpush1.msra.mxu0 0.0
    %6761 = vmatprep.subr.mxu0 0.0
    %6762 = vmatpush1.msra.mxu0 0.0
    %6763 = vmatprep.subr.mxu0 0.0
    %6764 = vmatpush1.msra.mxu0 0.0
    %6765 = vmatprep.subr.mxu0 0.0
    %6766 = vmatpush1.msra.mxu0 0.0
    %6767 = vmatprep.subr.mxu0 %v6748
    %6768 = vmatpush1.msra.mxu0 %v6747
    %6769 = vmatprep.subr.mxu0 %v6746
    %6770 = vmatpush1.msra.mxu0 %v6745
    %6771 = vmatprep.subr.mxu0 %v6744
    %6772 = vmatpush1.msra.mxu0 %v6743
    %6773 = vmatprep.subr.mxu0 %v6742
    %6774 = vmatpush1.msra.mxu0 %v6741
    %6775 = vmatprep.subr.mxu0 %v6740
    %6776 = vmatpush1.msra.mxu0 %v6739
    %6777 = vmatprep.subr.mxu0 %v6738
    %6778 = vmatpush1.msra.mxu0 %v6737
    %6779 = vmatprep.subr.mxu0 %v6736
    %6780 = vmatpush1.msra.mxu0 %v6735
    %6781 = vmatprep.subr.mxu0 %v6734
    %6782 = vmatpush1.msra.mxu0 %v6733
    %6783 = vmatprep.subr.mxu0 0.0
    %6784 = vmatpush2.msra.mxu0 0.0
    %6785 = vmatprep.subr.mxu0 0.0
    %6786 = vmatpush2.msra.mxu0 0.0
    %6787 = vmatprep.subr.mxu0 0.0
    %6788 = vmatpush2.msra.mxu0 0.0
    %6789 = vmatprep.subr.mxu0 0.0
    %6790 = vmatpush2.msra.mxu0 0.0
    %6791 = vmatprep.subr.mxu0 0.0
    %6792 = vmatpush2.msra.mxu0 0.0
    %6793 = vmatprep.subr.mxu0 0.0
    %6794 = vmatpush2.msra.mxu0 0.0
    %6795 = vmatprep.subr.mxu0 0.0
    %6796 = vmatpush2.msra.mxu0 0.0
    %6797 = vmatprep.subr.mxu0 0.0
    %6798 = vmatpush2.msra.mxu0 0.0
    %6799 = vmatprep.subr.mxu0 0.0
    %6800 = vmatpush2.msra.mxu0 0.0
    %6801 = vmatprep.subr.mxu0 0.0
    %6802 = vmatpush2.msra.mxu0 0.0
    %6803 = vmatprep.subr.mxu0 0.0
    %6804 = vmatpush2.msra.mxu0 0.0
    %6805 = vmatprep.subr.mxu0 0.0
    %6806 = vmatpush2.msra.mxu0 0.0
    %6807 = vmatprep.subr.mxu0 0.0
    %6808 = vmatpush2.msra.mxu0 0.0
    %6809 = vmatprep.subr.mxu0 0.0
    %6810 = vmatpush2.msra.mxu0 0.0
    %6811 = vmatprep.subr.mxu0 0.0
    %6812 = vmatpush2.msra.mxu0 0.0
    %6813 = vmatprep.subr.mxu0 0.0
    %6814 = vmatpush2.msra.mxu0 0.0
    %6815 = vmatprep.mubr.f32.mxu0 0.0
    %6816 = vmatmul.mubr.f32.gmra.mxu0 %v6749
    %v6817 = vpop.f32.mrf.mxu0
    %v6818 = vadd.f32 0.0, %v6817
    %v6819 = vpop.f32.mrf.mxu0
    %v6820 = vadd.f32 0.0, %v6819
    %6821 = vdwg.mxu0
    %6823 = vrot.lane.b32.xlu0 %v6716, 64
    %v6824 = vpop.permute.xlu0 %6823
    %v6825 = vsel %vm3782, %v6824, 0
    %6827 = vmatprep.subr.mxu0 0.0
    %6828 = vmatpush1.msra.mxu0 0.0
    %6829 = vmatprep.subr.mxu0 0.0
    %6830 = vmatpush1.msra.mxu0 0.0
    %6831 = vmatprep.subr.mxu0 0.0
    %6832 = vmatpush1.msra.mxu0 0.0
    %6833 = vmatprep.subr.mxu0 0.0
    %6834 = vmatpush1.msra.mxu0 0.0
    %6835 = vmatprep.subr.mxu0 0.0
    %6836 = vmatpush1.msra.mxu0 0.0
    %6837 = vmatprep.subr.mxu0 0.0
    %6838 = vmatpush1.msra.mxu0 0.0
    %6839 = vmatprep.subr.mxu0 0.0
    %6840 = vmatpush1.msra.mxu0 0.0
    %6841 = vmatprep.subr.mxu0 0.0
    %6842 = vmatpush1.msra.mxu0 0.0
    %6843 = vmatprep.subr.mxu0 %v6732
    %6844 = vmatpush1.msra.mxu0 %v6731
    %6845 = vmatprep.subr.mxu0 %v6730
    %6846 = vmatpush1.msra.mxu0 %v6729
    %6847 = vmatprep.subr.mxu0 %v6728
    %6848 = vmatpush1.msra.mxu0 %v6727
    %6849 = vmatprep.subr.mxu0 %v6726
    %6850 = vmatpush1.msra.mxu0 %v6725
    %6851 = vmatprep.subr.mxu0 %v6724
    %6852 = vmatpush1.msra.mxu0 %v6723
    %6853 = vmatprep.subr.mxu0 %v6722
    %6854 = vmatpush1.msra.mxu0 %v6721
    %6855 = vmatprep.subr.mxu0 %v6720
    %6856 = vmatpush1.msra.mxu0 %v6719
    %6857 = vmatprep.subr.mxu0 %v6718
    %6858 = vmatpush1.msra.mxu0 %v6717
    %6859 = vmatprep.subr.mxu0 0.0
    %6860 = vmatpush2.msra.mxu0 0.0
    %6861 = vmatprep.subr.mxu0 0.0
    %6862 = vmatpush2.msra.mxu0 0.0
    %6863 = vmatprep.subr.mxu0 0.0
    %6864 = vmatpush2.msra.mxu0 0.0
    %6865 = vmatprep.subr.mxu0 0.0
    %6866 = vmatpush2.msra.mxu0 0.0
    %6867 = vmatprep.subr.mxu0 0.0
    %6868 = vmatpush2.msra.mxu0 0.0
    %6869 = vmatprep.subr.mxu0 0.0
    %6870 = vmatpush2.msra.mxu0 0.0
    %6871 = vmatprep.subr.mxu0 0.0
    %6872 = vmatpush2.msra.mxu0 0.0
    %6873 = vmatprep.subr.mxu0 0.0
    %6874 = vmatpush2.msra.mxu0 0.0
    %6875 = vmatprep.subr.mxu0 0.0
    %6876 = vmatpush2.msra.mxu0 0.0
    %6877 = vmatprep.subr.mxu0 0.0
    %6878 = vmatpush2.msra.mxu0 0.0
    %6879 = vmatprep.subr.mxu0 0.0
    %6880 = vmatpush2.msra.mxu0 0.0
    %6881 = vmatprep.subr.mxu0 0.0
    %6882 = vmatpush2.msra.mxu0 0.0
    %6883 = vmatprep.subr.mxu0 0.0
    %6884 = vmatpush2.msra.mxu0 0.0
    %6885 = vmatprep.subr.mxu0 0.0
    %6886 = vmatpush2.msra.mxu0 0.0
    %6887 = vmatprep.subr.mxu0 0.0
    %6888 = vmatpush2.msra.mxu0 0.0
    %6889 = vmatprep.subr.mxu0 0.0
    %6890 = vmatpush2.msra.mxu0 0.0
    %6891 = vmatprep.mubr.f32.mxu0 0.0
    %6892 = vmatmul.mubr.f32.gmra.mxu0 %v6825
    %v6893 = vpop.f32.mrf.mxu0
    %v6894 = vadd.f32 %v6818, %v6893
    %v6895 = vpop.f32.mrf.mxu0
    %v6896 = vadd.f32 %v6820, %v6895
    %6897 = vdwg.mxu0
    %v6898 = vld [vmem:[#allocation28] sm:$0x3]
    %v6900 = vlaneseq
    %v6901 = vshrl.u32 %v6900, 7
    %v6902 = vsub.s32 0, %v6901
    %v6903 = vrot.slane %v6898, %v6902
    %v6904 = vlaneseq
    %v6905 = vshrl.u32 %v6904, 7
    %v6906 = vsub.s32 1, %v6905
    %v6907 = vrot.slane %v6898, %v6906
    %v6910 = vadd.f32 %v6894, %v6903
    %v6911 = vadd.f32 %v6896, %v6907
    %v6912 = vxor.u32 %v6910, 2147483648
    %v6913 = vxor.u32 %v6911, 2147483648
    %v6914 = vmul.f32 %v6912, 1.442695
    %v6915 = vpow.pop %v6914
    %v6916 = vmul.f32 %v6913, 1.442695
    %v6917 = vpow.pop %v6916
    %v6918 = vadd.f32 %v6915, 1.0
    %v6919 = vadd.f32 %v6917, 1.0
    %v6920 = vrcp.pop %v6918
    %v6921 = vmul.f32 1.0, %v6920
    %v6922 = vrcp.pop %v6919
    %v6923 = vmul.f32 1.0, %v6922
    %v6924 = vtanh.pop %v6911
    %v6925 = vmul.f32 %v6921, %v6598
    %v6926 = vmul.f32 %v6921, %v6924
    %6928 = vrot.lane.b32.xlu0 %v6926, 64
    %v6929 = vpop.permute.xlu0 %6928
    %v6931 = vadd.f32 %v6925, %v6929
    %v6932 = vtanh.pop %v6931
    %v6933 = vmul.f32 %v6923, %v6932
    %6935 = vrot.lane.b32.xlu0 %v6933, 64
    %v6936 = vpop.permute.xlu0 %6935
    %6938 = vst.msk [vmem:[#allocation3 + $0xe] sm:$0x3] %vm4606, %v6936
    %v6939 = vld [vmem:[#allocation3] sm:$0xff]
    %v6940 = vld [vmem:[#allocation3 + $0x8] sm:$0xff]
    %v6941 = vld [vmem:[#allocation9] sm:$0xff]
    %v6942 = vld [vmem:[#allocation9 + $0x8] sm:$0xff]
    %v6943 = vld [vmem:[#allocation9 + $0x10] sm:$0xff]
    %v6944 = vld [vmem:[#allocation9 + $0x18] sm:$0xff]
    %v6945 = vld [vmem:[#allocation9 + $0x20] sm:$0xff]
    %v6946 = vld [vmem:[#allocation9 + $0x28] sm:$0xff]
    %v6947 = vld [vmem:[#allocation9 + $0x30] sm:$0xff]
    %v6948 = vld [vmem:[#allocation9 + $0x38] sm:$0xff]
    %v6949 = vld [vmem:[%s41] sm:$0x1]
    %v6951 = vlaneseq
    %v6952 = vshrl.u32 %v6951, 7
    %v6953 = vsub.s32 0, %v6952
    %v6954 = vrot.slane %v6949, %v6953
    %v6957 = vsel %vm3782, %v6939, 0
    %v6960 = vsel %vm3782, %v6940, 0
    %6962 = vmatprep.subr.mxu0 0.0
    %6963 = vmatpush1.msra.mxu0 0.0
    %6964 = vmatprep.subr.mxu0 0.0
    %6965 = vmatpush1.msra.mxu0 0.0
    %6966 = vmatprep.subr.mxu0 0.0
    %6967 = vmatpush1.msra.mxu0 0.0
    %6968 = vmatprep.subr.mxu0 0.0
    %6969 = vmatpush1.msra.mxu0 0.0
    %6970 = vmatprep.subr.mxu0 0.0
    %6971 = vmatpush1.msra.mxu0 0.0
    %6972 = vmatprep.subr.mxu0 0.0
    %6973 = vmatpush1.msra.mxu0 0.0
    %6974 = vmatprep.subr.mxu0 0.0
    %6975 = vmatpush1.msra.mxu0 0.0
    %6976 = vmatprep.subr.mxu0 0.0
    %6977 = vmatpush1.msra.mxu0 0.0
    %6978 = vmatprep.subr.mxu0 0.0
    %6979 = vmatpush1.msra.mxu0 %v6948
    %6980 = vmatprep.subr.mxu0 0.0
    %6981 = vmatpush1.msra.mxu0 %v6947
    %6982 = vmatprep.subr.mxu0 0.0
    %6983 = vmatpush1.msra.mxu0 %v6946
    %6984 = vmatprep.subr.mxu0 0.0
    %6985 = vmatpush1.msra.mxu0 %v6945
    %6986 = vmatprep.subr.mxu0 0.0
    %6987 = vmatpush1.msra.mxu0 %v6944
    %6988 = vmatprep.subr.mxu0 0.0
    %6989 = vmatpush1.msra.mxu0 %v6943
    %6990 = vmatprep.subr.mxu0 0.0
    %6991 = vmatpush1.msra.mxu0 %v6942
    %6992 = vmatprep.subr.mxu0 0.0
    %6993 = vmatpush1.msra.mxu0 %v6941
    %6994 = vmatprep.subr.mxu0 0.0
    %6995 = vmatpush2.msra.mxu0 0.0
    %6996 = vmatprep.subr.mxu0 0.0
    %6997 = vmatpush2.msra.mxu0 0.0
    %6998 = vmatprep.subr.mxu0 0.0
    %6999 = vmatpush2.msra.mxu0 0.0
    %7000 = vmatprep.subr.mxu0 0.0
    %7001 = vmatpush2.msra.mxu0 0.0
    %7002 = vmatprep.subr.mxu0 0.0
    %7003 = vmatpush2.msra.mxu0 0.0
    %7004 = vmatprep.subr.mxu0 0.0
    %7005 = vmatpush2.msra.mxu0 0.0
    %7006 = vmatprep.subr.mxu0 0.0
    %7007 = vmatpush2.msra.mxu0 0.0
    %7008 = vmatprep.subr.mxu0 0.0
    %7009 = vmatpush2.msra.mxu0 0.0
    %7010 = vmatprep.subr.mxu0 0.0
    %7011 = vmatpush2.msra.mxu0 0.0
    %7012 = vmatprep.subr.mxu0 0.0
    %7013 = vmatpush2.msra.mxu0 0.0
    %7014 = vmatprep.subr.mxu0 0.0
    %7015 = vmatpush2.msra.mxu0 0.0
    %7016 = vmatprep.subr.mxu0 0.0
    %7017 = vmatpush2.msra.mxu0 0.0
    %7018 = vmatprep.subr.mxu0 0.0
    %7019 = vmatpush2.msra.mxu0 0.0
    %7020 = vmatprep.subr.mxu0 0.0
    %7021 = vmatpush2.msra.mxu0 0.0
    %7022 = vmatprep.subr.mxu0 0.0
    %7023 = vmatpush2.msra.mxu0 0.0
    %7024 = vmatprep.subr.mxu0 0.0
    %7025 = vmatpush2.msra.mxu0 0.0
    %7026 = vmatprep.mubr.f32.mxu0 0.0
    %7027 = vmatmul.mubr.f32.gmra.mxu0 %v6957
    %v7028 = vpop.f32.mrf.mxu0
    %v7029 = vadd.f32 %v6954, %v7028
    %v7030 = vpop.f32.mrf.mxu0
    %7031 = vmatprep.mubr.f32.mxu0 0.0
    %7032 = vmatmul.mubr.f32.gmra.mxu0 %v6960
    %v7033 = vpop.f32.mrf.mxu0
    %v7034 = vadd.f32 %v6954, %v7033
    %v7035 = vpop.f32.mrf.mxu0
    %7036 = vdwg.mxu0
    %v7037 = vsel %vm937, %v7029, 0.0
    %7038 = vadd.xlane.f32.xlu0 %v7037
    %v7039 = vpop.xlane.xlu0 %7038
    %v7040 = vsel %vm937, %v7034, 0.0
    %7041 = vadd.xlane.f32.xlu0 %v7040
    %v7042 = vpop.xlane.xlu0 %7041
    %v7043 = vrcp.pop 32.0
    %v7044 = vmul.f32 %v7039, %v7043
    %v7045 = vmul.f32 %v7042, %v7043
    %v7046 = vsub.f32 %v7029, %v7044
    %v7047 = vsub.f32 %v7034, %v7045
    %v7048 = vmul.f32 %v7046, %v7046
    %v7049 = vmul.f32 %v7047, %v7047
    %v7050 = vsel %vm937, %v7048, 0.0
    %7051 = vadd.xlane.f32.xlu0 %v7050
    %v7052 = vpop.xlane.xlu0 %7051
    %v7053 = vsel %vm937, %v7049, 0.0
    %7054 = vadd.xlane.f32.xlu0 %v7053
    %v7055 = vpop.xlane.xlu0 %7054
    %v7056 = vmul.f32 %v7052, %v7043
    %v7057 = vmul.f32 %v7055, %v7043
    %v7058 = vadd.f32 %v7056, 1e-05
    %v7059 = vadd.f32 %v7057, 1e-05
    %v7060 = vrsqrt.pop %v7058
    %v7061 = vrsqrt.pop %v7059
    %v7062 = vmul.f32 %v7046, %v7060
    %v7063 = vmul.f32 %v7047, %v7061
    %v7064 = vld [vmem:[#allocation29] sm:$0x1]
    %v7066 = vlaneseq
    %v7067 = vshrl.u32 %v7066, 7
    %v7068 = vsub.s32 0, %v7067
    %v7069 = vrot.slane %v7064, %v7068
    %v7071 = vmul.f32 %v7062, %v7069
    %v7072 = vmul.f32 %v7063, %v7069
    %v7073 = vld [vmem:[#allocation31] sm:$0x1]
    %v7075 = vlaneseq
    %v7076 = vshrl.u32 %v7075, 7
    %v7077 = vsub.s32 0, %v7076
    %v7078 = vrot.slane %v7073, %v7077
    %v7080 = vadd.f32 %v7071, %v7078
    %v7081 = vadd.f32 %v7072, %v7078
    %v7082 = vld [vmem:[%s47] sm:$0xff]
    %v7083 = vld [vmem:[%s47 + $0x8] sm:$0xff]
    %v7084 = vld [vmem:[%s47 + $0x10] sm:$0xff]
    %v7085 = vld [vmem:[%s47 + $0x18] sm:$0xff]
    %v7086 = vld [vmem:[%s49] sm:$0x1]
    %v7088 = vlaneseq
    %v7089 = vshrl.u32 %v7088, 7
    %v7090 = vsub.s32 0, %v7089
    %v7091 = vrot.slane %v7086, %v7090
    %v7094 = vsel %vm937, %v7080, 0
    %v7097 = vsel %vm937, %v7081, 0
    %7099 = vmatprep.subr.mxu0 0.0
    %7100 = vmatpush1.msra.mxu0 0.0
    %7101 = vmatprep.subr.mxu0 0.0
    %7102 = vmatpush1.msra.mxu0 0.0
    %7103 = vmatprep.subr.mxu0 0.0
    %7104 = vmatpush1.msra.mxu0 0.0
    %7105 = vmatprep.subr.mxu0 0.0
    %7106 = vmatpush1.msra.mxu0 0.0
    %7107 = vmatprep.subr.mxu0 0.0
    %7108 = vmatpush1.msra.mxu0 0.0
    %7109 = vmatprep.subr.mxu0 0.0
    %7110 = vmatpush1.msra.mxu0 0.0
    %7111 = vmatprep.subr.mxu0 0.0
    %7112 = vmatpush1.msra.mxu0 0.0
    %7113 = vmatprep.subr.mxu0 0.0
    %7114 = vmatpush1.msra.mxu0 0.0
    %7115 = vmatprep.subr.mxu0 0.0
    %7116 = vmatpush1.msra.mxu0 0.0
    %7117 = vmatprep.subr.mxu0 0.0
    %7118 = vmatpush1.msra.mxu0 0.0
    %7119 = vmatprep.subr.mxu0 0.0
    %7120 = vmatpush1.msra.mxu0 0.0
    %7121 = vmatprep.subr.mxu0 0.0
    %7122 = vmatpush1.msra.mxu0 0.0
    %7123 = vmatprep.subr.mxu0 0.0
    %7124 = vmatpush1.msra.mxu0 %v7085
    %7125 = vmatprep.subr.mxu0 0.0
    %7126 = vmatpush1.msra.mxu0 %v7084
    %7127 = vmatprep.subr.mxu0 0.0
    %7128 = vmatpush1.msra.mxu0 %v7083
    %7129 = vmatprep.subr.mxu0 0.0
    %7130 = vmatpush1.msra.mxu0 %v7082
    %7131 = vmatprep.subr.mxu0 0.0
    %7132 = vmatpush2.msra.mxu0 0.0
    %7133 = vmatprep.subr.mxu0 0.0
    %7134 = vmatpush2.msra.mxu0 0.0
    %7135 = vmatprep.subr.mxu0 0.0
    %7136 = vmatpush2.msra.mxu0 0.0
    %7137 = vmatprep.subr.mxu0 0.0
    %7138 = vmatpush2.msra.mxu0 0.0
    %7139 = vmatprep.subr.mxu0 0.0
    %7140 = vmatpush2.msra.mxu0 0.0
    %7141 = vmatprep.subr.mxu0 0.0
    %7142 = vmatpush2.msra.mxu0 0.0
    %7143 = vmatprep.subr.mxu0 0.0
    %7144 = vmatpush2.msra.mxu0 0.0
    %7145 = vmatprep.subr.mxu0 0.0
    %7146 = vmatpush2.msra.mxu0 0.0
    %7147 = vmatprep.subr.mxu0 0.0
    %7148 = vmatpush2.msra.mxu0 0.0
    %7149 = vmatprep.subr.mxu0 0.0
    %7150 = vmatpush2.msra.mxu0 0.0
    %7151 = vmatprep.subr.mxu0 0.0
    %7152 = vmatpush2.msra.mxu0 0.0
    %7153 = vmatprep.subr.mxu0 0.0
    %7154 = vmatpush2.msra.mxu0 0.0
    %7155 = vmatprep.subr.mxu0 0.0
    %7156 = vmatpush2.msra.mxu0 0.0
    %7157 = vmatprep.subr.mxu0 0.0
    %7158 = vmatpush2.msra.mxu0 0.0
    %7159 = vmatprep.subr.mxu0 0.0
    %7160 = vmatpush2.msra.mxu0 0.0
    %7161 = vmatprep.subr.mxu0 0.0
    %7162 = vmatpush2.msra.mxu0 0.0
    %7163 = vmatprep.mubr.f32.mxu0 0.0
    %7164 = vmatmul.mubr.f32.gmra.mxu0 %v7094
    %v7165 = vpop.f32.mrf.mxu0
    %v7166 = vadd.f32 %v7091, %v7165
    %v7167 = vpop.f32.mrf.mxu0
    %7168 = vmatprep.mubr.f32.mxu0 0.0
    %7169 = vmatmul.mubr.f32.gmra.mxu0 %v7097
    %v7170 = vpop.f32.mrf.mxu0
    %v7171 = vadd.f32 %v7091, %v7170
    %v7172 = vpop.f32.mrf.mxu0
    %7173 = vdwg.mxu0
    %7174 = vst [vmem:[%s63] sm:$0xff] %v7166
    %7175 = vst [vmem:[%s63 + $0x8] sm:$0xff] %v7171
    // Predicated region
    $region328: #{model_forward.1} parent=1 // pred_check
      _
    $region329: #{model_forward.1} parent=1 // pred_check_branch
      %7177 = sbr.rel (0) target = $region331
    $region330: #{model_forward.1} parent=1 // pred_region
      _
    $region331: #{model_forward.1} parent=1 // pred_fallthru
      _
    // Predicated region
    $region332: #{model_forward.1} parent=1 // pred_check
      _
    $region333: #{model_forward.1} parent=1 // pred_check_branch
      %7179 = sbr.rel (0) target = $region335
    $region334: #{model_forward.1} parent=1 // pred_region
      _
    $region335: #{model_forward.1} parent=1 // pred_fallthru
      _
    %7180 = vsyncpa [#allocation13], 1
    %7181 = vsyncpa [#allocation15], 1
    %7182 = vsyncpa [#allocation18], 1
    %7183 = vsyncpa [#allocation21], 1
    %7184 = vsyncpa [#allocation24], 1
    %7185 = vsyncpa [#allocation27], 1
    %7186 = vsyncpa [#allocation30], 1
  %7187 = vsyncmov [#allocation10]
  %s7188 = vpop.sfrf %7187
  %p7189 = scmp.eq.s32.totalorder %s7188, 0
  %p7190 = pneg %p7189
  %7192 = shalt.err (%p7190)
  %s7193 = scalar_lea.sflag [#allocation10], 1
  %7194 = vsyncmov %s7193
  %s7195 = vpop.sfrf %7194
  %p7196 = scmp.eq.s32.totalorder %s7195, 0
  %p7197 = pneg %p7196
  %7199 = shalt.err (%p7197)
  %s7200 = scalar_lea.sflag [#allocation10], 2
  %7201 = vsyncmov %s7200
  %s7202 = vpop.sfrf %7201
  %p7203 = scmp.eq.s32.totalorder %s7202, 0
  %p7204 = pneg %p7203
  %7206 = shalt.err (%p7204)
  %s7207 = scalar_lea.sflag [#allocation10], 3
  %7208 = vsyncmov %s7207
  %s7209 = vpop.sfrf %7208
  %p7210 = scmp.eq.s32.totalorder %s7209, 0
  %p7211 = pneg %p7210
  %7213 = shalt.err (%p7211)
  %s7214 = scalar_lea.sflag [#allocation10], 4
  %7215 = vsyncmov %s7214
  %s7216 = vpop.sfrf %7215
  %p7217 = scmp.eq.s32.totalorder %s7216, 0
  %p7218 = pneg %p7217
  %7220 = shalt.err (%p7218)
  %s7221 = scalar_lea.sflag [#allocation10], 5
  %7222 = vsyncmov %s7221
  %s7223 = vpop.sfrf %7222
  %p7224 = scmp.eq.s32.totalorder %s7223, 0
  %p7225 = pneg %p7224
  %7227 = shalt.err (%p7225)

</llo_original>
